<compile_context>
chip_gen: v5e
topology: v5e:2x2
jax: 0.10.0
libtpu: 0.0.40
codegen_flags: <defaults>
</compile_context>

<pallas_src>
import functools

import jax
import jax.numpy as jnp
from jax import lax
from jax.experimental import pallas as pl
from jax.experimental.pallas import tpu as pltpu

_VMEM_LIMIT = 32 * 1024 * 1024   # safe on v5e/v6e (128 MiB) and v7x (64 MiB)


def _round_up(x, m):
    return -(-x // m) * m


# ---------------------------------------------------------------------------
# Pallas kernel 1: tiled MXU matmul, bf16 operands -> f32 output.
# ---------------------------------------------------------------------------
def _matmul_kernel(a_ref, b_ref, o_ref):
    o_ref[...] = jnp.dot(a_ref[...], b_ref[...],
                         preferred_element_type=jnp.float32)


def matmul_pallas(a, b):
    """a: (M, K) bf16, b: (K, Ncols) bf16; K and Ncols are multiples of 128."""
    M, K = a.shape
    Kb, Ncols = b.shape
    assert K == Kb and K % 128 == 0 and Ncols % 128 == 0

    m16 = _round_up(M, 16)
    tm = m16 if m16 <= 1024 else 256
    Mp = _round_up(M, tm)
    tn = Ncols if Ncols <= 512 else 512
    if Ncols % tn:
        tn = 128
    if Mp != M:
        a = jnp.pad(a, ((0, Mp - M), (0, 0)))

    out = pl.pallas_call(
        _matmul_kernel,
        out_shape=jax.ShapeDtypeStruct((Mp, Ncols), jnp.float32),
        grid_spec=pltpu.PrefetchScalarGridSpec(
            num_scalar_prefetch=0,
            grid=(Mp // tm, Ncols // tn),
            in_specs=[pl.BlockSpec((tm, K), lambda i, j: (i, 0)),
                      pl.BlockSpec((K, tn), lambda i, j: (0, j))],
            out_specs=pl.BlockSpec((tm, tn), lambda i, j: (i, j))),
        compiler_params=pltpu.CompilerParams(
            dimension_semantics=("parallel", "parallel"),
            vmem_limit_bytes=_VMEM_LIMIT),
    )(a, b)
    return out[:M] if Mp != M else out


# ---------------------------------------------------------------------------
# Pallas kernels 2+3: training-mode BatchNorm (+ ReLU / tanh) on an (M, C)
# channels-last slab.  Pass 1: per-channel sum / sum-of-squares (tiled over M,
# accumulated into a resident (1, C) output block).  Pass 2: normalize + act.
# ---------------------------------------------------------------------------
def _bn_stats_kernel(y_ref, s1_ref, s2_ref):
    @pl.when(pl.program_id(0) == 0)
    def _():
        s1_ref[...] = jnp.zeros_like(s1_ref)
        s2_ref[...] = jnp.zeros_like(s2_ref)

    y = y_ref[...]
    s1_ref[...] += jnp.sum(y, axis=0, keepdims=True)
    s2_ref[...] += jnp.sum(y * y, axis=0, keepdims=True)


def _bn_apply_kernel(y_ref, s1_ref, s2_ref, g_ref, b_ref, o_ref, *,
                     count, eps, act):
    inv_n = 1.0 / count
    mean = s1_ref[...] * inv_n
    var = jnp.maximum(s2_ref[...] * inv_n - mean * mean, 0.0)   # biased var
    scale = g_ref[...] * lax.rsqrt(var + eps)
    z = (y_ref[...] - mean) * scale + b_ref[...]
    z = jnp.maximum(z, 0.0) if act == "relu" else jnp.tanh(z)
    o_ref[...] = z.astype(o_ref.dtype)


def bn_act_pallas(y, gamma, beta, *, act, out_dtype, eps=1e-5):
    M, C = y.shape
    tm = min(_round_up(M, 16), 1024)
    Mp = _round_up(M, tm)
    if Mp != M:
        y = jnp.pad(y, ((0, Mp - M), (0, 0)))     # zero rows: sums unaffected
    grid = (Mp // tm,)

    s1, s2 = pl.pallas_call(
        _bn_stats_kernel,
        out_shape=(jax.ShapeDtypeStruct((1, C), jnp.float32),
                   jax.ShapeDtypeStruct((1, C), jnp.float32)),
        grid_spec=pltpu.PrefetchScalarGridSpec(
            num_scalar_prefetch=0, grid=grid,
            in_specs=[pl.BlockSpec((tm, C), lambda i: (i, 0))],
            out_specs=[pl.BlockSpec((1, C), lambda i: (0, 0)),
                       pl.BlockSpec((1, C), lambda i: (0, 0))]),
        compiler_params=pltpu.CompilerParams(
            dimension_semantics=("arbitrary",),
            vmem_limit_bytes=_VMEM_LIMIT),
    )(y)

    apply_kernel = functools.partial(_bn_apply_kernel, count=float(M),
                                     eps=eps, act=act)
    out = pl.pallas_call(
        apply_kernel,
        out_shape=jax.ShapeDtypeStruct((Mp, C), out_dtype),
        grid_spec=pltpu.PrefetchScalarGridSpec(
            num_scalar_prefetch=0, grid=grid,
            in_specs=[pl.BlockSpec((tm, C), lambda i: (i, 0)),
                      pl.BlockSpec((1, C), lambda i: (0, 0)),
                      pl.BlockSpec((1, C), lambda i: (0, 0)),
                      pl.BlockSpec((1, C), lambda i: (0, 0)),
                      pl.BlockSpec((1, C), lambda i: (0, 0))],
            out_specs=pl.BlockSpec((tm, C), lambda i: (i, 0))),
        compiler_params=pltpu.CompilerParams(
            dimension_semantics=("parallel",),
            vmem_limit_bytes=_VMEM_LIMIT),
    )(y, s1, s2, gamma, beta)
    return out[:M] if Mp != M else out


# ---------------------------------------------------------------------------
# ConvTranspose2d(K=4, stride=2, pad=1) + BN + act via sub-pixel decomposition:
#   out[n, 2q+r, 2p+s, oc] = sum_{ic,dh,dw} xp[n, q+r+dh, p+s+dw, ic]
#                                           * w[ic, oc, 3-2dh-r, 3-2dw-s]
# => one (N*(H+1)*(W+1), 4*Cin) x (4*Cin, 4*Cout) matmul + phase de-interleave.
# ---------------------------------------------------------------------------
def _deconv_s2_bn_act(h, layer, *, act, out_dtype):
    N, H, W, Cin = h.shape
    Cout = layer["gamma"].shape[1]
    ncols = 4 * Cout

    xp = jnp.pad(h, ((0, 0), (1, 1), (1, 1), (0, 0)))
    A = jnp.concatenate(
        [xp[:, dh:dh + H + 1, dw:dw + W + 1, :]
         for dh in (0, 1) for dw in (0, 1)],
        axis=-1).reshape(N * (H + 1) * (W + 1), 4 * Cin)

    Y = matmul_pallas(A, layer["B"])[:, :ncols]          # (N*(H+1)*(W+1), 4*Cout)
    Y6 = Y.reshape(N, H + 1, W + 1, 2, 2, Cout)

    # De-interleave the 4 phases onto the (2H, 2W) output grid.
    rows = []
    for r in (0, 1):
        cols = [Y6[:, r:r + H, s:s + W, r, s, :] for s in (0, 1)]
        rows.append(jnp.stack(cols, axis=3))             # (N, H, W, 2, Cout)
    Z = jnp.stack(rows, axis=2)                          # (N, H, 2, W, 2, Cout)
    slab = Z.reshape(N * 2 * H * 2 * W, Cout)

    out = bn_act_pallas(slab, layer["gamma"], layer["beta"],
                        act=act, out_dtype=out_dtype)
    return out.reshape(N, 2 * H, 2 * W, Cout)


def generator_forward(x, prep):
    """x: (N, 128, 1, 1) NCHW latent.  Returns (N, 1, 32, 32) NCHW."""
    l1, l2, l3, l4 = prep
    N, Cin, H, W = x.shape
    assert H == 1 and W == 1, "DCGAN generator expects a 1x1 latent input"

    # Layer 1: ConvTranspose2d(128,256,4,1,0) on a 1x1 input == pure matmul.
    x2 = x.reshape(N, Cin).astype(jnp.bfloat16)
    y = matmul_pallas(x2, l1["B"])                       # (N, 16*256) f32
    c1 = l1["gamma"].shape[1]
    h = bn_act_pallas(y.reshape(N * 16, c1), l1["gamma"], l1["beta"],
                      act="relu", out_dtype=jnp.bfloat16)
    h = h.reshape(N, 4, 4, c1)

    # Layers 2-4: stride-2 conv-transpose via sub-pixel decomposition.
    h = _deconv_s2_bn_act(h, l2, act="relu", out_dtype=jnp.bfloat16)   # (N, 8, 8,128)
    h = _deconv_s2_bn_act(h, l3, act="relu", out_dtype=jnp.bfloat16)   # (N,16,16, 64)
    h = _deconv_s2_bn_act(h, l4, act="tanh", out_dtype=jnp.float32)    # (N,32,32,  1)

    return jnp.transpose(h, (0, 3, 1, 2))                # to NCHW once, at the end


# ---------------------------------------------------------------------------
# Parameters
# ---------------------------------------------------------------------------
def init_params(key):
    # (weight, bias, gamma, beta) per layer; weight in PyTorch ConvTranspose2d
    # layout (Cin, Cout, K, K).  The bias is kept only for the reference model:
    # under training-mode BatchNorm it is exactly cancelled by the mean.
    shapes = [(128, 256, 4, 4), (256, 128, 4, 4), (128, 64, 4, 4), (64, 1, 4, 4)]
    params = []
    for i, s in enumerate(shapes):
        kw, kb, kg, kt = jax.random.split(jax.random.fold_in(key, i), 4)
        cout = s[1]
        params.append((
            0.05 * jax.random.normal(kw, s, jnp.float32),
            0.05 * jax.random.normal(kb, (cout,), jnp.float32),
            1.0 + 0.1 * jax.random.normal(kg, (cout,), jnp.float32),
            0.1 * jax.random.normal(kt, (cout,), jnp.float32)))
    return params


def prepare_params(params):
    """Pre-flip / reshape / pad / bf16-cast the weight slabs once (outside jit)."""
    prep = []
    for idx, (w, _b, gamma, beta) in enumerate(params):
        Cin, Cout, K, _ = w.shape
        if idx == 0:
            # 1x1-input stride-1 layer: B[ic, (oh*K+ow)*Cout + oc] = w[ic,oc,oh,ow]
            B = jnp.transpose(w, (0, 2, 3, 1)).reshape(Cin, K * K * Cout)
        else:
            # stride-2 sub-pixel slab:
            # B[(dh*2+dw)*Cin+ic, (r*2+s)*Cout+oc] = w[ic, oc, 3-2dh-r, 3-2dw-s]
            wf = w[:, :, ::-1, ::-1].reshape(Cin, Cout, 2, 2, 2, 2)
            B = jnp.transpose(wf, (2, 4, 0, 3, 5, 1)).reshape(4 * Cin, 4 * Cout)
        npad = _round_up(B.shape[1], 128)
        if npad != B.shape[1]:
            B = jnp.pad(B, ((0, 0), (0, npad - B.shape[1])))
        prep.append(dict(B=B.astype(jnp.bfloat16),
                         gamma=gamma.reshape(1, Cout).astype(jnp.float32),
                         beta=beta.reshape(1, Cout).astype(jnp.float32)))
    return prep


# ---------------------------------------------------------------------------
# Pure-JAX f32 reference of the PyTorch module (for the self-check).
# ---------------------------------------------------------------------------
def reference_forward(x, params):
    def convT(h, w, b, stride, pad):
        K = w.shape[2]
        w_conv = jnp.transpose(w[:, :, ::-1, ::-1], (1, 0, 2, 3))   # OIHW
        y = lax.conv_general_dilated(
            h, w_conv, window_strides=(1, 1),
            padding=[(K - 1 - pad, K - 1 - pad)] * 2,
            lhs_dilation=(stride, stride),
            dimension_numbers=("NCHW", "OIHW", "NCHW"),
            precision=lax.Precision.HIGHEST)
        return y + b.reshape(1, -1, 1, 1)

    def bn(y, gamma, beta, eps=1e-5):
        mean = jnp.mean(y, axis=(0, 2, 3), keepdims=True)
        var = jnp.mean(jnp.square(y - mean), axis=(0, 2, 3), keepdims=True)
        return ((y - mean) * lax.rsqrt(var + eps) * gamma.reshape(1, -1, 1, 1)
                + beta.reshape(1, -1, 1, 1))

    strides, pads = (1, 2, 2, 2), (0, 1, 1, 1)
    h = x
    for i, (w, b, g, t) in enumerate(params):
        h = bn(convT(h, w, b, strides[i], pads[i]), g, t)
        h = jnp.maximum(h, 0.0) if i < 3 else jnp.tanh(h)
    return h


if __name__ == "__main__":
    key = jax.random.PRNGKey(0)
    kx, kp = jax.random.split(key)
    x = jax.random.normal(kx, (2, 128, 1, 1), jnp.float32)   # DCGAN latent
    params = init_params(kp)
    prep = prepare_params(params)

    fwd = jax.jit(generator_forward)
    out = jax.block_until_ready(fwd(x, prep))
    assert out.shape == (2, 1, 32, 32), out.shape
    assert bool(jnp.all(jnp.isfinite(out)))

    # Numerical self-check vs the f32 reference (loose tol: bf16 matmul operands).
    ref = reference_forward(x, params)
    max_err = float(jnp.max(jnp.abs(out - ref)))
    assert max_err < 0.1, f"max abs err vs reference: {max_err}"

    print("KERNEL_OK")
</pallas_src>

<mosaic_0001>
module attributes {stable_mosaic.version = 11 : i64} {
  func.func @_matmul_kernel(%arg0: i32, %arg1: i32, %arg2: memref<16x128xbf16, #tpu.memory_space<vmem>>, %arg3: memref<128x512xbf16, #tpu.memory_space<vmem>>, %arg4: memref<16x512xf32, #tpu.memory_space<vmem>>) attributes {dimension_semantics = [#tpu.dimension_semantics<parallel>, #tpu.dimension_semantics<parallel>], iteration_bounds = array<i64: 1, 8>, scalar_prefetch = 0 : i64, scratch_operands = 0 : i64, tpu.core_type = #tpu.core_type<tc>, window_params = [{transform_indices = @transform_0, window_bounds = array<i64: 16, 128>}, {transform_indices = @transform_1, window_bounds = array<i64: 128, 512>}, {transform_indices = @transform_2, window_bounds = array<i64: 16, 512>}]} {
    %c0 = arith.constant 0 : index
    %c0_0 = arith.constant 0 : index
    %0 = vector.load %arg2[%c0, %c0_0] : memref<16x128xbf16, #tpu.memory_space<vmem>>, vector<16x128xbf16>
    %c0_1 = arith.constant 0 : index
    %c0_2 = arith.constant 0 : index
    %1 = vector.load %arg3[%c0_1, %c0_2] : memref<128x512xbf16, #tpu.memory_space<vmem>>, vector<128x512xbf16>
    %cst = arith.constant dense<0.000000e+00> : vector<16x512xf32>
    %2 = tpu.matmul %0, %1, %cst {dimension_numbers = #tpu.dot_dimension_numbers<[1], [0], [0], [1], [0, 0, 1, 1], [], []>} : vector<16x128xbf16>, vector<128x512xbf16>, vector<16x512xf32> -> vector<16x512xf32>
    %c0_3 = arith.constant 0 : index
    %c0_4 = arith.constant 0 : index
    %3 = vector.load %arg4[%c0_3, %c0_4] : memref<16x512xf32, #tpu.memory_space<vmem>>, vector<16x512xf32>
    tpu.vector_store %arg4[%c0_3, %c0_4], %2 {strides = array<i32>} : memref<16x512xf32, #tpu.memory_space<vmem>>, vector<16x512xf32>,
    return
  }
  func.func @transform_0(%arg0: i32, %arg1: i32) -> (i32, i32) {
    %c0_i32 = arith.constant 0 : i32
    %c0_i32_0 = arith.constant 0 : i32
    return %arg0, %c0_i32 : i32, i32
  }
  func.func @transform_1(%arg0: i32, %arg1: i32) -> (i32, i32) {
    %c0_i32 = arith.constant 0 : i32
    %c0_i32_0 = arith.constant 0 : i32
    return %c0_i32, %arg1 : i32, i32
  }
  func.func @transform_2(%arg0: i32, %arg1: i32) -> (i32, i32) {
    %c0_i32 = arith.constant 0 : i32
    return %arg0, %arg1 : i32, i32
  }
}

module attributes {stable_mosaic.version = 11 : i64} {
  func.func @_bn_stats_kernel(%arg0: i32, %arg1: memref<32x256xf32, #tpu.memory_space<vmem>>, %arg2: memref<1x256xf32, #tpu.memory_space<vmem>>, %arg3: memref<1x256xf32, #tpu.memory_space<vmem>>) attributes {dimension_semantics = [#tpu.dimension_semantics<arbitrary>], iteration_bounds = array<i64: 1>, scalar_prefetch = 0 : i64, scratch_operands = 0 : i64, tpu.core_type = #tpu.core_type<tc>, window_params = [{transform_indices = @transform_0, window_bounds = array<i64: 32, 256>}, {pipeline_mode = #tpu.pipeline_mode<synchronous>, transform_indices = @transform_1, window_bounds = array<i64: 1, 256>}, {pipeline_mode = #tpu.pipeline_mode<synchronous>, transform_indices = @transform_2, window_bounds = array<i64: 1, 256>}]} {
    %c0_i32 = arith.constant 0 : i32
    %0 = arith.cmpi eq, %arg0, %c0_i32 : i32
    %1 = arith.extui %0 : i1 to i32
    %c0_i32_0 = arith.constant 0 : i32
    %2 = arith.cmpi ne, %1, %c0_i32_0 : i32
    scf.if %2 {
      %cst_11 = arith.constant 0.000000e+00 : f32
      %15 = vector.broadcast %cst_11 : f32 to vector<1x256xf32>
      %c0_12 = arith.constant 0 : index
      %c0_13 = arith.constant 0 : index
      %16 = vector.load %arg2[%c0_12, %c0_13] : memref<1x256xf32, #tpu.memory_space<vmem>>, vector<1x256xf32>
      tpu.vector_store %arg2[%c0_12, %c0_13], %15 {strides = array<i32>} : memref<1x256xf32, #tpu.memory_space<vmem>>, vector<1x256xf32>,
      %cst_14 = arith.constant 0.000000e+00 : f32
      %17 = vector.broadcast %cst_14 : f32 to vector<1x256xf32>
      %c0_15 = arith.constant 0 : index
      %c0_16 = arith.constant 0 : index
      %18 = vector.load %arg3[%c0_15, %c0_16] : memref<1x256xf32, #tpu.memory_space<vmem>>, vector<1x256xf32>
      tpu.vector_store %arg3[%c0_15, %c0_16], %17 {strides = array<i32>} : memref<1x256xf32, #tpu.memory_space<vmem>>, vector<1x256xf32>,
    } else {
    }
    %c0 = arith.constant 0 : index
    %c0_1 = arith.constant 0 : index
    %3 = vector.load %arg1[%c0, %c0_1] : memref<32x256xf32, #tpu.memory_space<vmem>>, vector<32x256xf32>
    %c0_2 = arith.constant 0 : index
    %c0_3 = arith.constant 0 : index
    %4 = vector.load %arg2[%c0_2, %c0_3] : memref<1x256xf32, #tpu.memory_space<vmem>>, vector<1x256xf32>
    %cst = arith.constant dense<0.000000e+00> : vector<256xf32>
    %5 = vector.multi_reduction <add>, %3, %cst [0] : vector<32x256xf32> to vector<256xf32>
    %6 = vector.shape_cast %5 : vector<256xf32> to vector<1x256xf32>
    %7 = arith.addf %4, %6 : vector<1x256xf32>
    %c0_4 = arith.constant 0 : index
    %c0_5 = arith.constant 0 : index
    %8 = vector.load %arg2[%c0_4, %c0_5] : memref<1x256xf32, #tpu.memory_space<vmem>>, vector<1x256xf32>
    tpu.vector_store %arg2[%c0_4, %c0_5], %7 {strides = array<i32>} : memref<1x256xf32, #tpu.memory_space<vmem>>, vector<1x256xf32>,
    %c0_6 = arith.constant 0 : index
    %c0_7 = arith.constant 0 : index
    %9 = vector.load %arg3[%c0_6, %c0_7] : memref<1x256xf32, #tpu.memory_space<vmem>>, vector<1x256xf32>
    %10 = arith.mulf %3, %3 : vector<32x256xf32>
    %cst_8 = arith.constant dense<0.000000e+00> : vector<256xf32>
    %11 = vector.multi_reduction <add>, %10, %cst_8 [0] : vector<32x256xf32> to vector<256xf32>
    %12 = vector.shape_cast %11 : vector<256xf32> to vector<1x256xf32>
    %13 = arith.addf %9, %12 : vector<1x256xf32>
    %c0_9 = arith.constant 0 : index
    %c0_10 = arith.constant 0 : index
    %14 = vector.load %arg3[%c0_9, %c0_10] : memref<1x256xf32, #tpu.memory_space<vmem>>, vector<1x256xf32>
    tpu.vector_store %arg3[%c0_9, %c0_10], %13 {strides = array<i32>} : memref<1x256xf32, #tpu.memory_space<vmem>>, vector<1x256xf32>,
    return
  }
  func.func @transform_0(%arg0: i32) -> (i32, i32) {
    %c0_i32 = arith.constant 0 : i32
    %c0_i32_0 = arith.constant 0 : i32
    return %arg0, %c0_i32 : i32, i32
  }
  func.func @transform_1(%arg0: i32) -> (i32, i32) {
    %c0_i32 = arith.constant 0 : i32
    %c0_i32_0 = arith.constant 0 : i32
    %c0_i32_1 = arith.constant 0 : i32
    return %c0_i32, %c0_i32_0 : i32, i32
  }
  func.func @transform_2(%arg0: i32) -> (i32, i32) {
    %c0_i32 = arith.constant 0 : i32
    %c0_i32_0 = arith.constant 0 : i32
    %c0_i32_1 = arith.constant 0 : i32
    return %c0_i32, %c0_i32_0 : i32, i32
  }
}

module attributes {stable_mosaic.version = 11 : i64} {
  func.func @_bn_apply_kernel(%arg0: i32, %arg1: memref<32x256xf32, #tpu.memory_space<vmem>>, %arg2: memref<1x256xf32, #tpu.memory_space<vmem>>, %arg3: memref<1x256xf32, #tpu.memory_space<vmem>>, %arg4: memref<1x256xf32, #tpu.memory_space<vmem>>, %arg5: memref<1x256xf32, #tpu.memory_space<vmem>>, %arg6: memref<32x256xbf16, #tpu.memory_space<vmem>>) attributes {dimension_semantics = [#tpu.dimension_semantics<parallel>], iteration_bounds = array<i64: 1>, scalar_prefetch = 0 : i64, scratch_operands = 0 : i64, tpu.core_type = #tpu.core_type<tc>, window_params = [{transform_indices = @transform_0, window_bounds = array<i64: 32, 256>}, {pipeline_mode = #tpu.pipeline_mode<synchronous>, transform_indices = @transform_1, window_bounds = array<i64: 1, 256>}, {pipeline_mode = #tpu.pipeline_mode<synchronous>, transform_indices = @transform_2, window_bounds = array<i64: 1, 256>}, {pipeline_mode = #tpu.pipeline_mode<synchronous>, transform_indices = @transform_3, window_bounds = array<i64: 1, 256>}, {pipeline_mode = #tpu.pipeline_mode<synchronous>, transform_indices = @transform_4, window_bounds = array<i64: 1, 256>}, {transform_indices = @transform_5, window_bounds = array<i64: 32, 256>}]} {
    %c0 = arith.constant 0 : index
    %c0_0 = arith.constant 0 : index
    %0 = vector.load %arg2[%c0, %c0_0] : memref<1x256xf32, #tpu.memory_space<vmem>>, vector<1x256xf32>
    %cst = arith.constant 3.125000e-02 : f32
    %1 = vector.broadcast %cst : f32 to vector<1x256xf32>
    %2 = arith.mulf %0, %1 : vector<1x256xf32>
    %c0_1 = arith.constant 0 : index
    %c0_2 = arith.constant 0 : index
    %3 = vector.load %arg3[%c0_1, %c0_2] : memref<1x256xf32, #tpu.memory_space<vmem>>, vector<1x256xf32>
    %cst_3 = arith.constant 3.125000e-02 : f32
    %4 = vector.broadcast %cst_3 : f32 to vector<1x256xf32>
    %5 = arith.mulf %3, %4 : vector<1x256xf32>
    %6 = arith.mulf %2, %2 : vector<1x256xf32>
    %7 = arith.subf %5, %6 : vector<1x256xf32>
    %cst_4 = arith.constant 0.000000e+00 : f32
    %8 = vector.broadcast %cst_4 : f32 to vector<1x256xf32>
    %9 = arith.maximumf %7, %8 : vector<1x256xf32>
    %c0_5 = arith.constant 0 : index
    %c0_6 = arith.constant 0 : index
    %10 = vector.load %arg4[%c0_5, %c0_6] : memref<1x256xf32, #tpu.memory_space<vmem>>, vector<1x256xf32>
    %cst_7 = arith.constant 9.99999974E-6 : f32
    %11 = vector.broadcast %cst_7 : f32 to vector<1x256xf32>
    %12 = arith.addf %9, %11 : vector<1x256xf32>
    %13 = math.rsqrt %12 : vector<1x256xf32>
    %14 = arith.mulf %10, %13 : vector<1x256xf32>
    %c0_8 = arith.constant 0 : index
    %c0_9 = arith.constant 0 : index
    %15 = vector.load %arg1[%c0_8, %c0_9] : memref<32x256xf32, #tpu.memory_space<vmem>>, vector<32x256xf32>
    %16 = vector.broadcast %2 : vector<1x256xf32> to vector<32x256xf32>
    %17 = arith.subf %15, %16 : vector<32x256xf32>
    %18 = vector.broadcast %14 : vector<1x256xf32> to vector<32x256xf32>
    %19 = arith.mulf %17, %18 : vector<32x256xf32>
    %c0_10 = arith.constant 0 : index
    %c0_11 = arith.constant 0 : index
    %20 = vector.load %arg5[%c0_10, %c0_11] : memref<1x256xf32, #tpu.memory_space<vmem>>, vector<1x256xf32>
    %21 = vector.broadcast %20 : vector<1x256xf32> to vector<32x256xf32>
    %22 = arith.addf %19, %21 : vector<32x256xf32>
    %cst_12 = arith.constant 0.000000e+00 : f32
    %23 = vector.broadcast %cst_12 : f32 to vector<32x256xf32>
    %24 = arith.maximumf %22, %23 : vector<32x256xf32>
    %25 = arith.truncf %24 : vector<32x256xf32> to vector<32x256xbf16>
    %c0_13 = arith.constant 0 : index
    %c0_14 = arith.constant 0 : index
    %26 = vector.load %arg6[%c0_13, %c0_14] : memref<32x256xbf16, #tpu.memory_space<vmem>>, vector<32x256xbf16>
    tpu.vector_store %arg6[%c0_13, %c0_14], %25 {strides = array<i32>} : memref<32x256xbf16, #tpu.memory_space<vmem>>, vector<32x256xbf16>,
    return
  }
  func.func @transform_0(%arg0: i32) -> (i32, i32) {
    %c0_i32 = arith.constant 0 : i32
    %c0_i32_0 = arith.constant 0 : i32
    return %arg0, %c0_i32 : i32, i32
  }
  func.func @transform_1(%arg0: i32) -> (i32, i32) {
    %c0_i32 = arith.constant 0 : i32
    %c0_i32_0 = arith.constant 0 : i32
    %c0_i32_1 = arith.constant 0 : i32
    return %c0_i32, %c0_i32_0 : i32, i32
  }
  func.func @transform_2(%arg0: i32) -> (i32, i32) {
    %c0_i32 = arith.constant 0 : i32
    %c0_i32_0 = arith.constant 0 : i32
    %c0_i32_1 = arith.constant 0 : i32
    return %c0_i32, %c0_i32_0 : i32, i32
  }
  func.func @transform_3(%arg0: i32) -> (i32, i32) {
    %c0_i32 = arith.constant 0 : i32
    %c0_i32_0 = arith.constant 0 : i32
    %c0_i32_1 = arith.constant 0 : i32
    return %c0_i32, %c0_i32_0 : i32, i32
  }
  func.func @transform_4(%arg0: i32) -> (i32, i32) {
    %c0_i32 = arith.constant 0 : i32
    %c0_i32_0 = arith.constant 0 : i32
    %c0_i32_1 = arith.constant 0 : i32
    return %c0_i32, %c0_i32_0 : i32, i32
  }
  func.func @transform_5(%arg0: i32) -> (i32, i32) {
    %c0_i32 = arith.constant 0 : i32
    %c0_i32_0 = arith.constant 0 : i32
    return %arg0, %c0_i32 : i32, i32
  }
}

module attributes {stable_mosaic.version = 11 : i64} {
  func.func @_matmul_kernel(%arg0: i32, %arg1: i32, %arg2: memref<64x1024xbf16, #tpu.memory_space<vmem>>, %arg3: memref<1024x512xbf16, #tpu.memory_space<vmem>>, %arg4: memref<64x512xf32, #tpu.memory_space<vmem>>) attributes {dimension_semantics = [#tpu.dimension_semantics<parallel>, #tpu.dimension_semantics<parallel>], iteration_bounds = array<i64: 1, 1>, scalar_prefetch = 0 : i64, scratch_operands = 0 : i64, tpu.core_type = #tpu.core_type<tc>, window_params = [{transform_indices = @transform_0, window_bounds = array<i64: 64, 1024>}, {transform_indices = @transform_1, window_bounds = array<i64: 1024, 512>}, {transform_indices = @transform_2, window_bounds = array<i64: 64, 512>}]} {
    %c0 = arith.constant 0 : index
    %c0_0 = arith.constant 0 : index
    %0 = vector.load %arg2[%c0, %c0_0] : memref<64x1024xbf16, #tpu.memory_space<vmem>>, vector<64x1024xbf16>
    %c0_1 = arith.constant 0 : index
    %c0_2 = arith.constant 0 : index
    %1 = vector.load %arg3[%c0_1, %c0_2] : memref<1024x512xbf16, #tpu.memory_space<vmem>>, vector<1024x512xbf16>
    %cst = arith.constant dense<0.000000e+00> : vector<64x512xf32>
    %2 = tpu.matmul %0, %1, %cst {dimension_numbers = #tpu.dot_dimension_numbers<[1], [0], [0], [1], [0, 0, 1, 1], [], []>} : vector<64x1024xbf16>, vector<1024x512xbf16>, vector<64x512xf32> -> vector<64x512xf32>
    %c0_3 = arith.constant 0 : index
    %c0_4 = arith.constant 0 : index
    %3 = vector.load %arg4[%c0_3, %c0_4] : memref<64x512xf32, #tpu.memory_space<vmem>>, vector<64x512xf32>
    tpu.vector_store %arg4[%c0_3, %c0_4], %2 {strides = array<i32>} : memref<64x512xf32, #tpu.memory_space<vmem>>, vector<64x512xf32>,
    return
  }
  func.func @transform_0(%arg0: i32, %arg1: i32) -> (i32, i32) {
    %c0_i32 = arith.constant 0 : i32
    %c0_i32_0 = arith.constant 0 : i32
    return %arg0, %c0_i32 : i32, i32
  }
  func.func @transform_1(%arg0: i32, %arg1: i32) -> (i32, i32) {
    %c0_i32 = arith.constant 0 : i32
    %c0_i32_0 = arith.constant 0 : i32
    return %c0_i32, %arg1 : i32, i32
  }
  func.func @transform_2(%arg0: i32, %arg1: i32) -> (i32, i32) {
    %c0_i32 = arith.constant 0 : i32
    return %arg0, %arg1 : i32, i32
  }
}

module attributes {stable_mosaic.version = 11 : i64} {
  func.func @_bn_stats_kernel(%arg0: i32, %arg1: memref<128x128xf32, #tpu.memory_space<vmem>>, %arg2: memref<1x128xf32, #tpu.memory_space<vmem>>, %arg3: memref<1x128xf32, #tpu.memory_space<vmem>>) attributes {dimension_semantics = [#tpu.dimension_semantics<arbitrary>], iteration_bounds = array<i64: 1>, scalar_prefetch = 0 : i64, scratch_operands = 0 : i64, tpu.core_type = #tpu.core_type<tc>, window_params = [{transform_indices = @transform_0, window_bounds = array<i64: 128, 128>}, {pipeline_mode = #tpu.pipeline_mode<synchronous>, transform_indices = @transform_1, window_bounds = array<i64: 1, 128>}, {pipeline_mode = #tpu.pipeline_mode<synchronous>, transform_indices = @transform_2, window_bounds = array<i64: 1, 128>}]} {
    %c0_i32 = arith.constant 0 : i32
    %0 = arith.cmpi eq, %arg0, %c0_i32 : i32
    %1 = arith.extui %0 : i1 to i32
    %c0_i32_0 = arith.constant 0 : i32
    %2 = arith.cmpi ne, %1, %c0_i32_0 : i32
    scf.if %2 {
      %cst_11 = arith.constant 0.000000e+00 : f32
      %15 = vector.broadcast %cst_11 : f32 to vector<1x128xf32>
      %c0_12 = arith.constant 0 : index
      %c0_13 = arith.constant 0 : index
      %16 = vector.load %arg2[%c0_12, %c0_13] : memref<1x128xf32, #tpu.memory_space<vmem>>, vector<1x128xf32>
      tpu.vector_store %arg2[%c0_12, %c0_13], %15 {strides = array<i32>} : memref<1x128xf32, #tpu.memory_space<vmem>>, vector<1x128xf32>,
      %cst_14 = arith.constant 0.000000e+00 : f32
      %17 = vector.broadcast %cst_14 : f32 to vector<1x128xf32>
      %c0_15 = arith.constant 0 : index
      %c0_16 = arith.constant 0 : index
      %18 = vector.load %arg3[%c0_15, %c0_16] : memref<1x128xf32, #tpu.memory_space<vmem>>, vector<1x128xf32>
      tpu.vector_store %arg3[%c0_15, %c0_16], %17 {strides = array<i32>} : memref<1x128xf32, #tpu.memory_space<vmem>>, vector<1x128xf32>,
    } else {
    }
    %c0 = arith.constant 0 : index
    %c0_1 = arith.constant 0 : index
    %3 = vector.load %arg1[%c0, %c0_1] : memref<128x128xf32, #tpu.memory_space<vmem>>, vector<128x128xf32>
    %c0_2 = arith.constant 0 : index
    %c0_3 = arith.constant 0 : index
    %4 = vector.load %arg2[%c0_2, %c0_3] : memref<1x128xf32, #tpu.memory_space<vmem>>, vector<1x128xf32>
    %cst = arith.constant dense<0.000000e+00> : vector<128xf32>
    %5 = vector.multi_reduction <add>, %3, %cst [0] : vector<128x128xf32> to vector<128xf32>
    %6 = vector.shape_cast %5 : vector<128xf32> to vector<1x128xf32>
    %7 = arith.addf %4, %6 : vector<1x128xf32>
    %c0_4 = arith.constant 0 : index
    %c0_5 = arith.constant 0 : index
    %8 = vector.load %arg2[%c0_4, %c0_5] : memref<1x128xf32, #tpu.memory_space<vmem>>, vector<1x128xf32>
    tpu.vector_store %arg2[%c0_4, %c0_5], %7 {strides = array<i32>} : memref<1x128xf32, #tpu.memory_space<vmem>>, vector<1x128xf32>,
    %c0_6 = arith.constant 0 : index
    %c0_7 = arith.constant 0 : index
    %9 = vector.load %arg3[%c0_6, %c0_7] : memref<1x128xf32, #tpu.memory_space<vmem>>, vector<1x128xf32>
    %10 = arith.mulf %3, %3 : vector<128x128xf32>
    %cst_8 = arith.constant dense<0.000000e+00> : vector<128xf32>
    %11 = vector.multi_reduction <add>, %10, %cst_8 [0] : vector<128x128xf32> to vector<128xf32>
    %12 = vector.shape_cast %11 : vector<128xf32> to vector<1x128xf32>
    %13 = arith.addf %9, %12 : vector<1x128xf32>
    %c0_9 = arith.constant 0 : index
    %c0_10 = arith.constant 0 : index
    %14 = vector.load %arg3[%c0_9, %c0_10] : memref<1x128xf32, #tpu.memory_space<vmem>>, vector<1x128xf32>
    tpu.vector_store %arg3[%c0_9, %c0_10], %13 {strides = array<i32>} : memref<1x128xf32, #tpu.memory_space<vmem>>, vector<1x128xf32>,
    return
  }
  func.func @transform_0(%arg0: i32) -> (i32, i32) {
    %c0_i32 = arith.constant 0 : i32
    %c0_i32_0 = arith.constant 0 : i32
    return %arg0, %c0_i32 : i32, i32
  }
  func.func @transform_1(%arg0: i32) -> (i32, i32) {
    %c0_i32 = arith.constant 0 : i32
    %c0_i32_0 = arith.constant 0 : i32
    %c0_i32_1 = arith.constant 0 : i32
    return %c0_i32, %c0_i32_0 : i32, i32
  }
  func.func @transform_2(%arg0: i32) -> (i32, i32) {
    %c0_i32 = arith.constant 0 : i32
    %c0_i32_0 = arith.constant 0 : i32
    %c0_i32_1 = arith.constant 0 : i32
    return %c0_i32, %c0_i32_0 : i32, i32
  }
}

module attributes {stable_mosaic.version = 11 : i64} {
  func.func @_bn_apply_kernel(%arg0: i32, %arg1: memref<128x128xf32, #tpu.memory_space<vmem>>, %arg2: memref<1x128xf32, #tpu.memory_space<vmem>>, %arg3: memref<1x128xf32, #tpu.memory_space<vmem>>, %arg4: memref<1x128xf32, #tpu.memory_space<vmem>>, %arg5: memref<1x128xf32, #tpu.memory_space<vmem>>, %arg6: memref<128x128xbf16, #tpu.memory_space<vmem>>) attributes {dimension_semantics = [#tpu.dimension_semantics<parallel>], iteration_bounds = array<i64: 1>, scalar_prefetch = 0 : i64, scratch_operands = 0 : i64, tpu.core_type = #tpu.core_type<tc>, window_params = [{transform_indices = @transform_0, window_bounds = array<i64: 128, 128>}, {pipeline_mode = #tpu.pipeline_mode<synchronous>, transform_indices = @transform_1, window_bounds = array<i64: 1, 128>}, {pipeline_mode = #tpu.pipeline_mode<synchronous>, transform_indices = @transform_2, window_bounds = array<i64: 1, 128>}, {pipeline_mode = #tpu.pipeline_mode<synchronous>, transform_indices = @transform_3, window_bounds = array<i64: 1, 128>}, {pipeline_mode = #tpu.pipeline_mode<synchronous>, transform_indices = @transform_4, window_bounds = array<i64: 1, 128>}, {transform_indices = @transform_5, window_bounds = array<i64: 128, 128>}]} {
    %c0 = arith.constant 0 : index
    %c0_0 = arith.constant 0 : index
    %0 = vector.load %arg2[%c0, %c0_0] : memref<1x128xf32, #tpu.memory_space<vmem>>, vector<1x128xf32>
    %cst = arith.constant 7.812500e-03 : f32
    %1 = vector.broadcast %cst : f32 to vector<1x128xf32>
    %2 = arith.mulf %0, %1 : vector<1x128xf32>
    %c0_1 = arith.constant 0 : index
    %c0_2 = arith.constant 0 : index
    %3 = vector.load %arg3[%c0_1, %c0_2] : memref<1x128xf32, #tpu.memory_space<vmem>>, vector<1x128xf32>
    %cst_3 = arith.constant 7.812500e-03 : f32
    %4 = vector.broadcast %cst_3 : f32 to vector<1x128xf32>
    %5 = arith.mulf %3, %4 : vector<1x128xf32>
    %6 = arith.mulf %2, %2 : vector<1x128xf32>
    %7 = arith.subf %5, %6 : vector<1x128xf32>
    %cst_4 = arith.constant 0.000000e+00 : f32
    %8 = vector.broadcast %cst_4 : f32 to vector<1x128xf32>
    %9 = arith.maximumf %7, %8 : vector<1x128xf32>
    %c0_5 = arith.constant 0 : index
    %c0_6 = arith.constant 0 : index
    %10 = vector.load %arg4[%c0_5, %c0_6] : memref<1x128xf32, #tpu.memory_space<vmem>>, vector<1x128xf32>
    %cst_7 = arith.constant 9.99999974E-6 : f32
    %11 = vector.broadcast %cst_7 : f32 to vector<1x128xf32>
    %12 = arith.addf %9, %11 : vector<1x128xf32>
    %13 = math.rsqrt %12 : vector<1x128xf32>
    %14 = arith.mulf %10, %13 : vector<1x128xf32>
    %c0_8 = arith.constant 0 : index
    %c0_9 = arith.constant 0 : index
    %15 = vector.load %arg1[%c0_8, %c0_9] : memref<128x128xf32, #tpu.memory_space<vmem>>, vector<128x128xf32>
    %16 = vector.broadcast %2 : vector<1x128xf32> to vector<128x128xf32>
    %17 = arith.subf %15, %16 : vector<128x128xf32>
    %18 = vector.broadcast %14 : vector<1x128xf32> to vector<128x128xf32>
    %19 = arith.mulf %17, %18 : vector<128x128xf32>
    %c0_10 = arith.constant 0 : index
    %c0_11 = arith.constant 0 : index
    %20 = vector.load %arg5[%c0_10, %c0_11] : memref<1x128xf32, #tpu.memory_space<vmem>>, vector<1x128xf32>
    %21 = vector.broadcast %20 : vector<1x128xf32> to vector<128x128xf32>
    %22 = arith.addf %19, %21 : vector<128x128xf32>
    %cst_12 = arith.constant 0.000000e+00 : f32
    %23 = vector.broadcast %cst_12 : f32 to vector<128x128xf32>
    %24 = arith.maximumf %22, %23 : vector<128x128xf32>
    %25 = arith.truncf %24 : vector<128x128xf32> to vector<128x128xbf16>
    %c0_13 = arith.constant 0 : index
    %c0_14 = arith.constant 0 : index
    %26 = vector.load %arg6[%c0_13, %c0_14] : memref<128x128xbf16, #tpu.memory_space<vmem>>, vector<128x128xbf16>
    tpu.vector_store %arg6[%c0_13, %c0_14], %25 {strides = array<i32>} : memref<128x128xbf16, #tpu.memory_space<vmem>>, vector<128x128xbf16>,
    return
  }
  func.func @transform_0(%arg0: i32) -> (i32, i32) {
    %c0_i32 = arith.constant 0 : i32
    %c0_i32_0 = arith.constant 0 : i32
    return %arg0, %c0_i32 : i32, i32
  }
  func.func @transform_1(%arg0: i32) -> (i32, i32) {
    %c0_i32 = arith.constant 0 : i32
    %c0_i32_0 = arith.constant 0 : i32
    %c0_i32_1 = arith.constant 0 : i32
    return %c0_i32, %c0_i32_0 : i32, i32
  }
  func.func @transform_2(%arg0: i32) -> (i32, i32) {
    %c0_i32 = arith.constant 0 : i32
    %c0_i32_0 = arith.constant 0 : i32
    %c0_i32_1 = arith.constant 0 : i32
    return %c0_i32, %c0_i32_0 : i32, i32
  }
  func.func @transform_3(%arg0: i32) -> (i32, i32) {
    %c0_i32 = arith.constant 0 : i32
    %c0_i32_0 = arith.constant 0 : i32
    %c0_i32_1 = arith.constant 0 : i32
    return %c0_i32, %c0_i32_0 : i32, i32
  }
  func.func @transform_4(%arg0: i32) -> (i32, i32) {
    %c0_i32 = arith.constant 0 : i32
    %c0_i32_0 = arith.constant 0 : i32
    %c0_i32_1 = arith.constant 0 : i32
    return %c0_i32, %c0_i32_0 : i32, i32
  }
  func.func @transform_5(%arg0: i32) -> (i32, i32) {
    %c0_i32 = arith.constant 0 : i32
    %c0_i32_0 = arith.constant 0 : i32
    return %arg0, %c0_i32 : i32, i32
  }
}

module attributes {stable_mosaic.version = 11 : i64} {
  func.func @_matmul_kernel(%arg0: i32, %arg1: i32, %arg2: memref<176x512xbf16, #tpu.memory_space<vmem>>, %arg3: memref<512x256xbf16, #tpu.memory_space<vmem>>, %arg4: memref<176x256xf32, #tpu.memory_space<vmem>>) attributes {dimension_semantics = [#tpu.dimension_semantics<parallel>, #tpu.dimension_semantics<parallel>], iteration_bounds = array<i64: 1, 1>, scalar_prefetch = 0 : i64, scratch_operands = 0 : i64, tpu.core_type = #tpu.core_type<tc>, window_params = [{transform_indices = @transform_0, window_bounds = array<i64: 176, 512>}, {transform_indices = @transform_1, window_bounds = array<i64: 512, 256>}, {transform_indices = @transform_2, window_bounds = array<i64: 176, 256>}]} {
    %c0 = arith.constant 0 : index
    %c0_0 = arith.constant 0 : index
    %0 = vector.load %arg2[%c0, %c0_0] : memref<176x512xbf16, #tpu.memory_space<vmem>>, vector<176x512xbf16>
    %c0_1 = arith.constant 0 : index
    %c0_2 = arith.constant 0 : index
    %1 = vector.load %arg3[%c0_1, %c0_2] : memref<512x256xbf16, #tpu.memory_space<vmem>>, vector<512x256xbf16>
    %cst = arith.constant dense<0.000000e+00> : vector<176x256xf32>
    %2 = tpu.matmul %0, %1, %cst {dimension_numbers = #tpu.dot_dimension_numbers<[1], [0], [0], [1], [0, 0, 1, 1], [], []>} : vector<176x512xbf16>, vector<512x256xbf16>, vector<176x256xf32> -> vector<176x256xf32>
    %c0_3 = arith.constant 0 : index
    %c0_4 = arith.constant 0 : index
    %3 = vector.load %arg4[%c0_3, %c0_4] : memref<176x256xf32, #tpu.memory_space<vmem>>, vector<176x256xf32>
    tpu.vector_store %arg4[%c0_3, %c0_4], %2 {strides = array<i32>} : memref<176x256xf32, #tpu.memory_space<vmem>>, vector<176x256xf32>,
    return
  }
  func.func @transform_0(%arg0: i32, %arg1: i32) -> (i32, i32) {
    %c0_i32 = arith.constant 0 : i32
    %c0_i32_0 = arith.constant 0 : i32
    return %arg0, %c0_i32 : i32, i32
  }
  func.func @transform_1(%arg0: i32, %arg1: i32) -> (i32, i32) {
    %c0_i32 = arith.constant 0 : i32
    %c0_i32_0 = arith.constant 0 : i32
    return %c0_i32, %arg1 : i32, i32
  }
  func.func @transform_2(%arg0: i32, %arg1: i32) -> (i32, i32) {
    %c0_i32 = arith.constant 0 : i32
    return %arg0, %arg1 : i32, i32
  }
}

module attributes {stable_mosaic.version = 11 : i64} {
  func.func @_bn_stats_kernel(%arg0: i32, %arg1: memref<512x64xf32, #tpu.memory_space<vmem>>, %arg2: memref<1x64xf32, #tpu.memory_space<vmem>>, %arg3: memref<1x64xf32, #tpu.memory_space<vmem>>) attributes {dimension_semantics = [#tpu.dimension_semantics<arbitrary>], iteration_bounds = array<i64: 1>, scalar_prefetch = 0 : i64, scratch_operands = 0 : i64, tpu.core_type = #tpu.core_type<tc>, window_params = [{transform_indices = @transform_0, window_bounds = array<i64: 512, 64>}, {pipeline_mode = #tpu.pipeline_mode<synchronous>, transform_indices = @transform_1, window_bounds = array<i64: 1, 64>}, {pipeline_mode = #tpu.pipeline_mode<synchronous>, transform_indices = @transform_2, window_bounds = array<i64: 1, 64>}]} {
    %c0_i32 = arith.constant 0 : i32
    %0 = arith.cmpi eq, %arg0, %c0_i32 : i32
    %1 = arith.extui %0 : i1 to i32
    %c0_i32_0 = arith.constant 0 : i32
    %2 = arith.cmpi ne, %1, %c0_i32_0 : i32
    scf.if %2 {
      %cst_11 = arith.constant 0.000000e+00 : f32
      %15 = vector.broadcast %cst_11 : f32 to vector<1x64xf32>
      %c0_12 = arith.constant 0 : index
      %c0_13 = arith.constant 0 : index
      %16 = vector.load %arg2[%c0_12, %c0_13] : memref<1x64xf32, #tpu.memory_space<vmem>>, vector<1x64xf32>
      tpu.vector_store %arg2[%c0_12, %c0_13], %15 {strides = array<i32>} : memref<1x64xf32, #tpu.memory_space<vmem>>, vector<1x64xf32>,
      %cst_14 = arith.constant 0.000000e+00 : f32
      %17 = vector.broadcast %cst_14 : f32 to vector<1x64xf32>
      %c0_15 = arith.constant 0 : index
      %c0_16 = arith.constant 0 : index
      %18 = vector.load %arg3[%c0_15, %c0_16] : memref<1x64xf32, #tpu.memory_space<vmem>>, vector<1x64xf32>
      tpu.vector_store %arg3[%c0_15, %c0_16], %17 {strides = array<i32>} : memref<1x64xf32, #tpu.memory_space<vmem>>, vector<1x64xf32>,
    } else {
    }
    %c0 = arith.constant 0 : index
    %c0_1 = arith.constant 0 : index
    %3 = vector.load %arg1[%c0, %c0_1] : memref<512x64xf32, #tpu.memory_space<vmem>>, vector<512x64xf32>
    %c0_2 = arith.constant 0 : index
    %c0_3 = arith.constant 0 : index
    %4 = vector.load %arg2[%c0_2, %c0_3] : memref<1x64xf32, #tpu.memory_space<vmem>>, vector<1x64xf32>
    %cst = arith.constant dense<0.000000e+00> : vector<64xf32>
    %5 = vector.multi_reduction <add>, %3, %cst [0] : vector<512x64xf32> to vector<64xf32>
    %6 = vector.shape_cast %5 : vector<64xf32> to vector<1x64xf32>
    %7 = arith.addf %4, %6 : vector<1x64xf32>
    %c0_4 = arith.constant 0 : index
    %c0_5 = arith.constant 0 : index
    %8 = vector.load %arg2[%c0_4, %c0_5] : memref<1x64xf32, #tpu.memory_space<vmem>>, vector<1x64xf32>
    tpu.vector_store %arg2[%c0_4, %c0_5], %7 {strides = array<i32>} : memref<1x64xf32, #tpu.memory_space<vmem>>, vector<1x64xf32>,
    %c0_6 = arith.constant 0 : index
    %c0_7 = arith.constant 0 : index
    %9 = vector.load %arg3[%c0_6, %c0_7] : memref<1x64xf32, #tpu.memory_space<vmem>>, vector<1x64xf32>
    %10 = arith.mulf %3, %3 : vector<512x64xf32>
    %cst_8 = arith.constant dense<0.000000e+00> : vector<64xf32>
    %11 = vector.multi_reduction <add>, %10, %cst_8 [0] : vector<512x64xf32> to vector<64xf32>
    %12 = vector.shape_cast %11 : vector<64xf32> to vector<1x64xf32>
    %13 = arith.addf %9, %12 : vector<1x64xf32>
    %c0_9 = arith.constant 0 : index
    %c0_10 = arith.constant 0 : index
    %14 = vector.load %arg3[%c0_9, %c0_10] : memref<1x64xf32, #tpu.memory_space<vmem>>, vector<1x64xf32>
    tpu.vector_store %arg3[%c0_9, %c0_10], %13 {strides = array<i32>} : memref<1x64xf32, #tpu.memory_space<vmem>>, vector<1x64xf32>,
    return
  }
  func.func @transform_0(%arg0: i32) -> (i32, i32) {
    %c0_i32 = arith.constant 0 : i32
    %c0_i32_0 = arith.constant 0 : i32
    return %arg0, %c0_i32 : i32, i32
  }
  func.func @transform_1(%arg0: i32) -> (i32, i32) {
    %c0_i32 = arith.constant 0 : i32
    %c0_i32_0 = arith.constant 0 : i32
    %c0_i32_1 = arith.constant 0 : i32
    return %c0_i32, %c0_i32_0 : i32, i32
  }
  func.func @transform_2(%arg0: i32) -> (i32, i32) {
    %c0_i32 = arith.constant 0 : i32
    %c0_i32_0 = arith.constant 0 : i32
    %c0_i32_1 = arith.constant 0 : i32
    return %c0_i32, %c0_i32_0 : i32, i32
  }
}

module attributes {stable_mosaic.version = 11 : i64} {
  func.func @_bn_apply_kernel(%arg0: i32, %arg1: memref<512x64xf32, #tpu.memory_space<vmem>>, %arg2: memref<1x64xf32, #tpu.memory_space<vmem>>, %arg3: memref<1x64xf32, #tpu.memory_space<vmem>>, %arg4: memref<1x64xf32, #tpu.memory_space<vmem>>, %arg5: memref<1x64xf32, #tpu.memory_space<vmem>>, %arg6: memref<512x64xbf16, #tpu.memory_space<vmem>>) attributes {dimension_semantics = [#tpu.dimension_semantics<parallel>], iteration_bounds = array<i64: 1>, scalar_prefetch = 0 : i64, scratch_operands = 0 : i64, tpu.core_type = #tpu.core_type<tc>, window_params = [{transform_indices = @transform_0, window_bounds = array<i64: 512, 64>}, {pipeline_mode = #tpu.pipeline_mode<synchronous>, transform_indices = @transform_1, window_bounds = array<i64: 1, 64>}, {pipeline_mode = #tpu.pipeline_mode<synchronous>, transform_indices = @transform_2, window_bounds = array<i64: 1, 64>}, {pipeline_mode = #tpu.pipeline_mode<synchronous>, transform_indices = @transform_3, window_bounds = array<i64: 1, 64>}, {pipeline_mode = #tpu.pipeline_mode<synchronous>, transform_indices = @transform_4, window_bounds = array<i64: 1, 64>}, {transform_indices = @transform_5, window_bounds = array<i64: 512, 64>}]} {
    %c0 = arith.constant 0 : index
    %c0_0 = arith.constant 0 : index
    %0 = vector.load %arg2[%c0, %c0_0] : memref<1x64xf32, #tpu.memory_space<vmem>>, vector<1x64xf32>
    %cst = arith.constant 0.001953125 : f32
    %1 = vector.broadcast %cst : f32 to vector<1x64xf32>
    %2 = arith.mulf %0, %1 : vector<1x64xf32>
    %c0_1 = arith.constant 0 : index
    %c0_2 = arith.constant 0 : index
    %3 = vector.load %arg3[%c0_1, %c0_2] : memref<1x64xf32, #tpu.memory_space<vmem>>, vector<1x64xf32>
    %cst_3 = arith.constant 0.001953125 : f32
    %4 = vector.broadcast %cst_3 : f32 to vector<1x64xf32>
    %5 = arith.mulf %3, %4 : vector<1x64xf32>
    %6 = arith.mulf %2, %2 : vector<1x64xf32>
    %7 = arith.subf %5, %6 : vector<1x64xf32>
    %cst_4 = arith.constant 0.000000e+00 : f32
    %8 = vector.broadcast %cst_4 : f32 to vector<1x64xf32>
    %9 = arith.maximumf %7, %8 : vector<1x64xf32>
    %c0_5 = arith.constant 0 : index
    %c0_6 = arith.constant 0 : index
    %10 = vector.load %arg4[%c0_5, %c0_6] : memref<1x64xf32, #tpu.memory_space<vmem>>, vector<1x64xf32>
    %cst_7 = arith.constant 9.99999974E-6 : f32
    %11 = vector.broadcast %cst_7 : f32 to vector<1x64xf32>
    %12 = arith.addf %9, %11 : vector<1x64xf32>
    %13 = math.rsqrt %12 : vector<1x64xf32>
    %14 = arith.mulf %10, %13 : vector<1x64xf32>
    %c0_8 = arith.constant 0 : index
    %c0_9 = arith.constant 0 : index
    %15 = vector.load %arg1[%c0_8, %c0_9] : memref<512x64xf32, #tpu.memory_space<vmem>>, vector<512x64xf32>
    %16 = vector.broadcast %2 : vector<1x64xf32> to vector<512x64xf32>
    %17 = arith.subf %15, %16 : vector<512x64xf32>
    %18 = vector.broadcast %14 : vector<1x64xf32> to vector<512x64xf32>
    %19 = arith.mulf %17, %18 : vector<512x64xf32>
    %c0_10 = arith.constant 0 : index
    %c0_11 = arith.constant 0 : index
    %20 = vector.load %arg5[%c0_10, %c0_11] : memref<1x64xf32, #tpu.memory_space<vmem>>, vector<1x64xf32>
    %21 = vector.broadcast %20 : vector<1x64xf32> to vector<512x64xf32>
    %22 = arith.addf %19, %21 : vector<512x64xf32>
    %cst_12 = arith.constant 0.000000e+00 : f32
    %23 = vector.broadcast %cst_12 : f32 to vector<512x64xf32>
    %24 = arith.maximumf %22, %23 : vector<512x64xf32>
    %25 = arith.truncf %24 : vector<512x64xf32> to vector<512x64xbf16>
    %c0_13 = arith.constant 0 : index
    %c0_14 = arith.constant 0 : index
    %26 = vector.load %arg6[%c0_13, %c0_14] : memref<512x64xbf16, #tpu.memory_space<vmem>>, vector<512x64xbf16>
    tpu.vector_store %arg6[%c0_13, %c0_14], %25 {strides = array<i32>} : memref<512x64xbf16, #tpu.memory_space<vmem>>, vector<512x64xbf16>,
    return
  }
  func.func @transform_0(%arg0: i32) -> (i32, i32) {
    %c0_i32 = arith.constant 0 : i32
    %c0_i32_0 = arith.constant 0 : i32
    return %arg0, %c0_i32 : i32, i32
  }
  func.func @transform_1(%arg0: i32) -> (i32, i32) {
    %c0_i32 = arith.constant 0 : i32
    %c0_i32_0 = arith.constant 0 : i32
    %c0_i32_1 = arith.constant 0 : i32
    return %c0_i32, %c0_i32_0 : i32, i32
  }
  func.func @transform_2(%arg0: i32) -> (i32, i32) {
    %c0_i32 = arith.constant 0 : i32
    %c0_i32_0 = arith.constant 0 : i32
    %c0_i32_1 = arith.constant 0 : i32
    return %c0_i32, %c0_i32_0 : i32, i32
  }
  func.func @transform_3(%arg0: i32) -> (i32, i32) {
    %c0_i32 = arith.constant 0 : i32
    %c0_i32_0 = arith.constant 0 : i32
    %c0_i32_1 = arith.constant 0 : i32
    return %c0_i32, %c0_i32_0 : i32, i32
  }
  func.func @transform_4(%arg0: i32) -> (i32, i32) {
    %c0_i32 = arith.constant 0 : i32
    %c0_i32_0 = arith.constant 0 : i32
    %c0_i32_1 = arith.constant 0 : i32
    return %c0_i32, %c0_i32_0 : i32, i32
  }
  func.func @transform_5(%arg0: i32) -> (i32, i32) {
    %c0_i32 = arith.constant 0 : i32
    %c0_i32_0 = arith.constant 0 : i32
    return %arg0, %c0_i32 : i32, i32
  }
}

module attributes {stable_mosaic.version = 11 : i64} {
  func.func @_matmul_kernel(%arg0: i32, %arg1: i32, %arg2: memref<592x256xbf16, #tpu.memory_space<vmem>>, %arg3: memref<256x128xbf16, #tpu.memory_space<vmem>>, %arg4: memref<592x128xf32, #tpu.memory_space<vmem>>) attributes {dimension_semantics = [#tpu.dimension_semantics<parallel>, #tpu.dimension_semantics<parallel>], iteration_bounds = array<i64: 1, 1>, scalar_prefetch = 0 : i64, scratch_operands = 0 : i64, tpu.core_type = #tpu.core_type<tc>, window_params = [{transform_indices = @transform_0, window_bounds = array<i64: 592, 256>}, {transform_indices = @transform_1, window_bounds = array<i64: 256, 128>}, {transform_indices = @transform_2, window_bounds = array<i64: 592, 128>}]} {
    %c0 = arith.constant 0 : index
    %c0_0 = arith.constant 0 : index
    %0 = vector.load %arg2[%c0, %c0_0] : memref<592x256xbf16, #tpu.memory_space<vmem>>, vector<592x256xbf16>
    %c0_1 = arith.constant 0 : index
    %c0_2 = arith.constant 0 : index
    %1 = vector.load %arg3[%c0_1, %c0_2] : memref<256x128xbf16, #tpu.memory_space<vmem>>, vector<256x128xbf16>
    %cst = arith.constant dense<0.000000e+00> : vector<592x128xf32>
    %2 = tpu.matmul %0, %1, %cst {dimension_numbers = #tpu.dot_dimension_numbers<[1], [0], [0], [1], [0, 0, 1, 1], [], []>} : vector<592x256xbf16>, vector<256x128xbf16>, vector<592x128xf32> -> vector<592x128xf32>
    %c0_3 = arith.constant 0 : index
    %c0_4 = arith.constant 0 : index
    %3 = vector.load %arg4[%c0_3, %c0_4] : memref<592x128xf32, #tpu.memory_space<vmem>>, vector<592x128xf32>
    tpu.vector_store %arg4[%c0_3, %c0_4], %2 {strides = array<i32>} : memref<592x128xf32, #tpu.memory_space<vmem>>, vector<592x128xf32>,
    return
  }
  func.func @transform_0(%arg0: i32, %arg1: i32) -> (i32, i32) {
    %c0_i32 = arith.constant 0 : i32
    %c0_i32_0 = arith.constant 0 : i32
    return %arg0, %c0_i32 : i32, i32
  }
  func.func @transform_1(%arg0: i32, %arg1: i32) -> (i32, i32) {
    %c0_i32 = arith.constant 0 : i32
    %c0_i32_0 = arith.constant 0 : i32
    return %c0_i32, %arg1 : i32, i32
  }
  func.func @transform_2(%arg0: i32, %arg1: i32) -> (i32, i32) {
    %c0_i32 = arith.constant 0 : i32
    return %arg0, %arg1 : i32, i32
  }
}

module attributes {stable_mosaic.version = 11 : i64} {
  func.func @_bn_stats_kernel(%arg0: i32, %arg1: memref<1024x1xf32, #tpu.memory_space<vmem>>, %arg2: memref<1x1xf32, #tpu.memory_space<vmem>>, %arg3: memref<1x1xf32, #tpu.memory_space<vmem>>) attributes {dimension_semantics = [#tpu.dimension_semantics<arbitrary>], iteration_bounds = array<i64: 2>, scalar_prefetch = 0 : i64, scratch_operands = 0 : i64, tpu.core_type = #tpu.core_type<tc>, window_params = [{transform_indices = @transform_0, window_bounds = array<i64: 1024, 1>}, {pipeline_mode = #tpu.pipeline_mode<synchronous>, transform_indices = @transform_1, window_bounds = array<i64: 1, 1>}, {pipeline_mode = #tpu.pipeline_mode<synchronous>, transform_indices = @transform_2, window_bounds = array<i64: 1, 1>}]} {
    %c0_i32 = arith.constant 0 : i32
    %0 = arith.cmpi eq, %arg0, %c0_i32 : i32
    %1 = arith.extui %0 : i1 to i32
    %c0_i32_0 = arith.constant 0 : i32
    %2 = arith.cmpi ne, %1, %c0_i32_0 : i32
    scf.if %2 {
      %cst_11 = arith.constant 0.000000e+00 : f32
      %15 = vector.broadcast %cst_11 : f32 to vector<1x1xf32>
      %c0_12 = arith.constant 0 : index
      %c0_13 = arith.constant 0 : index
      %16 = vector.load %arg2[%c0_12, %c0_13] : memref<1x1xf32, #tpu.memory_space<vmem>>, vector<1x1xf32>
      tpu.vector_store %arg2[%c0_12, %c0_13], %15 {strides = array<i32>} : memref<1x1xf32, #tpu.memory_space<vmem>>, vector<1x1xf32>,
      %cst_14 = arith.constant 0.000000e+00 : f32
      %17 = vector.broadcast %cst_14 : f32 to vector<1x1xf32>
      %c0_15 = arith.constant 0 : index
      %c0_16 = arith.constant 0 : index
      %18 = vector.load %arg3[%c0_15, %c0_16] : memref<1x1xf32, #tpu.memory_space<vmem>>, vector<1x1xf32>
      tpu.vector_store %arg3[%c0_15, %c0_16], %17 {strides = array<i32>} : memref<1x1xf32, #tpu.memory_space<vmem>>, vector<1x1xf32>,
    } else {
    }
    %c0 = arith.constant 0 : index
    %c0_1 = arith.constant 0 : index
    %3 = vector.load %arg1[%c0, %c0_1] : memref<1024x1xf32, #tpu.memory_space<vmem>>, vector<1024x1xf32>
    %c0_2 = arith.constant 0 : index
    %c0_3 = arith.constant 0 : index
    %4 = vector.load %arg2[%c0_2, %c0_3] : memref<1x1xf32, #tpu.memory_space<vmem>>, vector<1x1xf32>
    %cst = arith.constant dense<0.000000e+00> : vector<1xf32>
    %5 = vector.multi_reduction <add>, %3, %cst [0] : vector<1024x1xf32> to vector<1xf32>
    %6 = vector.shape_cast %5 : vector<1xf32> to vector<1x1xf32>
    %7 = arith.addf %4, %6 : vector<1x1xf32>
    %c0_4 = arith.constant 0 : index
    %c0_5 = arith.constant 0 : index
    %8 = vector.load %arg2[%c0_4, %c0_5] : memref<1x1xf32, #tpu.memory_space<vmem>>, vector<1x1xf32>
    tpu.vector_store %arg2[%c0_4, %c0_5], %7 {strides = array<i32>} : memref<1x1xf32, #tpu.memory_space<vmem>>, vector<1x1xf32>,
    %c0_6 = arith.constant 0 : index
    %c0_7 = arith.constant 0 : index
    %9 = vector.load %arg3[%c0_6, %c0_7] : memref<1x1xf32, #tpu.memory_space<vmem>>, vector<1x1xf32>
    %10 = arith.mulf %3, %3 : vector<1024x1xf32>
    %cst_8 = arith.constant dense<0.000000e+00> : vector<1xf32>
    %11 = vector.multi_reduction <add>, %10, %cst_8 [0] : vector<1024x1xf32> to vector<1xf32>
    %12 = vector.shape_cast %11 : vector<1xf32> to vector<1x1xf32>
    %13 = arith.addf %9, %12 : vector<1x1xf32>
    %c0_9 = arith.constant 0 : index
    %c0_10 = arith.constant 0 : index
    %14 = vector.load %arg3[%c0_9, %c0_10] : memref<1x1xf32, #tpu.memory_space<vmem>>, vector<1x1xf32>
    tpu.vector_store %arg3[%c0_9, %c0_10], %13 {strides = array<i32>} : memref<1x1xf32, #tpu.memory_space<vmem>>, vector<1x1xf32>,
    return
  }
  func.func @transform_0(%arg0: i32) -> (i32, i32) {
    %c0_i32 = arith.constant 0 : i32
    %c0_i32_0 = arith.constant 0 : i32
    return %arg0, %c0_i32 : i32, i32
  }
  func.func @transform_1(%arg0: i32) -> (i32, i32) {
    %c0_i32 = arith.constant 0 : i32
    %c0_i32_0 = arith.constant 0 : i32
    %c0_i32_1 = arith.constant 0 : i32
    return %c0_i32, %c0_i32_0 : i32, i32
  }
  func.func @transform_2(%arg0: i32) -> (i32, i32) {
    %c0_i32 = arith.constant 0 : i32
    %c0_i32_0 = arith.constant 0 : i32
    %c0_i32_1 = arith.constant 0 : i32
    return %c0_i32, %c0_i32_0 : i32, i32
  }
}

module attributes {stable_mosaic.version = 11 : i64} {
  func.func @_bn_apply_kernel(%arg0: i32, %arg1: memref<1024x1xf32, #tpu.memory_space<vmem>>, %arg2: memref<1x1xf32, #tpu.memory_space<vmem>>, %arg3: memref<1x1xf32, #tpu.memory_space<vmem>>, %arg4: memref<1x1xf32, #tpu.memory_space<vmem>>, %arg5: memref<1x1xf32, #tpu.memory_space<vmem>>, %arg6: memref<1024x1xf32, #tpu.memory_space<vmem>>) attributes {dimension_semantics = [#tpu.dimension_semantics<parallel>], iteration_bounds = array<i64: 2>, scalar_prefetch = 0 : i64, scratch_operands = 0 : i64, tpu.core_type = #tpu.core_type<tc>, window_params = [{transform_indices = @transform_0, window_bounds = array<i64: 1024, 1>}, {pipeline_mode = #tpu.pipeline_mode<synchronous>, transform_indices = @transform_1, window_bounds = array<i64: 1, 1>}, {pipeline_mode = #tpu.pipeline_mode<synchronous>, transform_indices = @transform_2, window_bounds = array<i64: 1, 1>}, {pipeline_mode = #tpu.pipeline_mode<synchronous>, transform_indices = @transform_3, window_bounds = array<i64: 1, 1>}, {pipeline_mode = #tpu.pipeline_mode<synchronous>, transform_indices = @transform_4, window_bounds = array<i64: 1, 1>}, {transform_indices = @transform_5, window_bounds = array<i64: 1024, 1>}]} {
    %c0 = arith.constant 0 : index
    %c0_0 = arith.constant 0 : index
    %0 = vector.load %arg2[%c0, %c0_0] : memref<1x1xf32, #tpu.memory_space<vmem>>, vector<1x1xf32>
    %cst = arith.constant 4.8828125E-4 : f32
    %1 = vector.broadcast %cst : f32 to vector<1x1xf32>
    %2 = arith.mulf %0, %1 : vector<1x1xf32>
    %c0_1 = arith.constant 0 : index
    %c0_2 = arith.constant 0 : index
    %3 = vector.load %arg3[%c0_1, %c0_2] : memref<1x1xf32, #tpu.memory_space<vmem>>, vector<1x1xf32>
    %cst_3 = arith.constant 4.8828125E-4 : f32
    %4 = vector.broadcast %cst_3 : f32 to vector<1x1xf32>
    %5 = arith.mulf %3, %4 : vector<1x1xf32>
    %6 = arith.mulf %2, %2 : vector<1x1xf32>
    %7 = arith.subf %5, %6 : vector<1x1xf32>
    %cst_4 = arith.constant 0.000000e+00 : f32
    %8 = vector.broadcast %cst_4 : f32 to vector<1x1xf32>
    %9 = arith.maximumf %7, %8 : vector<1x1xf32>
    %c0_5 = arith.constant 0 : index
    %c0_6 = arith.constant 0 : index
    %10 = vector.load %arg4[%c0_5, %c0_6] : memref<1x1xf32, #tpu.memory_space<vmem>>, vector<1x1xf32>
    %cst_7 = arith.constant 9.99999974E-6 : f32
    %11 = vector.broadcast %cst_7 : f32 to vector<1x1xf32>
    %12 = arith.addf %9, %11 : vector<1x1xf32>
    %13 = math.rsqrt %12 : vector<1x1xf32>
    %14 = arith.mulf %10, %13 : vector<1x1xf32>
    %c0_8 = arith.constant 0 : index
    %c0_9 = arith.constant 0 : index
    %15 = vector.load %arg1[%c0_8, %c0_9] : memref<1024x1xf32, #tpu.memory_space<vmem>>, vector<1024x1xf32>
    %16 = vector.broadcast %2 : vector<1x1xf32> to vector<1024x1xf32>
    %17 = arith.subf %15, %16 : vector<1024x1xf32>
    %18 = vector.broadcast %14 : vector<1x1xf32> to vector<1024x1xf32>
    %19 = arith.mulf %17, %18 : vector<1024x1xf32>
    %c0_10 = arith.constant 0 : index
    %c0_11 = arith.constant 0 : index
    %20 = vector.load %arg5[%c0_10, %c0_11] : memref<1x1xf32, #tpu.memory_space<vmem>>, vector<1x1xf32>
    %21 = vector.broadcast %20 : vector<1x1xf32> to vector<1024x1xf32>
    %22 = arith.addf %19, %21 : vector<1024x1xf32>
    %23 = math.tanh %22 : vector<1024x1xf32>
    %c0_12 = arith.constant 0 : index
    %c0_13 = arith.constant 0 : index
    %24 = vector.load %arg6[%c0_12, %c0_13] : memref<1024x1xf32, #tpu.memory_space<vmem>>, vector<1024x1xf32>
    tpu.vector_store %arg6[%c0_12, %c0_13], %23 {strides = array<i32>} : memref<1024x1xf32, #tpu.memory_space<vmem>>, vector<1024x1xf32>,
    return
  }
  func.func @transform_0(%arg0: i32) -> (i32, i32) {
    %c0_i32 = arith.constant 0 : i32
    %c0_i32_0 = arith.constant 0 : i32
    return %arg0, %c0_i32 : i32, i32
  }
  func.func @transform_1(%arg0: i32) -> (i32, i32) {
    %c0_i32 = arith.constant 0 : i32
    %c0_i32_0 = arith.constant 0 : i32
    %c0_i32_1 = arith.constant 0 : i32
    return %c0_i32, %c0_i32_0 : i32, i32
  }
  func.func @transform_2(%arg0: i32) -> (i32, i32) {
    %c0_i32 = arith.constant 0 : i32
    %c0_i32_0 = arith.constant 0 : i32
    %c0_i32_1 = arith.constant 0 : i32
    return %c0_i32, %c0_i32_0 : i32, i32
  }
  func.func @transform_3(%arg0: i32) -> (i32, i32) {
    %c0_i32 = arith.constant 0 : i32
    %c0_i32_0 = arith.constant 0 : i32
    %c0_i32_1 = arith.constant 0 : i32
    return %c0_i32, %c0_i32_0 : i32, i32
  }
  func.func @transform_4(%arg0: i32) -> (i32, i32) {
    %c0_i32 = arith.constant 0 : i32
    %c0_i32_0 = arith.constant 0 : i32
    %c0_i32_1 = arith.constant 0 : i32
    return %c0_i32, %c0_i32_0 : i32, i32
  }
  func.func @transform_5(%arg0: i32) -> (i32, i32) {
    %c0_i32 = arith.constant 0 : i32
    %c0_i32_0 = arith.constant 0 : i32
    return %arg0, %c0_i32 : i32, i32
  }
}

</mosaic_0001>

<llo_original>
// kernel: generator_forward.13
$region0: #{generator_forward.13}
  #allocation0 [shape = 'u32[]', space=smem, size = 0x4, offset = 0x4, fixed_abs, tag = 'smem constant byte address 0x4 - core index']
  #allocation1 [shape = 'u32[72,128]{1,0:T(1,128)}', space=vmem, size = 0x9000, scoped, tag = 'internal scratch']
  %s0 = inlined_call_operand.vmem [shape: f32[32,256], index: 0, kind: input, shape index: {}]
  %s1 = inlined_call_operand.vmem [shape: f32[1,256], index: 1, kind: output, shape index: {0}]
  %s2 = inlined_call_operand.vmem [shape: f32[1,256], index: 2, kind: output, shape index: {1}]
  %3 = xla_tuple %s1, %s2
  %s4 = sld [smem:[#allocation0]]
  $region26: #{generator_forward.13} parent=0
    _
  %s6 = ssub.s32 1, %s4
  %s7 = scalar_select 0, %s6, %s4
  // Predicated region
  $region2: #{generator_forward.13} parent=0 // pred_check
    _
  $region3: #{generator_forward.13} parent=0 // pred_check_branch
    %9 = sbr.rel (0) target = $region5
  $region4: #{generator_forward.13} parent=0 // pred_region
    _
  $region5: #{generator_forward.13} parent=0 // pred_fallthru
    _
  %p10 = scmp.eq.s32.totalorder 0, 0
  // Predicated region
  $region6: #{generator_forward.13} parent=0 // pred_check
    %p11 = pneg %p10
  $region7: #{generator_forward.13} parent=0 // pred_check_branch
    %13 = sbr.rel (%p11) target = $region9
  $region8: #{generator_forward.13} parent=0 // pred_region
    %v14 = vlaneseq
    %vm15 = vcmp.ge.s32.totalorder %v14, 0
    %vm16 = vcmp.lt.s32.totalorder %v14, 256
    %vm17 = vmand %vm15, %vm16
    %18 = vst.msk [vmem:[%s1] sm:$0x3] %vm17, 0.0
    %19 = vst.msk [vmem:[%s2] sm:$0x3] %vm17, 0.0
  $region9: #{generator_forward.13} parent=0 // pred_fallthru
    _
  %v20 = vld [vmem:[%s0] sm:$0xff]
  %v21 = vld [vmem:[%s0 + $0x8] sm:$0xff]
  %v22 = vld [vmem:[%s0 + $0x10] sm:$0xff]
  %v23 = vld [vmem:[%s0 + $0x18] sm:$0xff]
  %v24 = vld [vmem:[%s0 + $0x20] sm:$0xff]
  %v25 = vld [vmem:[%s0 + $0x28] sm:$0xff]
  %v26 = vld [vmem:[%s0 + $0x30] sm:$0xff]
  %v27 = vld [vmem:[%s0 + $0x38] sm:$0xff]
  %v28 = vld [vmem:[%s1] sm:$0x3]
  %v29 = vadd.f32 %v20, %v22
  %v30 = vadd.f32 %v29, %v24
  %v31 = vadd.f32 %v30, %v26
  %v32 = vrot.slane %v31, 4
  %v33 = vadd.f32 %v31, %v32
  %v34 = vrot.slane %v33, 2
  %v35 = vadd.f32 %v33, %v34
  %v36 = vrot.slane %v35, 1
  %v37 = vadd.f32 %v35, %v36
  %v38 = vadd.f32 %v21, %v23
  %v39 = vadd.f32 %v38, %v25
  %v40 = vadd.f32 %v39, %v27
  %v41 = vrot.slane %v40, 4
  %v42 = vadd.f32 %v40, %v41
  %v43 = vrot.slane %v42, 2
  %v44 = vadd.f32 %v42, %v43
  %v45 = vrot.slane %v44, 1
  %v46 = vadd.f32 %v44, %v45
  %v49 = vrot.slane %v46, 7
  %vm50 = vcmask 1040384
  %v51 = vsel %vm50, %v37, %v49
  %v53 = vadd.f32 %v28, %v51
  %v54 = vlaneseq
  %vm55 = vcmp.ge.s32.totalorder %v54, 0
  %vm56 = vcmp.lt.s32.totalorder %v54, 256
  %vm57 = vmand %vm55, %vm56
  %58 = vst.msk [vmem:[%s1] sm:$0x3] %vm57, %v53
  %v59 = vld [vmem:[%s2] sm:$0x3]
  %v60 = vmul.f32 %v20, %v20
  %v61 = vmul.f32 %v21, %v21
  %v62 = vmul.f32 %v22, %v22
  %v63 = vmul.f32 %v23, %v23
  %v64 = vmul.f32 %v24, %v24
  %v65 = vmul.f32 %v25, %v25
  %v66 = vmul.f32 %v26, %v26
  %v67 = vmul.f32 %v27, %v27
  %v68 = vadd.f32 %v60, %v62
  %v69 = vadd.f32 %v68, %v64
  %v70 = vadd.f32 %v69, %v66
  %v71 = vrot.slane %v70, 4
  %v72 = vadd.f32 %v70, %v71
  %v73 = vrot.slane %v72, 2
  %v74 = vadd.f32 %v72, %v73
  %v75 = vrot.slane %v74, 1
  %v76 = vadd.f32 %v74, %v75
  %v77 = vadd.f32 %v61, %v63
  %v78 = vadd.f32 %v77, %v65
  %v79 = vadd.f32 %v78, %v67
  %v80 = vrot.slane %v79, 4
  %v81 = vadd.f32 %v79, %v80
  %v82 = vrot.slane %v81, 2
  %v83 = vadd.f32 %v81, %v82
  %v84 = vrot.slane %v83, 1
  %v85 = vadd.f32 %v83, %v84
  %v88 = vrot.slane %v85, 7
  %v89 = vsel %vm50, %v76, %v88
  %v91 = vadd.f32 %v59, %v89
  %92 = vst.msk [vmem:[%s2] sm:$0x3] %vm57, %v91
  // Predicated region
  $region10: #{generator_forward.13} parent=0 // pred_check
    _
  $region11: #{generator_forward.13} parent=0 // pred_check_branch
    %94 = sbr.rel (0) target = $region13
  $region12: #{generator_forward.13} parent=0 // pred_region
    _
  $region13: #{generator_forward.13} parent=0 // pred_fallthru
    _
  // Predicated region
  $region14: #{generator_forward.13} parent=0 // pred_check
    _
  $region15: #{generator_forward.13} parent=0 // pred_check_branch
    %96 = sbr.rel (0) target = $region17
  $region16: #{generator_forward.13} parent=0 // pred_region
    _
  $region17: #{generator_forward.13} parent=0 // pred_fallthru
    _
  // Predicated region
  $region18: #{generator_forward.13} parent=0 // pred_check
    _
  $region19: #{generator_forward.13} parent=0 // pred_check_branch
    %98 = sbr.rel (0) target = $region21
  $region20: #{generator_forward.13} parent=0 // pred_region
    _
  $region21: #{generator_forward.13} parent=0 // pred_fallthru
    _
  // Predicated region
  $region22: #{generator_forward.13} parent=0 // pred_check
    _
  $region23: #{generator_forward.13} parent=0 // pred_check_branch
    %100 = sbr.rel (0) target = $region25
  $region24: #{generator_forward.13} parent=0 // pred_region
    _
  $region25: #{generator_forward.13} parent=0 // pred_fallthru
    _

// kernel: generator_forward.12
$region0: #{generator_forward.12}
  #allocation0 [shape = 'u32[]', space=smem, size = 0x4, offset = 0x4, fixed_abs, tag = 'smem constant byte address 0x4 - core index']
  #allocation1 [shape = 'u32[72,128]{1,0:T(1,128)}', space=vmem, size = 0x9000, scoped, tag = 'internal scratch']
  %s0 = inlined_call_operand.vmem [shape: bf16[16,128], index: 0, kind: input, shape index: {}]
  %s1 = inlined_call_operand.hbm [shape: bf16[128,4096], index: 1, kind: input, shape index: {}]
  %s2 = inlined_call_operand.vmem [shape: f32[16,4096], index: 2, kind: output, shape index: {}]
  %s3 = sld [smem:[#allocation0]]
  $region64: #{generator_forward.12} parent=0
    _
  %s5 = ssub.s32 1, %s3
  %s6 = scalar_select 0, %s5, %s3
  $region1: #{generator_forward.12} parent=0
    #allocation2 [shape = 'u8[262144]{0}', space=vmem, size = 0x40000, scoped, tag = 'input window, operand 1']
    #allocation3 [shape = 's32[2]{0}', space=sflag, size = 0x8, scoped, tag = 'scoped memory for generator_forward.12']
    #allocation4 [shape = 'u8[65536]{0}', space=vmem, size = 0x10000, scoped, tag = 'output window, operand 0']
    %7 = vsyncpa [#allocation3], 0
    %s8 = scalar_lea.sflag [#allocation3], 1
    %9 = vsyncpa %s8, 0
    loop: start=0, step=1, limit=10
    $region2: #{generator_forward.12} parent=1 // loop_pre_header
      _
    $region3: #{generator_forward.12} parent=1 // loop_header
      %s11 = sphi 0, %s15
      %p12 = scmp.ge.s32.totalorder %s11, 10
      %s18 = sphi 0, %s30
      %s19 = sphi 0, %s26
      %s20 = sphi 0, %s18
      %s21 = sphi 0, %s19
      %s22 = sphi 0, %s20
      %s23 = sphi 0, %s21
      %s33 = sphi 0, %s35
      %s36 = sphi 0, %s33
      %s37 = sphi 0, %s36
      %s53 = sphi 0, %s37
      %s59 = sphi 0, %s61
      %s62 = sphi 0, %s59
      %s63 = sphi 0, %s62
      %s79 = sphi 0, %s63
      %s87 = sphi 0, %s89
      %s90 = sphi 0, %s87
      %s91 = sphi 0, %s90
      %s107 = sphi 0, %s91
    $region4: #{generator_forward.12} parent=1 // loop_header_branch
      %14 = sbr.rel (%p12) target = $region8
    $region5: #{generator_forward.12} parent=1 // loop_body
      %s16 = ssub.s32 %s11, 1
      %s17 = ssub.s32 %s11, 2
      %s24 = sadd.s32 1, %s19
      %p25 = scmp.ge.s32.totalorder %s24, 8
      %s26 = scalar_select %p25, 0, %s24
      %s27 = sadd.s32 1, %s18
      %s28 = scalar_select %p25, %s27, %s18
      %p29 = scmp.ge.s32.totalorder %s28, 1
      %s30 = scalar_select %p29, 0, %s28
      %s31 = ssub.s32 %s18, %s30
      %p32 = scmp.eq.s32.totalorder %s31, 0
      %s34 = sadd.s32 %s33, 1
      %s35 = scalar_select %p32, %s33, %s34
      %p38 = pneg %p32
      %p39 = scmp.eq.s32.totalorder %s11, 7
      %p40 = por %p38, %p39
      %p41 = scmp.ne.s32.totalorder %s33, %s36
      %p42 = scmp.eq.s32.totalorder %s11, 0
      %p43 = por %p41, %p42
      %p44 = scmp.ne.s32.totalorder %s33, %s36
      %p45 = scmp.eq.s32.totalorder %s16, 7
      %p46 = por %p44, %p45
      %p47 = scmp.ne.s32.totalorder %s36, %s37
      %p48 = scmp.eq.s32.totalorder %s16, 0
      %p49 = por %p47, %p48
      %p50 = scmp.ne.s32.totalorder %s36, %s37
      %p51 = scmp.eq.s32.totalorder %s17, 7
      %p52 = por %p50, %p51
      %p54 = scmp.ne.s32.totalorder %s37, %s53
      %p55 = scmp.eq.s32.totalorder %s17, 0
      %p56 = por %p54, %p55
      %s57 = ssub.s32 %s19, %s26
      %p58 = scmp.eq.s32.totalorder %s57, 0
      %s60 = sadd.s32 %s59, 1
      %s61 = scalar_select %p58, %s59, %s60
      %p64 = pneg %p58
      %p65 = scmp.eq.s32.totalorder %s11, 7
      %p66 = por %p64, %p65
      %p67 = scmp.ne.s32.totalorder %s59, %s62
      %p68 = scmp.eq.s32.totalorder %s11, 0
      %p69 = por %p67, %p68
      %p70 = scmp.ne.s32.totalorder %s59, %s62
      %p71 = scmp.eq.s32.totalorder %s16, 7
      %p72 = por %p70, %p71
      %p73 = scmp.ne.s32.totalorder %s62, %s63
      %p74 = scmp.eq.s32.totalorder %s16, 0
      %p75 = por %p73, %p74
      %p76 = scmp.ne.s32.totalorder %s62, %s63
      %p77 = scmp.eq.s32.totalorder %s17, 7
      %p78 = por %p76, %p77
      %p80 = scmp.ne.s32.totalorder %s63, %s79
      %p81 = scmp.eq.s32.totalorder %s17, 0
      %p82 = por %p80, %p81
      %s83 = ssub.s32 %s18, %s30
      %s84 = ssub.s32 %s19, %s26
      %s85 = sor.u32 %s83, %s84
      %p86 = scmp.eq.s32.totalorder %s85, 0
      %s88 = sadd.s32 %s87, 1
      %s89 = scalar_select %p86, %s87, %s88
      %p92 = pneg %p86
      %p93 = scmp.eq.s32.totalorder %s11, 7
      %p94 = por %p92, %p93
      %p95 = scmp.ne.s32.totalorder %s87, %s90
      %p96 = scmp.eq.s32.totalorder %s11, 0
      %p97 = por %p95, %p96
      %p98 = scmp.ne.s32.totalorder %s87, %s90
      %p99 = scmp.eq.s32.totalorder %s16, 7
      %p100 = por %p98, %p99
      %p101 = scmp.ne.s32.totalorder %s90, %s91
      %p102 = scmp.eq.s32.totalorder %s16, 0
      %p103 = por %p101, %p102
      %p104 = scmp.ne.s32.totalorder %s90, %s91
      %p105 = scmp.eq.s32.totalorder %s17, 7
      %p106 = por %p104, %p105
      %p108 = scmp.ne.s32.totalorder %s91, %s107
      %p109 = scmp.eq.s32.totalorder %s17, 0
      %p110 = por %p108, %p109
      %p111 = scmp.le.s32.totalorder 1, %s11
      %p112 = scmp.lt.s32.totalorder %s11, 9
      %p113 = pnand %p111, %p112
      %p114 = pneg %p113
      // Predicated region
      $region9: #{generator_forward.12} parent=5 // pred_check
        _
      $region10: #{generator_forward.12} parent=5 // pred_check_branch
        %116 = sbr.rel (%p113) target = $region12
      $region11: #{generator_forward.12} parent=5 // pred_region
        %s117 = ssub.s32 %s11, 1
        // Predicated region
        $region13: #{generator_forward.12} parent=11 // pred_check
          %p118 = pneg %p49
        $region14: #{generator_forward.12} parent=11 // pred_check_branch
          %120 = sbr.rel (%p118) target = $region16
        $region15: #{generator_forward.12} parent=11 // pred_region
          %s121 = smul.u32 2, %s20
          %p122 = scmp.lt.s32.totalorder %s121, 1
          %s123 = scalar_select %p122, %s121, 1
          %s124 = smul.addr %s123, 4
          %s125 = scalar_lea.vmem %s0, %s124
          %s126 = smul.u32 2, %s20
        $region16: #{generator_forward.12} parent=11 // pred_fallthru
          _
      $region12: #{generator_forward.12} parent=5 // pred_fallthru
        _
      %p127 = scmp.lt.s32.totalorder %s11, 8
      // Predicated region
      $region17: #{generator_forward.12} parent=5 // pred_check
        %p128 = pneg %p127
      $region18: #{generator_forward.12} parent=5 // pred_check_branch
        %130 = sbr.rel (%p128) target = $region20
      $region19: #{generator_forward.12} parent=5 // pred_region
        // Predicated region
        $region21: #{generator_forward.12} parent=19 // pred_check
          %p131 = pneg %p69
        $region22: #{generator_forward.12} parent=19 // pred_check_branch
          %133 = sbr.rel (%p131) target = $region24
        $region23: #{generator_forward.12} parent=19 // pred_region
          %s134 = sand.u32 %s59, 1
          %s135 = scalar_lea.sflag [#allocation3], %s134
          %s136 = sand.u32 %s59, 1
          %s137 = smul.addr %s136, 256
          %s138 = scalar_lea.vmem [#allocation2], %s137
          %s139 = smul.u32 4, %s19
          %141 = vsyncadd %s135, 0
          %s142 = smul.addr %s139, 4
          %s143 = scalar_lea.hbm %s1, %s142
          %s144 = sshll.u32 %s143, 4
          %s145 = int_to_ptr.hbm [resolvable:$true] %s144
          %s146 = sshll.u32 %s138, 4
          %s147 = int_to_ptr.vmem [resolvable:$true] %s146
          %152 = dma.hbm_to_vmem [thread:$0]  %s145, 4096, %s147, %s135, 2048, 256, 16
        $region24: #{generator_forward.12} parent=19 // pred_fallthru
          _
      $region20: #{generator_forward.12} parent=5 // pred_fallthru
        _
      %p153 = scmp.le.s32.totalorder 1, %s11
      %p154 = scmp.lt.s32.totalorder %s11, 9
      %p155 = pnand %p153, %p154
      %p156 = pneg %p155
      // Predicated region
      $region25: #{generator_forward.12} parent=5 // pred_check
        _
      $region26: #{generator_forward.12} parent=5 // pred_check_branch
        %158 = sbr.rel (%p155) target = $region28
      $region27: #{generator_forward.12} parent=5 // pred_region
        %s159 = ssub.s32 %s11, 1
        %s160 = sand.u32 %s62, 1
        %s161 = scalar_lea.sflag [#allocation3], %s160
        %s162 = sand.u32 %s62, 1
        %s163 = smul.addr %s162, 256
        %s164 = scalar_lea.vmem [#allocation2], %s163
        // Predicated region
        $region29: #{generator_forward.12} parent=27 // pred_check
          %p165 = pneg %p75
        $region30: #{generator_forward.12} parent=27 // pred_check_branch
          %167 = sbr.rel (%p165) target = $region32
        $region31: #{generator_forward.12} parent=27 // pred_region
          %169 = dma.done %s161, 4096
        $region32: #{generator_forward.12} parent=27 // pred_fallthru
          _
        %s170 = smul.u32 2, %s20
        %p171 = scmp.lt.s32.totalorder %s170, 1
        %s172 = scalar_select %p171, %s170, 1
        %s173 = smul.addr %s172, 4
        %s174 = scalar_lea.vmem %s0, %s173
        %p175 = pneg %p49
        %p176 = pneg %p46
        %s177 = sand.u32 %s62, 1
        %s178 = scalar_lea.sflag [#allocation3], %s177
        %s179 = sand.u32 %s62, 1
        %s180 = smul.addr %s179, 256
        %s181 = scalar_lea.vmem [#allocation2], %s180
        %p182 = pneg %p75
        %p183 = pneg %p72
        %p184 = pneg %p103
        %p185 = pneg %p100
        %s186 = sand.u32 %s90, 1
        %s187 = sand.u32 %s90, 1
        %s188 = smul.addr %s187, 64
        %s189 = scalar_lea.vmem [#allocation4], %s188
        %s190 = smul.u32 2, %s20
        %p191 = scmp.lt.s32.totalorder %s190, 1
        %s192 = scalar_select %p191, %s190, 1
        %s193 = smul.addr %s192, 4
        %s194 = scalar_lea.vmem %s0, %s193
        %s195 = smul.u32 2, %s20
        %s196 = smul.u32 4, %s21
        %s197 = smul.u32 2, %s20
        %s198 = smul.u32 4, %s21
        %v199 = vld [vmem:[%s194] sm:$0xf]
        %v200 = vld [vmem:[%s194 + $0x4] sm:$0xf]
        %v201 = vld [vmem:[%s164] sm:$0xff]
        %v202 = vld [vmem:[%s164 + $0x8] sm:$0xff]
        %v203 = vld [vmem:[%s164 + $0x10] sm:$0xff]
        %v204 = vld [vmem:[%s164 + $0x18] sm:$0xff]
        %v205 = vld [vmem:[%s164 + $0x20] sm:$0xff]
        %v206 = vld [vmem:[%s164 + $0x28] sm:$0xff]
        %v207 = vld [vmem:[%s164 + $0x30] sm:$0xff]
        %v208 = vld [vmem:[%s164 + $0x38] sm:$0xff]
        %v209 = vld [vmem:[%s164 + $0x40] sm:$0xff]
        %v210 = vld [vmem:[%s164 + $0x48] sm:$0xff]
        %v211 = vld [vmem:[%s164 + $0x50] sm:$0xff]
        %v212 = vld [vmem:[%s164 + $0x58] sm:$0xff]
        %v213 = vld [vmem:[%s164 + $0x60] sm:$0xff]
        %v214 = vld [vmem:[%s164 + $0x68] sm:$0xff]
        %v215 = vld [vmem:[%s164 + $0x70] sm:$0xff]
        %v216 = vld [vmem:[%s164 + $0x78] sm:$0xff]
        %v217 = vld [vmem:[%s164 + $0x80] sm:$0xff]
        %v218 = vld [vmem:[%s164 + $0x88] sm:$0xff]
        %v219 = vld [vmem:[%s164 + $0x90] sm:$0xff]
        %v220 = vld [vmem:[%s164 + $0x98] sm:$0xff]
        %v221 = vld [vmem:[%s164 + $0xa0] sm:$0xff]
        %v222 = vld [vmem:[%s164 + $0xa8] sm:$0xff]
        %v223 = vld [vmem:[%s164 + $0xb0] sm:$0xff]
        %v224 = vld [vmem:[%s164 + $0xb8] sm:$0xff]
        %v225 = vld [vmem:[%s164 + $0xc0] sm:$0xff]
        %v226 = vld [vmem:[%s164 + $0xc8] sm:$0xff]
        %v227 = vld [vmem:[%s164 + $0xd0] sm:$0xff]
        %v228 = vld [vmem:[%s164 + $0xd8] sm:$0xff]
        %v229 = vld [vmem:[%s164 + $0xe0] sm:$0xff]
        %v230 = vld [vmem:[%s164 + $0xe8] sm:$0xff]
        %v231 = vld [vmem:[%s164 + $0xf0] sm:$0xff]
        %v232 = vld [vmem:[%s164 + $0xf8] sm:$0xff]
        %v235 = vunpack.c.l.b16 %v199
        %v236 = vunpack.c.l.b16 %v200
        %v237 = vpack.c.b16 %v236, %v235
        %v271 = vunpack.c.l.b16 %v201
        %v272 = vunpack.c.h.b16 %v201
        %v273 = vunpack.c.l.b16 %v202
        %v274 = vunpack.c.h.b16 %v202
        %v275 = vunpack.c.l.b16 %v203
        %v276 = vunpack.c.h.b16 %v203
        %v277 = vunpack.c.l.b16 %v204
        %v278 = vunpack.c.h.b16 %v204
        %v279 = vunpack.c.l.b16 %v205
        %v280 = vunpack.c.h.b16 %v205
        %v281 = vunpack.c.l.b16 %v206
        %v282 = vunpack.c.h.b16 %v206
        %v283 = vunpack.c.l.b16 %v207
        %v284 = vunpack.c.h.b16 %v207
        %v285 = vunpack.c.l.b16 %v208
        %v286 = vunpack.c.h.b16 %v208
        %v287 = vunpack.c.l.b16 %v209
        %v288 = vunpack.c.h.b16 %v209
        %v289 = vunpack.c.l.b16 %v210
        %v290 = vunpack.c.h.b16 %v210
        %v291 = vunpack.c.l.b16 %v211
        %v292 = vunpack.c.h.b16 %v211
        %v293 = vunpack.c.l.b16 %v212
        %v294 = vunpack.c.h.b16 %v212
        %v295 = vunpack.c.l.b16 %v213
        %v296 = vunpack.c.h.b16 %v213
        %v297 = vunpack.c.l.b16 %v214
        %v298 = vunpack.c.h.b16 %v214
        %v299 = vunpack.c.l.b16 %v215
        %v300 = vunpack.c.h.b16 %v215
        %v301 = vunpack.c.l.b16 %v216
        %v302 = vunpack.c.h.b16 %v216
        %v303 = vunpack.c.l.b16 %v217
        %v304 = vunpack.c.h.b16 %v217
        %v305 = vunpack.c.l.b16 %v218
        %v306 = vunpack.c.h.b16 %v218
        %v307 = vunpack.c.l.b16 %v219
        %v308 = vunpack.c.h.b16 %v219
        %v309 = vunpack.c.l.b16 %v220
        %v310 = vunpack.c.h.b16 %v220
        %v311 = vunpack.c.l.b16 %v221
        %v312 = vunpack.c.h.b16 %v221
        %v313 = vunpack.c.l.b16 %v222
        %v314 = vunpack.c.h.b16 %v222
        %v315 = vunpack.c.l.b16 %v223
        %v316 = vunpack.c.h.b16 %v223
        %v317 = vunpack.c.l.b16 %v224
        %v318 = vunpack.c.h.b16 %v224
        %v319 = vunpack.c.l.b16 %v225
        %v320 = vunpack.c.h.b16 %v225
        %v321 = vunpack.c.l.b16 %v226
        %v322 = vunpack.c.h.b16 %v226
        %v323 = vunpack.c.l.b16 %v227
        %v324 = vunpack.c.h.b16 %v227
        %v325 = vunpack.c.l.b16 %v228
        %v326 = vunpack.c.h.b16 %v228
        %v327 = vunpack.c.l.b16 %v229
        %v328 = vunpack.c.h.b16 %v229
        %v329 = vunpack.c.l.b16 %v230
        %v330 = vunpack.c.h.b16 %v230
        %v331 = vunpack.c.l.b16 %v231
        %v332 = vunpack.c.h.b16 %v231
        %v333 = vunpack.c.l.b16 %v232
        %v334 = vunpack.c.h.b16 %v232
        %v335 = vpack.c.b16 %v275, %v271
        %v336 = vpack.c.b16 %v276, %v272
        %v337 = vpack.c.b16 %v277, %v273
        %v338 = vpack.c.b16 %v278, %v274
        %v339 = vpack.c.b16 %v283, %v279
        %v340 = vpack.c.b16 %v284, %v280
        %v341 = vpack.c.b16 %v285, %v281
        %v342 = vpack.c.b16 %v286, %v282
        %v343 = vpack.c.b16 %v291, %v287
        %v344 = vpack.c.b16 %v292, %v288
        %v345 = vpack.c.b16 %v293, %v289
        %v346 = vpack.c.b16 %v294, %v290
        %v347 = vpack.c.b16 %v299, %v295
        %v348 = vpack.c.b16 %v300, %v296
        %v349 = vpack.c.b16 %v301, %v297
        %v350 = vpack.c.b16 %v302, %v298
        %v351 = vpack.c.b16 %v307, %v303
        %v352 = vpack.c.b16 %v308, %v304
        %v353 = vpack.c.b16 %v309, %v305
        %v354 = vpack.c.b16 %v310, %v306
        %v355 = vpack.c.b16 %v315, %v311
        %v356 = vpack.c.b16 %v316, %v312
        %v357 = vpack.c.b16 %v317, %v313
        %v358 = vpack.c.b16 %v318, %v314
        %v359 = vpack.c.b16 %v323, %v319
        %v360 = vpack.c.b16 %v324, %v320
        %v361 = vpack.c.b16 %v325, %v321
        %v362 = vpack.c.b16 %v326, %v322
        %v363 = vpack.c.b16 %v331, %v327
        %v364 = vpack.c.b16 %v332, %v328
        %v365 = vpack.c.b16 %v333, %v329
        %v366 = vpack.c.b16 %v334, %v330
        %399 = vmatpush.bf16.msra.mxu0 %v363
        %400 = vmatpush.bf16.msra.mxu0 %v359
        %401 = vmatpush.bf16.msra.mxu0 %v355
        %402 = vmatpush.bf16.msra.mxu0 %v351
        %403 = vmatpush.bf16.msra.mxu0 %v347
        %404 = vmatpush.bf16.msra.mxu0 %v343
        %405 = vmatpush.bf16.msra.mxu0 %v339
        %406 = vmatpush.bf16.msra.mxu0 %v335
        %407 = vmatmul.bf16.gmra.mxu0 %v237
        %v408 = vpop.f32.mrf.mxu0
        %v409 = vadd.f32 0.0, %v408
        %v410 = vpop.f32.mrf.mxu0
        %v411 = vadd.f32 0.0, %v410
        %412 = vdwg.mxu0
        %413 = vmatpush.bf16.msra.mxu0 %v364
        %414 = vmatpush.bf16.msra.mxu0 %v360
        %415 = vmatpush.bf16.msra.mxu0 %v356
        %416 = vmatpush.bf16.msra.mxu0 %v352
        %417 = vmatpush.bf16.msra.mxu0 %v348
        %418 = vmatpush.bf16.msra.mxu0 %v344
        %419 = vmatpush.bf16.msra.mxu0 %v340
        %420 = vmatpush.bf16.msra.mxu0 %v336
        %421 = vmatmul.bf16.gmra.mxu0 %v237
        %v422 = vpop.f32.mrf.mxu0
        %v423 = vadd.f32 0.0, %v422
        %v424 = vpop.f32.mrf.mxu0
        %v425 = vadd.f32 0.0, %v424
        %426 = vdwg.mxu0
        %427 = vmatpush.bf16.msra.mxu0 %v365
        %428 = vmatpush.bf16.msra.mxu0 %v361
        %429 = vmatpush.bf16.msra.mxu0 %v357
        %430 = vmatpush.bf16.msra.mxu0 %v353
        %431 = vmatpush.bf16.msra.mxu0 %v349
        %432 = vmatpush.bf16.msra.mxu0 %v345
        %433 = vmatpush.bf16.msra.mxu0 %v341
        %434 = vmatpush.bf16.msra.mxu0 %v337
        %435 = vmatmul.bf16.gmra.mxu0 %v237
        %v436 = vpop.f32.mrf.mxu0
        %v437 = vadd.f32 0.0, %v436
        %v438 = vpop.f32.mrf.mxu0
        %v439 = vadd.f32 0.0, %v438
        %440 = vdwg.mxu0
        %441 = vmatpush.bf16.msra.mxu0 %v366
        %442 = vmatpush.bf16.msra.mxu0 %v362
        %443 = vmatpush.bf16.msra.mxu0 %v358
        %444 = vmatpush.bf16.msra.mxu0 %v354
        %445 = vmatpush.bf16.msra.mxu0 %v350
        %446 = vmatpush.bf16.msra.mxu0 %v346
        %447 = vmatpush.bf16.msra.mxu0 %v342
        %448 = vmatpush.bf16.msra.mxu0 %v338
        %449 = vmatmul.bf16.gmra.mxu0 %v237
        %v450 = vpop.f32.mrf.mxu0
        %v451 = vadd.f32 0.0, %v450
        %v452 = vpop.f32.mrf.mxu0
        %v453 = vadd.f32 0.0, %v452
        %454 = vdwg.mxu0
        %455 = vst [vmem:[%s189] sm:$0xff] %v409
        %456 = vst [vmem:[%s189 + $0x8] sm:$0xff] %v423
        %457 = vst [vmem:[%s189 + $0x10] sm:$0xff] %v437
        %458 = vst [vmem:[%s189 + $0x18] sm:$0xff] %v451
        %459 = vst [vmem:[%s189 + $0x20] sm:$0xff] %v411
        %460 = vst [vmem:[%s189 + $0x28] sm:$0xff] %v425
        %461 = vst [vmem:[%s189 + $0x30] sm:$0xff] %v439
        %462 = vst [vmem:[%s189 + $0x38] sm:$0xff] %v453
        %s463 = sand.u32 %s90, 1
        %s464 = sand.u32 %s90, 1
        %s465 = smul.addr %s464, 64
        %s466 = scalar_lea.vmem [#allocation4], %s465
        // Predicated region
        $region33: #{generator_forward.12} parent=27 // pred_check
          %p467 = pneg %p100
        $region34: #{generator_forward.12} parent=27 // pred_check_branch
          %469 = sbr.rel (%p467) target = $region36
        $region35: #{generator_forward.12} parent=27 // pred_region
          %s470 = smul.u32 2, %s20
          %s471 = smul.u32 4, %s21
          %s472 = smul.addr %s470, 32
          %s473 = sadd.s32 %s471, %s472
          %s474 = smul.addr %s473, 8
          %s475 = scalar_lea.vmem %s2, %s474
          // Predicated region
          $region37: #{generator_forward.12} parent=35 // pred_check
            _
          $region38: #{generator_forward.12} parent=35 // pred_check_branch
            %477 = sbr.rel (0) target = $region40
          $region39: #{generator_forward.12} parent=35 // pred_region
            // Predicated region
            $region41: #{generator_forward.12} parent=39 // pred_check
              _
            $region42: #{generator_forward.12} parent=39 // pred_check_branch
              %479 = sbr.rel (0) target = $region44
            $region43: #{generator_forward.12} parent=39 // pred_region
              loop: start=0, step=1, limit=1
              $region45: #{generator_forward.12} parent=43 // loop_pre_header
                _
              $region46: #{generator_forward.12} parent=43 // loop_header
                %s481 = sphi 0, %s485
                %p482 = scmp.ge.s32.totalorder %s481, 1
                %s486 = sphi %s466, %s466
                %s487 = sphi %s475, %s475
              $region47: #{generator_forward.12} parent=43 // loop_header_branch
                %484 = sbr.rel (%p482) target = $region51
              $region48: #{generator_forward.12} parent=43 // loop_body
                %v488 = vld [vmem:[%s486] sm:$0xff]
                %489 = vst [vmem:[%s487] sm:$0xff] %v488
                %v490 = vld [vmem:[%s486 + $0x8] sm:$0xff]
                %491 = vst [vmem:[%s487 + $0x8] sm:$0xff] %v490
                %v492 = vld [vmem:[%s486 + $0x10] sm:$0xff]
                %493 = vst [vmem:[%s487 + $0x10] sm:$0xff] %v492
                %v494 = vld [vmem:[%s486 + $0x18] sm:$0xff]
                %495 = vst [vmem:[%s487 + $0x18] sm:$0xff] %v494
                %v496 = vld [vmem:[%s486 + $0x20] sm:$0xff]
                %497 = vst [vmem:[%s487 + $0x100] sm:$0xff] %v496
                %v498 = vld [vmem:[%s486 + $0x28] sm:$0xff]
                %499 = vst [vmem:[%s487 + $0x108] sm:$0xff] %v498
                %v500 = vld [vmem:[%s486 + $0x30] sm:$0xff]
                %501 = vst [vmem:[%s487 + $0x110] sm:$0xff] %v500
                %v502 = vld [vmem:[%s486 + $0x38] sm:$0xff]
                %503 = vst [vmem:[%s487 + $0x118] sm:$0xff] %v502
              $region49: #{generator_forward.12} parent=43 // loop_footer
                %s485 = sadd.s32 1, %s481
              $region50: #{generator_forward.12} parent=43 // loop_footer_branch
                %480 = sbr.rel target = $region46
              $region51: #{generator_forward.12} parent=43 // loop_exit
                _
            $region44: #{generator_forward.12} parent=39 // pred_fallthru
              _
            // Predicated region
            $region52: #{generator_forward.12} parent=39 // pred_check
              _
            $region53: #{generator_forward.12} parent=39 // pred_check_branch
              %505 = sbr.rel target = $region55
            $region54: #{generator_forward.12} parent=39 // pred_region
              _
            $region55: #{generator_forward.12} parent=39 // pred_fallthru
              _
          $region40: #{generator_forward.12} parent=35 // pred_fallthru
            _
          %506 = vnop
        $region36: #{generator_forward.12} parent=27 // pred_fallthru
          _
      $region28: #{generator_forward.12} parent=5 // pred_fallthru
        _
      %p507 = scmp.le.s32.totalorder 2, %s11
      // Predicated region
      $region56: #{generator_forward.12} parent=5 // pred_check
        %p508 = pneg %p507
      $region57: #{generator_forward.12} parent=5 // pred_check_branch
        %510 = sbr.rel (%p508) target = $region59
      $region58: #{generator_forward.12} parent=5 // pred_region
        %s511 = ssub.s32 %s11, 2
        // Predicated region
        $region60: #{generator_forward.12} parent=58 // pred_check
          %p512 = pneg %p106
        $region61: #{generator_forward.12} parent=58 // pred_check_branch
          %514 = sbr.rel (%p512) target = $region63
        $region62: #{generator_forward.12} parent=58 // pred_region
          %s515 = sand.u32 %s91, 1
          %s516 = sand.u32 %s91, 1
          %s517 = smul.addr %s516, 64
          %s518 = scalar_lea.vmem [#allocation4], %s517
        $region63: #{generator_forward.12} parent=58 // pred_fallthru
          _
      $region59: #{generator_forward.12} parent=5 // pred_fallthru
        _
    $region6: #{generator_forward.12} parent=1 // loop_footer
      %s15 = sadd.s32 1, %s11
    $region7: #{generator_forward.12} parent=1 // loop_footer_branch
      %10 = sbr.rel target = $region3
    $region8: #{generator_forward.12} parent=1 // loop_exit
      _
    %519 = vsyncpa [#allocation3], 1
    %s520 = scalar_lea.sflag [#allocation3], 1
    %521 = vsyncpa %s520, 1

// kernel: generator_forward.14
$region0: #{generator_forward.14}
  #allocation0 [shape = 'u32[]', space=smem, size = 0x4, offset = 0x4, fixed_abs, tag = 'smem constant byte address 0x4 - core index']
  #allocation1 [shape = 'u32[72,128]{1,0:T(1,128)}', space=vmem, size = 0x9000, scoped, tag = 'internal scratch']
  %s0 = inlined_call_operand.vmem [shape: f32[32,256], index: 0, kind: input, shape index: {}]
  %s1 = inlined_call_operand.vmem [shape: f32[1,256], index: 1, kind: input, shape index: {}]
  %s2 = inlined_call_operand.vmem [shape: f32[1,256], index: 2, kind: input, shape index: {}]
  %s3 = inlined_call_operand.vmem [shape: f32[1,256], index: 3, kind: input, shape index: {}]
  %s4 = inlined_call_operand.hbm [shape: f32[1,256], index: 4, kind: input, shape index: {}]
  %s5 = inlined_call_operand.vmem [shape: bf16[32,256], index: 5, kind: output, shape index: {}]
  %s6 = sld [smem:[#allocation0]]
  $region34: #{generator_forward.14} parent=0
    _
  %s8 = ssub.s32 1, %s6
  %s9 = scalar_select 0, %s8, %s6
  $region1: #{generator_forward.14} parent=0
    #allocation2 [shape = 'u8[1024]{0}', space=vmem, size = 0x400, scoped, tag = 'input window, operand 4, single buffered']
    #allocation3 [shape = 's32[1]{0}', space=sflag, size = 0x4, scoped, tag = 'scoped memory for generator_forward.14']
    %10 = vsyncpa [#allocation3], 0
    // Predicated region
    $region2: #{generator_forward.14} parent=1 // pred_check
      _
    $region3: #{generator_forward.14} parent=1 // pred_check_branch
      %12 = sbr.rel (0) target = $region5
    $region4: #{generator_forward.14} parent=1 // pred_region
      _
    $region5: #{generator_forward.14} parent=1 // pred_fallthru
      _
    // Predicated region
    $region6: #{generator_forward.14} parent=1 // pred_check
      _
    $region7: #{generator_forward.14} parent=1 // pred_check_branch
      %14 = sbr.rel (0) target = $region9
    $region8: #{generator_forward.14} parent=1 // pred_region
      _
    $region9: #{generator_forward.14} parent=1 // pred_fallthru
      _
    // Predicated region
    $region10: #{generator_forward.14} parent=1 // pred_check
      _
    $region11: #{generator_forward.14} parent=1 // pred_check_branch
      %16 = sbr.rel (0) target = $region13
    $region12: #{generator_forward.14} parent=1 // pred_region
      _
    $region13: #{generator_forward.14} parent=1 // pred_fallthru
      _
    // Predicated region
    $region14: #{generator_forward.14} parent=1 // pred_check
      _
    $region15: #{generator_forward.14} parent=1 // pred_check_branch
      %18 = sbr.rel (0) target = $region17
    $region16: #{generator_forward.14} parent=1 // pred_region
      _
    $region17: #{generator_forward.14} parent=1 // pred_fallthru
      _
    // Predicated region
    $region18: #{generator_forward.14} parent=1 // pred_check
      _
    $region19: #{generator_forward.14} parent=1 // pred_check_branch
      %20 = sbr.rel (0) target = $region21
    $region20: #{generator_forward.14} parent=1 // pred_region
      %22 = vsyncadd [#allocation3], 0
      %s24 = sshll.u32 %s4, 4
      %s25 = int_to_ptr.hbm [resolvable:$true] %s24
      %s26 = sshll.u32 [#allocation2], 4
      %s27 = int_to_ptr.vmem [resolvable:$true] %s26
      %29 = dma.hbm_to_vmem [thread:$0]  %s25, 32, %s27, [#allocation3]
    $region21: #{generator_forward.14} parent=1 // pred_fallthru
      _
    // Predicated region
    $region22: #{generator_forward.14} parent=1 // pred_check
      _
    $region23: #{generator_forward.14} parent=1 // pred_check_branch
      %31 = sbr.rel (0) target = $region25
    $region24: #{generator_forward.14} parent=1 // pred_region
      %33 = dma.done [#allocation3], 32
    $region25: #{generator_forward.14} parent=1 // pred_fallthru
      _
    %v34 = vld [vmem:[%s1] sm:$0x3]
    %v35 = vmul.f32 %v34, 0.03125
    %v36 = vld [vmem:[%s2] sm:$0x3]
    %v37 = vmul.f32 %v36, 0.03125
    %v38 = vmul.f32 %v35, %v35
    %v39 = vsub.f32 %v37, %v38
    %v40 = vmax.f32 %v39, 0.0
    %v41 = vld [vmem:[%s3] sm:$0x3]
    %v42 = vadd.f32 %v40, 1e-05
    %v43 = vrsqrt.pop %v42
    %v44 = vmul.f32 %v43, %v42
    %v45 = vmul.f32 %v44, %v43
    %v46 = vmul.f32 0.5, %v45
    %v47 = vsub.f32 1.5, %v46
    %v48 = vmul.f32 %v43, %v47
    %vm49 = vweird.f32 %v42
    %vm50 = vweird.f32 %v43
    %vm51 = vmor %vm49, %vm50
    %v52 = vsel %vm51, %v43, %v48
    %v53 = vmul.f32 %v41, %v52
    %v54 = vld [vmem:[%s0] sm:$0xff]
    %v55 = vld [vmem:[%s0 + $0x8] sm:$0xff]
    %v56 = vld [vmem:[%s0 + $0x10] sm:$0xff]
    %v57 = vld [vmem:[%s0 + $0x18] sm:$0xff]
    %v58 = vld [vmem:[%s0 + $0x20] sm:$0xff]
    %v59 = vld [vmem:[%s0 + $0x28] sm:$0xff]
    %v60 = vld [vmem:[%s0 + $0x30] sm:$0xff]
    %v61 = vld [vmem:[%s0 + $0x38] sm:$0xff]
    %v63 = vperm.slane %v35, 0
    %v64 = vperm.slane %v35, 1
    %v67 = vsub.f32 %v54, %v63
    %v68 = vsub.f32 %v55, %v64
    %v69 = vsub.f32 %v56, %v63
    %v70 = vsub.f32 %v57, %v64
    %v71 = vsub.f32 %v58, %v63
    %v72 = vsub.f32 %v59, %v64
    %v73 = vsub.f32 %v60, %v63
    %v74 = vsub.f32 %v61, %v64
    %v76 = vperm.slane %v53, 0
    %v77 = vperm.slane %v53, 1
    %v80 = vmul.f32 %v67, %v76
    %v81 = vmul.f32 %v68, %v77
    %v82 = vmul.f32 %v69, %v76
    %v83 = vmul.f32 %v70, %v77
    %v84 = vmul.f32 %v71, %v76
    %v85 = vmul.f32 %v72, %v77
    %v86 = vmul.f32 %v73, %v76
    %v87 = vmul.f32 %v74, %v77
    %v88 = vld [vmem:[#allocation2] sm:$0x3]
    %v90 = vperm.slane %v88, 0
    %v91 = vperm.slane %v88, 1
    %v94 = vadd.f32 %v80, %v90
    %v95 = vadd.f32 %v81, %v91
    %v96 = vadd.f32 %v82, %v90
    %v97 = vadd.f32 %v83, %v91
    %v98 = vadd.f32 %v84, %v90
    %v99 = vadd.f32 %v85, %v91
    %v100 = vadd.f32 %v86, %v90
    %v101 = vadd.f32 %v87, %v91
    %v102 = vmax.f32 %v94, 0.0
    %v103 = vmax.f32 %v95, 0.0
    %v104 = vmax.f32 %v96, 0.0
    %v105 = vmax.f32 %v97, 0.0
    %v106 = vmax.f32 %v98, 0.0
    %v107 = vmax.f32 %v99, 0.0
    %v108 = vmax.f32 %v100, 0.0
    %v109 = vmax.f32 %v101, 0.0
    %v110 = vpack.c.bf16 %v103, %v102
    %v111 = vpack.c.bf16 %v105, %v104
    %v112 = vpack.c.bf16 %v107, %v106
    %v113 = vpack.c.bf16 %v109, %v108
    %114 = vst [vmem:[%s5] sm:$0xff] %v110
    %115 = vst [vmem:[%s5 + $0x8] sm:$0xff] %v111
    %116 = vst [vmem:[%s5 + $0x10] sm:$0xff] %v112
    %117 = vst [vmem:[%s5 + $0x18] sm:$0xff] %v113
    // Predicated region
    $region26: #{generator_forward.14} parent=1 // pred_check
      _
    $region27: #{generator_forward.14} parent=1 // pred_check_branch
      %119 = sbr.rel (0) target = $region29
    $region28: #{generator_forward.14} parent=1 // pred_region
      _
    $region29: #{generator_forward.14} parent=1 // pred_fallthru
      _
    // Predicated region
    $region30: #{generator_forward.14} parent=1 // pred_check
      _
    $region31: #{generator_forward.14} parent=1 // pred_check_branch
      %121 = sbr.rel (0) target = $region33
    $region32: #{generator_forward.14} parent=1 // pred_region
      _
    $region33: #{generator_forward.14} parent=1 // pred_fallthru
      _
    %122 = vsyncpa [#allocation3], 1

// kernel: generator_forward.16
$region0: #{generator_forward.16}
  #allocation0 [shape = 'u32[]', space=smem, size = 0x4, offset = 0x4, fixed_abs, tag = 'smem constant byte address 0x4 - core index']
  #allocation1 [shape = 'u32[72,128]{1,0:T(1,128)}', space=vmem, size = 0x9000, scoped, tag = 'internal scratch']
  %s0 = inlined_call_operand.vmem [shape: f32[128,128], index: 0, kind: input, shape index: {}]
  %s1 = inlined_call_operand.vmem [shape: f32[1,128], index: 1, kind: output, shape index: {0}]
  %s2 = inlined_call_operand.vmem [shape: f32[1,128], index: 2, kind: output, shape index: {1}]
  %3 = xla_tuple %s1, %s2
  %s4 = sld [smem:[#allocation0]]
  $region26: #{generator_forward.16} parent=0
    _
  %s6 = ssub.s32 1, %s4
  %s7 = scalar_select 0, %s6, %s4
  // Predicated region
  $region2: #{generator_forward.16} parent=0 // pred_check
    _
  $region3: #{generator_forward.16} parent=0 // pred_check_branch
    %9 = sbr.rel (0) target = $region5
  $region4: #{generator_forward.16} parent=0 // pred_region
    _
  $region5: #{generator_forward.16} parent=0 // pred_fallthru
    _
  %p10 = scmp.eq.s32.totalorder 0, 0
  // Predicated region
  $region6: #{generator_forward.16} parent=0 // pred_check
    %p11 = pneg %p10
  $region7: #{generator_forward.16} parent=0 // pred_check_branch
    %13 = sbr.rel (%p11) target = $region9
  $region8: #{generator_forward.16} parent=0 // pred_region
    %14 = vst [vmem:[%s1] sm:$0x1] 0.0
    %15 = vst [vmem:[%s2] sm:$0x1] 0.0
  $region9: #{generator_forward.16} parent=0 // pred_fallthru
    _
  %v16 = vld [vmem:[%s0] sm:$0xff]
  %v17 = vld [vmem:[%s0 + $0x8] sm:$0xff]
  %v18 = vld [vmem:[%s0 + $0x10] sm:$0xff]
  %v19 = vld [vmem:[%s0 + $0x18] sm:$0xff]
  %v20 = vld [vmem:[%s0 + $0x20] sm:$0xff]
  %v21 = vld [vmem:[%s0 + $0x28] sm:$0xff]
  %v22 = vld [vmem:[%s0 + $0x30] sm:$0xff]
  %v23 = vld [vmem:[%s0 + $0x38] sm:$0xff]
  %v24 = vld [vmem:[%s0 + $0x40] sm:$0xff]
  %v25 = vld [vmem:[%s0 + $0x48] sm:$0xff]
  %v26 = vld [vmem:[%s0 + $0x50] sm:$0xff]
  %v27 = vld [vmem:[%s0 + $0x58] sm:$0xff]
  %v28 = vld [vmem:[%s0 + $0x60] sm:$0xff]
  %v29 = vld [vmem:[%s0 + $0x68] sm:$0xff]
  %v30 = vld [vmem:[%s0 + $0x70] sm:$0xff]
  %v31 = vld [vmem:[%s0 + $0x78] sm:$0xff]
  %v32 = vld [vmem:[%s1] sm:$0x1]
  %v33 = vadd.f32 %v16, %v17
  %v34 = vadd.f32 %v33, %v18
  %v35 = vadd.f32 %v34, %v19
  %v36 = vadd.f32 %v35, %v20
  %v37 = vadd.f32 %v36, %v21
  %v38 = vadd.f32 %v37, %v22
  %v39 = vadd.f32 %v38, %v23
  %v40 = vadd.f32 %v39, %v24
  %v41 = vadd.f32 %v40, %v25
  %v42 = vadd.f32 %v41, %v26
  %v43 = vadd.f32 %v42, %v27
  %v44 = vadd.f32 %v43, %v28
  %v45 = vadd.f32 %v44, %v29
  %v46 = vadd.f32 %v45, %v30
  %v47 = vadd.f32 %v46, %v31
  %v48 = vrot.slane %v47, 4
  %v49 = vadd.f32 %v47, %v48
  %v50 = vrot.slane %v49, 2
  %v51 = vadd.f32 %v49, %v50
  %v52 = vrot.slane %v51, 1
  %v53 = vadd.f32 %v51, %v52
  %v54 = vadd.f32 %v32, %v53
  %55 = vst [vmem:[%s1] sm:$0x1] %v54
  %v56 = vld [vmem:[%s2] sm:$0x1]
  %v57 = vmul.f32 %v16, %v16
  %v58 = vmul.f32 %v17, %v17
  %v59 = vmul.f32 %v18, %v18
  %v60 = vmul.f32 %v19, %v19
  %v61 = vmul.f32 %v20, %v20
  %v62 = vmul.f32 %v21, %v21
  %v63 = vmul.f32 %v22, %v22
  %v64 = vmul.f32 %v23, %v23
  %v65 = vmul.f32 %v24, %v24
  %v66 = vmul.f32 %v25, %v25
  %v67 = vmul.f32 %v26, %v26
  %v68 = vmul.f32 %v27, %v27
  %v69 = vmul.f32 %v28, %v28
  %v70 = vmul.f32 %v29, %v29
  %v71 = vmul.f32 %v30, %v30
  %v72 = vmul.f32 %v31, %v31
  %v73 = vadd.f32 %v57, %v58
  %v74 = vadd.f32 %v73, %v59
  %v75 = vadd.f32 %v74, %v60
  %v76 = vadd.f32 %v75, %v61
  %v77 = vadd.f32 %v76, %v62
  %v78 = vadd.f32 %v77, %v63
  %v79 = vadd.f32 %v78, %v64
  %v80 = vadd.f32 %v79, %v65
  %v81 = vadd.f32 %v80, %v66
  %v82 = vadd.f32 %v81, %v67
  %v83 = vadd.f32 %v82, %v68
  %v84 = vadd.f32 %v83, %v69
  %v85 = vadd.f32 %v84, %v70
  %v86 = vadd.f32 %v85, %v71
  %v87 = vadd.f32 %v86, %v72
  %v88 = vrot.slane %v87, 4
  %v89 = vadd.f32 %v87, %v88
  %v90 = vrot.slane %v89, 2
  %v91 = vadd.f32 %v89, %v90
  %v92 = vrot.slane %v91, 1
  %v93 = vadd.f32 %v91, %v92
  %v94 = vadd.f32 %v56, %v93
  %95 = vst [vmem:[%s2] sm:$0x1] %v94
  // Predicated region
  $region10: #{generator_forward.16} parent=0 // pred_check
    _
  $region11: #{generator_forward.16} parent=0 // pred_check_branch
    %97 = sbr.rel (0) target = $region13
  $region12: #{generator_forward.16} parent=0 // pred_region
    _
  $region13: #{generator_forward.16} parent=0 // pred_fallthru
    _
  // Predicated region
  $region14: #{generator_forward.16} parent=0 // pred_check
    _
  $region15: #{generator_forward.16} parent=0 // pred_check_branch
    %99 = sbr.rel (0) target = $region17
  $region16: #{generator_forward.16} parent=0 // pred_region
    _
  $region17: #{generator_forward.16} parent=0 // pred_fallthru
    _
  // Predicated region
  $region18: #{generator_forward.16} parent=0 // pred_check
    _
  $region19: #{generator_forward.16} parent=0 // pred_check_branch
    %101 = sbr.rel (0) target = $region21
  $region20: #{generator_forward.16} parent=0 // pred_region
    _
  $region21: #{generator_forward.16} parent=0 // pred_fallthru
    _
  // Predicated region
  $region22: #{generator_forward.16} parent=0 // pred_check
    _
  $region23: #{generator_forward.16} parent=0 // pred_check_branch
    %103 = sbr.rel (0) target = $region25
  $region24: #{generator_forward.16} parent=0 // pred_region
    _
  $region25: #{generator_forward.16} parent=0 // pred_fallthru
    _

// kernel: generator_forward.17
$region0: #{generator_forward.17}
  #allocation0 [shape = 'u32[]', space=smem, size = 0x4, offset = 0x4, fixed_abs, tag = 'smem constant byte address 0x4 - core index']
  #allocation1 [shape = 'u32[72,128]{1,0:T(1,128)}', space=vmem, size = 0x9000, scoped, tag = 'internal scratch']
  %s0 = inlined_call_operand.vmem [shape: f32[128,128], index: 0, kind: input, shape index: {}]
  %s1 = inlined_call_operand.vmem [shape: f32[1,128], index: 1, kind: input, shape index: {}]
  %s2 = inlined_call_operand.vmem [shape: f32[1,128], index: 2, kind: input, shape index: {}]
  %s3 = inlined_call_operand.vmem [shape: f32[1,128], index: 3, kind: input, shape index: {}]
  %s4 = inlined_call_operand.vmem [shape: f32[1,128], index: 4, kind: input, shape index: {}]
  %s5 = inlined_call_operand.vmem [shape: bf16[128,128], index: 5, kind: output, shape index: {}]
  %s6 = sld [smem:[#allocation0]]
  $region30: #{generator_forward.17} parent=0
    _
  %s8 = ssub.s32 1, %s6
  %s9 = scalar_select 0, %s8, %s6
  // Predicated region
  $region2: #{generator_forward.17} parent=0 // pred_check
    _
  $region3: #{generator_forward.17} parent=0 // pred_check_branch
    %11 = sbr.rel (0) target = $region5
  $region4: #{generator_forward.17} parent=0 // pred_region
    _
  $region5: #{generator_forward.17} parent=0 // pred_fallthru
    _
  // Predicated region
  $region6: #{generator_forward.17} parent=0 // pred_check
    _
  $region7: #{generator_forward.17} parent=0 // pred_check_branch
    %13 = sbr.rel (0) target = $region9
  $region8: #{generator_forward.17} parent=0 // pred_region
    _
  $region9: #{generator_forward.17} parent=0 // pred_fallthru
    _
  // Predicated region
  $region10: #{generator_forward.17} parent=0 // pred_check
    _
  $region11: #{generator_forward.17} parent=0 // pred_check_branch
    %15 = sbr.rel (0) target = $region13
  $region12: #{generator_forward.17} parent=0 // pred_region
    _
  $region13: #{generator_forward.17} parent=0 // pred_fallthru
    _
  // Predicated region
  $region14: #{generator_forward.17} parent=0 // pred_check
    _
  $region15: #{generator_forward.17} parent=0 // pred_check_branch
    %17 = sbr.rel (0) target = $region17
  $region16: #{generator_forward.17} parent=0 // pred_region
    _
  $region17: #{generator_forward.17} parent=0 // pred_fallthru
    _
  // Predicated region
  $region18: #{generator_forward.17} parent=0 // pred_check
    _
  $region19: #{generator_forward.17} parent=0 // pred_check_branch
    %19 = sbr.rel (0) target = $region21
  $region20: #{generator_forward.17} parent=0 // pred_region
    _
  $region21: #{generator_forward.17} parent=0 // pred_fallthru
    _
  %v20 = vld [vmem:[%s1] sm:$0x1]
  %v21 = vmul.f32 %v20, 0.0078125
  %v22 = vld [vmem:[%s2] sm:$0x1]
  %v23 = vmul.f32 %v22, 0.0078125
  %v24 = vmul.f32 %v21, %v21
  %v25 = vsub.f32 %v23, %v24
  %v26 = vmax.f32 %v25, 0.0
  %v27 = vld [vmem:[%s3] sm:$0x1]
  %v28 = vadd.f32 %v26, 1e-05
  %v29 = vrsqrt.pop %v28
  %v30 = vmul.f32 %v29, %v28
  %v31 = vmul.f32 %v30, %v29
  %v32 = vmul.f32 0.5, %v31
  %v33 = vsub.f32 1.5, %v32
  %v34 = vmul.f32 %v29, %v33
  %vm35 = vweird.f32 %v28
  %vm36 = vweird.f32 %v29
  %vm37 = vmor %vm35, %vm36
  %v38 = vsel %vm37, %v29, %v34
  %v39 = vmul.f32 %v27, %v38
  %v40 = vld [vmem:[%s0] sm:$0xff]
  %v41 = vld [vmem:[%s0 + $0x8] sm:$0xff]
  %v42 = vld [vmem:[%s0 + $0x10] sm:$0xff]
  %v43 = vld [vmem:[%s0 + $0x18] sm:$0xff]
  %v44 = vld [vmem:[%s0 + $0x20] sm:$0xff]
  %v45 = vld [vmem:[%s0 + $0x28] sm:$0xff]
  %v46 = vld [vmem:[%s0 + $0x30] sm:$0xff]
  %v47 = vld [vmem:[%s0 + $0x38] sm:$0xff]
  %v48 = vld [vmem:[%s0 + $0x40] sm:$0xff]
  %v49 = vld [vmem:[%s0 + $0x48] sm:$0xff]
  %v50 = vld [vmem:[%s0 + $0x50] sm:$0xff]
  %v51 = vld [vmem:[%s0 + $0x58] sm:$0xff]
  %v52 = vld [vmem:[%s0 + $0x60] sm:$0xff]
  %v53 = vld [vmem:[%s0 + $0x68] sm:$0xff]
  %v54 = vld [vmem:[%s0 + $0x70] sm:$0xff]
  %v55 = vld [vmem:[%s0 + $0x78] sm:$0xff]
  %v57 = vperm.slane %v21, 0
  %v59 = vsub.f32 %v40, %v57
  %v60 = vsub.f32 %v41, %v57
  %v61 = vsub.f32 %v42, %v57
  %v62 = vsub.f32 %v43, %v57
  %v63 = vsub.f32 %v44, %v57
  %v64 = vsub.f32 %v45, %v57
  %v65 = vsub.f32 %v46, %v57
  %v66 = vsub.f32 %v47, %v57
  %v67 = vsub.f32 %v48, %v57
  %v68 = vsub.f32 %v49, %v57
  %v69 = vsub.f32 %v50, %v57
  %v70 = vsub.f32 %v51, %v57
  %v71 = vsub.f32 %v52, %v57
  %v72 = vsub.f32 %v53, %v57
  %v73 = vsub.f32 %v54, %v57
  %v74 = vsub.f32 %v55, %v57
  %v76 = vperm.slane %v39, 0
  %v78 = vmul.f32 %v59, %v76
  %v79 = vmul.f32 %v60, %v76
  %v80 = vmul.f32 %v61, %v76
  %v81 = vmul.f32 %v62, %v76
  %v82 = vmul.f32 %v63, %v76
  %v83 = vmul.f32 %v64, %v76
  %v84 = vmul.f32 %v65, %v76
  %v85 = vmul.f32 %v66, %v76
  %v86 = vmul.f32 %v67, %v76
  %v87 = vmul.f32 %v68, %v76
  %v88 = vmul.f32 %v69, %v76
  %v89 = vmul.f32 %v70, %v76
  %v90 = vmul.f32 %v71, %v76
  %v91 = vmul.f32 %v72, %v76
  %v92 = vmul.f32 %v73, %v76
  %v93 = vmul.f32 %v74, %v76
  %v94 = vld [vmem:[%s4] sm:$0x1]
  %v96 = vperm.slane %v94, 0
  %v98 = vadd.f32 %v78, %v96
  %v99 = vadd.f32 %v79, %v96
  %v100 = vadd.f32 %v80, %v96
  %v101 = vadd.f32 %v81, %v96
  %v102 = vadd.f32 %v82, %v96
  %v103 = vadd.f32 %v83, %v96
  %v104 = vadd.f32 %v84, %v96
  %v105 = vadd.f32 %v85, %v96
  %v106 = vadd.f32 %v86, %v96
  %v107 = vadd.f32 %v87, %v96
  %v108 = vadd.f32 %v88, %v96
  %v109 = vadd.f32 %v89, %v96
  %v110 = vadd.f32 %v90, %v96
  %v111 = vadd.f32 %v91, %v96
  %v112 = vadd.f32 %v92, %v96
  %v113 = vadd.f32 %v93, %v96
  %v114 = vmax.f32 %v98, 0.0
  %v115 = vmax.f32 %v99, 0.0
  %v116 = vmax.f32 %v100, 0.0
  %v117 = vmax.f32 %v101, 0.0
  %v118 = vmax.f32 %v102, 0.0
  %v119 = vmax.f32 %v103, 0.0
  %v120 = vmax.f32 %v104, 0.0
  %v121 = vmax.f32 %v105, 0.0
  %v122 = vmax.f32 %v106, 0.0
  %v123 = vmax.f32 %v107, 0.0
  %v124 = vmax.f32 %v108, 0.0
  %v125 = vmax.f32 %v109, 0.0
  %v126 = vmax.f32 %v110, 0.0
  %v127 = vmax.f32 %v111, 0.0
  %v128 = vmax.f32 %v112, 0.0
  %v129 = vmax.f32 %v113, 0.0
  %v130 = vpack.c.bf16 %v114, %v114
  %v131 = vpack.c.bf16 %v115, %v115
  %v132 = vpack.c.bf16 %v116, %v116
  %v133 = vpack.c.bf16 %v117, %v117
  %v134 = vpack.c.bf16 %v118, %v118
  %v135 = vpack.c.bf16 %v119, %v119
  %v136 = vpack.c.bf16 %v120, %v120
  %v137 = vpack.c.bf16 %v121, %v121
  %v138 = vpack.c.bf16 %v122, %v122
  %v139 = vpack.c.bf16 %v123, %v123
  %v140 = vpack.c.bf16 %v124, %v124
  %v141 = vpack.c.bf16 %v125, %v125
  %v142 = vpack.c.bf16 %v126, %v126
  %v143 = vpack.c.bf16 %v127, %v127
  %v144 = vpack.c.bf16 %v128, %v128
  %v145 = vpack.c.bf16 %v129, %v129
  %146 = vst [vmem:[%s5] sm:$0xf] %v130
  %147 = vst [vmem:[%s5 + $0x4] sm:$0xf] %v131
  %148 = vst [vmem:[%s5 + $0x8] sm:$0xf] %v132
  %149 = vst [vmem:[%s5 + $0xc] sm:$0xf] %v133
  %150 = vst [vmem:[%s5 + $0x10] sm:$0xf] %v134
  %151 = vst [vmem:[%s5 + $0x14] sm:$0xf] %v135
  %152 = vst [vmem:[%s5 + $0x18] sm:$0xf] %v136
  %153 = vst [vmem:[%s5 + $0x1c] sm:$0xf] %v137
  %154 = vst [vmem:[%s5 + $0x20] sm:$0xf] %v138
  %155 = vst [vmem:[%s5 + $0x24] sm:$0xf] %v139
  %156 = vst [vmem:[%s5 + $0x28] sm:$0xf] %v140
  %157 = vst [vmem:[%s5 + $0x2c] sm:$0xf] %v141
  %158 = vst [vmem:[%s5 + $0x30] sm:$0xf] %v142
  %159 = vst [vmem:[%s5 + $0x34] sm:$0xf] %v143
  %160 = vst [vmem:[%s5 + $0x38] sm:$0xf] %v144
  %161 = vst [vmem:[%s5 + $0x3c] sm:$0xf] %v145
  // Predicated region
  $region22: #{generator_forward.17} parent=0 // pred_check
    _
  $region23: #{generator_forward.17} parent=0 // pred_check_branch
    %163 = sbr.rel (0) target = $region25
  $region24: #{generator_forward.17} parent=0 // pred_region
    _
  $region25: #{generator_forward.17} parent=0 // pred_fallthru
    _
  // Predicated region
  $region26: #{generator_forward.17} parent=0 // pred_check
    _
  $region27: #{generator_forward.17} parent=0 // pred_check_branch
    %165 = sbr.rel (0) target = $region29
  $region28: #{generator_forward.17} parent=0 // pred_region
    _
  $region29: #{generator_forward.17} parent=0 // pred_fallthru
    _

// kernel: generator_forward.15
$region0: #{generator_forward.15}
  #allocation0 [shape = 'u32[]', space=smem, size = 0x4, offset = 0x4, fixed_abs, tag = 'smem constant byte address 0x4 - core index']
  #allocation1 [shape = 'u32[72,128]{1,0:T(1,128)}', space=vmem, size = 0x9000, scoped, tag = 'internal scratch']
  %s0 = inlined_call_operand.vmem [shape: bf16[64,1024], index: 0, kind: input, shape index: {}]
  %s1 = inlined_call_operand.vmem [shape: bf16[1024,512], index: 1, kind: input, shape index: {}]
  %s2 = inlined_call_operand.vmem [shape: f32[64,512], index: 2, kind: output, shape index: {}]
  %s3 = sld [smem:[#allocation0]]
  $region18: #{generator_forward.15} parent=0
    _
  %s5 = ssub.s32 1, %s3
  %s6 = scalar_select 0, %s5, %s3
  // Predicated region
  $region2: #{generator_forward.15} parent=0 // pred_check
    _
  $region3: #{generator_forward.15} parent=0 // pred_check_branch
    %8 = sbr.rel (0) target = $region5
  $region4: #{generator_forward.15} parent=0 // pred_region
    _
  $region5: #{generator_forward.15} parent=0 // pred_fallthru
    _
  // Predicated region
  $region6: #{generator_forward.15} parent=0 // pred_check
    _
  $region7: #{generator_forward.15} parent=0 // pred_check_branch
    %10 = sbr.rel (0) target = $region9
  $region8: #{generator_forward.15} parent=0 // pred_region
    _
  $region9: #{generator_forward.15} parent=0 // pred_fallthru
    _
  %v11 = vld [vmem:[%s0] sm:$0xff]
  %v12 = vld [vmem:[%s0 + $0x8] sm:$0xff]
  %v13 = vld [vmem:[%s0 + $0x10] sm:$0xff]
  %v14 = vld [vmem:[%s0 + $0x18] sm:$0xff]
  %v15 = vld [vmem:[%s0 + $0x20] sm:$0xff]
  %v16 = vld [vmem:[%s0 + $0x28] sm:$0xff]
  %v17 = vld [vmem:[%s0 + $0x30] sm:$0xff]
  %v18 = vld [vmem:[%s0 + $0x38] sm:$0xff]
  %v19 = vld [vmem:[%s0 + $0x40] sm:$0xff]
  %v20 = vld [vmem:[%s0 + $0x48] sm:$0xff]
  %v21 = vld [vmem:[%s0 + $0x50] sm:$0xff]
  %v22 = vld [vmem:[%s0 + $0x58] sm:$0xff]
  %v23 = vld [vmem:[%s0 + $0x60] sm:$0xff]
  %v24 = vld [vmem:[%s0 + $0x68] sm:$0xff]
  %v25 = vld [vmem:[%s0 + $0x70] sm:$0xff]
  %v26 = vld [vmem:[%s0 + $0x78] sm:$0xff]
  %v27 = vld [vmem:[%s0 + $0x80] sm:$0xff]
  %v28 = vld [vmem:[%s0 + $0x88] sm:$0xff]
  %v29 = vld [vmem:[%s0 + $0x90] sm:$0xff]
  %v30 = vld [vmem:[%s0 + $0x98] sm:$0xff]
  %v31 = vld [vmem:[%s0 + $0xa0] sm:$0xff]
  %v32 = vld [vmem:[%s0 + $0xa8] sm:$0xff]
  %v33 = vld [vmem:[%s0 + $0xb0] sm:$0xff]
  %v34 = vld [vmem:[%s0 + $0xb8] sm:$0xff]
  %v35 = vld [vmem:[%s0 + $0xc0] sm:$0xff]
  %v36 = vld [vmem:[%s0 + $0xc8] sm:$0xff]
  %v37 = vld [vmem:[%s0 + $0xd0] sm:$0xff]
  %v38 = vld [vmem:[%s0 + $0xd8] sm:$0xff]
  %v39 = vld [vmem:[%s0 + $0xe0] sm:$0xff]
  %v40 = vld [vmem:[%s0 + $0xe8] sm:$0xff]
  %v41 = vld [vmem:[%s0 + $0xf0] sm:$0xff]
  %v42 = vld [vmem:[%s0 + $0xf8] sm:$0xff]
  %v43 = vld [vmem:[%s1] sm:$0xff]
  %v44 = vld [vmem:[%s1 + $0x8] sm:$0xff]
  %v45 = vld [vmem:[%s1 + $0x10] sm:$0xff]
  %v46 = vld [vmem:[%s1 + $0x18] sm:$0xff]
  %v47 = vld [vmem:[%s1 + $0x20] sm:$0xff]
  %v48 = vld [vmem:[%s1 + $0x28] sm:$0xff]
  %v49 = vld [vmem:[%s1 + $0x30] sm:$0xff]
  %v50 = vld [vmem:[%s1 + $0x38] sm:$0xff]
  %v51 = vld [vmem:[%s1 + $0x40] sm:$0xff]
  %v52 = vld [vmem:[%s1 + $0x48] sm:$0xff]
  %v53 = vld [vmem:[%s1 + $0x50] sm:$0xff]
  %v54 = vld [vmem:[%s1 + $0x58] sm:$0xff]
  %v55 = vld [vmem:[%s1 + $0x60] sm:$0xff]
  %v56 = vld [vmem:[%s1 + $0x68] sm:$0xff]
  %v57 = vld [vmem:[%s1 + $0x70] sm:$0xff]
  %v58 = vld [vmem:[%s1 + $0x78] sm:$0xff]
  %v59 = vld [vmem:[%s1 + $0x80] sm:$0xff]
  %v60 = vld [vmem:[%s1 + $0x88] sm:$0xff]
  %v61 = vld [vmem:[%s1 + $0x90] sm:$0xff]
  %v62 = vld [vmem:[%s1 + $0x98] sm:$0xff]
  %v63 = vld [vmem:[%s1 + $0xa0] sm:$0xff]
  %v64 = vld [vmem:[%s1 + $0xa8] sm:$0xff]
  %v65 = vld [vmem:[%s1 + $0xb0] sm:$0xff]
  %v66 = vld [vmem:[%s1 + $0xb8] sm:$0xff]
  %v67 = vld [vmem:[%s1 + $0xc0] sm:$0xff]
  %v68 = vld [vmem:[%s1 + $0xc8] sm:$0xff]
  %v69 = vld [vmem:[%s1 + $0xd0] sm:$0xff]
  %v70 = vld [vmem:[%s1 + $0xd8] sm:$0xff]
  %v71 = vld [vmem:[%s1 + $0xe0] sm:$0xff]
  %v72 = vld [vmem:[%s1 + $0xe8] sm:$0xff]
  %v73 = vld [vmem:[%s1 + $0xf0] sm:$0xff]
  %v74 = vld [vmem:[%s1 + $0xf8] sm:$0xff]
  %v75 = vld [vmem:[%s1 + $0x100] sm:$0xff]
  %v76 = vld [vmem:[%s1 + $0x108] sm:$0xff]
  %v77 = vld [vmem:[%s1 + $0x110] sm:$0xff]
  %v78 = vld [vmem:[%s1 + $0x118] sm:$0xff]
  %v79 = vld [vmem:[%s1 + $0x120] sm:$0xff]
  %v80 = vld [vmem:[%s1 + $0x128] sm:$0xff]
  %v81 = vld [vmem:[%s1 + $0x130] sm:$0xff]
  %v82 = vld [vmem:[%s1 + $0x138] sm:$0xff]
  %v83 = vld [vmem:[%s1 + $0x140] sm:$0xff]
  %v84 = vld [vmem:[%s1 + $0x148] sm:$0xff]
  %v85 = vld [vmem:[%s1 + $0x150] sm:$0xff]
  %v86 = vld [vmem:[%s1 + $0x158] sm:$0xff]
  %v87 = vld [vmem:[%s1 + $0x160] sm:$0xff]
  %v88 = vld [vmem:[%s1 + $0x168] sm:$0xff]
  %v89 = vld [vmem:[%s1 + $0x170] sm:$0xff]
  %v90 = vld [vmem:[%s1 + $0x178] sm:$0xff]
  %v91 = vld [vmem:[%s1 + $0x180] sm:$0xff]
  %v92 = vld [vmem:[%s1 + $0x188] sm:$0xff]
  %v93 = vld [vmem:[%s1 + $0x190] sm:$0xff]
  %v94 = vld [vmem:[%s1 + $0x198] sm:$0xff]
  %v95 = vld [vmem:[%s1 + $0x1a0] sm:$0xff]
  %v96 = vld [vmem:[%s1 + $0x1a8] sm:$0xff]
  %v97 = vld [vmem:[%s1 + $0x1b0] sm:$0xff]
  %v98 = vld [vmem:[%s1 + $0x1b8] sm:$0xff]
  %v99 = vld [vmem:[%s1 + $0x1c0] sm:$0xff]
  %v100 = vld [vmem:[%s1 + $0x1c8] sm:$0xff]
  %v101 = vld [vmem:[%s1 + $0x1d0] sm:$0xff]
  %v102 = vld [vmem:[%s1 + $0x1d8] sm:$0xff]
  %v103 = vld [vmem:[%s1 + $0x1e0] sm:$0xff]
  %v104 = vld [vmem:[%s1 + $0x1e8] sm:$0xff]
  %v105 = vld [vmem:[%s1 + $0x1f0] sm:$0xff]
  %v106 = vld [vmem:[%s1 + $0x1f8] sm:$0xff]
  %v107 = vld [vmem:[%s1 + $0x200] sm:$0xff]
  %v108 = vld [vmem:[%s1 + $0x208] sm:$0xff]
  %v109 = vld [vmem:[%s1 + $0x210] sm:$0xff]
  %v110 = vld [vmem:[%s1 + $0x218] sm:$0xff]
  %v111 = vld [vmem:[%s1 + $0x220] sm:$0xff]
  %v112 = vld [vmem:[%s1 + $0x228] sm:$0xff]
  %v113 = vld [vmem:[%s1 + $0x230] sm:$0xff]
  %v114 = vld [vmem:[%s1 + $0x238] sm:$0xff]
  %v115 = vld [vmem:[%s1 + $0x240] sm:$0xff]
  %v116 = vld [vmem:[%s1 + $0x248] sm:$0xff]
  %v117 = vld [vmem:[%s1 + $0x250] sm:$0xff]
  %v118 = vld [vmem:[%s1 + $0x258] sm:$0xff]
  %v119 = vld [vmem:[%s1 + $0x260] sm:$0xff]
  %v120 = vld [vmem:[%s1 + $0x268] sm:$0xff]
  %v121 = vld [vmem:[%s1 + $0x270] sm:$0xff]
  %v122 = vld [vmem:[%s1 + $0x278] sm:$0xff]
  %v123 = vld [vmem:[%s1 + $0x280] sm:$0xff]
  %v124 = vld [vmem:[%s1 + $0x288] sm:$0xff]
  %v125 = vld [vmem:[%s1 + $0x290] sm:$0xff]
  %v126 = vld [vmem:[%s1 + $0x298] sm:$0xff]
  %v127 = vld [vmem:[%s1 + $0x2a0] sm:$0xff]
  %v128 = vld [vmem:[%s1 + $0x2a8] sm:$0xff]
  %v129 = vld [vmem:[%s1 + $0x2b0] sm:$0xff]
  %v130 = vld [vmem:[%s1 + $0x2b8] sm:$0xff]
  %v131 = vld [vmem:[%s1 + $0x2c0] sm:$0xff]
  %v132 = vld [vmem:[%s1 + $0x2c8] sm:$0xff]
  %v133 = vld [vmem:[%s1 + $0x2d0] sm:$0xff]
  %v134 = vld [vmem:[%s1 + $0x2d8] sm:$0xff]
  %v135 = vld [vmem:[%s1 + $0x2e0] sm:$0xff]
  %v136 = vld [vmem:[%s1 + $0x2e8] sm:$0xff]
  %v137 = vld [vmem:[%s1 + $0x2f0] sm:$0xff]
  %v138 = vld [vmem:[%s1 + $0x2f8] sm:$0xff]
  %v139 = vld [vmem:[%s1 + $0x300] sm:$0xff]
  %v140 = vld [vmem:[%s1 + $0x308] sm:$0xff]
  %v141 = vld [vmem:[%s1 + $0x310] sm:$0xff]
  %v142 = vld [vmem:[%s1 + $0x318] sm:$0xff]
  %v143 = vld [vmem:[%s1 + $0x320] sm:$0xff]
  %v144 = vld [vmem:[%s1 + $0x328] sm:$0xff]
  %v145 = vld [vmem:[%s1 + $0x330] sm:$0xff]
  %v146 = vld [vmem:[%s1 + $0x338] sm:$0xff]
  %v147 = vld [vmem:[%s1 + $0x340] sm:$0xff]
  %v148 = vld [vmem:[%s1 + $0x348] sm:$0xff]
  %v149 = vld [vmem:[%s1 + $0x350] sm:$0xff]
  %v150 = vld [vmem:[%s1 + $0x358] sm:$0xff]
  %v151 = vld [vmem:[%s1 + $0x360] sm:$0xff]
  %v152 = vld [vmem:[%s1 + $0x368] sm:$0xff]
  %v153 = vld [vmem:[%s1 + $0x370] sm:$0xff]
  %v154 = vld [vmem:[%s1 + $0x378] sm:$0xff]
  %v155 = vld [vmem:[%s1 + $0x380] sm:$0xff]
  %v156 = vld [vmem:[%s1 + $0x388] sm:$0xff]
  %v157 = vld [vmem:[%s1 + $0x390] sm:$0xff]
  %v158 = vld [vmem:[%s1 + $0x398] sm:$0xff]
  %v159 = vld [vmem:[%s1 + $0x3a0] sm:$0xff]
  %v160 = vld [vmem:[%s1 + $0x3a8] sm:$0xff]
  %v161 = vld [vmem:[%s1 + $0x3b0] sm:$0xff]
  %v162 = vld [vmem:[%s1 + $0x3b8] sm:$0xff]
  %v163 = vld [vmem:[%s1 + $0x3c0] sm:$0xff]
  %v164 = vld [vmem:[%s1 + $0x3c8] sm:$0xff]
  %v165 = vld [vmem:[%s1 + $0x3d0] sm:$0xff]
  %v166 = vld [vmem:[%s1 + $0x3d8] sm:$0xff]
  %v167 = vld [vmem:[%s1 + $0x3e0] sm:$0xff]
  %v168 = vld [vmem:[%s1 + $0x3e8] sm:$0xff]
  %v169 = vld [vmem:[%s1 + $0x3f0] sm:$0xff]
  %v170 = vld [vmem:[%s1 + $0x3f8] sm:$0xff]
  %v171 = vld [vmem:[%s1 + $0x400] sm:$0xff]
  %v172 = vld [vmem:[%s1 + $0x408] sm:$0xff]
  %v173 = vld [vmem:[%s1 + $0x410] sm:$0xff]
  %v174 = vld [vmem:[%s1 + $0x418] sm:$0xff]
  %v175 = vld [vmem:[%s1 + $0x420] sm:$0xff]
  %v176 = vld [vmem:[%s1 + $0x428] sm:$0xff]
  %v177 = vld [vmem:[%s1 + $0x430] sm:$0xff]
  %v178 = vld [vmem:[%s1 + $0x438] sm:$0xff]
  %v179 = vld [vmem:[%s1 + $0x440] sm:$0xff]
  %v180 = vld [vmem:[%s1 + $0x448] sm:$0xff]
  %v181 = vld [vmem:[%s1 + $0x450] sm:$0xff]
  %v182 = vld [vmem:[%s1 + $0x458] sm:$0xff]
  %v183 = vld [vmem:[%s1 + $0x460] sm:$0xff]
  %v184 = vld [vmem:[%s1 + $0x468] sm:$0xff]
  %v185 = vld [vmem:[%s1 + $0x470] sm:$0xff]
  %v186 = vld [vmem:[%s1 + $0x478] sm:$0xff]
  %v187 = vld [vmem:[%s1 + $0x480] sm:$0xff]
  %v188 = vld [vmem:[%s1 + $0x488] sm:$0xff]
  %v189 = vld [vmem:[%s1 + $0x490] sm:$0xff]
  %v190 = vld [vmem:[%s1 + $0x498] sm:$0xff]
  %v191 = vld [vmem:[%s1 + $0x4a0] sm:$0xff]
  %v192 = vld [vmem:[%s1 + $0x4a8] sm:$0xff]
  %v193 = vld [vmem:[%s1 + $0x4b0] sm:$0xff]
  %v194 = vld [vmem:[%s1 + $0x4b8] sm:$0xff]
  %v195 = vld [vmem:[%s1 + $0x4c0] sm:$0xff]
  %v196 = vld [vmem:[%s1 + $0x4c8] sm:$0xff]
  %v197 = vld [vmem:[%s1 + $0x4d0] sm:$0xff]
  %v198 = vld [vmem:[%s1 + $0x4d8] sm:$0xff]
  %v199 = vld [vmem:[%s1 + $0x4e0] sm:$0xff]
  %v200 = vld [vmem:[%s1 + $0x4e8] sm:$0xff]
  %v201 = vld [vmem:[%s1 + $0x4f0] sm:$0xff]
  %v202 = vld [vmem:[%s1 + $0x4f8] sm:$0xff]
  %v203 = vld [vmem:[%s1 + $0x500] sm:$0xff]
  %v204 = vld [vmem:[%s1 + $0x508] sm:$0xff]
  %v205 = vld [vmem:[%s1 + $0x510] sm:$0xff]
  %v206 = vld [vmem:[%s1 + $0x518] sm:$0xff]
  %v207 = vld [vmem:[%s1 + $0x520] sm:$0xff]
  %v208 = vld [vmem:[%s1 + $0x528] sm:$0xff]
  %v209 = vld [vmem:[%s1 + $0x530] sm:$0xff]
  %v210 = vld [vmem:[%s1 + $0x538] sm:$0xff]
  %v211 = vld [vmem:[%s1 + $0x540] sm:$0xff]
  %v212 = vld [vmem:[%s1 + $0x548] sm:$0xff]
  %v213 = vld [vmem:[%s1 + $0x550] sm:$0xff]
  %v214 = vld [vmem:[%s1 + $0x558] sm:$0xff]
  %v215 = vld [vmem:[%s1 + $0x560] sm:$0xff]
  %v216 = vld [vmem:[%s1 + $0x568] sm:$0xff]
  %v217 = vld [vmem:[%s1 + $0x570] sm:$0xff]
  %v218 = vld [vmem:[%s1 + $0x578] sm:$0xff]
  %v219 = vld [vmem:[%s1 + $0x580] sm:$0xff]
  %v220 = vld [vmem:[%s1 + $0x588] sm:$0xff]
  %v221 = vld [vmem:[%s1 + $0x590] sm:$0xff]
  %v222 = vld [vmem:[%s1 + $0x598] sm:$0xff]
  %v223 = vld [vmem:[%s1 + $0x5a0] sm:$0xff]
  %v224 = vld [vmem:[%s1 + $0x5a8] sm:$0xff]
  %v225 = vld [vmem:[%s1 + $0x5b0] sm:$0xff]
  %v226 = vld [vmem:[%s1 + $0x5b8] sm:$0xff]
  %v227 = vld [vmem:[%s1 + $0x5c0] sm:$0xff]
  %v228 = vld [vmem:[%s1 + $0x5c8] sm:$0xff]
  %v229 = vld [vmem:[%s1 + $0x5d0] sm:$0xff]
  %v230 = vld [vmem:[%s1 + $0x5d8] sm:$0xff]
  %v231 = vld [vmem:[%s1 + $0x5e0] sm:$0xff]
  %v232 = vld [vmem:[%s1 + $0x5e8] sm:$0xff]
  %v233 = vld [vmem:[%s1 + $0x5f0] sm:$0xff]
  %v234 = vld [vmem:[%s1 + $0x5f8] sm:$0xff]
  %v235 = vld [vmem:[%s1 + $0x600] sm:$0xff]
  %v236 = vld [vmem:[%s1 + $0x608] sm:$0xff]
  %v237 = vld [vmem:[%s1 + $0x610] sm:$0xff]
  %v238 = vld [vmem:[%s1 + $0x618] sm:$0xff]
  %v239 = vld [vmem:[%s1 + $0x620] sm:$0xff]
  %v240 = vld [vmem:[%s1 + $0x628] sm:$0xff]
  %v241 = vld [vmem:[%s1 + $0x630] sm:$0xff]
  %v242 = vld [vmem:[%s1 + $0x638] sm:$0xff]
  %v243 = vld [vmem:[%s1 + $0x640] sm:$0xff]
  %v244 = vld [vmem:[%s1 + $0x648] sm:$0xff]
  %v245 = vld [vmem:[%s1 + $0x650] sm:$0xff]
  %v246 = vld [vmem:[%s1 + $0x658] sm:$0xff]
  %v247 = vld [vmem:[%s1 + $0x660] sm:$0xff]
  %v248 = vld [vmem:[%s1 + $0x668] sm:$0xff]
  %v249 = vld [vmem:[%s1 + $0x670] sm:$0xff]
  %v250 = vld [vmem:[%s1 + $0x678] sm:$0xff]
  %v251 = vld [vmem:[%s1 + $0x680] sm:$0xff]
  %v252 = vld [vmem:[%s1 + $0x688] sm:$0xff]
  %v253 = vld [vmem:[%s1 + $0x690] sm:$0xff]
  %v254 = vld [vmem:[%s1 + $0x698] sm:$0xff]
  %v255 = vld [vmem:[%s1 + $0x6a0] sm:$0xff]
  %v256 = vld [vmem:[%s1 + $0x6a8] sm:$0xff]
  %v257 = vld [vmem:[%s1 + $0x6b0] sm:$0xff]
  %v258 = vld [vmem:[%s1 + $0x6b8] sm:$0xff]
  %v259 = vld [vmem:[%s1 + $0x6c0] sm:$0xff]
  %v260 = vld [vmem:[%s1 + $0x6c8] sm:$0xff]
  %v261 = vld [vmem:[%s1 + $0x6d0] sm:$0xff]
  %v262 = vld [vmem:[%s1 + $0x6d8] sm:$0xff]
  %v263 = vld [vmem:[%s1 + $0x6e0] sm:$0xff]
  %v264 = vld [vmem:[%s1 + $0x6e8] sm:$0xff]
  %v265 = vld [vmem:[%s1 + $0x6f0] sm:$0xff]
  %v266 = vld [vmem:[%s1 + $0x6f8] sm:$0xff]
  %v267 = vld [vmem:[%s1 + $0x700] sm:$0xff]
  %v268 = vld [vmem:[%s1 + $0x708] sm:$0xff]
  %v269 = vld [vmem:[%s1 + $0x710] sm:$0xff]
  %v270 = vld [vmem:[%s1 + $0x718] sm:$0xff]
  %v271 = vld [vmem:[%s1 + $0x720] sm:$0xff]
  %v272 = vld [vmem:[%s1 + $0x728] sm:$0xff]
  %v273 = vld [vmem:[%s1 + $0x730] sm:$0xff]
  %v274 = vld [vmem:[%s1 + $0x738] sm:$0xff]
  %v275 = vld [vmem:[%s1 + $0x740] sm:$0xff]
  %v276 = vld [vmem:[%s1 + $0x748] sm:$0xff]
  %v277 = vld [vmem:[%s1 + $0x750] sm:$0xff]
  %v278 = vld [vmem:[%s1 + $0x758] sm:$0xff]
  %v279 = vld [vmem:[%s1 + $0x760] sm:$0xff]
  %v280 = vld [vmem:[%s1 + $0x768] sm:$0xff]
  %v281 = vld [vmem:[%s1 + $0x770] sm:$0xff]
  %v282 = vld [vmem:[%s1 + $0x778] sm:$0xff]
  %v283 = vld [vmem:[%s1 + $0x780] sm:$0xff]
  %v284 = vld [vmem:[%s1 + $0x788] sm:$0xff]
  %v285 = vld [vmem:[%s1 + $0x790] sm:$0xff]
  %v286 = vld [vmem:[%s1 + $0x798] sm:$0xff]
  %v287 = vld [vmem:[%s1 + $0x7a0] sm:$0xff]
  %v288 = vld [vmem:[%s1 + $0x7a8] sm:$0xff]
  %v289 = vld [vmem:[%s1 + $0x7b0] sm:$0xff]
  %v290 = vld [vmem:[%s1 + $0x7b8] sm:$0xff]
  %v291 = vld [vmem:[%s1 + $0x7c0] sm:$0xff]
  %v292 = vld [vmem:[%s1 + $0x7c8] sm:$0xff]
  %v293 = vld [vmem:[%s1 + $0x7d0] sm:$0xff]
  %v294 = vld [vmem:[%s1 + $0x7d8] sm:$0xff]
  %v295 = vld [vmem:[%s1 + $0x7e0] sm:$0xff]
  %v296 = vld [vmem:[%s1 + $0x7e8] sm:$0xff]
  %v297 = vld [vmem:[%s1 + $0x7f0] sm:$0xff]
  %v298 = vld [vmem:[%s1 + $0x7f8] sm:$0xff]
  %v331 = vunpack.c.l.b16 %v11
  %v332 = vunpack.c.h.b16 %v11
  %v333 = vunpack.c.l.b16 %v12
  %v334 = vunpack.c.h.b16 %v12
  %v335 = vunpack.c.l.b16 %v13
  %v336 = vunpack.c.h.b16 %v13
  %v337 = vunpack.c.l.b16 %v14
  %v338 = vunpack.c.h.b16 %v14
  %v339 = vunpack.c.l.b16 %v15
  %v340 = vunpack.c.h.b16 %v15
  %v341 = vunpack.c.l.b16 %v16
  %v342 = vunpack.c.h.b16 %v16
  %v343 = vunpack.c.l.b16 %v17
  %v344 = vunpack.c.h.b16 %v17
  %v345 = vunpack.c.l.b16 %v18
  %v346 = vunpack.c.h.b16 %v18
  %v347 = vunpack.c.l.b16 %v19
  %v348 = vunpack.c.h.b16 %v19
  %v349 = vunpack.c.l.b16 %v20
  %v350 = vunpack.c.h.b16 %v20
  %v351 = vunpack.c.l.b16 %v21
  %v352 = vunpack.c.h.b16 %v21
  %v353 = vunpack.c.l.b16 %v22
  %v354 = vunpack.c.h.b16 %v22
  %v355 = vunpack.c.l.b16 %v23
  %v356 = vunpack.c.h.b16 %v23
  %v357 = vunpack.c.l.b16 %v24
  %v358 = vunpack.c.h.b16 %v24
  %v359 = vunpack.c.l.b16 %v25
  %v360 = vunpack.c.h.b16 %v25
  %v361 = vunpack.c.l.b16 %v26
  %v362 = vunpack.c.h.b16 %v26
  %v363 = vunpack.c.l.b16 %v27
  %v364 = vunpack.c.h.b16 %v27
  %v365 = vunpack.c.l.b16 %v28
  %v366 = vunpack.c.h.b16 %v28
  %v367 = vunpack.c.l.b16 %v29
  %v368 = vunpack.c.h.b16 %v29
  %v369 = vunpack.c.l.b16 %v30
  %v370 = vunpack.c.h.b16 %v30
  %v371 = vunpack.c.l.b16 %v31
  %v372 = vunpack.c.h.b16 %v31
  %v373 = vunpack.c.l.b16 %v32
  %v374 = vunpack.c.h.b16 %v32
  %v375 = vunpack.c.l.b16 %v33
  %v376 = vunpack.c.h.b16 %v33
  %v377 = vunpack.c.l.b16 %v34
  %v378 = vunpack.c.h.b16 %v34
  %v379 = vunpack.c.l.b16 %v35
  %v380 = vunpack.c.h.b16 %v35
  %v381 = vunpack.c.l.b16 %v36
  %v382 = vunpack.c.h.b16 %v36
  %v383 = vunpack.c.l.b16 %v37
  %v384 = vunpack.c.h.b16 %v37
  %v385 = vunpack.c.l.b16 %v38
  %v386 = vunpack.c.h.b16 %v38
  %v387 = vunpack.c.l.b16 %v39
  %v388 = vunpack.c.h.b16 %v39
  %v389 = vunpack.c.l.b16 %v40
  %v390 = vunpack.c.h.b16 %v40
  %v391 = vunpack.c.l.b16 %v41
  %v392 = vunpack.c.h.b16 %v41
  %v393 = vunpack.c.l.b16 %v42
  %v394 = vunpack.c.h.b16 %v42
  %v395 = vpack.c.b16 %v339, %v331
  %v396 = vpack.c.b16 %v340, %v332
  %v397 = vpack.c.b16 %v341, %v333
  %v398 = vpack.c.b16 %v342, %v334
  %v399 = vpack.c.b16 %v343, %v335
  %v400 = vpack.c.b16 %v344, %v336
  %v401 = vpack.c.b16 %v345, %v337
  %v402 = vpack.c.b16 %v346, %v338
  %v403 = vpack.c.b16 %v355, %v347
  %v404 = vpack.c.b16 %v356, %v348
  %v405 = vpack.c.b16 %v357, %v349
  %v406 = vpack.c.b16 %v358, %v350
  %v407 = vpack.c.b16 %v359, %v351
  %v408 = vpack.c.b16 %v360, %v352
  %v409 = vpack.c.b16 %v361, %v353
  %v410 = vpack.c.b16 %v362, %v354
  %v411 = vpack.c.b16 %v371, %v363
  %v412 = vpack.c.b16 %v372, %v364
  %v413 = vpack.c.b16 %v373, %v365
  %v414 = vpack.c.b16 %v374, %v366
  %v415 = vpack.c.b16 %v375, %v367
  %v416 = vpack.c.b16 %v376, %v368
  %v417 = vpack.c.b16 %v377, %v369
  %v418 = vpack.c.b16 %v378, %v370
  %v419 = vpack.c.b16 %v387, %v379
  %v420 = vpack.c.b16 %v388, %v380
  %v421 = vpack.c.b16 %v389, %v381
  %v422 = vpack.c.b16 %v390, %v382
  %v423 = vpack.c.b16 %v391, %v383
  %v424 = vpack.c.b16 %v392, %v384
  %v425 = vpack.c.b16 %v393, %v385
  %v426 = vpack.c.b16 %v394, %v386
  %v715 = vunpack.c.l.b16 %v43
  %v716 = vunpack.c.h.b16 %v43
  %v717 = vunpack.c.l.b16 %v44
  %v718 = vunpack.c.h.b16 %v44
  %v719 = vunpack.c.l.b16 %v45
  %v720 = vunpack.c.h.b16 %v45
  %v721 = vunpack.c.l.b16 %v46
  %v722 = vunpack.c.h.b16 %v46
  %v723 = vunpack.c.l.b16 %v47
  %v724 = vunpack.c.h.b16 %v47
  %v725 = vunpack.c.l.b16 %v48
  %v726 = vunpack.c.h.b16 %v48
  %v727 = vunpack.c.l.b16 %v49
  %v728 = vunpack.c.h.b16 %v49
  %v729 = vunpack.c.l.b16 %v50
  %v730 = vunpack.c.h.b16 %v50
  %v731 = vunpack.c.l.b16 %v51
  %v732 = vunpack.c.h.b16 %v51
  %v733 = vunpack.c.l.b16 %v52
  %v734 = vunpack.c.h.b16 %v52
  %v735 = vunpack.c.l.b16 %v53
  %v736 = vunpack.c.h.b16 %v53
  %v737 = vunpack.c.l.b16 %v54
  %v738 = vunpack.c.h.b16 %v54
  %v739 = vunpack.c.l.b16 %v55
  %v740 = vunpack.c.h.b16 %v55
  %v741 = vunpack.c.l.b16 %v56
  %v742 = vunpack.c.h.b16 %v56
  %v743 = vunpack.c.l.b16 %v57
  %v744 = vunpack.c.h.b16 %v57
  %v745 = vunpack.c.l.b16 %v58
  %v746 = vunpack.c.h.b16 %v58
  %v747 = vunpack.c.l.b16 %v59
  %v748 = vunpack.c.h.b16 %v59
  %v749 = vunpack.c.l.b16 %v60
  %v750 = vunpack.c.h.b16 %v60
  %v751 = vunpack.c.l.b16 %v61
  %v752 = vunpack.c.h.b16 %v61
  %v753 = vunpack.c.l.b16 %v62
  %v754 = vunpack.c.h.b16 %v62
  %v755 = vunpack.c.l.b16 %v63
  %v756 = vunpack.c.h.b16 %v63
  %v757 = vunpack.c.l.b16 %v64
  %v758 = vunpack.c.h.b16 %v64
  %v759 = vunpack.c.l.b16 %v65
  %v760 = vunpack.c.h.b16 %v65
  %v761 = vunpack.c.l.b16 %v66
  %v762 = vunpack.c.h.b16 %v66
  %v763 = vunpack.c.l.b16 %v67
  %v764 = vunpack.c.h.b16 %v67
  %v765 = vunpack.c.l.b16 %v68
  %v766 = vunpack.c.h.b16 %v68
  %v767 = vunpack.c.l.b16 %v69
  %v768 = vunpack.c.h.b16 %v69
  %v769 = vunpack.c.l.b16 %v70
  %v770 = vunpack.c.h.b16 %v70
  %v771 = vunpack.c.l.b16 %v71
  %v772 = vunpack.c.h.b16 %v71
  %v773 = vunpack.c.l.b16 %v72
  %v774 = vunpack.c.h.b16 %v72
  %v775 = vunpack.c.l.b16 %v73
  %v776 = vunpack.c.h.b16 %v73
  %v777 = vunpack.c.l.b16 %v74
  %v778 = vunpack.c.h.b16 %v74
  %v779 = vunpack.c.l.b16 %v75
  %v780 = vunpack.c.h.b16 %v75
  %v781 = vunpack.c.l.b16 %v76
  %v782 = vunpack.c.h.b16 %v76
  %v783 = vunpack.c.l.b16 %v77
  %v784 = vunpack.c.h.b16 %v77
  %v785 = vunpack.c.l.b16 %v78
  %v786 = vunpack.c.h.b16 %v78
  %v787 = vunpack.c.l.b16 %v79
  %v788 = vunpack.c.h.b16 %v79
  %v789 = vunpack.c.l.b16 %v80
  %v790 = vunpack.c.h.b16 %v80
  %v791 = vunpack.c.l.b16 %v81
  %v792 = vunpack.c.h.b16 %v81
  %v793 = vunpack.c.l.b16 %v82
  %v794 = vunpack.c.h.b16 %v82
  %v795 = vunpack.c.l.b16 %v83
  %v796 = vunpack.c.h.b16 %v83
  %v797 = vunpack.c.l.b16 %v84
  %v798 = vunpack.c.h.b16 %v84
  %v799 = vunpack.c.l.b16 %v85
  %v800 = vunpack.c.h.b16 %v85
  %v801 = vunpack.c.l.b16 %v86
  %v802 = vunpack.c.h.b16 %v86
  %v803 = vunpack.c.l.b16 %v87
  %v804 = vunpack.c.h.b16 %v87
  %v805 = vunpack.c.l.b16 %v88
  %v806 = vunpack.c.h.b16 %v88
  %v807 = vunpack.c.l.b16 %v89
  %v808 = vunpack.c.h.b16 %v89
  %v809 = vunpack.c.l.b16 %v90
  %v810 = vunpack.c.h.b16 %v90
  %v811 = vunpack.c.l.b16 %v91
  %v812 = vunpack.c.h.b16 %v91
  %v813 = vunpack.c.l.b16 %v92
  %v814 = vunpack.c.h.b16 %v92
  %v815 = vunpack.c.l.b16 %v93
  %v816 = vunpack.c.h.b16 %v93
  %v817 = vunpack.c.l.b16 %v94
  %v818 = vunpack.c.h.b16 %v94
  %v819 = vunpack.c.l.b16 %v95
  %v820 = vunpack.c.h.b16 %v95
  %v821 = vunpack.c.l.b16 %v96
  %v822 = vunpack.c.h.b16 %v96
  %v823 = vunpack.c.l.b16 %v97
  %v824 = vunpack.c.h.b16 %v97
  %v825 = vunpack.c.l.b16 %v98
  %v826 = vunpack.c.h.b16 %v98
  %v827 = vunpack.c.l.b16 %v99
  %v828 = vunpack.c.h.b16 %v99
  %v829 = vunpack.c.l.b16 %v100
  %v830 = vunpack.c.h.b16 %v100
  %v831 = vunpack.c.l.b16 %v101
  %v832 = vunpack.c.h.b16 %v101
  %v833 = vunpack.c.l.b16 %v102
  %v834 = vunpack.c.h.b16 %v102
  %v835 = vunpack.c.l.b16 %v103
  %v836 = vunpack.c.h.b16 %v103
  %v837 = vunpack.c.l.b16 %v104
  %v838 = vunpack.c.h.b16 %v104
  %v839 = vunpack.c.l.b16 %v105
  %v840 = vunpack.c.h.b16 %v105
  %v841 = vunpack.c.l.b16 %v106
  %v842 = vunpack.c.h.b16 %v106
  %v843 = vunpack.c.l.b16 %v107
  %v844 = vunpack.c.h.b16 %v107
  %v845 = vunpack.c.l.b16 %v108
  %v846 = vunpack.c.h.b16 %v108
  %v847 = vunpack.c.l.b16 %v109
  %v848 = vunpack.c.h.b16 %v109
  %v849 = vunpack.c.l.b16 %v110
  %v850 = vunpack.c.h.b16 %v110
  %v851 = vunpack.c.l.b16 %v111
  %v852 = vunpack.c.h.b16 %v111
  %v853 = vunpack.c.l.b16 %v112
  %v854 = vunpack.c.h.b16 %v112
  %v855 = vunpack.c.l.b16 %v113
  %v856 = vunpack.c.h.b16 %v113
  %v857 = vunpack.c.l.b16 %v114
  %v858 = vunpack.c.h.b16 %v114
  %v859 = vunpack.c.l.b16 %v115
  %v860 = vunpack.c.h.b16 %v115
  %v861 = vunpack.c.l.b16 %v116
  %v862 = vunpack.c.h.b16 %v116
  %v863 = vunpack.c.l.b16 %v117
  %v864 = vunpack.c.h.b16 %v117
  %v865 = vunpack.c.l.b16 %v118
  %v866 = vunpack.c.h.b16 %v118
  %v867 = vunpack.c.l.b16 %v119
  %v868 = vunpack.c.h.b16 %v119
  %v869 = vunpack.c.l.b16 %v120
  %v870 = vunpack.c.h.b16 %v120
  %v871 = vunpack.c.l.b16 %v121
  %v872 = vunpack.c.h.b16 %v121
  %v873 = vunpack.c.l.b16 %v122
  %v874 = vunpack.c.h.b16 %v122
  %v875 = vunpack.c.l.b16 %v123
  %v876 = vunpack.c.h.b16 %v123
  %v877 = vunpack.c.l.b16 %v124
  %v878 = vunpack.c.h.b16 %v124
  %v879 = vunpack.c.l.b16 %v125
  %v880 = vunpack.c.h.b16 %v125
  %v881 = vunpack.c.l.b16 %v126
  %v882 = vunpack.c.h.b16 %v126
  %v883 = vunpack.c.l.b16 %v127
  %v884 = vunpack.c.h.b16 %v127
  %v885 = vunpack.c.l.b16 %v128
  %v886 = vunpack.c.h.b16 %v128
  %v887 = vunpack.c.l.b16 %v129
  %v888 = vunpack.c.h.b16 %v129
  %v889 = vunpack.c.l.b16 %v130
  %v890 = vunpack.c.h.b16 %v130
  %v891 = vunpack.c.l.b16 %v131
  %v892 = vunpack.c.h.b16 %v131
  %v893 = vunpack.c.l.b16 %v132
  %v894 = vunpack.c.h.b16 %v132
  %v895 = vunpack.c.l.b16 %v133
  %v896 = vunpack.c.h.b16 %v133
  %v897 = vunpack.c.l.b16 %v134
  %v898 = vunpack.c.h.b16 %v134
  %v899 = vunpack.c.l.b16 %v135
  %v900 = vunpack.c.h.b16 %v135
  %v901 = vunpack.c.l.b16 %v136
  %v902 = vunpack.c.h.b16 %v136
  %v903 = vunpack.c.l.b16 %v137
  %v904 = vunpack.c.h.b16 %v137
  %v905 = vunpack.c.l.b16 %v138
  %v906 = vunpack.c.h.b16 %v138
  %v907 = vunpack.c.l.b16 %v139
  %v908 = vunpack.c.h.b16 %v139
  %v909 = vunpack.c.l.b16 %v140
  %v910 = vunpack.c.h.b16 %v140
  %v911 = vunpack.c.l.b16 %v141
  %v912 = vunpack.c.h.b16 %v141
  %v913 = vunpack.c.l.b16 %v142
  %v914 = vunpack.c.h.b16 %v142
  %v915 = vunpack.c.l.b16 %v143
  %v916 = vunpack.c.h.b16 %v143
  %v917 = vunpack.c.l.b16 %v144
  %v918 = vunpack.c.h.b16 %v144
  %v919 = vunpack.c.l.b16 %v145
  %v920 = vunpack.c.h.b16 %v145
  %v921 = vunpack.c.l.b16 %v146
  %v922 = vunpack.c.h.b16 %v146
  %v923 = vunpack.c.l.b16 %v147
  %v924 = vunpack.c.h.b16 %v147
  %v925 = vunpack.c.l.b16 %v148
  %v926 = vunpack.c.h.b16 %v148
  %v927 = vunpack.c.l.b16 %v149
  %v928 = vunpack.c.h.b16 %v149
  %v929 = vunpack.c.l.b16 %v150
  %v930 = vunpack.c.h.b16 %v150
  %v931 = vunpack.c.l.b16 %v151
  %v932 = vunpack.c.h.b16 %v151
  %v933 = vunpack.c.l.b16 %v152
  %v934 = vunpack.c.h.b16 %v152
  %v935 = vunpack.c.l.b16 %v153
  %v936 = vunpack.c.h.b16 %v153
  %v937 = vunpack.c.l.b16 %v154
  %v938 = vunpack.c.h.b16 %v154
  %v939 = vunpack.c.l.b16 %v155
  %v940 = vunpack.c.h.b16 %v155
  %v941 = vunpack.c.l.b16 %v156
  %v942 = vunpack.c.h.b16 %v156
  %v943 = vunpack.c.l.b16 %v157
  %v944 = vunpack.c.h.b16 %v157
  %v945 = vunpack.c.l.b16 %v158
  %v946 = vunpack.c.h.b16 %v158
  %v947 = vunpack.c.l.b16 %v159
  %v948 = vunpack.c.h.b16 %v159
  %v949 = vunpack.c.l.b16 %v160
  %v950 = vunpack.c.h.b16 %v160
  %v951 = vunpack.c.l.b16 %v161
  %v952 = vunpack.c.h.b16 %v161
  %v953 = vunpack.c.l.b16 %v162
  %v954 = vunpack.c.h.b16 %v162
  %v955 = vunpack.c.l.b16 %v163
  %v956 = vunpack.c.h.b16 %v163
  %v957 = vunpack.c.l.b16 %v164
  %v958 = vunpack.c.h.b16 %v164
  %v959 = vunpack.c.l.b16 %v165
  %v960 = vunpack.c.h.b16 %v165
  %v961 = vunpack.c.l.b16 %v166
  %v962 = vunpack.c.h.b16 %v166
  %v963 = vunpack.c.l.b16 %v167
  %v964 = vunpack.c.h.b16 %v167
  %v965 = vunpack.c.l.b16 %v168
  %v966 = vunpack.c.h.b16 %v168
  %v967 = vunpack.c.l.b16 %v169
  %v968 = vunpack.c.h.b16 %v169
  %v969 = vunpack.c.l.b16 %v170
  %v970 = vunpack.c.h.b16 %v170
  %v971 = vunpack.c.l.b16 %v171
  %v972 = vunpack.c.h.b16 %v171
  %v973 = vunpack.c.l.b16 %v172
  %v974 = vunpack.c.h.b16 %v172
  %v975 = vunpack.c.l.b16 %v173
  %v976 = vunpack.c.h.b16 %v173
  %v977 = vunpack.c.l.b16 %v174
  %v978 = vunpack.c.h.b16 %v174
  %v979 = vunpack.c.l.b16 %v175
  %v980 = vunpack.c.h.b16 %v175
  %v981 = vunpack.c.l.b16 %v176
  %v982 = vunpack.c.h.b16 %v176
  %v983 = vunpack.c.l.b16 %v177
  %v984 = vunpack.c.h.b16 %v177
  %v985 = vunpack.c.l.b16 %v178
  %v986 = vunpack.c.h.b16 %v178
  %v987 = vunpack.c.l.b16 %v179
  %v988 = vunpack.c.h.b16 %v179
  %v989 = vunpack.c.l.b16 %v180
  %v990 = vunpack.c.h.b16 %v180
  %v991 = vunpack.c.l.b16 %v181
  %v992 = vunpack.c.h.b16 %v181
  %v993 = vunpack.c.l.b16 %v182
  %v994 = vunpack.c.h.b16 %v182
  %v995 = vunpack.c.l.b16 %v183
  %v996 = vunpack.c.h.b16 %v183
  %v997 = vunpack.c.l.b16 %v184
  %v998 = vunpack.c.h.b16 %v184
  %v999 = vunpack.c.l.b16 %v185
  %v1000 = vunpack.c.h.b16 %v185
  %v1001 = vunpack.c.l.b16 %v186
  %v1002 = vunpack.c.h.b16 %v186
  %v1003 = vunpack.c.l.b16 %v187
  %v1004 = vunpack.c.h.b16 %v187
  %v1005 = vunpack.c.l.b16 %v188
  %v1006 = vunpack.c.h.b16 %v188
  %v1007 = vunpack.c.l.b16 %v189
  %v1008 = vunpack.c.h.b16 %v189
  %v1009 = vunpack.c.l.b16 %v190
  %v1010 = vunpack.c.h.b16 %v190
  %v1011 = vunpack.c.l.b16 %v191
  %v1012 = vunpack.c.h.b16 %v191
  %v1013 = vunpack.c.l.b16 %v192
  %v1014 = vunpack.c.h.b16 %v192
  %v1015 = vunpack.c.l.b16 %v193
  %v1016 = vunpack.c.h.b16 %v193
  %v1017 = vunpack.c.l.b16 %v194
  %v1018 = vunpack.c.h.b16 %v194
  %v1019 = vunpack.c.l.b16 %v195
  %v1020 = vunpack.c.h.b16 %v195
  %v1021 = vunpack.c.l.b16 %v196
  %v1022 = vunpack.c.h.b16 %v196
  %v1023 = vunpack.c.l.b16 %v197
  %v1024 = vunpack.c.h.b16 %v197
  %v1025 = vunpack.c.l.b16 %v198
  %v1026 = vunpack.c.h.b16 %v198
  %v1027 = vunpack.c.l.b16 %v199
  %v1028 = vunpack.c.h.b16 %v199
  %v1029 = vunpack.c.l.b16 %v200
  %v1030 = vunpack.c.h.b16 %v200
  %v1031 = vunpack.c.l.b16 %v201
  %v1032 = vunpack.c.h.b16 %v201
  %v1033 = vunpack.c.l.b16 %v202
  %v1034 = vunpack.c.h.b16 %v202
  %v1035 = vunpack.c.l.b16 %v203
  %v1036 = vunpack.c.h.b16 %v203
  %v1037 = vunpack.c.l.b16 %v204
  %v1038 = vunpack.c.h.b16 %v204
  %v1039 = vunpack.c.l.b16 %v205
  %v1040 = vunpack.c.h.b16 %v205
  %v1041 = vunpack.c.l.b16 %v206
  %v1042 = vunpack.c.h.b16 %v206
  %v1043 = vunpack.c.l.b16 %v207
  %v1044 = vunpack.c.h.b16 %v207
  %v1045 = vunpack.c.l.b16 %v208
  %v1046 = vunpack.c.h.b16 %v208
  %v1047 = vunpack.c.l.b16 %v209
  %v1048 = vunpack.c.h.b16 %v209
  %v1049 = vunpack.c.l.b16 %v210
  %v1050 = vunpack.c.h.b16 %v210
  %v1051 = vunpack.c.l.b16 %v211
  %v1052 = vunpack.c.h.b16 %v211
  %v1053 = vunpack.c.l.b16 %v212
  %v1054 = vunpack.c.h.b16 %v212
  %v1055 = vunpack.c.l.b16 %v213
  %v1056 = vunpack.c.h.b16 %v213
  %v1057 = vunpack.c.l.b16 %v214
  %v1058 = vunpack.c.h.b16 %v214
  %v1059 = vunpack.c.l.b16 %v215
  %v1060 = vunpack.c.h.b16 %v215
  %v1061 = vunpack.c.l.b16 %v216
  %v1062 = vunpack.c.h.b16 %v216
  %v1063 = vunpack.c.l.b16 %v217
  %v1064 = vunpack.c.h.b16 %v217
  %v1065 = vunpack.c.l.b16 %v218
  %v1066 = vunpack.c.h.b16 %v218
  %v1067 = vunpack.c.l.b16 %v219
  %v1068 = vunpack.c.h.b16 %v219
  %v1069 = vunpack.c.l.b16 %v220
  %v1070 = vunpack.c.h.b16 %v220
  %v1071 = vunpack.c.l.b16 %v221
  %v1072 = vunpack.c.h.b16 %v221
  %v1073 = vunpack.c.l.b16 %v222
  %v1074 = vunpack.c.h.b16 %v222
  %v1075 = vunpack.c.l.b16 %v223
  %v1076 = vunpack.c.h.b16 %v223
  %v1077 = vunpack.c.l.b16 %v224
  %v1078 = vunpack.c.h.b16 %v224
  %v1079 = vunpack.c.l.b16 %v225
  %v1080 = vunpack.c.h.b16 %v225
  %v1081 = vunpack.c.l.b16 %v226
  %v1082 = vunpack.c.h.b16 %v226
  %v1083 = vunpack.c.l.b16 %v227
  %v1084 = vunpack.c.h.b16 %v227
  %v1085 = vunpack.c.l.b16 %v228
  %v1086 = vunpack.c.h.b16 %v228
  %v1087 = vunpack.c.l.b16 %v229
  %v1088 = vunpack.c.h.b16 %v229
  %v1089 = vunpack.c.l.b16 %v230
  %v1090 = vunpack.c.h.b16 %v230
  %v1091 = vunpack.c.l.b16 %v231
  %v1092 = vunpack.c.h.b16 %v231
  %v1093 = vunpack.c.l.b16 %v232
  %v1094 = vunpack.c.h.b16 %v232
  %v1095 = vunpack.c.l.b16 %v233
  %v1096 = vunpack.c.h.b16 %v233
  %v1097 = vunpack.c.l.b16 %v234
  %v1098 = vunpack.c.h.b16 %v234
  %v1099 = vunpack.c.l.b16 %v235
  %v1100 = vunpack.c.h.b16 %v235
  %v1101 = vunpack.c.l.b16 %v236
  %v1102 = vunpack.c.h.b16 %v236
  %v1103 = vunpack.c.l.b16 %v237
  %v1104 = vunpack.c.h.b16 %v237
  %v1105 = vunpack.c.l.b16 %v238
  %v1106 = vunpack.c.h.b16 %v238
  %v1107 = vunpack.c.l.b16 %v239
  %v1108 = vunpack.c.h.b16 %v239
  %v1109 = vunpack.c.l.b16 %v240
  %v1110 = vunpack.c.h.b16 %v240
  %v1111 = vunpack.c.l.b16 %v241
  %v1112 = vunpack.c.h.b16 %v241
  %v1113 = vunpack.c.l.b16 %v242
  %v1114 = vunpack.c.h.b16 %v242
  %v1115 = vunpack.c.l.b16 %v243
  %v1116 = vunpack.c.h.b16 %v243
  %v1117 = vunpack.c.l.b16 %v244
  %v1118 = vunpack.c.h.b16 %v244
  %v1119 = vunpack.c.l.b16 %v245
  %v1120 = vunpack.c.h.b16 %v245
  %v1121 = vunpack.c.l.b16 %v246
  %v1122 = vunpack.c.h.b16 %v246
  %v1123 = vunpack.c.l.b16 %v247
  %v1124 = vunpack.c.h.b16 %v247
  %v1125 = vunpack.c.l.b16 %v248
  %v1126 = vunpack.c.h.b16 %v248
  %v1127 = vunpack.c.l.b16 %v249
  %v1128 = vunpack.c.h.b16 %v249
  %v1129 = vunpack.c.l.b16 %v250
  %v1130 = vunpack.c.h.b16 %v250
  %v1131 = vunpack.c.l.b16 %v251
  %v1132 = vunpack.c.h.b16 %v251
  %v1133 = vunpack.c.l.b16 %v252
  %v1134 = vunpack.c.h.b16 %v252
  %v1135 = vunpack.c.l.b16 %v253
  %v1136 = vunpack.c.h.b16 %v253
  %v1137 = vunpack.c.l.b16 %v254
  %v1138 = vunpack.c.h.b16 %v254
  %v1139 = vunpack.c.l.b16 %v255
  %v1140 = vunpack.c.h.b16 %v255
  %v1141 = vunpack.c.l.b16 %v256
  %v1142 = vunpack.c.h.b16 %v256
  %v1143 = vunpack.c.l.b16 %v257
  %v1144 = vunpack.c.h.b16 %v257
  %v1145 = vunpack.c.l.b16 %v258
  %v1146 = vunpack.c.h.b16 %v258
  %v1147 = vunpack.c.l.b16 %v259
  %v1148 = vunpack.c.h.b16 %v259
  %v1149 = vunpack.c.l.b16 %v260
  %v1150 = vunpack.c.h.b16 %v260
  %v1151 = vunpack.c.l.b16 %v261
  %v1152 = vunpack.c.h.b16 %v261
  %v1153 = vunpack.c.l.b16 %v262
  %v1154 = vunpack.c.h.b16 %v262
  %v1155 = vunpack.c.l.b16 %v263
  %v1156 = vunpack.c.h.b16 %v263
  %v1157 = vunpack.c.l.b16 %v264
  %v1158 = vunpack.c.h.b16 %v264
  %v1159 = vunpack.c.l.b16 %v265
  %v1160 = vunpack.c.h.b16 %v265
  %v1161 = vunpack.c.l.b16 %v266
  %v1162 = vunpack.c.h.b16 %v266
  %v1163 = vunpack.c.l.b16 %v267
  %v1164 = vunpack.c.h.b16 %v267
  %v1165 = vunpack.c.l.b16 %v268
  %v1166 = vunpack.c.h.b16 %v268
  %v1167 = vunpack.c.l.b16 %v269
  %v1168 = vunpack.c.h.b16 %v269
  %v1169 = vunpack.c.l.b16 %v270
  %v1170 = vunpack.c.h.b16 %v270
  %v1171 = vunpack.c.l.b16 %v271
  %v1172 = vunpack.c.h.b16 %v271
  %v1173 = vunpack.c.l.b16 %v272
  %v1174 = vunpack.c.h.b16 %v272
  %v1175 = vunpack.c.l.b16 %v273
  %v1176 = vunpack.c.h.b16 %v273
  %v1177 = vunpack.c.l.b16 %v274
  %v1178 = vunpack.c.h.b16 %v274
  %v1179 = vunpack.c.l.b16 %v275
  %v1180 = vunpack.c.h.b16 %v275
  %v1181 = vunpack.c.l.b16 %v276
  %v1182 = vunpack.c.h.b16 %v276
  %v1183 = vunpack.c.l.b16 %v277
  %v1184 = vunpack.c.h.b16 %v277
  %v1185 = vunpack.c.l.b16 %v278
  %v1186 = vunpack.c.h.b16 %v278
  %v1187 = vunpack.c.l.b16 %v279
  %v1188 = vunpack.c.h.b16 %v279
  %v1189 = vunpack.c.l.b16 %v280
  %v1190 = vunpack.c.h.b16 %v280
  %v1191 = vunpack.c.l.b16 %v281
  %v1192 = vunpack.c.h.b16 %v281
  %v1193 = vunpack.c.l.b16 %v282
  %v1194 = vunpack.c.h.b16 %v282
  %v1195 = vunpack.c.l.b16 %v283
  %v1196 = vunpack.c.h.b16 %v283
  %v1197 = vunpack.c.l.b16 %v284
  %v1198 = vunpack.c.h.b16 %v284
  %v1199 = vunpack.c.l.b16 %v285
  %v1200 = vunpack.c.h.b16 %v285
  %v1201 = vunpack.c.l.b16 %v286
  %v1202 = vunpack.c.h.b16 %v286
  %v1203 = vunpack.c.l.b16 %v287
  %v1204 = vunpack.c.h.b16 %v287
  %v1205 = vunpack.c.l.b16 %v288
  %v1206 = vunpack.c.h.b16 %v288
  %v1207 = vunpack.c.l.b16 %v289
  %v1208 = vunpack.c.h.b16 %v289
  %v1209 = vunpack.c.l.b16 %v290
  %v1210 = vunpack.c.h.b16 %v290
  %v1211 = vunpack.c.l.b16 %v291
  %v1212 = vunpack.c.h.b16 %v291
  %v1213 = vunpack.c.l.b16 %v292
  %v1214 = vunpack.c.h.b16 %v292
  %v1215 = vunpack.c.l.b16 %v293
  %v1216 = vunpack.c.h.b16 %v293
  %v1217 = vunpack.c.l.b16 %v294
  %v1218 = vunpack.c.h.b16 %v294
  %v1219 = vunpack.c.l.b16 %v295
  %v1220 = vunpack.c.h.b16 %v295
  %v1221 = vunpack.c.l.b16 %v296
  %v1222 = vunpack.c.h.b16 %v296
  %v1223 = vunpack.c.l.b16 %v297
  %v1224 = vunpack.c.h.b16 %v297
  %v1225 = vunpack.c.l.b16 %v298
  %v1226 = vunpack.c.h.b16 %v298
  %v1227 = vpack.c.b16 %v719, %v715
  %v1228 = vpack.c.b16 %v720, %v716
  %v1229 = vpack.c.b16 %v721, %v717
  %v1230 = vpack.c.b16 %v722, %v718
  %v1231 = vpack.c.b16 %v727, %v723
  %v1232 = vpack.c.b16 %v728, %v724
  %v1233 = vpack.c.b16 %v729, %v725
  %v1234 = vpack.c.b16 %v730, %v726
  %v1235 = vpack.c.b16 %v735, %v731
  %v1236 = vpack.c.b16 %v736, %v732
  %v1237 = vpack.c.b16 %v737, %v733
  %v1238 = vpack.c.b16 %v738, %v734
  %v1239 = vpack.c.b16 %v743, %v739
  %v1240 = vpack.c.b16 %v744, %v740
  %v1241 = vpack.c.b16 %v745, %v741
  %v1242 = vpack.c.b16 %v746, %v742
  %v1243 = vpack.c.b16 %v751, %v747
  %v1244 = vpack.c.b16 %v752, %v748
  %v1245 = vpack.c.b16 %v753, %v749
  %v1246 = vpack.c.b16 %v754, %v750
  %v1247 = vpack.c.b16 %v759, %v755
  %v1248 = vpack.c.b16 %v760, %v756
  %v1249 = vpack.c.b16 %v761, %v757
  %v1250 = vpack.c.b16 %v762, %v758
  %v1251 = vpack.c.b16 %v767, %v763
  %v1252 = vpack.c.b16 %v768, %v764
  %v1253 = vpack.c.b16 %v769, %v765
  %v1254 = vpack.c.b16 %v770, %v766
  %v1255 = vpack.c.b16 %v775, %v771
  %v1256 = vpack.c.b16 %v776, %v772
  %v1257 = vpack.c.b16 %v777, %v773
  %v1258 = vpack.c.b16 %v778, %v774
  %v1259 = vpack.c.b16 %v783, %v779
  %v1260 = vpack.c.b16 %v784, %v780
  %v1261 = vpack.c.b16 %v785, %v781
  %v1262 = vpack.c.b16 %v786, %v782
  %v1263 = vpack.c.b16 %v791, %v787
  %v1264 = vpack.c.b16 %v792, %v788
  %v1265 = vpack.c.b16 %v793, %v789
  %v1266 = vpack.c.b16 %v794, %v790
  %v1267 = vpack.c.b16 %v799, %v795
  %v1268 = vpack.c.b16 %v800, %v796
  %v1269 = vpack.c.b16 %v801, %v797
  %v1270 = vpack.c.b16 %v802, %v798
  %v1271 = vpack.c.b16 %v807, %v803
  %v1272 = vpack.c.b16 %v808, %v804
  %v1273 = vpack.c.b16 %v809, %v805
  %v1274 = vpack.c.b16 %v810, %v806
  %v1275 = vpack.c.b16 %v815, %v811
  %v1276 = vpack.c.b16 %v816, %v812
  %v1277 = vpack.c.b16 %v817, %v813
  %v1278 = vpack.c.b16 %v818, %v814
  %v1279 = vpack.c.b16 %v823, %v819
  %v1280 = vpack.c.b16 %v824, %v820
  %v1281 = vpack.c.b16 %v825, %v821
  %v1282 = vpack.c.b16 %v826, %v822
  %v1283 = vpack.c.b16 %v831, %v827
  %v1284 = vpack.c.b16 %v832, %v828
  %v1285 = vpack.c.b16 %v833, %v829
  %v1286 = vpack.c.b16 %v834, %v830
  %v1287 = vpack.c.b16 %v839, %v835
  %v1288 = vpack.c.b16 %v840, %v836
  %v1289 = vpack.c.b16 %v841, %v837
  %v1290 = vpack.c.b16 %v842, %v838
  %v1291 = vpack.c.b16 %v847, %v843
  %v1292 = vpack.c.b16 %v848, %v844
  %v1293 = vpack.c.b16 %v849, %v845
  %v1294 = vpack.c.b16 %v850, %v846
  %v1295 = vpack.c.b16 %v855, %v851
  %v1296 = vpack.c.b16 %v856, %v852
  %v1297 = vpack.c.b16 %v857, %v853
  %v1298 = vpack.c.b16 %v858, %v854
  %v1299 = vpack.c.b16 %v863, %v859
  %v1300 = vpack.c.b16 %v864, %v860
  %v1301 = vpack.c.b16 %v865, %v861
  %v1302 = vpack.c.b16 %v866, %v862
  %v1303 = vpack.c.b16 %v871, %v867
  %v1304 = vpack.c.b16 %v872, %v868
  %v1305 = vpack.c.b16 %v873, %v869
  %v1306 = vpack.c.b16 %v874, %v870
  %v1307 = vpack.c.b16 %v879, %v875
  %v1308 = vpack.c.b16 %v880, %v876
  %v1309 = vpack.c.b16 %v881, %v877
  %v1310 = vpack.c.b16 %v882, %v878
  %v1311 = vpack.c.b16 %v887, %v883
  %v1312 = vpack.c.b16 %v888, %v884
  %v1313 = vpack.c.b16 %v889, %v885
  %v1314 = vpack.c.b16 %v890, %v886
  %v1315 = vpack.c.b16 %v895, %v891
  %v1316 = vpack.c.b16 %v896, %v892
  %v1317 = vpack.c.b16 %v897, %v893
  %v1318 = vpack.c.b16 %v898, %v894
  %v1319 = vpack.c.b16 %v903, %v899
  %v1320 = vpack.c.b16 %v904, %v900
  %v1321 = vpack.c.b16 %v905, %v901
  %v1322 = vpack.c.b16 %v906, %v902
  %v1323 = vpack.c.b16 %v911, %v907
  %v1324 = vpack.c.b16 %v912, %v908
  %v1325 = vpack.c.b16 %v913, %v909
  %v1326 = vpack.c.b16 %v914, %v910
  %v1327 = vpack.c.b16 %v919, %v915
  %v1328 = vpack.c.b16 %v920, %v916
  %v1329 = vpack.c.b16 %v921, %v917
  %v1330 = vpack.c.b16 %v922, %v918
  %v1331 = vpack.c.b16 %v927, %v923
  %v1332 = vpack.c.b16 %v928, %v924
  %v1333 = vpack.c.b16 %v929, %v925
  %v1334 = vpack.c.b16 %v930, %v926
  %v1335 = vpack.c.b16 %v935, %v931
  %v1336 = vpack.c.b16 %v936, %v932
  %v1337 = vpack.c.b16 %v937, %v933
  %v1338 = vpack.c.b16 %v938, %v934
  %v1339 = vpack.c.b16 %v943, %v939
  %v1340 = vpack.c.b16 %v944, %v940
  %v1341 = vpack.c.b16 %v945, %v941
  %v1342 = vpack.c.b16 %v946, %v942
  %v1343 = vpack.c.b16 %v951, %v947
  %v1344 = vpack.c.b16 %v952, %v948
  %v1345 = vpack.c.b16 %v953, %v949
  %v1346 = vpack.c.b16 %v954, %v950
  %v1347 = vpack.c.b16 %v959, %v955
  %v1348 = vpack.c.b16 %v960, %v956
  %v1349 = vpack.c.b16 %v961, %v957
  %v1350 = vpack.c.b16 %v962, %v958
  %v1351 = vpack.c.b16 %v967, %v963
  %v1352 = vpack.c.b16 %v968, %v964
  %v1353 = vpack.c.b16 %v969, %v965
  %v1354 = vpack.c.b16 %v970, %v966
  %v1355 = vpack.c.b16 %v975, %v971
  %v1356 = vpack.c.b16 %v976, %v972
  %v1357 = vpack.c.b16 %v977, %v973
  %v1358 = vpack.c.b16 %v978, %v974
  %v1359 = vpack.c.b16 %v983, %v979
  %v1360 = vpack.c.b16 %v984, %v980
  %v1361 = vpack.c.b16 %v985, %v981
  %v1362 = vpack.c.b16 %v986, %v982
  %v1363 = vpack.c.b16 %v991, %v987
  %v1364 = vpack.c.b16 %v992, %v988
  %v1365 = vpack.c.b16 %v993, %v989
  %v1366 = vpack.c.b16 %v994, %v990
  %v1367 = vpack.c.b16 %v999, %v995
  %v1368 = vpack.c.b16 %v1000, %v996
  %v1369 = vpack.c.b16 %v1001, %v997
  %v1370 = vpack.c.b16 %v1002, %v998
  %v1371 = vpack.c.b16 %v1007, %v1003
  %v1372 = vpack.c.b16 %v1008, %v1004
  %v1373 = vpack.c.b16 %v1009, %v1005
  %v1374 = vpack.c.b16 %v1010, %v1006
  %v1375 = vpack.c.b16 %v1015, %v1011
  %v1376 = vpack.c.b16 %v1016, %v1012
  %v1377 = vpack.c.b16 %v1017, %v1013
  %v1378 = vpack.c.b16 %v1018, %v1014
  %v1379 = vpack.c.b16 %v1023, %v1019
  %v1380 = vpack.c.b16 %v1024, %v1020
  %v1381 = vpack.c.b16 %v1025, %v1021
  %v1382 = vpack.c.b16 %v1026, %v1022
  %v1383 = vpack.c.b16 %v1031, %v1027
  %v1384 = vpack.c.b16 %v1032, %v1028
  %v1385 = vpack.c.b16 %v1033, %v1029
  %v1386 = vpack.c.b16 %v1034, %v1030
  %v1387 = vpack.c.b16 %v1039, %v1035
  %v1388 = vpack.c.b16 %v1040, %v1036
  %v1389 = vpack.c.b16 %v1041, %v1037
  %v1390 = vpack.c.b16 %v1042, %v1038
  %v1391 = vpack.c.b16 %v1047, %v1043
  %v1392 = vpack.c.b16 %v1048, %v1044
  %v1393 = vpack.c.b16 %v1049, %v1045
  %v1394 = vpack.c.b16 %v1050, %v1046
  %v1395 = vpack.c.b16 %v1055, %v1051
  %v1396 = vpack.c.b16 %v1056, %v1052
  %v1397 = vpack.c.b16 %v1057, %v1053
  %v1398 = vpack.c.b16 %v1058, %v1054
  %v1399 = vpack.c.b16 %v1063, %v1059
  %v1400 = vpack.c.b16 %v1064, %v1060
  %v1401 = vpack.c.b16 %v1065, %v1061
  %v1402 = vpack.c.b16 %v1066, %v1062
  %v1403 = vpack.c.b16 %v1071, %v1067
  %v1404 = vpack.c.b16 %v1072, %v1068
  %v1405 = vpack.c.b16 %v1073, %v1069
  %v1406 = vpack.c.b16 %v1074, %v1070
  %v1407 = vpack.c.b16 %v1079, %v1075
  %v1408 = vpack.c.b16 %v1080, %v1076
  %v1409 = vpack.c.b16 %v1081, %v1077
  %v1410 = vpack.c.b16 %v1082, %v1078
  %v1411 = vpack.c.b16 %v1087, %v1083
  %v1412 = vpack.c.b16 %v1088, %v1084
  %v1413 = vpack.c.b16 %v1089, %v1085
  %v1414 = vpack.c.b16 %v1090, %v1086
  %v1415 = vpack.c.b16 %v1095, %v1091
  %v1416 = vpack.c.b16 %v1096, %v1092
  %v1417 = vpack.c.b16 %v1097, %v1093
  %v1418 = vpack.c.b16 %v1098, %v1094
  %v1419 = vpack.c.b16 %v1103, %v1099
  %v1420 = vpack.c.b16 %v1104, %v1100
  %v1421 = vpack.c.b16 %v1105, %v1101
  %v1422 = vpack.c.b16 %v1106, %v1102
  %v1423 = vpack.c.b16 %v1111, %v1107
  %v1424 = vpack.c.b16 %v1112, %v1108
  %v1425 = vpack.c.b16 %v1113, %v1109
  %v1426 = vpack.c.b16 %v1114, %v1110
  %v1427 = vpack.c.b16 %v1119, %v1115
  %v1428 = vpack.c.b16 %v1120, %v1116
  %v1429 = vpack.c.b16 %v1121, %v1117
  %v1430 = vpack.c.b16 %v1122, %v1118
  %v1431 = vpack.c.b16 %v1127, %v1123
  %v1432 = vpack.c.b16 %v1128, %v1124
  %v1433 = vpack.c.b16 %v1129, %v1125
  %v1434 = vpack.c.b16 %v1130, %v1126
  %v1435 = vpack.c.b16 %v1135, %v1131
  %v1436 = vpack.c.b16 %v1136, %v1132
  %v1437 = vpack.c.b16 %v1137, %v1133
  %v1438 = vpack.c.b16 %v1138, %v1134
  %v1439 = vpack.c.b16 %v1143, %v1139
  %v1440 = vpack.c.b16 %v1144, %v1140
  %v1441 = vpack.c.b16 %v1145, %v1141
  %v1442 = vpack.c.b16 %v1146, %v1142
  %v1443 = vpack.c.b16 %v1151, %v1147
  %v1444 = vpack.c.b16 %v1152, %v1148
  %v1445 = vpack.c.b16 %v1153, %v1149
  %v1446 = vpack.c.b16 %v1154, %v1150
  %v1447 = vpack.c.b16 %v1159, %v1155
  %v1448 = vpack.c.b16 %v1160, %v1156
  %v1449 = vpack.c.b16 %v1161, %v1157
  %v1450 = vpack.c.b16 %v1162, %v1158
  %v1451 = vpack.c.b16 %v1167, %v1163
  %v1452 = vpack.c.b16 %v1168, %v1164
  %v1453 = vpack.c.b16 %v1169, %v1165
  %v1454 = vpack.c.b16 %v1170, %v1166
  %v1455 = vpack.c.b16 %v1175, %v1171
  %v1456 = vpack.c.b16 %v1176, %v1172
  %v1457 = vpack.c.b16 %v1177, %v1173
  %v1458 = vpack.c.b16 %v1178, %v1174
  %v1459 = vpack.c.b16 %v1183, %v1179
  %v1460 = vpack.c.b16 %v1184, %v1180
  %v1461 = vpack.c.b16 %v1185, %v1181
  %v1462 = vpack.c.b16 %v1186, %v1182
  %v1463 = vpack.c.b16 %v1191, %v1187
  %v1464 = vpack.c.b16 %v1192, %v1188
  %v1465 = vpack.c.b16 %v1193, %v1189
  %v1466 = vpack.c.b16 %v1194, %v1190
  %v1467 = vpack.c.b16 %v1199, %v1195
  %v1468 = vpack.c.b16 %v1200, %v1196
  %v1469 = vpack.c.b16 %v1201, %v1197
  %v1470 = vpack.c.b16 %v1202, %v1198
  %v1471 = vpack.c.b16 %v1207, %v1203
  %v1472 = vpack.c.b16 %v1208, %v1204
  %v1473 = vpack.c.b16 %v1209, %v1205
  %v1474 = vpack.c.b16 %v1210, %v1206
  %v1475 = vpack.c.b16 %v1215, %v1211
  %v1476 = vpack.c.b16 %v1216, %v1212
  %v1477 = vpack.c.b16 %v1217, %v1213
  %v1478 = vpack.c.b16 %v1218, %v1214
  %v1479 = vpack.c.b16 %v1223, %v1219
  %v1480 = vpack.c.b16 %v1224, %v1220
  %v1481 = vpack.c.b16 %v1225, %v1221
  %v1482 = vpack.c.b16 %v1226, %v1222
  %1739 = vmatpush.bf16.msra.mxu0 %v1255
  %1740 = vmatpush.bf16.msra.mxu0 %v1251
  %1741 = vmatpush.bf16.msra.mxu0 %v1247
  %1742 = vmatpush.bf16.msra.mxu0 %v1243
  %1743 = vmatpush.bf16.msra.mxu0 %v1239
  %1744 = vmatpush.bf16.msra.mxu0 %v1235
  %1745 = vmatpush.bf16.msra.mxu0 %v1231
  %1746 = vmatpush.bf16.msra.mxu0 %v1227
  %1747 = vmatmul.bf16.gmra.mxu0 %v395
  %v1748 = vpop.f32.mrf.mxu0
  %v1749 = vadd.f32 0.0, %v1748
  %v1750 = vpop.f32.mrf.mxu0
  %v1751 = vadd.f32 0.0, %v1750
  %1752 = vmatmul.bf16.gmra.mxu0 %v403
  %v1753 = vpop.f32.mrf.mxu0
  %v1754 = vadd.f32 0.0, %v1753
  %v1755 = vpop.f32.mrf.mxu0
  %v1756 = vadd.f32 0.0, %v1755
  %1757 = vmatmul.bf16.gmra.mxu0 %v411
  %v1758 = vpop.f32.mrf.mxu0
  %v1759 = vadd.f32 0.0, %v1758
  %v1760 = vpop.f32.mrf.mxu0
  %v1761 = vadd.f32 0.0, %v1760
  %1762 = vmatmul.bf16.gmra.mxu0 %v419
  %v1763 = vpop.f32.mrf.mxu0
  %v1764 = vadd.f32 0.0, %v1763
  %v1765 = vpop.f32.mrf.mxu0
  %v1766 = vadd.f32 0.0, %v1765
  %1767 = vdwg.mxu0
  %1768 = vmatpush.bf16.msra.mxu0 %v1287
  %1769 = vmatpush.bf16.msra.mxu0 %v1283
  %1770 = vmatpush.bf16.msra.mxu0 %v1279
  %1771 = vmatpush.bf16.msra.mxu0 %v1275
  %1772 = vmatpush.bf16.msra.mxu0 %v1271
  %1773 = vmatpush.bf16.msra.mxu0 %v1267
  %1774 = vmatpush.bf16.msra.mxu0 %v1263
  %1775 = vmatpush.bf16.msra.mxu0 %v1259
  %1776 = vmatmul.bf16.gmra.mxu0 %v396
  %v1777 = vpop.f32.mrf.mxu0
  %v1778 = vadd.f32 %v1749, %v1777
  %v1779 = vpop.f32.mrf.mxu0
  %v1780 = vadd.f32 %v1751, %v1779
  %1781 = vmatmul.bf16.gmra.mxu0 %v404
  %v1782 = vpop.f32.mrf.mxu0
  %v1783 = vadd.f32 %v1754, %v1782
  %v1784 = vpop.f32.mrf.mxu0
  %v1785 = vadd.f32 %v1756, %v1784
  %1786 = vmatmul.bf16.gmra.mxu0 %v412
  %v1787 = vpop.f32.mrf.mxu0
  %v1788 = vadd.f32 %v1759, %v1787
  %v1789 = vpop.f32.mrf.mxu0
  %v1790 = vadd.f32 %v1761, %v1789
  %1791 = vmatmul.bf16.gmra.mxu0 %v420
  %v1792 = vpop.f32.mrf.mxu0
  %v1793 = vadd.f32 %v1764, %v1792
  %v1794 = vpop.f32.mrf.mxu0
  %v1795 = vadd.f32 %v1766, %v1794
  %1796 = vdwg.mxu0
  %1797 = vmatpush.bf16.msra.mxu0 %v1319
  %1798 = vmatpush.bf16.msra.mxu0 %v1315
  %1799 = vmatpush.bf16.msra.mxu0 %v1311
  %1800 = vmatpush.bf16.msra.mxu0 %v1307
  %1801 = vmatpush.bf16.msra.mxu0 %v1303
  %1802 = vmatpush.bf16.msra.mxu0 %v1299
  %1803 = vmatpush.bf16.msra.mxu0 %v1295
  %1804 = vmatpush.bf16.msra.mxu0 %v1291
  %1805 = vmatmul.bf16.gmra.mxu0 %v397
  %v1806 = vpop.f32.mrf.mxu0
  %v1807 = vadd.f32 %v1778, %v1806
  %v1808 = vpop.f32.mrf.mxu0
  %v1809 = vadd.f32 %v1780, %v1808
  %1810 = vmatmul.bf16.gmra.mxu0 %v405
  %v1811 = vpop.f32.mrf.mxu0
  %v1812 = vadd.f32 %v1783, %v1811
  %v1813 = vpop.f32.mrf.mxu0
  %v1814 = vadd.f32 %v1785, %v1813
  %1815 = vmatmul.bf16.gmra.mxu0 %v413
  %v1816 = vpop.f32.mrf.mxu0
  %v1817 = vadd.f32 %v1788, %v1816
  %v1818 = vpop.f32.mrf.mxu0
  %v1819 = vadd.f32 %v1790, %v1818
  %1820 = vmatmul.bf16.gmra.mxu0 %v421
  %v1821 = vpop.f32.mrf.mxu0
  %v1822 = vadd.f32 %v1793, %v1821
  %v1823 = vpop.f32.mrf.mxu0
  %v1824 = vadd.f32 %v1795, %v1823
  %1825 = vdwg.mxu0
  %1826 = vmatpush.bf16.msra.mxu0 %v1351
  %1827 = vmatpush.bf16.msra.mxu0 %v1347
  %1828 = vmatpush.bf16.msra.mxu0 %v1343
  %1829 = vmatpush.bf16.msra.mxu0 %v1339
  %1830 = vmatpush.bf16.msra.mxu0 %v1335
  %1831 = vmatpush.bf16.msra.mxu0 %v1331
  %1832 = vmatpush.bf16.msra.mxu0 %v1327
  %1833 = vmatpush.bf16.msra.mxu0 %v1323
  %1834 = vmatmul.bf16.gmra.mxu0 %v398
  %v1835 = vpop.f32.mrf.mxu0
  %v1836 = vadd.f32 %v1807, %v1835
  %v1837 = vpop.f32.mrf.mxu0
  %v1838 = vadd.f32 %v1809, %v1837
  %1839 = vmatmul.bf16.gmra.mxu0 %v406
  %v1840 = vpop.f32.mrf.mxu0
  %v1841 = vadd.f32 %v1812, %v1840
  %v1842 = vpop.f32.mrf.mxu0
  %v1843 = vadd.f32 %v1814, %v1842
  %1844 = vmatmul.bf16.gmra.mxu0 %v414
  %v1845 = vpop.f32.mrf.mxu0
  %v1846 = vadd.f32 %v1817, %v1845
  %v1847 = vpop.f32.mrf.mxu0
  %v1848 = vadd.f32 %v1819, %v1847
  %1849 = vmatmul.bf16.gmra.mxu0 %v422
  %v1850 = vpop.f32.mrf.mxu0
  %v1851 = vadd.f32 %v1822, %v1850
  %v1852 = vpop.f32.mrf.mxu0
  %v1853 = vadd.f32 %v1824, %v1852
  %1854 = vdwg.mxu0
  %1855 = vmatpush.bf16.msra.mxu0 %v1383
  %1856 = vmatpush.bf16.msra.mxu0 %v1379
  %1857 = vmatpush.bf16.msra.mxu0 %v1375
  %1858 = vmatpush.bf16.msra.mxu0 %v1371
  %1859 = vmatpush.bf16.msra.mxu0 %v1367
  %1860 = vmatpush.bf16.msra.mxu0 %v1363
  %1861 = vmatpush.bf16.msra.mxu0 %v1359
  %1862 = vmatpush.bf16.msra.mxu0 %v1355
  %1863 = vmatmul.bf16.gmra.mxu0 %v399
  %v1864 = vpop.f32.mrf.mxu0
  %v1865 = vadd.f32 %v1836, %v1864
  %v1866 = vpop.f32.mrf.mxu0
  %v1867 = vadd.f32 %v1838, %v1866
  %1868 = vmatmul.bf16.gmra.mxu0 %v407
  %v1869 = vpop.f32.mrf.mxu0
  %v1870 = vadd.f32 %v1841, %v1869
  %v1871 = vpop.f32.mrf.mxu0
  %v1872 = vadd.f32 %v1843, %v1871
  %1873 = vmatmul.bf16.gmra.mxu0 %v415
  %v1874 = vpop.f32.mrf.mxu0
  %v1875 = vadd.f32 %v1846, %v1874
  %v1876 = vpop.f32.mrf.mxu0
  %v1877 = vadd.f32 %v1848, %v1876
  %1878 = vmatmul.bf16.gmra.mxu0 %v423
  %v1879 = vpop.f32.mrf.mxu0
  %v1880 = vadd.f32 %v1851, %v1879
  %v1881 = vpop.f32.mrf.mxu0
  %v1882 = vadd.f32 %v1853, %v1881
  %1883 = vdwg.mxu0
  %1884 = vmatpush.bf16.msra.mxu0 %v1415
  %1885 = vmatpush.bf16.msra.mxu0 %v1411
  %1886 = vmatpush.bf16.msra.mxu0 %v1407
  %1887 = vmatpush.bf16.msra.mxu0 %v1403
  %1888 = vmatpush.bf16.msra.mxu0 %v1399
  %1889 = vmatpush.bf16.msra.mxu0 %v1395
  %1890 = vmatpush.bf16.msra.mxu0 %v1391
  %1891 = vmatpush.bf16.msra.mxu0 %v1387
  %1892 = vmatmul.bf16.gmra.mxu0 %v400
  %v1893 = vpop.f32.mrf.mxu0
  %v1894 = vadd.f32 %v1865, %v1893
  %v1895 = vpop.f32.mrf.mxu0
  %v1896 = vadd.f32 %v1867, %v1895
  %1897 = vmatmul.bf16.gmra.mxu0 %v408
  %v1898 = vpop.f32.mrf.mxu0
  %v1899 = vadd.f32 %v1870, %v1898
  %v1900 = vpop.f32.mrf.mxu0
  %v1901 = vadd.f32 %v1872, %v1900
  %1902 = vmatmul.bf16.gmra.mxu0 %v416
  %v1903 = vpop.f32.mrf.mxu0
  %v1904 = vadd.f32 %v1875, %v1903
  %v1905 = vpop.f32.mrf.mxu0
  %v1906 = vadd.f32 %v1877, %v1905
  %1907 = vmatmul.bf16.gmra.mxu0 %v424
  %v1908 = vpop.f32.mrf.mxu0
  %v1909 = vadd.f32 %v1880, %v1908
  %v1910 = vpop.f32.mrf.mxu0
  %v1911 = vadd.f32 %v1882, %v1910
  %1912 = vdwg.mxu0
  %1913 = vmatpush.bf16.msra.mxu0 %v1447
  %1914 = vmatpush.bf16.msra.mxu0 %v1443
  %1915 = vmatpush.bf16.msra.mxu0 %v1439
  %1916 = vmatpush.bf16.msra.mxu0 %v1435
  %1917 = vmatpush.bf16.msra.mxu0 %v1431
  %1918 = vmatpush.bf16.msra.mxu0 %v1427
  %1919 = vmatpush.bf16.msra.mxu0 %v1423
  %1920 = vmatpush.bf16.msra.mxu0 %v1419
  %1921 = vmatmul.bf16.gmra.mxu0 %v401
  %v1922 = vpop.f32.mrf.mxu0
  %v1923 = vadd.f32 %v1894, %v1922
  %v1924 = vpop.f32.mrf.mxu0
  %v1925 = vadd.f32 %v1896, %v1924
  %1926 = vmatmul.bf16.gmra.mxu0 %v409
  %v1927 = vpop.f32.mrf.mxu0
  %v1928 = vadd.f32 %v1899, %v1927
  %v1929 = vpop.f32.mrf.mxu0
  %v1930 = vadd.f32 %v1901, %v1929
  %1931 = vmatmul.bf16.gmra.mxu0 %v417
  %v1932 = vpop.f32.mrf.mxu0
  %v1933 = vadd.f32 %v1904, %v1932
  %v1934 = vpop.f32.mrf.mxu0
  %v1935 = vadd.f32 %v1906, %v1934
  %1936 = vmatmul.bf16.gmra.mxu0 %v425
  %v1937 = vpop.f32.mrf.mxu0
  %v1938 = vadd.f32 %v1909, %v1937
  %v1939 = vpop.f32.mrf.mxu0
  %v1940 = vadd.f32 %v1911, %v1939
  %1941 = vdwg.mxu0
  %1942 = vmatpush.bf16.msra.mxu0 %v1479
  %1943 = vmatpush.bf16.msra.mxu0 %v1475
  %1944 = vmatpush.bf16.msra.mxu0 %v1471
  %1945 = vmatpush.bf16.msra.mxu0 %v1467
  %1946 = vmatpush.bf16.msra.mxu0 %v1463
  %1947 = vmatpush.bf16.msra.mxu0 %v1459
  %1948 = vmatpush.bf16.msra.mxu0 %v1455
  %1949 = vmatpush.bf16.msra.mxu0 %v1451
  %1950 = vmatmul.bf16.gmra.mxu0 %v402
  %v1951 = vpop.f32.mrf.mxu0
  %v1952 = vadd.f32 %v1923, %v1951
  %v1953 = vpop.f32.mrf.mxu0
  %v1954 = vadd.f32 %v1925, %v1953
  %1955 = vmatmul.bf16.gmra.mxu0 %v410
  %v1956 = vpop.f32.mrf.mxu0
  %v1957 = vadd.f32 %v1928, %v1956
  %v1958 = vpop.f32.mrf.mxu0
  %v1959 = vadd.f32 %v1930, %v1958
  %1960 = vmatmul.bf16.gmra.mxu0 %v418
  %v1961 = vpop.f32.mrf.mxu0
  %v1962 = vadd.f32 %v1933, %v1961
  %v1963 = vpop.f32.mrf.mxu0
  %v1964 = vadd.f32 %v1935, %v1963
  %1965 = vmatmul.bf16.gmra.mxu0 %v426
  %v1966 = vpop.f32.mrf.mxu0
  %v1967 = vadd.f32 %v1938, %v1966
  %v1968 = vpop.f32.mrf.mxu0
  %v1969 = vadd.f32 %v1940, %v1968
  %1970 = vdwg.mxu0
  %1971 = vmatpush.bf16.msra.mxu0 %v1256
  %1972 = vmatpush.bf16.msra.mxu0 %v1252
  %1973 = vmatpush.bf16.msra.mxu0 %v1248
  %1974 = vmatpush.bf16.msra.mxu0 %v1244
  %1975 = vmatpush.bf16.msra.mxu0 %v1240
  %1976 = vmatpush.bf16.msra.mxu0 %v1236
  %1977 = vmatpush.bf16.msra.mxu0 %v1232
  %1978 = vmatpush.bf16.msra.mxu0 %v1228
  %1979 = vmatmul.bf16.gmra.mxu0 %v395
  %v1980 = vpop.f32.mrf.mxu0
  %v1981 = vadd.f32 0.0, %v1980
  %v1982 = vpop.f32.mrf.mxu0
  %v1983 = vadd.f32 0.0, %v1982
  %1984 = vmatmul.bf16.gmra.mxu0 %v403
  %v1985 = vpop.f32.mrf.mxu0
  %v1986 = vadd.f32 0.0, %v1985
  %v1987 = vpop.f32.mrf.mxu0
  %v1988 = vadd.f32 0.0, %v1987
  %1989 = vmatmul.bf16.gmra.mxu0 %v411
  %v1990 = vpop.f32.mrf.mxu0
  %v1991 = vadd.f32 0.0, %v1990
  %v1992 = vpop.f32.mrf.mxu0
  %v1993 = vadd.f32 0.0, %v1992
  %1994 = vmatmul.bf16.gmra.mxu0 %v419
  %v1995 = vpop.f32.mrf.mxu0
  %v1996 = vadd.f32 0.0, %v1995
  %v1997 = vpop.f32.mrf.mxu0
  %v1998 = vadd.f32 0.0, %v1997
  %1999 = vdwg.mxu0
  %2000 = vmatpush.bf16.msra.mxu0 %v1288
  %2001 = vmatpush.bf16.msra.mxu0 %v1284
  %2002 = vmatpush.bf16.msra.mxu0 %v1280
  %2003 = vmatpush.bf16.msra.mxu0 %v1276
  %2004 = vmatpush.bf16.msra.mxu0 %v1272
  %2005 = vmatpush.bf16.msra.mxu0 %v1268
  %2006 = vmatpush.bf16.msra.mxu0 %v1264
  %2007 = vmatpush.bf16.msra.mxu0 %v1260
  %2008 = vmatmul.bf16.gmra.mxu0 %v396
  %v2009 = vpop.f32.mrf.mxu0
  %v2010 = vadd.f32 %v1981, %v2009
  %v2011 = vpop.f32.mrf.mxu0
  %v2012 = vadd.f32 %v1983, %v2011
  %2013 = vmatmul.bf16.gmra.mxu0 %v404
  %v2014 = vpop.f32.mrf.mxu0
  %v2015 = vadd.f32 %v1986, %v2014
  %v2016 = vpop.f32.mrf.mxu0
  %v2017 = vadd.f32 %v1988, %v2016
  %2018 = vmatmul.bf16.gmra.mxu0 %v412
  %v2019 = vpop.f32.mrf.mxu0
  %v2020 = vadd.f32 %v1991, %v2019
  %v2021 = vpop.f32.mrf.mxu0
  %v2022 = vadd.f32 %v1993, %v2021
  %2023 = vmatmul.bf16.gmra.mxu0 %v420
  %v2024 = vpop.f32.mrf.mxu0
  %v2025 = vadd.f32 %v1996, %v2024
  %v2026 = vpop.f32.mrf.mxu0
  %v2027 = vadd.f32 %v1998, %v2026
  %2028 = vdwg.mxu0
  %2029 = vmatpush.bf16.msra.mxu0 %v1320
  %2030 = vmatpush.bf16.msra.mxu0 %v1316
  %2031 = vmatpush.bf16.msra.mxu0 %v1312
  %2032 = vmatpush.bf16.msra.mxu0 %v1308
  %2033 = vmatpush.bf16.msra.mxu0 %v1304
  %2034 = vmatpush.bf16.msra.mxu0 %v1300
  %2035 = vmatpush.bf16.msra.mxu0 %v1296
  %2036 = vmatpush.bf16.msra.mxu0 %v1292
  %2037 = vmatmul.bf16.gmra.mxu0 %v397
  %v2038 = vpop.f32.mrf.mxu0
  %v2039 = vadd.f32 %v2010, %v2038
  %v2040 = vpop.f32.mrf.mxu0
  %v2041 = vadd.f32 %v2012, %v2040
  %2042 = vmatmul.bf16.gmra.mxu0 %v405
  %v2043 = vpop.f32.mrf.mxu0
  %v2044 = vadd.f32 %v2015, %v2043
  %v2045 = vpop.f32.mrf.mxu0
  %v2046 = vadd.f32 %v2017, %v2045
  %2047 = vmatmul.bf16.gmra.mxu0 %v413
  %v2048 = vpop.f32.mrf.mxu0
  %v2049 = vadd.f32 %v2020, %v2048
  %v2050 = vpop.f32.mrf.mxu0
  %v2051 = vadd.f32 %v2022, %v2050
  %2052 = vmatmul.bf16.gmra.mxu0 %v421
  %v2053 = vpop.f32.mrf.mxu0
  %v2054 = vadd.f32 %v2025, %v2053
  %v2055 = vpop.f32.mrf.mxu0
  %v2056 = vadd.f32 %v2027, %v2055
  %2057 = vdwg.mxu0
  %2058 = vmatpush.bf16.msra.mxu0 %v1352
  %2059 = vmatpush.bf16.msra.mxu0 %v1348
  %2060 = vmatpush.bf16.msra.mxu0 %v1344
  %2061 = vmatpush.bf16.msra.mxu0 %v1340
  %2062 = vmatpush.bf16.msra.mxu0 %v1336
  %2063 = vmatpush.bf16.msra.mxu0 %v1332
  %2064 = vmatpush.bf16.msra.mxu0 %v1328
  %2065 = vmatpush.bf16.msra.mxu0 %v1324
  %2066 = vmatmul.bf16.gmra.mxu0 %v398
  %v2067 = vpop.f32.mrf.mxu0
  %v2068 = vadd.f32 %v2039, %v2067
  %v2069 = vpop.f32.mrf.mxu0
  %v2070 = vadd.f32 %v2041, %v2069
  %2071 = vmatmul.bf16.gmra.mxu0 %v406
  %v2072 = vpop.f32.mrf.mxu0
  %v2073 = vadd.f32 %v2044, %v2072
  %v2074 = vpop.f32.mrf.mxu0
  %v2075 = vadd.f32 %v2046, %v2074
  %2076 = vmatmul.bf16.gmra.mxu0 %v414
  %v2077 = vpop.f32.mrf.mxu0
  %v2078 = vadd.f32 %v2049, %v2077
  %v2079 = vpop.f32.mrf.mxu0
  %v2080 = vadd.f32 %v2051, %v2079
  %2081 = vmatmul.bf16.gmra.mxu0 %v422
  %v2082 = vpop.f32.mrf.mxu0
  %v2083 = vadd.f32 %v2054, %v2082
  %v2084 = vpop.f32.mrf.mxu0
  %v2085 = vadd.f32 %v2056, %v2084
  %2086 = vdwg.mxu0
  %2087 = vmatpush.bf16.msra.mxu0 %v1384
  %2088 = vmatpush.bf16.msra.mxu0 %v1380
  %2089 = vmatpush.bf16.msra.mxu0 %v1376
  %2090 = vmatpush.bf16.msra.mxu0 %v1372
  %2091 = vmatpush.bf16.msra.mxu0 %v1368
  %2092 = vmatpush.bf16.msra.mxu0 %v1364
  %2093 = vmatpush.bf16.msra.mxu0 %v1360
  %2094 = vmatpush.bf16.msra.mxu0 %v1356
  %2095 = vmatmul.bf16.gmra.mxu0 %v399
  %v2096 = vpop.f32.mrf.mxu0
  %v2097 = vadd.f32 %v2068, %v2096
  %v2098 = vpop.f32.mrf.mxu0
  %v2099 = vadd.f32 %v2070, %v2098
  %2100 = vmatmul.bf16.gmra.mxu0 %v407
  %v2101 = vpop.f32.mrf.mxu0
  %v2102 = vadd.f32 %v2073, %v2101
  %v2103 = vpop.f32.mrf.mxu0
  %v2104 = vadd.f32 %v2075, %v2103
  %2105 = vmatmul.bf16.gmra.mxu0 %v415
  %v2106 = vpop.f32.mrf.mxu0
  %v2107 = vadd.f32 %v2078, %v2106
  %v2108 = vpop.f32.mrf.mxu0
  %v2109 = vadd.f32 %v2080, %v2108
  %2110 = vmatmul.bf16.gmra.mxu0 %v423
  %v2111 = vpop.f32.mrf.mxu0
  %v2112 = vadd.f32 %v2083, %v2111
  %v2113 = vpop.f32.mrf.mxu0
  %v2114 = vadd.f32 %v2085, %v2113
  %2115 = vdwg.mxu0
  %2116 = vmatpush.bf16.msra.mxu0 %v1416
  %2117 = vmatpush.bf16.msra.mxu0 %v1412
  %2118 = vmatpush.bf16.msra.mxu0 %v1408
  %2119 = vmatpush.bf16.msra.mxu0 %v1404
  %2120 = vmatpush.bf16.msra.mxu0 %v1400
  %2121 = vmatpush.bf16.msra.mxu0 %v1396
  %2122 = vmatpush.bf16.msra.mxu0 %v1392
  %2123 = vmatpush.bf16.msra.mxu0 %v1388
  %2124 = vmatmul.bf16.gmra.mxu0 %v400
  %v2125 = vpop.f32.mrf.mxu0
  %v2126 = vadd.f32 %v2097, %v2125
  %v2127 = vpop.f32.mrf.mxu0
  %v2128 = vadd.f32 %v2099, %v2127
  %2129 = vmatmul.bf16.gmra.mxu0 %v408
  %v2130 = vpop.f32.mrf.mxu0
  %v2131 = vadd.f32 %v2102, %v2130
  %v2132 = vpop.f32.mrf.mxu0
  %v2133 = vadd.f32 %v2104, %v2132
  %2134 = vmatmul.bf16.gmra.mxu0 %v416
  %v2135 = vpop.f32.mrf.mxu0
  %v2136 = vadd.f32 %v2107, %v2135
  %v2137 = vpop.f32.mrf.mxu0
  %v2138 = vadd.f32 %v2109, %v2137
  %2139 = vmatmul.bf16.gmra.mxu0 %v424
  %v2140 = vpop.f32.mrf.mxu0
  %v2141 = vadd.f32 %v2112, %v2140
  %v2142 = vpop.f32.mrf.mxu0
  %v2143 = vadd.f32 %v2114, %v2142
  %2144 = vdwg.mxu0
  %2145 = vmatpush.bf16.msra.mxu0 %v1448
  %2146 = vmatpush.bf16.msra.mxu0 %v1444
  %2147 = vmatpush.bf16.msra.mxu0 %v1440
  %2148 = vmatpush.bf16.msra.mxu0 %v1436
  %2149 = vmatpush.bf16.msra.mxu0 %v1432
  %2150 = vmatpush.bf16.msra.mxu0 %v1428
  %2151 = vmatpush.bf16.msra.mxu0 %v1424
  %2152 = vmatpush.bf16.msra.mxu0 %v1420
  %2153 = vmatmul.bf16.gmra.mxu0 %v401
  %v2154 = vpop.f32.mrf.mxu0
  %v2155 = vadd.f32 %v2126, %v2154
  %v2156 = vpop.f32.mrf.mxu0
  %v2157 = vadd.f32 %v2128, %v2156
  %2158 = vmatmul.bf16.gmra.mxu0 %v409
  %v2159 = vpop.f32.mrf.mxu0
  %v2160 = vadd.f32 %v2131, %v2159
  %v2161 = vpop.f32.mrf.mxu0
  %v2162 = vadd.f32 %v2133, %v2161
  %2163 = vmatmul.bf16.gmra.mxu0 %v417
  %v2164 = vpop.f32.mrf.mxu0
  %v2165 = vadd.f32 %v2136, %v2164
  %v2166 = vpop.f32.mrf.mxu0
  %v2167 = vadd.f32 %v2138, %v2166
  %2168 = vmatmul.bf16.gmra.mxu0 %v425
  %v2169 = vpop.f32.mrf.mxu0
  %v2170 = vadd.f32 %v2141, %v2169
  %v2171 = vpop.f32.mrf.mxu0
  %v2172 = vadd.f32 %v2143, %v2171
  %2173 = vdwg.mxu0
  %2174 = vmatpush.bf16.msra.mxu0 %v1480
  %2175 = vmatpush.bf16.msra.mxu0 %v1476
  %2176 = vmatpush.bf16.msra.mxu0 %v1472
  %2177 = vmatpush.bf16.msra.mxu0 %v1468
  %2178 = vmatpush.bf16.msra.mxu0 %v1464
  %2179 = vmatpush.bf16.msra.mxu0 %v1460
  %2180 = vmatpush.bf16.msra.mxu0 %v1456
  %2181 = vmatpush.bf16.msra.mxu0 %v1452
  %2182 = vmatmul.bf16.gmra.mxu0 %v402
  %v2183 = vpop.f32.mrf.mxu0
  %v2184 = vadd.f32 %v2155, %v2183
  %v2185 = vpop.f32.mrf.mxu0
  %v2186 = vadd.f32 %v2157, %v2185
  %2187 = vmatmul.bf16.gmra.mxu0 %v410
  %v2188 = vpop.f32.mrf.mxu0
  %v2189 = vadd.f32 %v2160, %v2188
  %v2190 = vpop.f32.mrf.mxu0
  %v2191 = vadd.f32 %v2162, %v2190
  %2192 = vmatmul.bf16.gmra.mxu0 %v418
  %v2193 = vpop.f32.mrf.mxu0
  %v2194 = vadd.f32 %v2165, %v2193
  %v2195 = vpop.f32.mrf.mxu0
  %v2196 = vadd.f32 %v2167, %v2195
  %2197 = vmatmul.bf16.gmra.mxu0 %v426
  %v2198 = vpop.f32.mrf.mxu0
  %v2199 = vadd.f32 %v2170, %v2198
  %v2200 = vpop.f32.mrf.mxu0
  %v2201 = vadd.f32 %v2172, %v2200
  %2202 = vdwg.mxu0
  %2203 = vmatpush.bf16.msra.mxu0 %v1257
  %2204 = vmatpush.bf16.msra.mxu0 %v1253
  %2205 = vmatpush.bf16.msra.mxu0 %v1249
  %2206 = vmatpush.bf16.msra.mxu0 %v1245
  %2207 = vmatpush.bf16.msra.mxu0 %v1241
  %2208 = vmatpush.bf16.msra.mxu0 %v1237
  %2209 = vmatpush.bf16.msra.mxu0 %v1233
  %2210 = vmatpush.bf16.msra.mxu0 %v1229
  %2211 = vmatmul.bf16.gmra.mxu0 %v395
  %v2212 = vpop.f32.mrf.mxu0
  %v2213 = vadd.f32 0.0, %v2212
  %v2214 = vpop.f32.mrf.mxu0
  %v2215 = vadd.f32 0.0, %v2214
  %2216 = vmatmul.bf16.gmra.mxu0 %v403
  %v2217 = vpop.f32.mrf.mxu0
  %v2218 = vadd.f32 0.0, %v2217
  %v2219 = vpop.f32.mrf.mxu0
  %v2220 = vadd.f32 0.0, %v2219
  %2221 = vmatmul.bf16.gmra.mxu0 %v411
  %v2222 = vpop.f32.mrf.mxu0
  %v2223 = vadd.f32 0.0, %v2222
  %v2224 = vpop.f32.mrf.mxu0
  %v2225 = vadd.f32 0.0, %v2224
  %2226 = vmatmul.bf16.gmra.mxu0 %v419
  %v2227 = vpop.f32.mrf.mxu0
  %v2228 = vadd.f32 0.0, %v2227
  %v2229 = vpop.f32.mrf.mxu0
  %v2230 = vadd.f32 0.0, %v2229
  %2231 = vdwg.mxu0
  %2232 = vmatpush.bf16.msra.mxu0 %v1289
  %2233 = vmatpush.bf16.msra.mxu0 %v1285
  %2234 = vmatpush.bf16.msra.mxu0 %v1281
  %2235 = vmatpush.bf16.msra.mxu0 %v1277
  %2236 = vmatpush.bf16.msra.mxu0 %v1273
  %2237 = vmatpush.bf16.msra.mxu0 %v1269
  %2238 = vmatpush.bf16.msra.mxu0 %v1265
  %2239 = vmatpush.bf16.msra.mxu0 %v1261
  %2240 = vmatmul.bf16.gmra.mxu0 %v396
  %v2241 = vpop.f32.mrf.mxu0
  %v2242 = vadd.f32 %v2213, %v2241
  %v2243 = vpop.f32.mrf.mxu0
  %v2244 = vadd.f32 %v2215, %v2243
  %2245 = vmatmul.bf16.gmra.mxu0 %v404
  %v2246 = vpop.f32.mrf.mxu0
  %v2247 = vadd.f32 %v2218, %v2246
  %v2248 = vpop.f32.mrf.mxu0
  %v2249 = vadd.f32 %v2220, %v2248
  %2250 = vmatmul.bf16.gmra.mxu0 %v412
  %v2251 = vpop.f32.mrf.mxu0
  %v2252 = vadd.f32 %v2223, %v2251
  %v2253 = vpop.f32.mrf.mxu0
  %v2254 = vadd.f32 %v2225, %v2253
  %2255 = vmatmul.bf16.gmra.mxu0 %v420
  %v2256 = vpop.f32.mrf.mxu0
  %v2257 = vadd.f32 %v2228, %v2256
  %v2258 = vpop.f32.mrf.mxu0
  %v2259 = vadd.f32 %v2230, %v2258
  %2260 = vdwg.mxu0
  %2261 = vmatpush.bf16.msra.mxu0 %v1321
  %2262 = vmatpush.bf16.msra.mxu0 %v1317
  %2263 = vmatpush.bf16.msra.mxu0 %v1313
  %2264 = vmatpush.bf16.msra.mxu0 %v1309
  %2265 = vmatpush.bf16.msra.mxu0 %v1305
  %2266 = vmatpush.bf16.msra.mxu0 %v1301
  %2267 = vmatpush.bf16.msra.mxu0 %v1297
  %2268 = vmatpush.bf16.msra.mxu0 %v1293
  %2269 = vmatmul.bf16.gmra.mxu0 %v397
  %v2270 = vpop.f32.mrf.mxu0
  %v2271 = vadd.f32 %v2242, %v2270
  %v2272 = vpop.f32.mrf.mxu0
  %v2273 = vadd.f32 %v2244, %v2272
  %2274 = vmatmul.bf16.gmra.mxu0 %v405
  %v2275 = vpop.f32.mrf.mxu0
  %v2276 = vadd.f32 %v2247, %v2275
  %v2277 = vpop.f32.mrf.mxu0
  %v2278 = vadd.f32 %v2249, %v2277
  %2279 = vmatmul.bf16.gmra.mxu0 %v413
  %v2280 = vpop.f32.mrf.mxu0
  %v2281 = vadd.f32 %v2252, %v2280
  %v2282 = vpop.f32.mrf.mxu0
  %v2283 = vadd.f32 %v2254, %v2282
  %2284 = vmatmul.bf16.gmra.mxu0 %v421
  %v2285 = vpop.f32.mrf.mxu0
  %v2286 = vadd.f32 %v2257, %v2285
  %v2287 = vpop.f32.mrf.mxu0
  %v2288 = vadd.f32 %v2259, %v2287
  %2289 = vdwg.mxu0
  %2290 = vmatpush.bf16.msra.mxu0 %v1353
  %2291 = vmatpush.bf16.msra.mxu0 %v1349
  %2292 = vmatpush.bf16.msra.mxu0 %v1345
  %2293 = vmatpush.bf16.msra.mxu0 %v1341
  %2294 = vmatpush.bf16.msra.mxu0 %v1337
  %2295 = vmatpush.bf16.msra.mxu0 %v1333
  %2296 = vmatpush.bf16.msra.mxu0 %v1329
  %2297 = vmatpush.bf16.msra.mxu0 %v1325
  %2298 = vmatmul.bf16.gmra.mxu0 %v398
  %v2299 = vpop.f32.mrf.mxu0
  %v2300 = vadd.f32 %v2271, %v2299
  %v2301 = vpop.f32.mrf.mxu0
  %v2302 = vadd.f32 %v2273, %v2301
  %2303 = vmatmul.bf16.gmra.mxu0 %v406
  %v2304 = vpop.f32.mrf.mxu0
  %v2305 = vadd.f32 %v2276, %v2304
  %v2306 = vpop.f32.mrf.mxu0
  %v2307 = vadd.f32 %v2278, %v2306
  %2308 = vmatmul.bf16.gmra.mxu0 %v414
  %v2309 = vpop.f32.mrf.mxu0
  %v2310 = vadd.f32 %v2281, %v2309
  %v2311 = vpop.f32.mrf.mxu0
  %v2312 = vadd.f32 %v2283, %v2311
  %2313 = vmatmul.bf16.gmra.mxu0 %v422
  %v2314 = vpop.f32.mrf.mxu0
  %v2315 = vadd.f32 %v2286, %v2314
  %v2316 = vpop.f32.mrf.mxu0
  %v2317 = vadd.f32 %v2288, %v2316
  %2318 = vdwg.mxu0
  %2319 = vmatpush.bf16.msra.mxu0 %v1385
  %2320 = vmatpush.bf16.msra.mxu0 %v1381
  %2321 = vmatpush.bf16.msra.mxu0 %v1377
  %2322 = vmatpush.bf16.msra.mxu0 %v1373
  %2323 = vmatpush.bf16.msra.mxu0 %v1369
  %2324 = vmatpush.bf16.msra.mxu0 %v1365
  %2325 = vmatpush.bf16.msra.mxu0 %v1361
  %2326 = vmatpush.bf16.msra.mxu0 %v1357
  %2327 = vmatmul.bf16.gmra.mxu0 %v399
  %v2328 = vpop.f32.mrf.mxu0
  %v2329 = vadd.f32 %v2300, %v2328
  %v2330 = vpop.f32.mrf.mxu0
  %v2331 = vadd.f32 %v2302, %v2330
  %2332 = vmatmul.bf16.gmra.mxu0 %v407
  %v2333 = vpop.f32.mrf.mxu0
  %v2334 = vadd.f32 %v2305, %v2333
  %v2335 = vpop.f32.mrf.mxu0
  %v2336 = vadd.f32 %v2307, %v2335
  %2337 = vmatmul.bf16.gmra.mxu0 %v415
  %v2338 = vpop.f32.mrf.mxu0
  %v2339 = vadd.f32 %v2310, %v2338
  %v2340 = vpop.f32.mrf.mxu0
  %v2341 = vadd.f32 %v2312, %v2340
  %2342 = vmatmul.bf16.gmra.mxu0 %v423
  %v2343 = vpop.f32.mrf.mxu0
  %v2344 = vadd.f32 %v2315, %v2343
  %v2345 = vpop.f32.mrf.mxu0
  %v2346 = vadd.f32 %v2317, %v2345
  %2347 = vdwg.mxu0
  %2348 = vmatpush.bf16.msra.mxu0 %v1417
  %2349 = vmatpush.bf16.msra.mxu0 %v1413
  %2350 = vmatpush.bf16.msra.mxu0 %v1409
  %2351 = vmatpush.bf16.msra.mxu0 %v1405
  %2352 = vmatpush.bf16.msra.mxu0 %v1401
  %2353 = vmatpush.bf16.msra.mxu0 %v1397
  %2354 = vmatpush.bf16.msra.mxu0 %v1393
  %2355 = vmatpush.bf16.msra.mxu0 %v1389
  %2356 = vmatmul.bf16.gmra.mxu0 %v400
  %v2357 = vpop.f32.mrf.mxu0
  %v2358 = vadd.f32 %v2329, %v2357
  %v2359 = vpop.f32.mrf.mxu0
  %v2360 = vadd.f32 %v2331, %v2359
  %2361 = vmatmul.bf16.gmra.mxu0 %v408
  %v2362 = vpop.f32.mrf.mxu0
  %v2363 = vadd.f32 %v2334, %v2362
  %v2364 = vpop.f32.mrf.mxu0
  %v2365 = vadd.f32 %v2336, %v2364
  %2366 = vmatmul.bf16.gmra.mxu0 %v416
  %v2367 = vpop.f32.mrf.mxu0
  %v2368 = vadd.f32 %v2339, %v2367
  %v2369 = vpop.f32.mrf.mxu0
  %v2370 = vadd.f32 %v2341, %v2369
  %2371 = vmatmul.bf16.gmra.mxu0 %v424
  %v2372 = vpop.f32.mrf.mxu0
  %v2373 = vadd.f32 %v2344, %v2372
  %v2374 = vpop.f32.mrf.mxu0
  %v2375 = vadd.f32 %v2346, %v2374
  %2376 = vdwg.mxu0
  %2377 = vmatpush.bf16.msra.mxu0 %v1449
  %2378 = vmatpush.bf16.msra.mxu0 %v1445
  %2379 = vmatpush.bf16.msra.mxu0 %v1441
  %2380 = vmatpush.bf16.msra.mxu0 %v1437
  %2381 = vmatpush.bf16.msra.mxu0 %v1433
  %2382 = vmatpush.bf16.msra.mxu0 %v1429
  %2383 = vmatpush.bf16.msra.mxu0 %v1425
  %2384 = vmatpush.bf16.msra.mxu0 %v1421
  %2385 = vmatmul.bf16.gmra.mxu0 %v401
  %v2386 = vpop.f32.mrf.mxu0
  %v2387 = vadd.f32 %v2358, %v2386
  %v2388 = vpop.f32.mrf.mxu0
  %v2389 = vadd.f32 %v2360, %v2388
  %2390 = vmatmul.bf16.gmra.mxu0 %v409
  %v2391 = vpop.f32.mrf.mxu0
  %v2392 = vadd.f32 %v2363, %v2391
  %v2393 = vpop.f32.mrf.mxu0
  %v2394 = vadd.f32 %v2365, %v2393
  %2395 = vmatmul.bf16.gmra.mxu0 %v417
  %v2396 = vpop.f32.mrf.mxu0
  %v2397 = vadd.f32 %v2368, %v2396
  %v2398 = vpop.f32.mrf.mxu0
  %v2399 = vadd.f32 %v2370, %v2398
  %2400 = vmatmul.bf16.gmra.mxu0 %v425
  %v2401 = vpop.f32.mrf.mxu0
  %v2402 = vadd.f32 %v2373, %v2401
  %v2403 = vpop.f32.mrf.mxu0
  %v2404 = vadd.f32 %v2375, %v2403
  %2405 = vdwg.mxu0
  %2406 = vmatpush.bf16.msra.mxu0 %v1481
  %2407 = vmatpush.bf16.msra.mxu0 %v1477
  %2408 = vmatpush.bf16.msra.mxu0 %v1473
  %2409 = vmatpush.bf16.msra.mxu0 %v1469
  %2410 = vmatpush.bf16.msra.mxu0 %v1465
  %2411 = vmatpush.bf16.msra.mxu0 %v1461
  %2412 = vmatpush.bf16.msra.mxu0 %v1457
  %2413 = vmatpush.bf16.msra.mxu0 %v1453
  %2414 = vmatmul.bf16.gmra.mxu0 %v402
  %v2415 = vpop.f32.mrf.mxu0
  %v2416 = vadd.f32 %v2387, %v2415
  %v2417 = vpop.f32.mrf.mxu0
  %v2418 = vadd.f32 %v2389, %v2417
  %2419 = vmatmul.bf16.gmra.mxu0 %v410
  %v2420 = vpop.f32.mrf.mxu0
  %v2421 = vadd.f32 %v2392, %v2420
  %v2422 = vpop.f32.mrf.mxu0
  %v2423 = vadd.f32 %v2394, %v2422
  %2424 = vmatmul.bf16.gmra.mxu0 %v418
  %v2425 = vpop.f32.mrf.mxu0
  %v2426 = vadd.f32 %v2397, %v2425
  %v2427 = vpop.f32.mrf.mxu0
  %v2428 = vadd.f32 %v2399, %v2427
  %2429 = vmatmul.bf16.gmra.mxu0 %v426
  %v2430 = vpop.f32.mrf.mxu0
  %v2431 = vadd.f32 %v2402, %v2430
  %v2432 = vpop.f32.mrf.mxu0
  %v2433 = vadd.f32 %v2404, %v2432
  %2434 = vdwg.mxu0
  %2435 = vmatpush.bf16.msra.mxu0 %v1258
  %2436 = vmatpush.bf16.msra.mxu0 %v1254
  %2437 = vmatpush.bf16.msra.mxu0 %v1250
  %2438 = vmatpush.bf16.msra.mxu0 %v1246
  %2439 = vmatpush.bf16.msra.mxu0 %v1242
  %2440 = vmatpush.bf16.msra.mxu0 %v1238
  %2441 = vmatpush.bf16.msra.mxu0 %v1234
  %2442 = vmatpush.bf16.msra.mxu0 %v1230
  %2443 = vmatmul.bf16.gmra.mxu0 %v395
  %v2444 = vpop.f32.mrf.mxu0
  %v2445 = vadd.f32 0.0, %v2444
  %v2446 = vpop.f32.mrf.mxu0
  %v2447 = vadd.f32 0.0, %v2446
  %2448 = vmatmul.bf16.gmra.mxu0 %v403
  %v2449 = vpop.f32.mrf.mxu0
  %v2450 = vadd.f32 0.0, %v2449
  %v2451 = vpop.f32.mrf.mxu0
  %v2452 = vadd.f32 0.0, %v2451
  %2453 = vmatmul.bf16.gmra.mxu0 %v411
  %v2454 = vpop.f32.mrf.mxu0
  %v2455 = vadd.f32 0.0, %v2454
  %v2456 = vpop.f32.mrf.mxu0
  %v2457 = vadd.f32 0.0, %v2456
  %2458 = vmatmul.bf16.gmra.mxu0 %v419
  %v2459 = vpop.f32.mrf.mxu0
  %v2460 = vadd.f32 0.0, %v2459
  %v2461 = vpop.f32.mrf.mxu0
  %v2462 = vadd.f32 0.0, %v2461
  %2463 = vdwg.mxu0
  %2464 = vmatpush.bf16.msra.mxu0 %v1290
  %2465 = vmatpush.bf16.msra.mxu0 %v1286
  %2466 = vmatpush.bf16.msra.mxu0 %v1282
  %2467 = vmatpush.bf16.msra.mxu0 %v1278
  %2468 = vmatpush.bf16.msra.mxu0 %v1274
  %2469 = vmatpush.bf16.msra.mxu0 %v1270
  %2470 = vmatpush.bf16.msra.mxu0 %v1266
  %2471 = vmatpush.bf16.msra.mxu0 %v1262
  %2472 = vmatmul.bf16.gmra.mxu0 %v396
  %v2473 = vpop.f32.mrf.mxu0
  %v2474 = vadd.f32 %v2445, %v2473
  %v2475 = vpop.f32.mrf.mxu0
  %v2476 = vadd.f32 %v2447, %v2475
  %2477 = vmatmul.bf16.gmra.mxu0 %v404
  %v2478 = vpop.f32.mrf.mxu0
  %v2479 = vadd.f32 %v2450, %v2478
  %v2480 = vpop.f32.mrf.mxu0
  %v2481 = vadd.f32 %v2452, %v2480
  %2482 = vmatmul.bf16.gmra.mxu0 %v412
  %v2483 = vpop.f32.mrf.mxu0
  %v2484 = vadd.f32 %v2455, %v2483
  %v2485 = vpop.f32.mrf.mxu0
  %v2486 = vadd.f32 %v2457, %v2485
  %2487 = vmatmul.bf16.gmra.mxu0 %v420
  %v2488 = vpop.f32.mrf.mxu0
  %v2489 = vadd.f32 %v2460, %v2488
  %v2490 = vpop.f32.mrf.mxu0
  %v2491 = vadd.f32 %v2462, %v2490
  %2492 = vdwg.mxu0
  %2493 = vmatpush.bf16.msra.mxu0 %v1322
  %2494 = vmatpush.bf16.msra.mxu0 %v1318
  %2495 = vmatpush.bf16.msra.mxu0 %v1314
  %2496 = vmatpush.bf16.msra.mxu0 %v1310
  %2497 = vmatpush.bf16.msra.mxu0 %v1306
  %2498 = vmatpush.bf16.msra.mxu0 %v1302
  %2499 = vmatpush.bf16.msra.mxu0 %v1298
  %2500 = vmatpush.bf16.msra.mxu0 %v1294
  %2501 = vmatmul.bf16.gmra.mxu0 %v397
  %v2502 = vpop.f32.mrf.mxu0
  %v2503 = vadd.f32 %v2474, %v2502
  %v2504 = vpop.f32.mrf.mxu0
  %v2505 = vadd.f32 %v2476, %v2504
  %2506 = vmatmul.bf16.gmra.mxu0 %v405
  %v2507 = vpop.f32.mrf.mxu0
  %v2508 = vadd.f32 %v2479, %v2507
  %v2509 = vpop.f32.mrf.mxu0
  %v2510 = vadd.f32 %v2481, %v2509
  %2511 = vmatmul.bf16.gmra.mxu0 %v413
  %v2512 = vpop.f32.mrf.mxu0
  %v2513 = vadd.f32 %v2484, %v2512
  %v2514 = vpop.f32.mrf.mxu0
  %v2515 = vadd.f32 %v2486, %v2514
  %2516 = vmatmul.bf16.gmra.mxu0 %v421
  %v2517 = vpop.f32.mrf.mxu0
  %v2518 = vadd.f32 %v2489, %v2517
  %v2519 = vpop.f32.mrf.mxu0
  %v2520 = vadd.f32 %v2491, %v2519
  %2521 = vdwg.mxu0
  %2522 = vmatpush.bf16.msra.mxu0 %v1354
  %2523 = vmatpush.bf16.msra.mxu0 %v1350
  %2524 = vmatpush.bf16.msra.mxu0 %v1346
  %2525 = vmatpush.bf16.msra.mxu0 %v1342
  %2526 = vmatpush.bf16.msra.mxu0 %v1338
  %2527 = vmatpush.bf16.msra.mxu0 %v1334
  %2528 = vmatpush.bf16.msra.mxu0 %v1330
  %2529 = vmatpush.bf16.msra.mxu0 %v1326
  %2530 = vmatmul.bf16.gmra.mxu0 %v398
  %v2531 = vpop.f32.mrf.mxu0
  %v2532 = vadd.f32 %v2503, %v2531
  %v2533 = vpop.f32.mrf.mxu0
  %v2534 = vadd.f32 %v2505, %v2533
  %2535 = vmatmul.bf16.gmra.mxu0 %v406
  %v2536 = vpop.f32.mrf.mxu0
  %v2537 = vadd.f32 %v2508, %v2536
  %v2538 = vpop.f32.mrf.mxu0
  %v2539 = vadd.f32 %v2510, %v2538
  %2540 = vmatmul.bf16.gmra.mxu0 %v414
  %v2541 = vpop.f32.mrf.mxu0
  %v2542 = vadd.f32 %v2513, %v2541
  %v2543 = vpop.f32.mrf.mxu0
  %v2544 = vadd.f32 %v2515, %v2543
  %2545 = vmatmul.bf16.gmra.mxu0 %v422
  %v2546 = vpop.f32.mrf.mxu0
  %v2547 = vadd.f32 %v2518, %v2546
  %v2548 = vpop.f32.mrf.mxu0
  %v2549 = vadd.f32 %v2520, %v2548
  %2550 = vdwg.mxu0
  %2551 = vmatpush.bf16.msra.mxu0 %v1386
  %2552 = vmatpush.bf16.msra.mxu0 %v1382
  %2553 = vmatpush.bf16.msra.mxu0 %v1378
  %2554 = vmatpush.bf16.msra.mxu0 %v1374
  %2555 = vmatpush.bf16.msra.mxu0 %v1370
  %2556 = vmatpush.bf16.msra.mxu0 %v1366
  %2557 = vmatpush.bf16.msra.mxu0 %v1362
  %2558 = vmatpush.bf16.msra.mxu0 %v1358
  %2559 = vmatmul.bf16.gmra.mxu0 %v399
  %v2560 = vpop.f32.mrf.mxu0
  %v2561 = vadd.f32 %v2532, %v2560
  %v2562 = vpop.f32.mrf.mxu0
  %v2563 = vadd.f32 %v2534, %v2562
  %2564 = vmatmul.bf16.gmra.mxu0 %v407
  %v2565 = vpop.f32.mrf.mxu0
  %v2566 = vadd.f32 %v2537, %v2565
  %v2567 = vpop.f32.mrf.mxu0
  %v2568 = vadd.f32 %v2539, %v2567
  %2569 = vmatmul.bf16.gmra.mxu0 %v415
  %v2570 = vpop.f32.mrf.mxu0
  %v2571 = vadd.f32 %v2542, %v2570
  %v2572 = vpop.f32.mrf.mxu0
  %v2573 = vadd.f32 %v2544, %v2572
  %2574 = vmatmul.bf16.gmra.mxu0 %v423
  %v2575 = vpop.f32.mrf.mxu0
  %v2576 = vadd.f32 %v2547, %v2575
  %v2577 = vpop.f32.mrf.mxu0
  %v2578 = vadd.f32 %v2549, %v2577
  %2579 = vdwg.mxu0
  %2580 = vmatpush.bf16.msra.mxu0 %v1418
  %2581 = vmatpush.bf16.msra.mxu0 %v1414
  %2582 = vmatpush.bf16.msra.mxu0 %v1410
  %2583 = vmatpush.bf16.msra.mxu0 %v1406
  %2584 = vmatpush.bf16.msra.mxu0 %v1402
  %2585 = vmatpush.bf16.msra.mxu0 %v1398
  %2586 = vmatpush.bf16.msra.mxu0 %v1394
  %2587 = vmatpush.bf16.msra.mxu0 %v1390
  %2588 = vmatmul.bf16.gmra.mxu0 %v400
  %v2589 = vpop.f32.mrf.mxu0
  %v2590 = vadd.f32 %v2561, %v2589
  %v2591 = vpop.f32.mrf.mxu0
  %v2592 = vadd.f32 %v2563, %v2591
  %2593 = vmatmul.bf16.gmra.mxu0 %v408
  %v2594 = vpop.f32.mrf.mxu0
  %v2595 = vadd.f32 %v2566, %v2594
  %v2596 = vpop.f32.mrf.mxu0
  %v2597 = vadd.f32 %v2568, %v2596
  %2598 = vmatmul.bf16.gmra.mxu0 %v416
  %v2599 = vpop.f32.mrf.mxu0
  %v2600 = vadd.f32 %v2571, %v2599
  %v2601 = vpop.f32.mrf.mxu0
  %v2602 = vadd.f32 %v2573, %v2601
  %2603 = vmatmul.bf16.gmra.mxu0 %v424
  %v2604 = vpop.f32.mrf.mxu0
  %v2605 = vadd.f32 %v2576, %v2604
  %v2606 = vpop.f32.mrf.mxu0
  %v2607 = vadd.f32 %v2578, %v2606
  %2608 = vdwg.mxu0
  %2609 = vmatpush.bf16.msra.mxu0 %v1450
  %2610 = vmatpush.bf16.msra.mxu0 %v1446
  %2611 = vmatpush.bf16.msra.mxu0 %v1442
  %2612 = vmatpush.bf16.msra.mxu0 %v1438
  %2613 = vmatpush.bf16.msra.mxu0 %v1434
  %2614 = vmatpush.bf16.msra.mxu0 %v1430
  %2615 = vmatpush.bf16.msra.mxu0 %v1426
  %2616 = vmatpush.bf16.msra.mxu0 %v1422
  %2617 = vmatmul.bf16.gmra.mxu0 %v401
  %v2618 = vpop.f32.mrf.mxu0
  %v2619 = vadd.f32 %v2590, %v2618
  %v2620 = vpop.f32.mrf.mxu0
  %v2621 = vadd.f32 %v2592, %v2620
  %2622 = vmatmul.bf16.gmra.mxu0 %v409
  %v2623 = vpop.f32.mrf.mxu0
  %v2624 = vadd.f32 %v2595, %v2623
  %v2625 = vpop.f32.mrf.mxu0
  %v2626 = vadd.f32 %v2597, %v2625
  %2627 = vmatmul.bf16.gmra.mxu0 %v417
  %v2628 = vpop.f32.mrf.mxu0
  %v2629 = vadd.f32 %v2600, %v2628
  %v2630 = vpop.f32.mrf.mxu0
  %v2631 = vadd.f32 %v2602, %v2630
  %2632 = vmatmul.bf16.gmra.mxu0 %v425
  %v2633 = vpop.f32.mrf.mxu0
  %v2634 = vadd.f32 %v2605, %v2633
  %v2635 = vpop.f32.mrf.mxu0
  %v2636 = vadd.f32 %v2607, %v2635
  %2637 = vdwg.mxu0
  %2638 = vmatpush.bf16.msra.mxu0 %v1482
  %2639 = vmatpush.bf16.msra.mxu0 %v1478
  %2640 = vmatpush.bf16.msra.mxu0 %v1474
  %2641 = vmatpush.bf16.msra.mxu0 %v1470
  %2642 = vmatpush.bf16.msra.mxu0 %v1466
  %2643 = vmatpush.bf16.msra.mxu0 %v1462
  %2644 = vmatpush.bf16.msra.mxu0 %v1458
  %2645 = vmatpush.bf16.msra.mxu0 %v1454
  %2646 = vmatmul.bf16.gmra.mxu0 %v402
  %v2647 = vpop.f32.mrf.mxu0
  %v2648 = vadd.f32 %v2619, %v2647
  %v2649 = vpop.f32.mrf.mxu0
  %v2650 = vadd.f32 %v2621, %v2649
  %2651 = vmatmul.bf16.gmra.mxu0 %v410
  %v2652 = vpop.f32.mrf.mxu0
  %v2653 = vadd.f32 %v2624, %v2652
  %v2654 = vpop.f32.mrf.mxu0
  %v2655 = vadd.f32 %v2626, %v2654
  %2656 = vmatmul.bf16.gmra.mxu0 %v418
  %v2657 = vpop.f32.mrf.mxu0
  %v2658 = vadd.f32 %v2629, %v2657
  %v2659 = vpop.f32.mrf.mxu0
  %v2660 = vadd.f32 %v2631, %v2659
  %2661 = vmatmul.bf16.gmra.mxu0 %v426
  %v2662 = vpop.f32.mrf.mxu0
  %v2663 = vadd.f32 %v2634, %v2662
  %v2664 = vpop.f32.mrf.mxu0
  %v2665 = vadd.f32 %v2636, %v2664
  %2666 = vdwg.mxu0
  %2667 = vst [vmem:[%s2] sm:$0xff] %v1952
  %2668 = vst [vmem:[%s2 + $0x8] sm:$0xff] %v2184
  %2669 = vst [vmem:[%s2 + $0x10] sm:$0xff] %v2416
  %2670 = vst [vmem:[%s2 + $0x18] sm:$0xff] %v2648
  %2671 = vst [vmem:[%s2 + $0x20] sm:$0xff] %v1954
  %2672 = vst [vmem:[%s2 + $0x28] sm:$0xff] %v2186
  %2673 = vst [vmem:[%s2 + $0x30] sm:$0xff] %v2418
  %2674 = vst [vmem:[%s2 + $0x38] sm:$0xff] %v2650
  %2675 = vst [vmem:[%s2 + $0x40] sm:$0xff] %v1957
  %2676 = vst [vmem:[%s2 + $0x48] sm:$0xff] %v2189
  %2677 = vst [vmem:[%s2 + $0x50] sm:$0xff] %v2421
  %2678 = vst [vmem:[%s2 + $0x58] sm:$0xff] %v2653
  %2679 = vst [vmem:[%s2 + $0x60] sm:$0xff] %v1959
  %2680 = vst [vmem:[%s2 + $0x68] sm:$0xff] %v2191
  %2681 = vst [vmem:[%s2 + $0x70] sm:$0xff] %v2423
  %2682 = vst [vmem:[%s2 + $0x78] sm:$0xff] %v2655
  %2683 = vst [vmem:[%s2 + $0x80] sm:$0xff] %v1962
  %2684 = vst [vmem:[%s2 + $0x88] sm:$0xff] %v2194
  %2685 = vst [vmem:[%s2 + $0x90] sm:$0xff] %v2426
  %2686 = vst [vmem:[%s2 + $0x98] sm:$0xff] %v2658
  %2687 = vst [vmem:[%s2 + $0xa0] sm:$0xff] %v1964
  %2688 = vst [vmem:[%s2 + $0xa8] sm:$0xff] %v2196
  %2689 = vst [vmem:[%s2 + $0xb0] sm:$0xff] %v2428
  %2690 = vst [vmem:[%s2 + $0xb8] sm:$0xff] %v2660
  %2691 = vst [vmem:[%s2 + $0xc0] sm:$0xff] %v1967
  %2692 = vst [vmem:[%s2 + $0xc8] sm:$0xff] %v2199
  %2693 = vst [vmem:[%s2 + $0xd0] sm:$0xff] %v2431
  %2694 = vst [vmem:[%s2 + $0xd8] sm:$0xff] %v2663
  %2695 = vst [vmem:[%s2 + $0xe0] sm:$0xff] %v1969
  %2696 = vst [vmem:[%s2 + $0xe8] sm:$0xff] %v2201
  %2697 = vst [vmem:[%s2 + $0xf0] sm:$0xff] %v2433
  %2698 = vst [vmem:[%s2 + $0xf8] sm:$0xff] %v2665
  // Predicated region
  $region10: #{generator_forward.15} parent=0 // pred_check
    _
  $region11: #{generator_forward.15} parent=0 // pred_check_branch
    %2700 = sbr.rel (0) target = $region13
  $region12: #{generator_forward.15} parent=0 // pred_region
    _
  $region13: #{generator_forward.15} parent=0 // pred_fallthru
    _
  // Predicated region
  $region14: #{generator_forward.15} parent=0 // pred_check
    _
  $region15: #{generator_forward.15} parent=0 // pred_check_branch
    %2702 = sbr.rel (0) target = $region17
  $region16: #{generator_forward.15} parent=0 // pred_region
    _
  $region17: #{generator_forward.15} parent=0 // pred_fallthru
    _

// kernel: generator_forward.18
$region0: #{generator_forward.18}
  #allocation0 [shape = 'u32[]', space=smem, size = 0x4, offset = 0x4, fixed_abs, tag = 'smem constant byte address 0x4 - core index']
  #allocation1 [shape = 'u32[72,128]{1,0:T(1,128)}', space=vmem, size = 0x9000, scoped, tag = 'internal scratch']
  %s0 = inlined_call_operand.vmem [shape: bf16[176,512], index: 0, kind: input, shape index: {}]
  %s1 = inlined_call_operand.vmem [shape: bf16[512,256], index: 1, kind: input, shape index: {}]
  %s2 = inlined_call_operand.vmem [shape: f32[176,256], index: 2, kind: output, shape index: {}]
  %s3 = sld [smem:[#allocation0]]
  $region18: #{generator_forward.18} parent=0
    _
  %s5 = ssub.s32 1, %s3
  %s6 = scalar_select 0, %s5, %s3
  // Predicated region
  $region2: #{generator_forward.18} parent=0 // pred_check
    _
  $region3: #{generator_forward.18} parent=0 // pred_check_branch
    %8 = sbr.rel (0) target = $region5
  $region4: #{generator_forward.18} parent=0 // pred_region
    _
  $region5: #{generator_forward.18} parent=0 // pred_fallthru
    _
  // Predicated region
  $region6: #{generator_forward.18} parent=0 // pred_check
    _
  $region7: #{generator_forward.18} parent=0 // pred_check_branch
    %10 = sbr.rel (0) target = $region9
  $region8: #{generator_forward.18} parent=0 // pred_region
    _
  $region9: #{generator_forward.18} parent=0 // pred_fallthru
    _
  %v11 = vld [vmem:[%s0] sm:$0xff]
  %v12 = vld [vmem:[%s0 + $0x8] sm:$0xff]
  %v13 = vld [vmem:[%s0 + $0x10] sm:$0xff]
  %v14 = vld [vmem:[%s0 + $0x18] sm:$0xff]
  %v15 = vld [vmem:[%s0 + $0x20] sm:$0xff]
  %v16 = vld [vmem:[%s0 + $0x28] sm:$0xff]
  %v17 = vld [vmem:[%s0 + $0x30] sm:$0xff]
  %v18 = vld [vmem:[%s0 + $0x38] sm:$0xff]
  %v19 = vld [vmem:[%s0 + $0x40] sm:$0xff]
  %v20 = vld [vmem:[%s0 + $0x48] sm:$0xff]
  %v21 = vld [vmem:[%s0 + $0x50] sm:$0xff]
  %v22 = vld [vmem:[%s0 + $0x58] sm:$0xff]
  %v23 = vld [vmem:[%s0 + $0x60] sm:$0xff]
  %v24 = vld [vmem:[%s0 + $0x68] sm:$0xff]
  %v25 = vld [vmem:[%s0 + $0x70] sm:$0xff]
  %v26 = vld [vmem:[%s0 + $0x78] sm:$0xff]
  %v27 = vld [vmem:[%s0 + $0x80] sm:$0xff]
  %v28 = vld [vmem:[%s0 + $0x88] sm:$0xff]
  %v29 = vld [vmem:[%s0 + $0x90] sm:$0xff]
  %v30 = vld [vmem:[%s0 + $0x98] sm:$0xff]
  %v31 = vld [vmem:[%s0 + $0xa0] sm:$0xff]
  %v32 = vld [vmem:[%s0 + $0xa8] sm:$0xff]
  %v33 = vld [vmem:[%s0 + $0xb0] sm:$0xff]
  %v34 = vld [vmem:[%s0 + $0xb8] sm:$0xff]
  %v35 = vld [vmem:[%s0 + $0xc0] sm:$0xff]
  %v36 = vld [vmem:[%s0 + $0xc8] sm:$0xff]
  %v37 = vld [vmem:[%s0 + $0xd0] sm:$0xff]
  %v38 = vld [vmem:[%s0 + $0xd8] sm:$0xff]
  %v39 = vld [vmem:[%s0 + $0xe0] sm:$0xff]
  %v40 = vld [vmem:[%s0 + $0xe8] sm:$0xff]
  %v41 = vld [vmem:[%s0 + $0xf0] sm:$0xff]
  %v42 = vld [vmem:[%s0 + $0xf8] sm:$0xff]
  %v43 = vld [vmem:[%s0 + $0x100] sm:$0xff]
  %v44 = vld [vmem:[%s0 + $0x108] sm:$0xff]
  %v45 = vld [vmem:[%s0 + $0x110] sm:$0xff]
  %v46 = vld [vmem:[%s0 + $0x118] sm:$0xff]
  %v47 = vld [vmem:[%s0 + $0x120] sm:$0xff]
  %v48 = vld [vmem:[%s0 + $0x128] sm:$0xff]
  %v49 = vld [vmem:[%s0 + $0x130] sm:$0xff]
  %v50 = vld [vmem:[%s0 + $0x138] sm:$0xff]
  %v51 = vld [vmem:[%s0 + $0x140] sm:$0xff]
  %v52 = vld [vmem:[%s0 + $0x148] sm:$0xff]
  %v53 = vld [vmem:[%s0 + $0x150] sm:$0xff]
  %v54 = vld [vmem:[%s0 + $0x158] sm:$0xff]
  %v55 = vld [vmem:[%s1] sm:$0xff]
  %v56 = vld [vmem:[%s1 + $0x8] sm:$0xff]
  %v57 = vld [vmem:[%s1 + $0x10] sm:$0xff]
  %v58 = vld [vmem:[%s1 + $0x18] sm:$0xff]
  %v59 = vld [vmem:[%s1 + $0x20] sm:$0xff]
  %v60 = vld [vmem:[%s1 + $0x28] sm:$0xff]
  %v61 = vld [vmem:[%s1 + $0x30] sm:$0xff]
  %v62 = vld [vmem:[%s1 + $0x38] sm:$0xff]
  %v63 = vld [vmem:[%s1 + $0x40] sm:$0xff]
  %v64 = vld [vmem:[%s1 + $0x48] sm:$0xff]
  %v65 = vld [vmem:[%s1 + $0x50] sm:$0xff]
  %v66 = vld [vmem:[%s1 + $0x58] sm:$0xff]
  %v67 = vld [vmem:[%s1 + $0x60] sm:$0xff]
  %v68 = vld [vmem:[%s1 + $0x68] sm:$0xff]
  %v69 = vld [vmem:[%s1 + $0x70] sm:$0xff]
  %v70 = vld [vmem:[%s1 + $0x78] sm:$0xff]
  %v71 = vld [vmem:[%s1 + $0x80] sm:$0xff]
  %v72 = vld [vmem:[%s1 + $0x88] sm:$0xff]
  %v73 = vld [vmem:[%s1 + $0x90] sm:$0xff]
  %v74 = vld [vmem:[%s1 + $0x98] sm:$0xff]
  %v75 = vld [vmem:[%s1 + $0xa0] sm:$0xff]
  %v76 = vld [vmem:[%s1 + $0xa8] sm:$0xff]
  %v77 = vld [vmem:[%s1 + $0xb0] sm:$0xff]
  %v78 = vld [vmem:[%s1 + $0xb8] sm:$0xff]
  %v79 = vld [vmem:[%s1 + $0xc0] sm:$0xff]
  %v80 = vld [vmem:[%s1 + $0xc8] sm:$0xff]
  %v81 = vld [vmem:[%s1 + $0xd0] sm:$0xff]
  %v82 = vld [vmem:[%s1 + $0xd8] sm:$0xff]
  %v83 = vld [vmem:[%s1 + $0xe0] sm:$0xff]
  %v84 = vld [vmem:[%s1 + $0xe8] sm:$0xff]
  %v85 = vld [vmem:[%s1 + $0xf0] sm:$0xff]
  %v86 = vld [vmem:[%s1 + $0xf8] sm:$0xff]
  %v87 = vld [vmem:[%s1 + $0x100] sm:$0xff]
  %v88 = vld [vmem:[%s1 + $0x108] sm:$0xff]
  %v89 = vld [vmem:[%s1 + $0x110] sm:$0xff]
  %v90 = vld [vmem:[%s1 + $0x118] sm:$0xff]
  %v91 = vld [vmem:[%s1 + $0x120] sm:$0xff]
  %v92 = vld [vmem:[%s1 + $0x128] sm:$0xff]
  %v93 = vld [vmem:[%s1 + $0x130] sm:$0xff]
  %v94 = vld [vmem:[%s1 + $0x138] sm:$0xff]
  %v95 = vld [vmem:[%s1 + $0x140] sm:$0xff]
  %v96 = vld [vmem:[%s1 + $0x148] sm:$0xff]
  %v97 = vld [vmem:[%s1 + $0x150] sm:$0xff]
  %v98 = vld [vmem:[%s1 + $0x158] sm:$0xff]
  %v99 = vld [vmem:[%s1 + $0x160] sm:$0xff]
  %v100 = vld [vmem:[%s1 + $0x168] sm:$0xff]
  %v101 = vld [vmem:[%s1 + $0x170] sm:$0xff]
  %v102 = vld [vmem:[%s1 + $0x178] sm:$0xff]
  %v103 = vld [vmem:[%s1 + $0x180] sm:$0xff]
  %v104 = vld [vmem:[%s1 + $0x188] sm:$0xff]
  %v105 = vld [vmem:[%s1 + $0x190] sm:$0xff]
  %v106 = vld [vmem:[%s1 + $0x198] sm:$0xff]
  %v107 = vld [vmem:[%s1 + $0x1a0] sm:$0xff]
  %v108 = vld [vmem:[%s1 + $0x1a8] sm:$0xff]
  %v109 = vld [vmem:[%s1 + $0x1b0] sm:$0xff]
  %v110 = vld [vmem:[%s1 + $0x1b8] sm:$0xff]
  %v111 = vld [vmem:[%s1 + $0x1c0] sm:$0xff]
  %v112 = vld [vmem:[%s1 + $0x1c8] sm:$0xff]
  %v113 = vld [vmem:[%s1 + $0x1d0] sm:$0xff]
  %v114 = vld [vmem:[%s1 + $0x1d8] sm:$0xff]
  %v115 = vld [vmem:[%s1 + $0x1e0] sm:$0xff]
  %v116 = vld [vmem:[%s1 + $0x1e8] sm:$0xff]
  %v117 = vld [vmem:[%s1 + $0x1f0] sm:$0xff]
  %v118 = vld [vmem:[%s1 + $0x1f8] sm:$0xff]
  %v163 = vunpack.c.l.b16 %v11
  %v164 = vunpack.c.h.b16 %v11
  %v165 = vunpack.c.l.b16 %v12
  %v166 = vunpack.c.h.b16 %v12
  %v167 = vunpack.c.l.b16 %v13
  %v168 = vunpack.c.h.b16 %v13
  %v169 = vunpack.c.l.b16 %v14
  %v170 = vunpack.c.h.b16 %v14
  %v171 = vunpack.c.l.b16 %v15
  %v172 = vunpack.c.h.b16 %v15
  %v173 = vunpack.c.l.b16 %v16
  %v174 = vunpack.c.h.b16 %v16
  %v175 = vunpack.c.l.b16 %v17
  %v176 = vunpack.c.h.b16 %v17
  %v177 = vunpack.c.l.b16 %v18
  %v178 = vunpack.c.h.b16 %v18
  %v179 = vunpack.c.l.b16 %v19
  %v180 = vunpack.c.h.b16 %v19
  %v181 = vunpack.c.l.b16 %v20
  %v182 = vunpack.c.h.b16 %v20
  %v183 = vunpack.c.l.b16 %v21
  %v184 = vunpack.c.h.b16 %v21
  %v185 = vunpack.c.l.b16 %v22
  %v186 = vunpack.c.h.b16 %v22
  %v187 = vunpack.c.l.b16 %v23
  %v188 = vunpack.c.h.b16 %v23
  %v189 = vunpack.c.l.b16 %v24
  %v190 = vunpack.c.h.b16 %v24
  %v191 = vunpack.c.l.b16 %v25
  %v192 = vunpack.c.h.b16 %v25
  %v193 = vunpack.c.l.b16 %v26
  %v194 = vunpack.c.h.b16 %v26
  %v195 = vunpack.c.l.b16 %v27
  %v196 = vunpack.c.h.b16 %v27
  %v197 = vunpack.c.l.b16 %v28
  %v198 = vunpack.c.h.b16 %v28
  %v199 = vunpack.c.l.b16 %v29
  %v200 = vunpack.c.h.b16 %v29
  %v201 = vunpack.c.l.b16 %v30
  %v202 = vunpack.c.h.b16 %v30
  %v203 = vunpack.c.l.b16 %v31
  %v204 = vunpack.c.h.b16 %v31
  %v205 = vunpack.c.l.b16 %v32
  %v206 = vunpack.c.h.b16 %v32
  %v207 = vunpack.c.l.b16 %v33
  %v208 = vunpack.c.h.b16 %v33
  %v209 = vunpack.c.l.b16 %v34
  %v210 = vunpack.c.h.b16 %v34
  %v211 = vunpack.c.l.b16 %v35
  %v212 = vunpack.c.h.b16 %v35
  %v213 = vunpack.c.l.b16 %v36
  %v214 = vunpack.c.h.b16 %v36
  %v215 = vunpack.c.l.b16 %v37
  %v216 = vunpack.c.h.b16 %v37
  %v217 = vunpack.c.l.b16 %v38
  %v218 = vunpack.c.h.b16 %v38
  %v219 = vunpack.c.l.b16 %v39
  %v220 = vunpack.c.h.b16 %v39
  %v221 = vunpack.c.l.b16 %v40
  %v222 = vunpack.c.h.b16 %v40
  %v223 = vunpack.c.l.b16 %v41
  %v224 = vunpack.c.h.b16 %v41
  %v225 = vunpack.c.l.b16 %v42
  %v226 = vunpack.c.h.b16 %v42
  %v227 = vunpack.c.l.b16 %v43
  %v228 = vunpack.c.h.b16 %v43
  %v229 = vunpack.c.l.b16 %v44
  %v230 = vunpack.c.h.b16 %v44
  %v231 = vunpack.c.l.b16 %v45
  %v232 = vunpack.c.h.b16 %v45
  %v233 = vunpack.c.l.b16 %v46
  %v234 = vunpack.c.h.b16 %v46
  %v235 = vunpack.c.l.b16 %v47
  %v236 = vunpack.c.h.b16 %v47
  %v237 = vunpack.c.l.b16 %v48
  %v238 = vunpack.c.h.b16 %v48
  %v239 = vunpack.c.l.b16 %v49
  %v240 = vunpack.c.h.b16 %v49
  %v241 = vunpack.c.l.b16 %v50
  %v242 = vunpack.c.h.b16 %v50
  %v243 = vunpack.c.l.b16 %v51
  %v244 = vunpack.c.h.b16 %v51
  %v245 = vunpack.c.l.b16 %v52
  %v246 = vunpack.c.h.b16 %v52
  %v247 = vunpack.c.l.b16 %v53
  %v248 = vunpack.c.h.b16 %v53
  %v249 = vunpack.c.l.b16 %v54
  %v250 = vunpack.c.h.b16 %v54
  %v251 = vpack.c.b16 %v167, %v163
  %v252 = vpack.c.b16 %v168, %v164
  %v253 = vpack.c.b16 %v169, %v165
  %v254 = vpack.c.b16 %v170, %v166
  %v255 = vpack.c.b16 %v175, %v171
  %v256 = vpack.c.b16 %v176, %v172
  %v257 = vpack.c.b16 %v177, %v173
  %v258 = vpack.c.b16 %v178, %v174
  %v259 = vpack.c.b16 %v183, %v179
  %v260 = vpack.c.b16 %v184, %v180
  %v261 = vpack.c.b16 %v185, %v181
  %v262 = vpack.c.b16 %v186, %v182
  %v263 = vpack.c.b16 %v191, %v187
  %v264 = vpack.c.b16 %v192, %v188
  %v265 = vpack.c.b16 %v193, %v189
  %v266 = vpack.c.b16 %v194, %v190
  %v267 = vpack.c.b16 %v199, %v195
  %v268 = vpack.c.b16 %v200, %v196
  %v269 = vpack.c.b16 %v201, %v197
  %v270 = vpack.c.b16 %v202, %v198
  %v271 = vpack.c.b16 %v207, %v203
  %v272 = vpack.c.b16 %v208, %v204
  %v273 = vpack.c.b16 %v209, %v205
  %v274 = vpack.c.b16 %v210, %v206
  %v275 = vpack.c.b16 %v215, %v211
  %v276 = vpack.c.b16 %v216, %v212
  %v277 = vpack.c.b16 %v217, %v213
  %v278 = vpack.c.b16 %v218, %v214
  %v279 = vpack.c.b16 %v223, %v219
  %v280 = vpack.c.b16 %v224, %v220
  %v281 = vpack.c.b16 %v225, %v221
  %v282 = vpack.c.b16 %v226, %v222
  %v283 = vpack.c.b16 %v231, %v227
  %v284 = vpack.c.b16 %v232, %v228
  %v285 = vpack.c.b16 %v233, %v229
  %v286 = vpack.c.b16 %v234, %v230
  %v287 = vpack.c.b16 %v239, %v235
  %v288 = vpack.c.b16 %v240, %v236
  %v289 = vpack.c.b16 %v241, %v237
  %v290 = vpack.c.b16 %v242, %v238
  %v291 = vpack.c.b16 %v247, %v243
  %v292 = vpack.c.b16 %v248, %v244
  %v293 = vpack.c.b16 %v249, %v245
  %v294 = vpack.c.b16 %v250, %v246
  %v403 = vunpack.c.l.b16 %v55
  %v404 = vunpack.c.h.b16 %v55
  %v405 = vunpack.c.l.b16 %v56
  %v406 = vunpack.c.h.b16 %v56
  %v407 = vunpack.c.l.b16 %v57
  %v408 = vunpack.c.h.b16 %v57
  %v409 = vunpack.c.l.b16 %v58
  %v410 = vunpack.c.h.b16 %v58
  %v411 = vunpack.c.l.b16 %v59
  %v412 = vunpack.c.h.b16 %v59
  %v413 = vunpack.c.l.b16 %v60
  %v414 = vunpack.c.h.b16 %v60
  %v415 = vunpack.c.l.b16 %v61
  %v416 = vunpack.c.h.b16 %v61
  %v417 = vunpack.c.l.b16 %v62
  %v418 = vunpack.c.h.b16 %v62
  %v419 = vunpack.c.l.b16 %v63
  %v420 = vunpack.c.h.b16 %v63
  %v421 = vunpack.c.l.b16 %v64
  %v422 = vunpack.c.h.b16 %v64
  %v423 = vunpack.c.l.b16 %v65
  %v424 = vunpack.c.h.b16 %v65
  %v425 = vunpack.c.l.b16 %v66
  %v426 = vunpack.c.h.b16 %v66
  %v427 = vunpack.c.l.b16 %v67
  %v428 = vunpack.c.h.b16 %v67
  %v429 = vunpack.c.l.b16 %v68
  %v430 = vunpack.c.h.b16 %v68
  %v431 = vunpack.c.l.b16 %v69
  %v432 = vunpack.c.h.b16 %v69
  %v433 = vunpack.c.l.b16 %v70
  %v434 = vunpack.c.h.b16 %v70
  %v435 = vunpack.c.l.b16 %v71
  %v436 = vunpack.c.h.b16 %v71
  %v437 = vunpack.c.l.b16 %v72
  %v438 = vunpack.c.h.b16 %v72
  %v439 = vunpack.c.l.b16 %v73
  %v440 = vunpack.c.h.b16 %v73
  %v441 = vunpack.c.l.b16 %v74
  %v442 = vunpack.c.h.b16 %v74
  %v443 = vunpack.c.l.b16 %v75
  %v444 = vunpack.c.h.b16 %v75
  %v445 = vunpack.c.l.b16 %v76
  %v446 = vunpack.c.h.b16 %v76
  %v447 = vunpack.c.l.b16 %v77
  %v448 = vunpack.c.h.b16 %v77
  %v449 = vunpack.c.l.b16 %v78
  %v450 = vunpack.c.h.b16 %v78
  %v451 = vunpack.c.l.b16 %v79
  %v452 = vunpack.c.h.b16 %v79
  %v453 = vunpack.c.l.b16 %v80
  %v454 = vunpack.c.h.b16 %v80
  %v455 = vunpack.c.l.b16 %v81
  %v456 = vunpack.c.h.b16 %v81
  %v457 = vunpack.c.l.b16 %v82
  %v458 = vunpack.c.h.b16 %v82
  %v459 = vunpack.c.l.b16 %v83
  %v460 = vunpack.c.h.b16 %v83
  %v461 = vunpack.c.l.b16 %v84
  %v462 = vunpack.c.h.b16 %v84
  %v463 = vunpack.c.l.b16 %v85
  %v464 = vunpack.c.h.b16 %v85
  %v465 = vunpack.c.l.b16 %v86
  %v466 = vunpack.c.h.b16 %v86
  %v467 = vunpack.c.l.b16 %v87
  %v468 = vunpack.c.h.b16 %v87
  %v469 = vunpack.c.l.b16 %v88
  %v470 = vunpack.c.h.b16 %v88
  %v471 = vunpack.c.l.b16 %v89
  %v472 = vunpack.c.h.b16 %v89
  %v473 = vunpack.c.l.b16 %v90
  %v474 = vunpack.c.h.b16 %v90
  %v475 = vunpack.c.l.b16 %v91
  %v476 = vunpack.c.h.b16 %v91
  %v477 = vunpack.c.l.b16 %v92
  %v478 = vunpack.c.h.b16 %v92
  %v479 = vunpack.c.l.b16 %v93
  %v480 = vunpack.c.h.b16 %v93
  %v481 = vunpack.c.l.b16 %v94
  %v482 = vunpack.c.h.b16 %v94
  %v483 = vunpack.c.l.b16 %v95
  %v484 = vunpack.c.h.b16 %v95
  %v485 = vunpack.c.l.b16 %v96
  %v486 = vunpack.c.h.b16 %v96
  %v487 = vunpack.c.l.b16 %v97
  %v488 = vunpack.c.h.b16 %v97
  %v489 = vunpack.c.l.b16 %v98
  %v490 = vunpack.c.h.b16 %v98
  %v491 = vunpack.c.l.b16 %v99
  %v492 = vunpack.c.h.b16 %v99
  %v493 = vunpack.c.l.b16 %v100
  %v494 = vunpack.c.h.b16 %v100
  %v495 = vunpack.c.l.b16 %v101
  %v496 = vunpack.c.h.b16 %v101
  %v497 = vunpack.c.l.b16 %v102
  %v498 = vunpack.c.h.b16 %v102
  %v499 = vunpack.c.l.b16 %v103
  %v500 = vunpack.c.h.b16 %v103
  %v501 = vunpack.c.l.b16 %v104
  %v502 = vunpack.c.h.b16 %v104
  %v503 = vunpack.c.l.b16 %v105
  %v504 = vunpack.c.h.b16 %v105
  %v505 = vunpack.c.l.b16 %v106
  %v506 = vunpack.c.h.b16 %v106
  %v507 = vunpack.c.l.b16 %v107
  %v508 = vunpack.c.h.b16 %v107
  %v509 = vunpack.c.l.b16 %v108
  %v510 = vunpack.c.h.b16 %v108
  %v511 = vunpack.c.l.b16 %v109
  %v512 = vunpack.c.h.b16 %v109
  %v513 = vunpack.c.l.b16 %v110
  %v514 = vunpack.c.h.b16 %v110
  %v515 = vunpack.c.l.b16 %v111
  %v516 = vunpack.c.h.b16 %v111
  %v517 = vunpack.c.l.b16 %v112
  %v518 = vunpack.c.h.b16 %v112
  %v519 = vunpack.c.l.b16 %v113
  %v520 = vunpack.c.h.b16 %v113
  %v521 = vunpack.c.l.b16 %v114
  %v522 = vunpack.c.h.b16 %v114
  %v523 = vunpack.c.l.b16 %v115
  %v524 = vunpack.c.h.b16 %v115
  %v525 = vunpack.c.l.b16 %v116
  %v526 = vunpack.c.h.b16 %v116
  %v527 = vunpack.c.l.b16 %v117
  %v528 = vunpack.c.h.b16 %v117
  %v529 = vunpack.c.l.b16 %v118
  %v530 = vunpack.c.h.b16 %v118
  %v531 = vpack.c.b16 %v405, %v403
  %v532 = vpack.c.b16 %v406, %v404
  %v533 = vpack.c.b16 %v409, %v407
  %v534 = vpack.c.b16 %v410, %v408
  %v535 = vpack.c.b16 %v413, %v411
  %v536 = vpack.c.b16 %v414, %v412
  %v537 = vpack.c.b16 %v417, %v415
  %v538 = vpack.c.b16 %v418, %v416
  %v539 = vpack.c.b16 %v421, %v419
  %v540 = vpack.c.b16 %v422, %v420
  %v541 = vpack.c.b16 %v425, %v423
  %v542 = vpack.c.b16 %v426, %v424
  %v543 = vpack.c.b16 %v429, %v427
  %v544 = vpack.c.b16 %v430, %v428
  %v545 = vpack.c.b16 %v433, %v431
  %v546 = vpack.c.b16 %v434, %v432
  %v547 = vpack.c.b16 %v437, %v435
  %v548 = vpack.c.b16 %v438, %v436
  %v549 = vpack.c.b16 %v441, %v439
  %v550 = vpack.c.b16 %v442, %v440
  %v551 = vpack.c.b16 %v445, %v443
  %v552 = vpack.c.b16 %v446, %v444
  %v553 = vpack.c.b16 %v449, %v447
  %v554 = vpack.c.b16 %v450, %v448
  %v555 = vpack.c.b16 %v453, %v451
  %v556 = vpack.c.b16 %v454, %v452
  %v557 = vpack.c.b16 %v457, %v455
  %v558 = vpack.c.b16 %v458, %v456
  %v559 = vpack.c.b16 %v461, %v459
  %v560 = vpack.c.b16 %v462, %v460
  %v561 = vpack.c.b16 %v465, %v463
  %v562 = vpack.c.b16 %v466, %v464
  %v563 = vpack.c.b16 %v469, %v467
  %v564 = vpack.c.b16 %v470, %v468
  %v565 = vpack.c.b16 %v473, %v471
  %v566 = vpack.c.b16 %v474, %v472
  %v567 = vpack.c.b16 %v477, %v475
  %v568 = vpack.c.b16 %v478, %v476
  %v569 = vpack.c.b16 %v481, %v479
  %v570 = vpack.c.b16 %v482, %v480
  %v571 = vpack.c.b16 %v485, %v483
  %v572 = vpack.c.b16 %v486, %v484
  %v573 = vpack.c.b16 %v489, %v487
  %v574 = vpack.c.b16 %v490, %v488
  %v575 = vpack.c.b16 %v493, %v491
  %v576 = vpack.c.b16 %v494, %v492
  %v577 = vpack.c.b16 %v497, %v495
  %v578 = vpack.c.b16 %v498, %v496
  %v579 = vpack.c.b16 %v501, %v499
  %v580 = vpack.c.b16 %v502, %v500
  %v581 = vpack.c.b16 %v505, %v503
  %v582 = vpack.c.b16 %v506, %v504
  %v583 = vpack.c.b16 %v509, %v507
  %v584 = vpack.c.b16 %v510, %v508
  %v585 = vpack.c.b16 %v513, %v511
  %v586 = vpack.c.b16 %v514, %v512
  %v587 = vpack.c.b16 %v517, %v515
  %v588 = vpack.c.b16 %v518, %v516
  %v589 = vpack.c.b16 %v521, %v519
  %v590 = vpack.c.b16 %v522, %v520
  %v591 = vpack.c.b16 %v525, %v523
  %v592 = vpack.c.b16 %v526, %v524
  %v593 = vpack.c.b16 %v529, %v527
  %v594 = vpack.c.b16 %v530, %v528
  %659 = vmatpush.bf16.msra.mxu0 %v545
  %660 = vmatpush.bf16.msra.mxu0 %v543
  %661 = vmatpush.bf16.msra.mxu0 %v541
  %662 = vmatpush.bf16.msra.mxu0 %v539
  %663 = vmatpush.bf16.msra.mxu0 %v537
  %664 = vmatpush.bf16.msra.mxu0 %v535
  %665 = vmatpush.bf16.msra.mxu0 %v533
  %666 = vmatpush.bf16.msra.mxu0 %v531
  %667 = vmatmul.bf16.gmra.mxu0 %v251
  %v668 = vpop.f32.mrf.mxu0
  %v669 = vadd.f32 0.0, %v668
  %v670 = vpop.f32.mrf.mxu0
  %v671 = vadd.f32 0.0, %v670
  %672 = vmatmul.bf16.gmra.mxu0 %v255
  %v673 = vpop.f32.mrf.mxu0
  %v674 = vadd.f32 0.0, %v673
  %v675 = vpop.f32.mrf.mxu0
  %v676 = vadd.f32 0.0, %v675
  %677 = vmatmul.bf16.gmra.mxu0 %v259
  %v678 = vpop.f32.mrf.mxu0
  %v679 = vadd.f32 0.0, %v678
  %v680 = vpop.f32.mrf.mxu0
  %v681 = vadd.f32 0.0, %v680
  %682 = vmatmul.bf16.gmra.mxu0 %v263
  %v683 = vpop.f32.mrf.mxu0
  %v684 = vadd.f32 0.0, %v683
  %v685 = vpop.f32.mrf.mxu0
  %v686 = vadd.f32 0.0, %v685
  %687 = vmatmul.bf16.gmra.mxu0 %v267
  %v688 = vpop.f32.mrf.mxu0
  %v689 = vadd.f32 0.0, %v688
  %v690 = vpop.f32.mrf.mxu0
  %v691 = vadd.f32 0.0, %v690
  %692 = vmatmul.bf16.gmra.mxu0 %v271
  %v693 = vpop.f32.mrf.mxu0
  %v694 = vadd.f32 0.0, %v693
  %v695 = vpop.f32.mrf.mxu0
  %v696 = vadd.f32 0.0, %v695
  %697 = vmatmul.bf16.gmra.mxu0 %v275
  %v698 = vpop.f32.mrf.mxu0
  %v699 = vadd.f32 0.0, %v698
  %v700 = vpop.f32.mrf.mxu0
  %v701 = vadd.f32 0.0, %v700
  %702 = vmatmul.bf16.gmra.mxu0 %v279
  %v703 = vpop.f32.mrf.mxu0
  %v704 = vadd.f32 0.0, %v703
  %v705 = vpop.f32.mrf.mxu0
  %v706 = vadd.f32 0.0, %v705
  %707 = vmatmul.bf16.gmra.mxu0 %v283
  %v708 = vpop.f32.mrf.mxu0
  %v709 = vadd.f32 0.0, %v708
  %v710 = vpop.f32.mrf.mxu0
  %v711 = vadd.f32 0.0, %v710
  %712 = vmatmul.bf16.gmra.mxu0 %v287
  %v713 = vpop.f32.mrf.mxu0
  %v714 = vadd.f32 0.0, %v713
  %v715 = vpop.f32.mrf.mxu0
  %v716 = vadd.f32 0.0, %v715
  %717 = vmatmul.bf16.gmra.mxu0 %v291
  %v718 = vpop.f32.mrf.mxu0
  %v719 = vadd.f32 0.0, %v718
  %v720 = vpop.f32.mrf.mxu0
  %v721 = vadd.f32 0.0, %v720
  %722 = vdwg.mxu0
  %723 = vmatpush.bf16.msra.mxu0 %v561
  %724 = vmatpush.bf16.msra.mxu0 %v559
  %725 = vmatpush.bf16.msra.mxu0 %v557
  %726 = vmatpush.bf16.msra.mxu0 %v555
  %727 = vmatpush.bf16.msra.mxu0 %v553
  %728 = vmatpush.bf16.msra.mxu0 %v551
  %729 = vmatpush.bf16.msra.mxu0 %v549
  %730 = vmatpush.bf16.msra.mxu0 %v547
  %731 = vmatmul.bf16.gmra.mxu0 %v252
  %v732 = vpop.f32.mrf.mxu0
  %v733 = vadd.f32 %v669, %v732
  %v734 = vpop.f32.mrf.mxu0
  %v735 = vadd.f32 %v671, %v734
  %736 = vmatmul.bf16.gmra.mxu0 %v256
  %v737 = vpop.f32.mrf.mxu0
  %v738 = vadd.f32 %v674, %v737
  %v739 = vpop.f32.mrf.mxu0
  %v740 = vadd.f32 %v676, %v739
  %741 = vmatmul.bf16.gmra.mxu0 %v260
  %v742 = vpop.f32.mrf.mxu0
  %v743 = vadd.f32 %v679, %v742
  %v744 = vpop.f32.mrf.mxu0
  %v745 = vadd.f32 %v681, %v744
  %746 = vmatmul.bf16.gmra.mxu0 %v264
  %v747 = vpop.f32.mrf.mxu0
  %v748 = vadd.f32 %v684, %v747
  %v749 = vpop.f32.mrf.mxu0
  %v750 = vadd.f32 %v686, %v749
  %751 = vmatmul.bf16.gmra.mxu0 %v268
  %v752 = vpop.f32.mrf.mxu0
  %v753 = vadd.f32 %v689, %v752
  %v754 = vpop.f32.mrf.mxu0
  %v755 = vadd.f32 %v691, %v754
  %756 = vmatmul.bf16.gmra.mxu0 %v272
  %v757 = vpop.f32.mrf.mxu0
  %v758 = vadd.f32 %v694, %v757
  %v759 = vpop.f32.mrf.mxu0
  %v760 = vadd.f32 %v696, %v759
  %761 = vmatmul.bf16.gmra.mxu0 %v276
  %v762 = vpop.f32.mrf.mxu0
  %v763 = vadd.f32 %v699, %v762
  %v764 = vpop.f32.mrf.mxu0
  %v765 = vadd.f32 %v701, %v764
  %766 = vmatmul.bf16.gmra.mxu0 %v280
  %v767 = vpop.f32.mrf.mxu0
  %v768 = vadd.f32 %v704, %v767
  %v769 = vpop.f32.mrf.mxu0
  %v770 = vadd.f32 %v706, %v769
  %771 = vmatmul.bf16.gmra.mxu0 %v284
  %v772 = vpop.f32.mrf.mxu0
  %v773 = vadd.f32 %v709, %v772
  %v774 = vpop.f32.mrf.mxu0
  %v775 = vadd.f32 %v711, %v774
  %776 = vmatmul.bf16.gmra.mxu0 %v288
  %v777 = vpop.f32.mrf.mxu0
  %v778 = vadd.f32 %v714, %v777
  %v779 = vpop.f32.mrf.mxu0
  %v780 = vadd.f32 %v716, %v779
  %781 = vmatmul.bf16.gmra.mxu0 %v292
  %v782 = vpop.f32.mrf.mxu0
  %v783 = vadd.f32 %v719, %v782
  %v784 = vpop.f32.mrf.mxu0
  %v785 = vadd.f32 %v721, %v784
  %786 = vdwg.mxu0
  %787 = vmatpush.bf16.msra.mxu0 %v577
  %788 = vmatpush.bf16.msra.mxu0 %v575
  %789 = vmatpush.bf16.msra.mxu0 %v573
  %790 = vmatpush.bf16.msra.mxu0 %v571
  %791 = vmatpush.bf16.msra.mxu0 %v569
  %792 = vmatpush.bf16.msra.mxu0 %v567
  %793 = vmatpush.bf16.msra.mxu0 %v565
  %794 = vmatpush.bf16.msra.mxu0 %v563
  %795 = vmatmul.bf16.gmra.mxu0 %v253
  %v796 = vpop.f32.mrf.mxu0
  %v797 = vadd.f32 %v733, %v796
  %v798 = vpop.f32.mrf.mxu0
  %v799 = vadd.f32 %v735, %v798
  %800 = vmatmul.bf16.gmra.mxu0 %v257
  %v801 = vpop.f32.mrf.mxu0
  %v802 = vadd.f32 %v738, %v801
  %v803 = vpop.f32.mrf.mxu0
  %v804 = vadd.f32 %v740, %v803
  %805 = vmatmul.bf16.gmra.mxu0 %v261
  %v806 = vpop.f32.mrf.mxu0
  %v807 = vadd.f32 %v743, %v806
  %v808 = vpop.f32.mrf.mxu0
  %v809 = vadd.f32 %v745, %v808
  %810 = vmatmul.bf16.gmra.mxu0 %v265
  %v811 = vpop.f32.mrf.mxu0
  %v812 = vadd.f32 %v748, %v811
  %v813 = vpop.f32.mrf.mxu0
  %v814 = vadd.f32 %v750, %v813
  %815 = vmatmul.bf16.gmra.mxu0 %v269
  %v816 = vpop.f32.mrf.mxu0
  %v817 = vadd.f32 %v753, %v816
  %v818 = vpop.f32.mrf.mxu0
  %v819 = vadd.f32 %v755, %v818
  %820 = vmatmul.bf16.gmra.mxu0 %v273
  %v821 = vpop.f32.mrf.mxu0
  %v822 = vadd.f32 %v758, %v821
  %v823 = vpop.f32.mrf.mxu0
  %v824 = vadd.f32 %v760, %v823
  %825 = vmatmul.bf16.gmra.mxu0 %v277
  %v826 = vpop.f32.mrf.mxu0
  %v827 = vadd.f32 %v763, %v826
  %v828 = vpop.f32.mrf.mxu0
  %v829 = vadd.f32 %v765, %v828
  %830 = vmatmul.bf16.gmra.mxu0 %v281
  %v831 = vpop.f32.mrf.mxu0
  %v832 = vadd.f32 %v768, %v831
  %v833 = vpop.f32.mrf.mxu0
  %v834 = vadd.f32 %v770, %v833
  %835 = vmatmul.bf16.gmra.mxu0 %v285
  %v836 = vpop.f32.mrf.mxu0
  %v837 = vadd.f32 %v773, %v836
  %v838 = vpop.f32.mrf.mxu0
  %v839 = vadd.f32 %v775, %v838
  %840 = vmatmul.bf16.gmra.mxu0 %v289
  %v841 = vpop.f32.mrf.mxu0
  %v842 = vadd.f32 %v778, %v841
  %v843 = vpop.f32.mrf.mxu0
  %v844 = vadd.f32 %v780, %v843
  %845 = vmatmul.bf16.gmra.mxu0 %v293
  %v846 = vpop.f32.mrf.mxu0
  %v847 = vadd.f32 %v783, %v846
  %v848 = vpop.f32.mrf.mxu0
  %v849 = vadd.f32 %v785, %v848
  %850 = vdwg.mxu0
  %851 = vmatpush.bf16.msra.mxu0 %v593
  %852 = vmatpush.bf16.msra.mxu0 %v591
  %853 = vmatpush.bf16.msra.mxu0 %v589
  %854 = vmatpush.bf16.msra.mxu0 %v587
  %855 = vmatpush.bf16.msra.mxu0 %v585
  %856 = vmatpush.bf16.msra.mxu0 %v583
  %857 = vmatpush.bf16.msra.mxu0 %v581
  %858 = vmatpush.bf16.msra.mxu0 %v579
  %859 = vmatmul.bf16.gmra.mxu0 %v254
  %v860 = vpop.f32.mrf.mxu0
  %v861 = vadd.f32 %v797, %v860
  %v862 = vpop.f32.mrf.mxu0
  %v863 = vadd.f32 %v799, %v862
  %864 = vmatmul.bf16.gmra.mxu0 %v258
  %v865 = vpop.f32.mrf.mxu0
  %v866 = vadd.f32 %v802, %v865
  %v867 = vpop.f32.mrf.mxu0
  %v868 = vadd.f32 %v804, %v867
  %869 = vmatmul.bf16.gmra.mxu0 %v262
  %v870 = vpop.f32.mrf.mxu0
  %v871 = vadd.f32 %v807, %v870
  %v872 = vpop.f32.mrf.mxu0
  %v873 = vadd.f32 %v809, %v872
  %874 = vmatmul.bf16.gmra.mxu0 %v266
  %v875 = vpop.f32.mrf.mxu0
  %v876 = vadd.f32 %v812, %v875
  %v877 = vpop.f32.mrf.mxu0
  %v878 = vadd.f32 %v814, %v877
  %879 = vmatmul.bf16.gmra.mxu0 %v270
  %v880 = vpop.f32.mrf.mxu0
  %v881 = vadd.f32 %v817, %v880
  %v882 = vpop.f32.mrf.mxu0
  %v883 = vadd.f32 %v819, %v882
  %884 = vmatmul.bf16.gmra.mxu0 %v274
  %v885 = vpop.f32.mrf.mxu0
  %v886 = vadd.f32 %v822, %v885
  %v887 = vpop.f32.mrf.mxu0
  %v888 = vadd.f32 %v824, %v887
  %889 = vmatmul.bf16.gmra.mxu0 %v278
  %v890 = vpop.f32.mrf.mxu0
  %v891 = vadd.f32 %v827, %v890
  %v892 = vpop.f32.mrf.mxu0
  %v893 = vadd.f32 %v829, %v892
  %894 = vmatmul.bf16.gmra.mxu0 %v282
  %v895 = vpop.f32.mrf.mxu0
  %v896 = vadd.f32 %v832, %v895
  %v897 = vpop.f32.mrf.mxu0
  %v898 = vadd.f32 %v834, %v897
  %899 = vmatmul.bf16.gmra.mxu0 %v286
  %v900 = vpop.f32.mrf.mxu0
  %v901 = vadd.f32 %v837, %v900
  %v902 = vpop.f32.mrf.mxu0
  %v903 = vadd.f32 %v839, %v902
  %904 = vmatmul.bf16.gmra.mxu0 %v290
  %v905 = vpop.f32.mrf.mxu0
  %v906 = vadd.f32 %v842, %v905
  %v907 = vpop.f32.mrf.mxu0
  %v908 = vadd.f32 %v844, %v907
  %909 = vmatmul.bf16.gmra.mxu0 %v294
  %v910 = vpop.f32.mrf.mxu0
  %v911 = vadd.f32 %v847, %v910
  %v912 = vpop.f32.mrf.mxu0
  %v913 = vadd.f32 %v849, %v912
  %914 = vdwg.mxu0
  %915 = vmatpush.bf16.msra.mxu0 %v546
  %916 = vmatpush.bf16.msra.mxu0 %v544
  %917 = vmatpush.bf16.msra.mxu0 %v542
  %918 = vmatpush.bf16.msra.mxu0 %v540
  %919 = vmatpush.bf16.msra.mxu0 %v538
  %920 = vmatpush.bf16.msra.mxu0 %v536
  %921 = vmatpush.bf16.msra.mxu0 %v534
  %922 = vmatpush.bf16.msra.mxu0 %v532
  %923 = vmatmul.bf16.gmra.mxu0 %v251
  %v924 = vpop.f32.mrf.mxu0
  %v925 = vadd.f32 0.0, %v924
  %v926 = vpop.f32.mrf.mxu0
  %v927 = vadd.f32 0.0, %v926
  %928 = vmatmul.bf16.gmra.mxu0 %v255
  %v929 = vpop.f32.mrf.mxu0
  %v930 = vadd.f32 0.0, %v929
  %v931 = vpop.f32.mrf.mxu0
  %v932 = vadd.f32 0.0, %v931
  %933 = vmatmul.bf16.gmra.mxu0 %v259
  %v934 = vpop.f32.mrf.mxu0
  %v935 = vadd.f32 0.0, %v934
  %v936 = vpop.f32.mrf.mxu0
  %v937 = vadd.f32 0.0, %v936
  %938 = vmatmul.bf16.gmra.mxu0 %v263
  %v939 = vpop.f32.mrf.mxu0
  %v940 = vadd.f32 0.0, %v939
  %v941 = vpop.f32.mrf.mxu0
  %v942 = vadd.f32 0.0, %v941
  %943 = vmatmul.bf16.gmra.mxu0 %v267
  %v944 = vpop.f32.mrf.mxu0
  %v945 = vadd.f32 0.0, %v944
  %v946 = vpop.f32.mrf.mxu0
  %v947 = vadd.f32 0.0, %v946
  %948 = vmatmul.bf16.gmra.mxu0 %v271
  %v949 = vpop.f32.mrf.mxu0
  %v950 = vadd.f32 0.0, %v949
  %v951 = vpop.f32.mrf.mxu0
  %v952 = vadd.f32 0.0, %v951
  %953 = vmatmul.bf16.gmra.mxu0 %v275
  %v954 = vpop.f32.mrf.mxu0
  %v955 = vadd.f32 0.0, %v954
  %v956 = vpop.f32.mrf.mxu0
  %v957 = vadd.f32 0.0, %v956
  %958 = vmatmul.bf16.gmra.mxu0 %v279
  %v959 = vpop.f32.mrf.mxu0
  %v960 = vadd.f32 0.0, %v959
  %v961 = vpop.f32.mrf.mxu0
  %v962 = vadd.f32 0.0, %v961
  %963 = vmatmul.bf16.gmra.mxu0 %v283
  %v964 = vpop.f32.mrf.mxu0
  %v965 = vadd.f32 0.0, %v964
  %v966 = vpop.f32.mrf.mxu0
  %v967 = vadd.f32 0.0, %v966
  %968 = vmatmul.bf16.gmra.mxu0 %v287
  %v969 = vpop.f32.mrf.mxu0
  %v970 = vadd.f32 0.0, %v969
  %v971 = vpop.f32.mrf.mxu0
  %v972 = vadd.f32 0.0, %v971
  %973 = vmatmul.bf16.gmra.mxu0 %v291
  %v974 = vpop.f32.mrf.mxu0
  %v975 = vadd.f32 0.0, %v974
  %v976 = vpop.f32.mrf.mxu0
  %v977 = vadd.f32 0.0, %v976
  %978 = vdwg.mxu0
  %979 = vmatpush.bf16.msra.mxu0 %v562
  %980 = vmatpush.bf16.msra.mxu0 %v560
  %981 = vmatpush.bf16.msra.mxu0 %v558
  %982 = vmatpush.bf16.msra.mxu0 %v556
  %983 = vmatpush.bf16.msra.mxu0 %v554
  %984 = vmatpush.bf16.msra.mxu0 %v552
  %985 = vmatpush.bf16.msra.mxu0 %v550
  %986 = vmatpush.bf16.msra.mxu0 %v548
  %987 = vmatmul.bf16.gmra.mxu0 %v252
  %v988 = vpop.f32.mrf.mxu0
  %v989 = vadd.f32 %v925, %v988
  %v990 = vpop.f32.mrf.mxu0
  %v991 = vadd.f32 %v927, %v990
  %992 = vmatmul.bf16.gmra.mxu0 %v256
  %v993 = vpop.f32.mrf.mxu0
  %v994 = vadd.f32 %v930, %v993
  %v995 = vpop.f32.mrf.mxu0
  %v996 = vadd.f32 %v932, %v995
  %997 = vmatmul.bf16.gmra.mxu0 %v260
  %v998 = vpop.f32.mrf.mxu0
  %v999 = vadd.f32 %v935, %v998
  %v1000 = vpop.f32.mrf.mxu0
  %v1001 = vadd.f32 %v937, %v1000
  %1002 = vmatmul.bf16.gmra.mxu0 %v264
  %v1003 = vpop.f32.mrf.mxu0
  %v1004 = vadd.f32 %v940, %v1003
  %v1005 = vpop.f32.mrf.mxu0
  %v1006 = vadd.f32 %v942, %v1005
  %1007 = vmatmul.bf16.gmra.mxu0 %v268
  %v1008 = vpop.f32.mrf.mxu0
  %v1009 = vadd.f32 %v945, %v1008
  %v1010 = vpop.f32.mrf.mxu0
  %v1011 = vadd.f32 %v947, %v1010
  %1012 = vmatmul.bf16.gmra.mxu0 %v272
  %v1013 = vpop.f32.mrf.mxu0
  %v1014 = vadd.f32 %v950, %v1013
  %v1015 = vpop.f32.mrf.mxu0
  %v1016 = vadd.f32 %v952, %v1015
  %1017 = vmatmul.bf16.gmra.mxu0 %v276
  %v1018 = vpop.f32.mrf.mxu0
  %v1019 = vadd.f32 %v955, %v1018
  %v1020 = vpop.f32.mrf.mxu0
  %v1021 = vadd.f32 %v957, %v1020
  %1022 = vmatmul.bf16.gmra.mxu0 %v280
  %v1023 = vpop.f32.mrf.mxu0
  %v1024 = vadd.f32 %v960, %v1023
  %v1025 = vpop.f32.mrf.mxu0
  %v1026 = vadd.f32 %v962, %v1025
  %1027 = vmatmul.bf16.gmra.mxu0 %v284
  %v1028 = vpop.f32.mrf.mxu0
  %v1029 = vadd.f32 %v965, %v1028
  %v1030 = vpop.f32.mrf.mxu0
  %v1031 = vadd.f32 %v967, %v1030
  %1032 = vmatmul.bf16.gmra.mxu0 %v288
  %v1033 = vpop.f32.mrf.mxu0
  %v1034 = vadd.f32 %v970, %v1033
  %v1035 = vpop.f32.mrf.mxu0
  %v1036 = vadd.f32 %v972, %v1035
  %1037 = vmatmul.bf16.gmra.mxu0 %v292
  %v1038 = vpop.f32.mrf.mxu0
  %v1039 = vadd.f32 %v975, %v1038
  %v1040 = vpop.f32.mrf.mxu0
  %v1041 = vadd.f32 %v977, %v1040
  %1042 = vdwg.mxu0
  %1043 = vmatpush.bf16.msra.mxu0 %v578
  %1044 = vmatpush.bf16.msra.mxu0 %v576
  %1045 = vmatpush.bf16.msra.mxu0 %v574
  %1046 = vmatpush.bf16.msra.mxu0 %v572
  %1047 = vmatpush.bf16.msra.mxu0 %v570
  %1048 = vmatpush.bf16.msra.mxu0 %v568
  %1049 = vmatpush.bf16.msra.mxu0 %v566
  %1050 = vmatpush.bf16.msra.mxu0 %v564
  %1051 = vmatmul.bf16.gmra.mxu0 %v253
  %v1052 = vpop.f32.mrf.mxu0
  %v1053 = vadd.f32 %v989, %v1052
  %v1054 = vpop.f32.mrf.mxu0
  %v1055 = vadd.f32 %v991, %v1054
  %1056 = vmatmul.bf16.gmra.mxu0 %v257
  %v1057 = vpop.f32.mrf.mxu0
  %v1058 = vadd.f32 %v994, %v1057
  %v1059 = vpop.f32.mrf.mxu0
  %v1060 = vadd.f32 %v996, %v1059
  %1061 = vmatmul.bf16.gmra.mxu0 %v261
  %v1062 = vpop.f32.mrf.mxu0
  %v1063 = vadd.f32 %v999, %v1062
  %v1064 = vpop.f32.mrf.mxu0
  %v1065 = vadd.f32 %v1001, %v1064
  %1066 = vmatmul.bf16.gmra.mxu0 %v265
  %v1067 = vpop.f32.mrf.mxu0
  %v1068 = vadd.f32 %v1004, %v1067
  %v1069 = vpop.f32.mrf.mxu0
  %v1070 = vadd.f32 %v1006, %v1069
  %1071 = vmatmul.bf16.gmra.mxu0 %v269
  %v1072 = vpop.f32.mrf.mxu0
  %v1073 = vadd.f32 %v1009, %v1072
  %v1074 = vpop.f32.mrf.mxu0
  %v1075 = vadd.f32 %v1011, %v1074
  %1076 = vmatmul.bf16.gmra.mxu0 %v273
  %v1077 = vpop.f32.mrf.mxu0
  %v1078 = vadd.f32 %v1014, %v1077
  %v1079 = vpop.f32.mrf.mxu0
  %v1080 = vadd.f32 %v1016, %v1079
  %1081 = vmatmul.bf16.gmra.mxu0 %v277
  %v1082 = vpop.f32.mrf.mxu0
  %v1083 = vadd.f32 %v1019, %v1082
  %v1084 = vpop.f32.mrf.mxu0
  %v1085 = vadd.f32 %v1021, %v1084
  %1086 = vmatmul.bf16.gmra.mxu0 %v281
  %v1087 = vpop.f32.mrf.mxu0
  %v1088 = vadd.f32 %v1024, %v1087
  %v1089 = vpop.f32.mrf.mxu0
  %v1090 = vadd.f32 %v1026, %v1089
  %1091 = vmatmul.bf16.gmra.mxu0 %v285
  %v1092 = vpop.f32.mrf.mxu0
  %v1093 = vadd.f32 %v1029, %v1092
  %v1094 = vpop.f32.mrf.mxu0
  %v1095 = vadd.f32 %v1031, %v1094
  %1096 = vmatmul.bf16.gmra.mxu0 %v289
  %v1097 = vpop.f32.mrf.mxu0
  %v1098 = vadd.f32 %v1034, %v1097
  %v1099 = vpop.f32.mrf.mxu0
  %v1100 = vadd.f32 %v1036, %v1099
  %1101 = vmatmul.bf16.gmra.mxu0 %v293
  %v1102 = vpop.f32.mrf.mxu0
  %v1103 = vadd.f32 %v1039, %v1102
  %v1104 = vpop.f32.mrf.mxu0
  %v1105 = vadd.f32 %v1041, %v1104
  %1106 = vdwg.mxu0
  %1107 = vmatpush.bf16.msra.mxu0 %v594
  %1108 = vmatpush.bf16.msra.mxu0 %v592
  %1109 = vmatpush.bf16.msra.mxu0 %v590
  %1110 = vmatpush.bf16.msra.mxu0 %v588
  %1111 = vmatpush.bf16.msra.mxu0 %v586
  %1112 = vmatpush.bf16.msra.mxu0 %v584
  %1113 = vmatpush.bf16.msra.mxu0 %v582
  %1114 = vmatpush.bf16.msra.mxu0 %v580
  %1115 = vmatmul.bf16.gmra.mxu0 %v254
  %v1116 = vpop.f32.mrf.mxu0
  %v1117 = vadd.f32 %v1053, %v1116
  %v1118 = vpop.f32.mrf.mxu0
  %v1119 = vadd.f32 %v1055, %v1118
  %1120 = vmatmul.bf16.gmra.mxu0 %v258
  %v1121 = vpop.f32.mrf.mxu0
  %v1122 = vadd.f32 %v1058, %v1121
  %v1123 = vpop.f32.mrf.mxu0
  %v1124 = vadd.f32 %v1060, %v1123
  %1125 = vmatmul.bf16.gmra.mxu0 %v262
  %v1126 = vpop.f32.mrf.mxu0
  %v1127 = vadd.f32 %v1063, %v1126
  %v1128 = vpop.f32.mrf.mxu0
  %v1129 = vadd.f32 %v1065, %v1128
  %1130 = vmatmul.bf16.gmra.mxu0 %v266
  %v1131 = vpop.f32.mrf.mxu0
  %v1132 = vadd.f32 %v1068, %v1131
  %v1133 = vpop.f32.mrf.mxu0
  %v1134 = vadd.f32 %v1070, %v1133
  %1135 = vmatmul.bf16.gmra.mxu0 %v270
  %v1136 = vpop.f32.mrf.mxu0
  %v1137 = vadd.f32 %v1073, %v1136
  %v1138 = vpop.f32.mrf.mxu0
  %v1139 = vadd.f32 %v1075, %v1138
  %1140 = vmatmul.bf16.gmra.mxu0 %v274
  %v1141 = vpop.f32.mrf.mxu0
  %v1142 = vadd.f32 %v1078, %v1141
  %v1143 = vpop.f32.mrf.mxu0
  %v1144 = vadd.f32 %v1080, %v1143
  %1145 = vmatmul.bf16.gmra.mxu0 %v278
  %v1146 = vpop.f32.mrf.mxu0
  %v1147 = vadd.f32 %v1083, %v1146
  %v1148 = vpop.f32.mrf.mxu0
  %v1149 = vadd.f32 %v1085, %v1148
  %1150 = vmatmul.bf16.gmra.mxu0 %v282
  %v1151 = vpop.f32.mrf.mxu0
  %v1152 = vadd.f32 %v1088, %v1151
  %v1153 = vpop.f32.mrf.mxu0
  %v1154 = vadd.f32 %v1090, %v1153
  %1155 = vmatmul.bf16.gmra.mxu0 %v286
  %v1156 = vpop.f32.mrf.mxu0
  %v1157 = vadd.f32 %v1093, %v1156
  %v1158 = vpop.f32.mrf.mxu0
  %v1159 = vadd.f32 %v1095, %v1158
  %1160 = vmatmul.bf16.gmra.mxu0 %v290
  %v1161 = vpop.f32.mrf.mxu0
  %v1162 = vadd.f32 %v1098, %v1161
  %v1163 = vpop.f32.mrf.mxu0
  %v1164 = vadd.f32 %v1100, %v1163
  %1165 = vmatmul.bf16.gmra.mxu0 %v294
  %v1166 = vpop.f32.mrf.mxu0
  %v1167 = vadd.f32 %v1103, %v1166
  %v1168 = vpop.f32.mrf.mxu0
  %v1169 = vadd.f32 %v1105, %v1168
  %1170 = vdwg.mxu0
  %1171 = vst [vmem:[%s2] sm:$0xff] %v861
  %1172 = vst [vmem:[%s2 + $0x8] sm:$0xff] %v1117
  %1173 = vst [vmem:[%s2 + $0x10] sm:$0xff] %v863
  %1174 = vst [vmem:[%s2 + $0x18] sm:$0xff] %v1119
  %1175 = vst [vmem:[%s2 + $0x20] sm:$0xff] %v866
  %1176 = vst [vmem:[%s2 + $0x28] sm:$0xff] %v1122
  %1177 = vst [vmem:[%s2 + $0x30] sm:$0xff] %v868
  %1178 = vst [vmem:[%s2 + $0x38] sm:$0xff] %v1124
  %1179 = vst [vmem:[%s2 + $0x40] sm:$0xff] %v871
  %1180 = vst [vmem:[%s2 + $0x48] sm:$0xff] %v1127
  %1181 = vst [vmem:[%s2 + $0x50] sm:$0xff] %v873
  %1182 = vst [vmem:[%s2 + $0x58] sm:$0xff] %v1129
  %1183 = vst [vmem:[%s2 + $0x60] sm:$0xff] %v876
  %1184 = vst [vmem:[%s2 + $0x68] sm:$0xff] %v1132
  %1185 = vst [vmem:[%s2 + $0x70] sm:$0xff] %v878
  %1186 = vst [vmem:[%s2 + $0x78] sm:$0xff] %v1134
  %1187 = vst [vmem:[%s2 + $0x80] sm:$0xff] %v881
  %1188 = vst [vmem:[%s2 + $0x88] sm:$0xff] %v1137
  %1189 = vst [vmem:[%s2 + $0x90] sm:$0xff] %v883
  %1190 = vst [vmem:[%s2 + $0x98] sm:$0xff] %v1139
  %1191 = vst [vmem:[%s2 + $0xa0] sm:$0xff] %v886
  %1192 = vst [vmem:[%s2 + $0xa8] sm:$0xff] %v1142
  %1193 = vst [vmem:[%s2 + $0xb0] sm:$0xff] %v888
  %1194 = vst [vmem:[%s2 + $0xb8] sm:$0xff] %v1144
  %1195 = vst [vmem:[%s2 + $0xc0] sm:$0xff] %v891
  %1196 = vst [vmem:[%s2 + $0xc8] sm:$0xff] %v1147
  %1197 = vst [vmem:[%s2 + $0xd0] sm:$0xff] %v893
  %1198 = vst [vmem:[%s2 + $0xd8] sm:$0xff] %v1149
  %1199 = vst [vmem:[%s2 + $0xe0] sm:$0xff] %v896
  %1200 = vst [vmem:[%s2 + $0xe8] sm:$0xff] %v1152
  %1201 = vst [vmem:[%s2 + $0xf0] sm:$0xff] %v898
  %1202 = vst [vmem:[%s2 + $0xf8] sm:$0xff] %v1154
  %1203 = vst [vmem:[%s2 + $0x100] sm:$0xff] %v901
  %1204 = vst [vmem:[%s2 + $0x108] sm:$0xff] %v1157
  %1205 = vst [vmem:[%s2 + $0x110] sm:$0xff] %v903
  %1206 = vst [vmem:[%s2 + $0x118] sm:$0xff] %v1159
  %1207 = vst [vmem:[%s2 + $0x120] sm:$0xff] %v906
  %1208 = vst [vmem:[%s2 + $0x128] sm:$0xff] %v1162
  %1209 = vst [vmem:[%s2 + $0x130] sm:$0xff] %v908
  %1210 = vst [vmem:[%s2 + $0x138] sm:$0xff] %v1164
  %1211 = vst [vmem:[%s2 + $0x140] sm:$0xff] %v911
  %1212 = vst [vmem:[%s2 + $0x148] sm:$0xff] %v1167
  %1213 = vst [vmem:[%s2 + $0x150] sm:$0xff] %v913
  %1214 = vst [vmem:[%s2 + $0x158] sm:$0xff] %v1169
  // Predicated region
  $region10: #{generator_forward.18} parent=0 // pred_check
    _
  $region11: #{generator_forward.18} parent=0 // pred_check_branch
    %1216 = sbr.rel (0) target = $region13
  $region12: #{generator_forward.18} parent=0 // pred_region
    _
  $region13: #{generator_forward.18} parent=0 // pred_fallthru
    _
  // Predicated region
  $region14: #{generator_forward.18} parent=0 // pred_check
    _
  $region15: #{generator_forward.18} parent=0 // pred_check_branch
    %1218 = sbr.rel (0) target = $region17
  $region16: #{generator_forward.18} parent=0 // pred_region
    _
  $region17: #{generator_forward.18} parent=0 // pred_fallthru
    _

// kernel: generator_forward.19
$region0: #{generator_forward.19}
  #allocation0 [shape = 'u32[]', space=smem, size = 0x4, offset = 0x4, fixed_abs, tag = 'smem constant byte address 0x4 - core index']
  #allocation1 [shape = 'u32[72,128]{1,0:T(1,128)}', space=vmem, size = 0x9000, scoped, tag = 'internal scratch']
  %s0 = inlined_call_operand.vmem [shape: f32[512,64], index: 0, kind: input, shape index: {}]
  %s1 = inlined_call_operand.vmem [shape: f32[1,64], index: 1, kind: output, shape index: {0}]
  %s2 = inlined_call_operand.vmem [shape: f32[1,64], index: 2, kind: output, shape index: {1}]
  %3 = xla_tuple %s1, %s2
  %s4 = sld [smem:[#allocation0]]
  $region26: #{generator_forward.19} parent=0
    _
  %s6 = ssub.s32 1, %s4
  %s7 = scalar_select 0, %s6, %s4
  // Predicated region
  $region2: #{generator_forward.19} parent=0 // pred_check
    _
  $region3: #{generator_forward.19} parent=0 // pred_check_branch
    %9 = sbr.rel (0) target = $region5
  $region4: #{generator_forward.19} parent=0 // pred_region
    _
  $region5: #{generator_forward.19} parent=0 // pred_fallthru
    _
  %p10 = scmp.eq.s32.totalorder 0, 0
  // Predicated region
  $region6: #{generator_forward.19} parent=0 // pred_check
    %p11 = pneg %p10
  $region7: #{generator_forward.19} parent=0 // pred_check_branch
    %13 = sbr.rel (%p11) target = $region9
  $region8: #{generator_forward.19} parent=0 // pred_region
    %vm14 = vcmask 516096
    %15 = vst.msk [vmem:[%s1] sm:$0x1] %vm14, 0.0
    %16 = vst.msk [vmem:[%s2] sm:$0x1] %vm14, 0.0
  $region9: #{generator_forward.19} parent=0 // pred_fallthru
    _
  %v17 = vld [vmem:[%s0] sm:$0xff]
  %v18 = vld [vmem:[%s0 + $0x8] sm:$0xff]
  %v19 = vld [vmem:[%s0 + $0x10] sm:$0xff]
  %v20 = vld [vmem:[%s0 + $0x18] sm:$0xff]
  %v21 = vld [vmem:[%s0 + $0x20] sm:$0xff]
  %v22 = vld [vmem:[%s0 + $0x28] sm:$0xff]
  %v23 = vld [vmem:[%s0 + $0x30] sm:$0xff]
  %v24 = vld [vmem:[%s0 + $0x38] sm:$0xff]
  %v25 = vld [vmem:[%s0 + $0x40] sm:$0xff]
  %v26 = vld [vmem:[%s0 + $0x48] sm:$0xff]
  %v27 = vld [vmem:[%s0 + $0x50] sm:$0xff]
  %v28 = vld [vmem:[%s0 + $0x58] sm:$0xff]
  %v29 = vld [vmem:[%s0 + $0x60] sm:$0xff]
  %v30 = vld [vmem:[%s0 + $0x68] sm:$0xff]
  %v31 = vld [vmem:[%s0 + $0x70] sm:$0xff]
  %v32 = vld [vmem:[%s0 + $0x78] sm:$0xff]
  %v33 = vld [vmem:[%s0 + $0x80] sm:$0xff]
  %v34 = vld [vmem:[%s0 + $0x88] sm:$0xff]
  %v35 = vld [vmem:[%s0 + $0x90] sm:$0xff]
  %v36 = vld [vmem:[%s0 + $0x98] sm:$0xff]
  %v37 = vld [vmem:[%s0 + $0xa0] sm:$0xff]
  %v38 = vld [vmem:[%s0 + $0xa8] sm:$0xff]
  %v39 = vld [vmem:[%s0 + $0xb0] sm:$0xff]
  %v40 = vld [vmem:[%s0 + $0xb8] sm:$0xff]
  %v41 = vld [vmem:[%s0 + $0xc0] sm:$0xff]
  %v42 = vld [vmem:[%s0 + $0xc8] sm:$0xff]
  %v43 = vld [vmem:[%s0 + $0xd0] sm:$0xff]
  %v44 = vld [vmem:[%s0 + $0xd8] sm:$0xff]
  %v45 = vld [vmem:[%s0 + $0xe0] sm:$0xff]
  %v46 = vld [vmem:[%s0 + $0xe8] sm:$0xff]
  %v47 = vld [vmem:[%s0 + $0xf0] sm:$0xff]
  %v48 = vld [vmem:[%s0 + $0xf8] sm:$0xff]
  %v49 = vld [vmem:[%s0 + $0x100] sm:$0xff]
  %v50 = vld [vmem:[%s0 + $0x108] sm:$0xff]
  %v51 = vld [vmem:[%s0 + $0x110] sm:$0xff]
  %v52 = vld [vmem:[%s0 + $0x118] sm:$0xff]
  %v53 = vld [vmem:[%s0 + $0x120] sm:$0xff]
  %v54 = vld [vmem:[%s0 + $0x128] sm:$0xff]
  %v55 = vld [vmem:[%s0 + $0x130] sm:$0xff]
  %v56 = vld [vmem:[%s0 + $0x138] sm:$0xff]
  %v57 = vld [vmem:[%s0 + $0x140] sm:$0xff]
  %v58 = vld [vmem:[%s0 + $0x148] sm:$0xff]
  %v59 = vld [vmem:[%s0 + $0x150] sm:$0xff]
  %v60 = vld [vmem:[%s0 + $0x158] sm:$0xff]
  %v61 = vld [vmem:[%s0 + $0x160] sm:$0xff]
  %v62 = vld [vmem:[%s0 + $0x168] sm:$0xff]
  %v63 = vld [vmem:[%s0 + $0x170] sm:$0xff]
  %v64 = vld [vmem:[%s0 + $0x178] sm:$0xff]
  %v65 = vld [vmem:[%s0 + $0x180] sm:$0xff]
  %v66 = vld [vmem:[%s0 + $0x188] sm:$0xff]
  %v67 = vld [vmem:[%s0 + $0x190] sm:$0xff]
  %v68 = vld [vmem:[%s0 + $0x198] sm:$0xff]
  %v69 = vld [vmem:[%s0 + $0x1a0] sm:$0xff]
  %v70 = vld [vmem:[%s0 + $0x1a8] sm:$0xff]
  %v71 = vld [vmem:[%s0 + $0x1b0] sm:$0xff]
  %v72 = vld [vmem:[%s0 + $0x1b8] sm:$0xff]
  %v73 = vld [vmem:[%s0 + $0x1c0] sm:$0xff]
  %v74 = vld [vmem:[%s0 + $0x1c8] sm:$0xff]
  %v75 = vld [vmem:[%s0 + $0x1d0] sm:$0xff]
  %v76 = vld [vmem:[%s0 + $0x1d8] sm:$0xff]
  %v77 = vld [vmem:[%s0 + $0x1e0] sm:$0xff]
  %v78 = vld [vmem:[%s0 + $0x1e8] sm:$0xff]
  %v79 = vld [vmem:[%s0 + $0x1f0] sm:$0xff]
  %v80 = vld [vmem:[%s0 + $0x1f8] sm:$0xff]
  %v81 = vld [vmem:[%s1] sm:$0x1]
  %vm82 = vcmask 523264
  %v83 = vsel %vm82, %v17, 0.0
  %v84 = vsel %vm82, %v18, 0.0
  %v85 = vadd.f32 %v83, %v84
  %v86 = vsel %vm82, %v19, 0.0
  %v87 = vadd.f32 %v85, %v86
  %v88 = vsel %vm82, %v20, 0.0
  %v89 = vadd.f32 %v87, %v88
  %v90 = vsel %vm82, %v21, 0.0
  %v91 = vadd.f32 %v89, %v90
  %v92 = vsel %vm82, %v22, 0.0
  %v93 = vadd.f32 %v91, %v92
  %v94 = vsel %vm82, %v23, 0.0
  %v95 = vadd.f32 %v93, %v94
  %v96 = vsel %vm82, %v24, 0.0
  %v97 = vadd.f32 %v95, %v96
  %v98 = vsel %vm82, %v25, 0.0
  %v99 = vadd.f32 %v97, %v98
  %v100 = vsel %vm82, %v26, 0.0
  %v101 = vadd.f32 %v99, %v100
  %v102 = vsel %vm82, %v27, 0.0
  %v103 = vadd.f32 %v101, %v102
  %v104 = vsel %vm82, %v28, 0.0
  %v105 = vadd.f32 %v103, %v104
  %v106 = vsel %vm82, %v29, 0.0
  %v107 = vadd.f32 %v105, %v106
  %v108 = vsel %vm82, %v30, 0.0
  %v109 = vadd.f32 %v107, %v108
  %v110 = vsel %vm82, %v31, 0.0
  %v111 = vadd.f32 %v109, %v110
  %v112 = vsel %vm82, %v32, 0.0
  %v113 = vadd.f32 %v111, %v112
  %v114 = vsel %vm82, %v33, 0.0
  %v115 = vadd.f32 %v113, %v114
  %v116 = vsel %vm82, %v34, 0.0
  %v117 = vadd.f32 %v115, %v116
  %v118 = vsel %vm82, %v35, 0.0
  %v119 = vadd.f32 %v117, %v118
  %v120 = vsel %vm82, %v36, 0.0
  %v121 = vadd.f32 %v119, %v120
  %v122 = vsel %vm82, %v37, 0.0
  %v123 = vadd.f32 %v121, %v122
  %v124 = vsel %vm82, %v38, 0.0
  %v125 = vadd.f32 %v123, %v124
  %v126 = vsel %vm82, %v39, 0.0
  %v127 = vadd.f32 %v125, %v126
  %v128 = vsel %vm82, %v40, 0.0
  %v129 = vadd.f32 %v127, %v128
  %v130 = vsel %vm82, %v41, 0.0
  %v131 = vadd.f32 %v129, %v130
  %v132 = vsel %vm82, %v42, 0.0
  %v133 = vadd.f32 %v131, %v132
  %v134 = vsel %vm82, %v43, 0.0
  %v135 = vadd.f32 %v133, %v134
  %v136 = vsel %vm82, %v44, 0.0
  %v137 = vadd.f32 %v135, %v136
  %v138 = vsel %vm82, %v45, 0.0
  %v139 = vadd.f32 %v137, %v138
  %v140 = vsel %vm82, %v46, 0.0
  %v141 = vadd.f32 %v139, %v140
  %v142 = vsel %vm82, %v47, 0.0
  %v143 = vadd.f32 %v141, %v142
  %v144 = vsel %vm82, %v48, 0.0
  %v145 = vadd.f32 %v143, %v144
  %v146 = vsel %vm82, %v49, 0.0
  %v147 = vadd.f32 %v145, %v146
  %v148 = vsel %vm82, %v50, 0.0
  %v149 = vadd.f32 %v147, %v148
  %v150 = vsel %vm82, %v51, 0.0
  %v151 = vadd.f32 %v149, %v150
  %v152 = vsel %vm82, %v52, 0.0
  %v153 = vadd.f32 %v151, %v152
  %v154 = vsel %vm82, %v53, 0.0
  %v155 = vadd.f32 %v153, %v154
  %v156 = vsel %vm82, %v54, 0.0
  %v157 = vadd.f32 %v155, %v156
  %v158 = vsel %vm82, %v55, 0.0
  %v159 = vadd.f32 %v157, %v158
  %v160 = vsel %vm82, %v56, 0.0
  %v161 = vadd.f32 %v159, %v160
  %v162 = vsel %vm82, %v57, 0.0
  %v163 = vadd.f32 %v161, %v162
  %v164 = vsel %vm82, %v58, 0.0
  %v165 = vadd.f32 %v163, %v164
  %v166 = vsel %vm82, %v59, 0.0
  %v167 = vadd.f32 %v165, %v166
  %v168 = vsel %vm82, %v60, 0.0
  %v169 = vadd.f32 %v167, %v168
  %v170 = vsel %vm82, %v61, 0.0
  %v171 = vadd.f32 %v169, %v170
  %v172 = vsel %vm82, %v62, 0.0
  %v173 = vadd.f32 %v171, %v172
  %v174 = vsel %vm82, %v63, 0.0
  %v175 = vadd.f32 %v173, %v174
  %v176 = vsel %vm82, %v64, 0.0
  %v177 = vadd.f32 %v175, %v176
  %v178 = vsel %vm82, %v65, 0.0
  %v179 = vadd.f32 %v177, %v178
  %v180 = vsel %vm82, %v66, 0.0
  %v181 = vadd.f32 %v179, %v180
  %v182 = vsel %vm82, %v67, 0.0
  %v183 = vadd.f32 %v181, %v182
  %v184 = vsel %vm82, %v68, 0.0
  %v185 = vadd.f32 %v183, %v184
  %v186 = vsel %vm82, %v69, 0.0
  %v187 = vadd.f32 %v185, %v186
  %v188 = vsel %vm82, %v70, 0.0
  %v189 = vadd.f32 %v187, %v188
  %v190 = vsel %vm82, %v71, 0.0
  %v191 = vadd.f32 %v189, %v190
  %v192 = vsel %vm82, %v72, 0.0
  %v193 = vadd.f32 %v191, %v192
  %v194 = vsel %vm82, %v73, 0.0
  %v195 = vadd.f32 %v193, %v194
  %v196 = vsel %vm82, %v74, 0.0
  %v197 = vadd.f32 %v195, %v196
  %v198 = vsel %vm82, %v75, 0.0
  %v199 = vadd.f32 %v197, %v198
  %v200 = vsel %vm82, %v76, 0.0
  %v201 = vadd.f32 %v199, %v200
  %v202 = vsel %vm82, %v77, 0.0
  %v203 = vadd.f32 %v201, %v202
  %v204 = vsel %vm82, %v78, 0.0
  %v205 = vadd.f32 %v203, %v204
  %v206 = vsel %vm82, %v79, 0.0
  %v207 = vadd.f32 %v205, %v206
  %v208 = vsel %vm82, %v80, 0.0
  %v209 = vadd.f32 %v207, %v208
  %v210 = vrot.slane %v209, 4
  %v211 = vadd.f32 %v209, %v210
  %v212 = vrot.slane %v211, 2
  %v213 = vadd.f32 %v211, %v212
  %v214 = vrot.slane %v213, 1
  %v215 = vadd.f32 %v213, %v214
  %v216 = vadd.f32 %v81, %v215
  %vm217 = vcmask 516096
  %218 = vst.msk [vmem:[%s1] sm:$0x1] %vm217, %v216
  %v219 = vld [vmem:[%s2] sm:$0x1]
  %v220 = vmul.f32 %v17, %v17
  %v221 = vmul.f32 %v18, %v18
  %v222 = vmul.f32 %v19, %v19
  %v223 = vmul.f32 %v20, %v20
  %v224 = vmul.f32 %v21, %v21
  %v225 = vmul.f32 %v22, %v22
  %v226 = vmul.f32 %v23, %v23
  %v227 = vmul.f32 %v24, %v24
  %v228 = vmul.f32 %v25, %v25
  %v229 = vmul.f32 %v26, %v26
  %v230 = vmul.f32 %v27, %v27
  %v231 = vmul.f32 %v28, %v28
  %v232 = vmul.f32 %v29, %v29
  %v233 = vmul.f32 %v30, %v30
  %v234 = vmul.f32 %v31, %v31
  %v235 = vmul.f32 %v32, %v32
  %v236 = vmul.f32 %v33, %v33
  %v237 = vmul.f32 %v34, %v34
  %v238 = vmul.f32 %v35, %v35
  %v239 = vmul.f32 %v36, %v36
  %v240 = vmul.f32 %v37, %v37
  %v241 = vmul.f32 %v38, %v38
  %v242 = vmul.f32 %v39, %v39
  %v243 = vmul.f32 %v40, %v40
  %v244 = vmul.f32 %v41, %v41
  %v245 = vmul.f32 %v42, %v42
  %v246 = vmul.f32 %v43, %v43
  %v247 = vmul.f32 %v44, %v44
  %v248 = vmul.f32 %v45, %v45
  %v249 = vmul.f32 %v46, %v46
  %v250 = vmul.f32 %v47, %v47
  %v251 = vmul.f32 %v48, %v48
  %v252 = vmul.f32 %v49, %v49
  %v253 = vmul.f32 %v50, %v50
  %v254 = vmul.f32 %v51, %v51
  %v255 = vmul.f32 %v52, %v52
  %v256 = vmul.f32 %v53, %v53
  %v257 = vmul.f32 %v54, %v54
  %v258 = vmul.f32 %v55, %v55
  %v259 = vmul.f32 %v56, %v56
  %v260 = vmul.f32 %v57, %v57
  %v261 = vmul.f32 %v58, %v58
  %v262 = vmul.f32 %v59, %v59
  %v263 = vmul.f32 %v60, %v60
  %v264 = vmul.f32 %v61, %v61
  %v265 = vmul.f32 %v62, %v62
  %v266 = vmul.f32 %v63, %v63
  %v267 = vmul.f32 %v64, %v64
  %v268 = vmul.f32 %v65, %v65
  %v269 = vmul.f32 %v66, %v66
  %v270 = vmul.f32 %v67, %v67
  %v271 = vmul.f32 %v68, %v68
  %v272 = vmul.f32 %v69, %v69
  %v273 = vmul.f32 %v70, %v70
  %v274 = vmul.f32 %v71, %v71
  %v275 = vmul.f32 %v72, %v72
  %v276 = vmul.f32 %v73, %v73
  %v277 = vmul.f32 %v74, %v74
  %v278 = vmul.f32 %v75, %v75
  %v279 = vmul.f32 %v76, %v76
  %v280 = vmul.f32 %v77, %v77
  %v281 = vmul.f32 %v78, %v78
  %v282 = vmul.f32 %v79, %v79
  %v283 = vmul.f32 %v80, %v80
  %v284 = vsel %vm82, %v220, 0.0
  %v285 = vsel %vm82, %v221, 0.0
  %v286 = vadd.f32 %v284, %v285
  %v287 = vsel %vm82, %v222, 0.0
  %v288 = vadd.f32 %v286, %v287
  %v289 = vsel %vm82, %v223, 0.0
  %v290 = vadd.f32 %v288, %v289
  %v291 = vsel %vm82, %v224, 0.0
  %v292 = vadd.f32 %v290, %v291
  %v293 = vsel %vm82, %v225, 0.0
  %v294 = vadd.f32 %v292, %v293
  %v295 = vsel %vm82, %v226, 0.0
  %v296 = vadd.f32 %v294, %v295
  %v297 = vsel %vm82, %v227, 0.0
  %v298 = vadd.f32 %v296, %v297
  %v299 = vsel %vm82, %v228, 0.0
  %v300 = vadd.f32 %v298, %v299
  %v301 = vsel %vm82, %v229, 0.0
  %v302 = vadd.f32 %v300, %v301
  %v303 = vsel %vm82, %v230, 0.0
  %v304 = vadd.f32 %v302, %v303
  %v305 = vsel %vm82, %v231, 0.0
  %v306 = vadd.f32 %v304, %v305
  %v307 = vsel %vm82, %v232, 0.0
  %v308 = vadd.f32 %v306, %v307
  %v309 = vsel %vm82, %v233, 0.0
  %v310 = vadd.f32 %v308, %v309
  %v311 = vsel %vm82, %v234, 0.0
  %v312 = vadd.f32 %v310, %v311
  %v313 = vsel %vm82, %v235, 0.0
  %v314 = vadd.f32 %v312, %v313
  %v315 = vsel %vm82, %v236, 0.0
  %v316 = vadd.f32 %v314, %v315
  %v317 = vsel %vm82, %v237, 0.0
  %v318 = vadd.f32 %v316, %v317
  %v319 = vsel %vm82, %v238, 0.0
  %v320 = vadd.f32 %v318, %v319
  %v321 = vsel %vm82, %v239, 0.0
  %v322 = vadd.f32 %v320, %v321
  %v323 = vsel %vm82, %v240, 0.0
  %v324 = vadd.f32 %v322, %v323
  %v325 = vsel %vm82, %v241, 0.0
  %v326 = vadd.f32 %v324, %v325
  %v327 = vsel %vm82, %v242, 0.0
  %v328 = vadd.f32 %v326, %v327
  %v329 = vsel %vm82, %v243, 0.0
  %v330 = vadd.f32 %v328, %v329
  %v331 = vsel %vm82, %v244, 0.0
  %v332 = vadd.f32 %v330, %v331
  %v333 = vsel %vm82, %v245, 0.0
  %v334 = vadd.f32 %v332, %v333
  %v335 = vsel %vm82, %v246, 0.0
  %v336 = vadd.f32 %v334, %v335
  %v337 = vsel %vm82, %v247, 0.0
  %v338 = vadd.f32 %v336, %v337
  %v339 = vsel %vm82, %v248, 0.0
  %v340 = vadd.f32 %v338, %v339
  %v341 = vsel %vm82, %v249, 0.0
  %v342 = vadd.f32 %v340, %v341
  %v343 = vsel %vm82, %v250, 0.0
  %v344 = vadd.f32 %v342, %v343
  %v345 = vsel %vm82, %v251, 0.0
  %v346 = vadd.f32 %v344, %v345
  %v347 = vsel %vm82, %v252, 0.0
  %v348 = vadd.f32 %v346, %v347
  %v349 = vsel %vm82, %v253, 0.0
  %v350 = vadd.f32 %v348, %v349
  %v351 = vsel %vm82, %v254, 0.0
  %v352 = vadd.f32 %v350, %v351
  %v353 = vsel %vm82, %v255, 0.0
  %v354 = vadd.f32 %v352, %v353
  %v355 = vsel %vm82, %v256, 0.0
  %v356 = vadd.f32 %v354, %v355
  %v357 = vsel %vm82, %v257, 0.0
  %v358 = vadd.f32 %v356, %v357
  %v359 = vsel %vm82, %v258, 0.0
  %v360 = vadd.f32 %v358, %v359
  %v361 = vsel %vm82, %v259, 0.0
  %v362 = vadd.f32 %v360, %v361
  %v363 = vsel %vm82, %v260, 0.0
  %v364 = vadd.f32 %v362, %v363
  %v365 = vsel %vm82, %v261, 0.0
  %v366 = vadd.f32 %v364, %v365
  %v367 = vsel %vm82, %v262, 0.0
  %v368 = vadd.f32 %v366, %v367
  %v369 = vsel %vm82, %v263, 0.0
  %v370 = vadd.f32 %v368, %v369
  %v371 = vsel %vm82, %v264, 0.0
  %v372 = vadd.f32 %v370, %v371
  %v373 = vsel %vm82, %v265, 0.0
  %v374 = vadd.f32 %v372, %v373
  %v375 = vsel %vm82, %v266, 0.0
  %v376 = vadd.f32 %v374, %v375
  %v377 = vsel %vm82, %v267, 0.0
  %v378 = vadd.f32 %v376, %v377
  %v379 = vsel %vm82, %v268, 0.0
  %v380 = vadd.f32 %v378, %v379
  %v381 = vsel %vm82, %v269, 0.0
  %v382 = vadd.f32 %v380, %v381
  %v383 = vsel %vm82, %v270, 0.0
  %v384 = vadd.f32 %v382, %v383
  %v385 = vsel %vm82, %v271, 0.0
  %v386 = vadd.f32 %v384, %v385
  %v387 = vsel %vm82, %v272, 0.0
  %v388 = vadd.f32 %v386, %v387
  %v389 = vsel %vm82, %v273, 0.0
  %v390 = vadd.f32 %v388, %v389
  %v391 = vsel %vm82, %v274, 0.0
  %v392 = vadd.f32 %v390, %v391
  %v393 = vsel %vm82, %v275, 0.0
  %v394 = vadd.f32 %v392, %v393
  %v395 = vsel %vm82, %v276, 0.0
  %v396 = vadd.f32 %v394, %v395
  %v397 = vsel %vm82, %v277, 0.0
  %v398 = vadd.f32 %v396, %v397
  %v399 = vsel %vm82, %v278, 0.0
  %v400 = vadd.f32 %v398, %v399
  %v401 = vsel %vm82, %v279, 0.0
  %v402 = vadd.f32 %v400, %v401
  %v403 = vsel %vm82, %v280, 0.0
  %v404 = vadd.f32 %v402, %v403
  %v405 = vsel %vm82, %v281, 0.0
  %v406 = vadd.f32 %v404, %v405
  %v407 = vsel %vm82, %v282, 0.0
  %v408 = vadd.f32 %v406, %v407
  %v409 = vsel %vm82, %v283, 0.0
  %v410 = vadd.f32 %v408, %v409
  %v411 = vrot.slane %v410, 4
  %v412 = vadd.f32 %v410, %v411
  %v413 = vrot.slane %v412, 2
  %v414 = vadd.f32 %v412, %v413
  %v415 = vrot.slane %v414, 1
  %v416 = vadd.f32 %v414, %v415
  %v417 = vadd.f32 %v219, %v416
  %418 = vst.msk [vmem:[%s2] sm:$0x1] %vm217, %v417
  // Predicated region
  $region10: #{generator_forward.19} parent=0 // pred_check
    _
  $region11: #{generator_forward.19} parent=0 // pred_check_branch
    %420 = sbr.rel (0) target = $region13
  $region12: #{generator_forward.19} parent=0 // pred_region
    _
  $region13: #{generator_forward.19} parent=0 // pred_fallthru
    _
  // Predicated region
  $region14: #{generator_forward.19} parent=0 // pred_check
    _
  $region15: #{generator_forward.19} parent=0 // pred_check_branch
    %422 = sbr.rel (0) target = $region17
  $region16: #{generator_forward.19} parent=0 // pred_region
    _
  $region17: #{generator_forward.19} parent=0 // pred_fallthru
    _
  // Predicated region
  $region18: #{generator_forward.19} parent=0 // pred_check
    _
  $region19: #{generator_forward.19} parent=0 // pred_check_branch
    %424 = sbr.rel (0) target = $region21
  $region20: #{generator_forward.19} parent=0 // pred_region
    _
  $region21: #{generator_forward.19} parent=0 // pred_fallthru
    _
  // Predicated region
  $region22: #{generator_forward.19} parent=0 // pred_check
    _
  $region23: #{generator_forward.19} parent=0 // pred_check_branch
    %426 = sbr.rel (0) target = $region25
  $region24: #{generator_forward.19} parent=0 // pred_region
    _
  $region25: #{generator_forward.19} parent=0 // pred_fallthru
    _

// kernel: generator_forward.20
$region0: #{generator_forward.20}
  #allocation0 [shape = 'u32[]', space=smem, size = 0x4, offset = 0x4, fixed_abs, tag = 'smem constant byte address 0x4 - core index']
  #allocation1 [shape = 'u32[72,128]{1,0:T(1,128)}', space=vmem, size = 0x9000, scoped, tag = 'internal scratch']
  %s0 = inlined_call_operand.vmem [shape: f32[512,64], index: 0, kind: input, shape index: {}]
  %s1 = inlined_call_operand.vmem [shape: f32[1,64], index: 1, kind: input, shape index: {}]
  %s2 = inlined_call_operand.vmem [shape: f32[1,64], index: 2, kind: input, shape index: {}]
  %s3 = inlined_call_operand.vmem [shape: f32[1,64], index: 3, kind: input, shape index: {}]
  %s4 = inlined_call_operand.vmem [shape: f32[1,64], index: 4, kind: input, shape index: {}]
  %s5 = inlined_call_operand.vmem [shape: bf16[512,64], index: 5, kind: output, shape index: {}]
  %s6 = sld [smem:[#allocation0]]
  $region30: #{generator_forward.20} parent=0
    _
  %s8 = ssub.s32 1, %s6
  %s9 = scalar_select 0, %s8, %s6
  // Predicated region
  $region2: #{generator_forward.20} parent=0 // pred_check
    _
  $region3: #{generator_forward.20} parent=0 // pred_check_branch
    %11 = sbr.rel (0) target = $region5
  $region4: #{generator_forward.20} parent=0 // pred_region
    _
  $region5: #{generator_forward.20} parent=0 // pred_fallthru
    _
  // Predicated region
  $region6: #{generator_forward.20} parent=0 // pred_check
    _
  $region7: #{generator_forward.20} parent=0 // pred_check_branch
    %13 = sbr.rel (0) target = $region9
  $region8: #{generator_forward.20} parent=0 // pred_region
    _
  $region9: #{generator_forward.20} parent=0 // pred_fallthru
    _
  // Predicated region
  $region10: #{generator_forward.20} parent=0 // pred_check
    _
  $region11: #{generator_forward.20} parent=0 // pred_check_branch
    %15 = sbr.rel (0) target = $region13
  $region12: #{generator_forward.20} parent=0 // pred_region
    _
  $region13: #{generator_forward.20} parent=0 // pred_fallthru
    _
  // Predicated region
  $region14: #{generator_forward.20} parent=0 // pred_check
    _
  $region15: #{generator_forward.20} parent=0 // pred_check_branch
    %17 = sbr.rel (0) target = $region17
  $region16: #{generator_forward.20} parent=0 // pred_region
    _
  $region17: #{generator_forward.20} parent=0 // pred_fallthru
    _
  // Predicated region
  $region18: #{generator_forward.20} parent=0 // pred_check
    _
  $region19: #{generator_forward.20} parent=0 // pred_check_branch
    %19 = sbr.rel (0) target = $region21
  $region20: #{generator_forward.20} parent=0 // pred_region
    _
  $region21: #{generator_forward.20} parent=0 // pred_fallthru
    _
  %v20 = vld [vmem:[%s1] sm:$0x1]
  %v21 = vmul.f32 %v20, 0.001953125
  %v22 = vld [vmem:[%s2] sm:$0x1]
  %v23 = vmul.f32 %v22, 0.001953125
  %v24 = vmul.f32 %v21, %v21
  %v25 = vsub.f32 %v23, %v24
  %v26 = vmax.f32 %v25, 0.0
  %v27 = vld [vmem:[%s3] sm:$0x1]
  %v28 = vadd.f32 %v26, 1e-05
  %v29 = vrsqrt.pop %v28
  %v30 = vmul.f32 %v29, %v28
  %v31 = vmul.f32 %v30, %v29
  %v32 = vmul.f32 0.5, %v31
  %v33 = vsub.f32 1.5, %v32
  %v34 = vmul.f32 %v29, %v33
  %vm35 = vweird.f32 %v28
  %vm36 = vweird.f32 %v29
  %vm37 = vmor %vm35, %vm36
  %v38 = vsel %vm37, %v29, %v34
  %v39 = vmul.f32 %v27, %v38
  %v40 = vld [vmem:[%s0] sm:$0xff]
  %v41 = vld [vmem:[%s0 + $0x8] sm:$0xff]
  %v42 = vld [vmem:[%s0 + $0x10] sm:$0xff]
  %v43 = vld [vmem:[%s0 + $0x18] sm:$0xff]
  %v44 = vld [vmem:[%s0 + $0x20] sm:$0xff]
  %v45 = vld [vmem:[%s0 + $0x28] sm:$0xff]
  %v46 = vld [vmem:[%s0 + $0x30] sm:$0xff]
  %v47 = vld [vmem:[%s0 + $0x38] sm:$0xff]
  %v48 = vld [vmem:[%s0 + $0x40] sm:$0xff]
  %v49 = vld [vmem:[%s0 + $0x48] sm:$0xff]
  %v50 = vld [vmem:[%s0 + $0x50] sm:$0xff]
  %v51 = vld [vmem:[%s0 + $0x58] sm:$0xff]
  %v52 = vld [vmem:[%s0 + $0x60] sm:$0xff]
  %v53 = vld [vmem:[%s0 + $0x68] sm:$0xff]
  %v54 = vld [vmem:[%s0 + $0x70] sm:$0xff]
  %v55 = vld [vmem:[%s0 + $0x78] sm:$0xff]
  %v56 = vld [vmem:[%s0 + $0x80] sm:$0xff]
  %v57 = vld [vmem:[%s0 + $0x88] sm:$0xff]
  %v58 = vld [vmem:[%s0 + $0x90] sm:$0xff]
  %v59 = vld [vmem:[%s0 + $0x98] sm:$0xff]
  %v60 = vld [vmem:[%s0 + $0xa0] sm:$0xff]
  %v61 = vld [vmem:[%s0 + $0xa8] sm:$0xff]
  %v62 = vld [vmem:[%s0 + $0xb0] sm:$0xff]
  %v63 = vld [vmem:[%s0 + $0xb8] sm:$0xff]
  %v64 = vld [vmem:[%s0 + $0xc0] sm:$0xff]
  %v65 = vld [vmem:[%s0 + $0xc8] sm:$0xff]
  %v66 = vld [vmem:[%s0 + $0xd0] sm:$0xff]
  %v67 = vld [vmem:[%s0 + $0xd8] sm:$0xff]
  %v68 = vld [vmem:[%s0 + $0xe0] sm:$0xff]
  %v69 = vld [vmem:[%s0 + $0xe8] sm:$0xff]
  %v70 = vld [vmem:[%s0 + $0xf0] sm:$0xff]
  %v71 = vld [vmem:[%s0 + $0xf8] sm:$0xff]
  %v72 = vld [vmem:[%s0 + $0x100] sm:$0xff]
  %v73 = vld [vmem:[%s0 + $0x108] sm:$0xff]
  %v74 = vld [vmem:[%s0 + $0x110] sm:$0xff]
  %v75 = vld [vmem:[%s0 + $0x118] sm:$0xff]
  %v76 = vld [vmem:[%s0 + $0x120] sm:$0xff]
  %v77 = vld [vmem:[%s0 + $0x128] sm:$0xff]
  %v78 = vld [vmem:[%s0 + $0x130] sm:$0xff]
  %v79 = vld [vmem:[%s0 + $0x138] sm:$0xff]
  %v80 = vld [vmem:[%s0 + $0x140] sm:$0xff]
  %v81 = vld [vmem:[%s0 + $0x148] sm:$0xff]
  %v82 = vld [vmem:[%s0 + $0x150] sm:$0xff]
  %v83 = vld [vmem:[%s0 + $0x158] sm:$0xff]
  %v84 = vld [vmem:[%s0 + $0x160] sm:$0xff]
  %v85 = vld [vmem:[%s0 + $0x168] sm:$0xff]
  %v86 = vld [vmem:[%s0 + $0x170] sm:$0xff]
  %v87 = vld [vmem:[%s0 + $0x178] sm:$0xff]
  %v88 = vld [vmem:[%s0 + $0x180] sm:$0xff]
  %v89 = vld [vmem:[%s0 + $0x188] sm:$0xff]
  %v90 = vld [vmem:[%s0 + $0x190] sm:$0xff]
  %v91 = vld [vmem:[%s0 + $0x198] sm:$0xff]
  %v92 = vld [vmem:[%s0 + $0x1a0] sm:$0xff]
  %v93 = vld [vmem:[%s0 + $0x1a8] sm:$0xff]
  %v94 = vld [vmem:[%s0 + $0x1b0] sm:$0xff]
  %v95 = vld [vmem:[%s0 + $0x1b8] sm:$0xff]
  %v96 = vld [vmem:[%s0 + $0x1c0] sm:$0xff]
  %v97 = vld [vmem:[%s0 + $0x1c8] sm:$0xff]
  %v98 = vld [vmem:[%s0 + $0x1d0] sm:$0xff]
  %v99 = vld [vmem:[%s0 + $0x1d8] sm:$0xff]
  %v100 = vld [vmem:[%s0 + $0x1e0] sm:$0xff]
  %v101 = vld [vmem:[%s0 + $0x1e8] sm:$0xff]
  %v102 = vld [vmem:[%s0 + $0x1f0] sm:$0xff]
  %v103 = vld [vmem:[%s0 + $0x1f8] sm:$0xff]
  %v105 = vperm.slane %v21, 0
  %v107 = vsub.f32 %v40, %v105
  %v108 = vsub.f32 %v41, %v105
  %v109 = vsub.f32 %v42, %v105
  %v110 = vsub.f32 %v43, %v105
  %v111 = vsub.f32 %v44, %v105
  %v112 = vsub.f32 %v45, %v105
  %v113 = vsub.f32 %v46, %v105
  %v114 = vsub.f32 %v47, %v105
  %v115 = vsub.f32 %v48, %v105
  %v116 = vsub.f32 %v49, %v105
  %v117 = vsub.f32 %v50, %v105
  %v118 = vsub.f32 %v51, %v105
  %v119 = vsub.f32 %v52, %v105
  %v120 = vsub.f32 %v53, %v105
  %v121 = vsub.f32 %v54, %v105
  %v122 = vsub.f32 %v55, %v105
  %v123 = vsub.f32 %v56, %v105
  %v124 = vsub.f32 %v57, %v105
  %v125 = vsub.f32 %v58, %v105
  %v126 = vsub.f32 %v59, %v105
  %v127 = vsub.f32 %v60, %v105
  %v128 = vsub.f32 %v61, %v105
  %v129 = vsub.f32 %v62, %v105
  %v130 = vsub.f32 %v63, %v105
  %v131 = vsub.f32 %v64, %v105
  %v132 = vsub.f32 %v65, %v105
  %v133 = vsub.f32 %v66, %v105
  %v134 = vsub.f32 %v67, %v105
  %v135 = vsub.f32 %v68, %v105
  %v136 = vsub.f32 %v69, %v105
  %v137 = vsub.f32 %v70, %v105
  %v138 = vsub.f32 %v71, %v105
  %v139 = vsub.f32 %v72, %v105
  %v140 = vsub.f32 %v73, %v105
  %v141 = vsub.f32 %v74, %v105
  %v142 = vsub.f32 %v75, %v105
  %v143 = vsub.f32 %v76, %v105
  %v144 = vsub.f32 %v77, %v105
  %v145 = vsub.f32 %v78, %v105
  %v146 = vsub.f32 %v79, %v105
  %v147 = vsub.f32 %v80, %v105
  %v148 = vsub.f32 %v81, %v105
  %v149 = vsub.f32 %v82, %v105
  %v150 = vsub.f32 %v83, %v105
  %v151 = vsub.f32 %v84, %v105
  %v152 = vsub.f32 %v85, %v105
  %v153 = vsub.f32 %v86, %v105
  %v154 = vsub.f32 %v87, %v105
  %v155 = vsub.f32 %v88, %v105
  %v156 = vsub.f32 %v89, %v105
  %v157 = vsub.f32 %v90, %v105
  %v158 = vsub.f32 %v91, %v105
  %v159 = vsub.f32 %v92, %v105
  %v160 = vsub.f32 %v93, %v105
  %v161 = vsub.f32 %v94, %v105
  %v162 = vsub.f32 %v95, %v105
  %v163 = vsub.f32 %v96, %v105
  %v164 = vsub.f32 %v97, %v105
  %v165 = vsub.f32 %v98, %v105
  %v166 = vsub.f32 %v99, %v105
  %v167 = vsub.f32 %v100, %v105
  %v168 = vsub.f32 %v101, %v105
  %v169 = vsub.f32 %v102, %v105
  %v170 = vsub.f32 %v103, %v105
  %v172 = vperm.slane %v39, 0
  %v174 = vmul.f32 %v107, %v172
  %v175 = vmul.f32 %v108, %v172
  %v176 = vmul.f32 %v109, %v172
  %v177 = vmul.f32 %v110, %v172
  %v178 = vmul.f32 %v111, %v172
  %v179 = vmul.f32 %v112, %v172
  %v180 = vmul.f32 %v113, %v172
  %v181 = vmul.f32 %v114, %v172
  %v182 = vmul.f32 %v115, %v172
  %v183 = vmul.f32 %v116, %v172
  %v184 = vmul.f32 %v117, %v172
  %v185 = vmul.f32 %v118, %v172
  %v186 = vmul.f32 %v119, %v172
  %v187 = vmul.f32 %v120, %v172
  %v188 = vmul.f32 %v121, %v172
  %v189 = vmul.f32 %v122, %v172
  %v190 = vmul.f32 %v123, %v172
  %v191 = vmul.f32 %v124, %v172
  %v192 = vmul.f32 %v125, %v172
  %v193 = vmul.f32 %v126, %v172
  %v194 = vmul.f32 %v127, %v172
  %v195 = vmul.f32 %v128, %v172
  %v196 = vmul.f32 %v129, %v172
  %v197 = vmul.f32 %v130, %v172
  %v198 = vmul.f32 %v131, %v172
  %v199 = vmul.f32 %v132, %v172
  %v200 = vmul.f32 %v133, %v172
  %v201 = vmul.f32 %v134, %v172
  %v202 = vmul.f32 %v135, %v172
  %v203 = vmul.f32 %v136, %v172
  %v204 = vmul.f32 %v137, %v172
  %v205 = vmul.f32 %v138, %v172
  %v206 = vmul.f32 %v139, %v172
  %v207 = vmul.f32 %v140, %v172
  %v208 = vmul.f32 %v141, %v172
  %v209 = vmul.f32 %v142, %v172
  %v210 = vmul.f32 %v143, %v172
  %v211 = vmul.f32 %v144, %v172
  %v212 = vmul.f32 %v145, %v172
  %v213 = vmul.f32 %v146, %v172
  %v214 = vmul.f32 %v147, %v172
  %v215 = vmul.f32 %v148, %v172
  %v216 = vmul.f32 %v149, %v172
  %v217 = vmul.f32 %v150, %v172
  %v218 = vmul.f32 %v151, %v172
  %v219 = vmul.f32 %v152, %v172
  %v220 = vmul.f32 %v153, %v172
  %v221 = vmul.f32 %v154, %v172
  %v222 = vmul.f32 %v155, %v172
  %v223 = vmul.f32 %v156, %v172
  %v224 = vmul.f32 %v157, %v172
  %v225 = vmul.f32 %v158, %v172
  %v226 = vmul.f32 %v159, %v172
  %v227 = vmul.f32 %v160, %v172
  %v228 = vmul.f32 %v161, %v172
  %v229 = vmul.f32 %v162, %v172
  %v230 = vmul.f32 %v163, %v172
  %v231 = vmul.f32 %v164, %v172
  %v232 = vmul.f32 %v165, %v172
  %v233 = vmul.f32 %v166, %v172
  %v234 = vmul.f32 %v167, %v172
  %v235 = vmul.f32 %v168, %v172
  %v236 = vmul.f32 %v169, %v172
  %v237 = vmul.f32 %v170, %v172
  %v238 = vld [vmem:[%s4] sm:$0x1]
  %v240 = vperm.slane %v238, 0
  %v242 = vadd.f32 %v174, %v240
  %v243 = vadd.f32 %v175, %v240
  %v244 = vadd.f32 %v176, %v240
  %v245 = vadd.f32 %v177, %v240
  %v246 = vadd.f32 %v178, %v240
  %v247 = vadd.f32 %v179, %v240
  %v248 = vadd.f32 %v180, %v240
  %v249 = vadd.f32 %v181, %v240
  %v250 = vadd.f32 %v182, %v240
  %v251 = vadd.f32 %v183, %v240
  %v252 = vadd.f32 %v184, %v240
  %v253 = vadd.f32 %v185, %v240
  %v254 = vadd.f32 %v186, %v240
  %v255 = vadd.f32 %v187, %v240
  %v256 = vadd.f32 %v188, %v240
  %v257 = vadd.f32 %v189, %v240
  %v258 = vadd.f32 %v190, %v240
  %v259 = vadd.f32 %v191, %v240
  %v260 = vadd.f32 %v192, %v240
  %v261 = vadd.f32 %v193, %v240
  %v262 = vadd.f32 %v194, %v240
  %v263 = vadd.f32 %v195, %v240
  %v264 = vadd.f32 %v196, %v240
  %v265 = vadd.f32 %v197, %v240
  %v266 = vadd.f32 %v198, %v240
  %v267 = vadd.f32 %v199, %v240
  %v268 = vadd.f32 %v200, %v240
  %v269 = vadd.f32 %v201, %v240
  %v270 = vadd.f32 %v202, %v240
  %v271 = vadd.f32 %v203, %v240
  %v272 = vadd.f32 %v204, %v240
  %v273 = vadd.f32 %v205, %v240
  %v274 = vadd.f32 %v206, %v240
  %v275 = vadd.f32 %v207, %v240
  %v276 = vadd.f32 %v208, %v240
  %v277 = vadd.f32 %v209, %v240
  %v278 = vadd.f32 %v210, %v240
  %v279 = vadd.f32 %v211, %v240
  %v280 = vadd.f32 %v212, %v240
  %v281 = vadd.f32 %v213, %v240
  %v282 = vadd.f32 %v214, %v240
  %v283 = vadd.f32 %v215, %v240
  %v284 = vadd.f32 %v216, %v240
  %v285 = vadd.f32 %v217, %v240
  %v286 = vadd.f32 %v218, %v240
  %v287 = vadd.f32 %v219, %v240
  %v288 = vadd.f32 %v220, %v240
  %v289 = vadd.f32 %v221, %v240
  %v290 = vadd.f32 %v222, %v240
  %v291 = vadd.f32 %v223, %v240
  %v292 = vadd.f32 %v224, %v240
  %v293 = vadd.f32 %v225, %v240
  %v294 = vadd.f32 %v226, %v240
  %v295 = vadd.f32 %v227, %v240
  %v296 = vadd.f32 %v228, %v240
  %v297 = vadd.f32 %v229, %v240
  %v298 = vadd.f32 %v230, %v240
  %v299 = vadd.f32 %v231, %v240
  %v300 = vadd.f32 %v232, %v240
  %v301 = vadd.f32 %v233, %v240
  %v302 = vadd.f32 %v234, %v240
  %v303 = vadd.f32 %v235, %v240
  %v304 = vadd.f32 %v236, %v240
  %v305 = vadd.f32 %v237, %v240
  %v306 = vmax.f32 %v242, 0.0
  %v307 = vmax.f32 %v243, 0.0
  %v308 = vmax.f32 %v244, 0.0
  %v309 = vmax.f32 %v245, 0.0
  %v310 = vmax.f32 %v246, 0.0
  %v311 = vmax.f32 %v247, 0.0
  %v312 = vmax.f32 %v248, 0.0
  %v313 = vmax.f32 %v249, 0.0
  %v314 = vmax.f32 %v250, 0.0
  %v315 = vmax.f32 %v251, 0.0
  %v316 = vmax.f32 %v252, 0.0
  %v317 = vmax.f32 %v253, 0.0
  %v318 = vmax.f32 %v254, 0.0
  %v319 = vmax.f32 %v255, 0.0
  %v320 = vmax.f32 %v256, 0.0
  %v321 = vmax.f32 %v257, 0.0
  %v322 = vmax.f32 %v258, 0.0
  %v323 = vmax.f32 %v259, 0.0
  %v324 = vmax.f32 %v260, 0.0
  %v325 = vmax.f32 %v261, 0.0
  %v326 = vmax.f32 %v262, 0.0
  %v327 = vmax.f32 %v263, 0.0
  %v328 = vmax.f32 %v264, 0.0
  %v329 = vmax.f32 %v265, 0.0
  %v330 = vmax.f32 %v266, 0.0
  %v331 = vmax.f32 %v267, 0.0
  %v332 = vmax.f32 %v268, 0.0
  %v333 = vmax.f32 %v269, 0.0
  %v334 = vmax.f32 %v270, 0.0
  %v335 = vmax.f32 %v271, 0.0
  %v336 = vmax.f32 %v272, 0.0
  %v337 = vmax.f32 %v273, 0.0
  %v338 = vmax.f32 %v274, 0.0
  %v339 = vmax.f32 %v275, 0.0
  %v340 = vmax.f32 %v276, 0.0
  %v341 = vmax.f32 %v277, 0.0
  %v342 = vmax.f32 %v278, 0.0
  %v343 = vmax.f32 %v279, 0.0
  %v344 = vmax.f32 %v280, 0.0
  %v345 = vmax.f32 %v281, 0.0
  %v346 = vmax.f32 %v282, 0.0
  %v347 = vmax.f32 %v283, 0.0
  %v348 = vmax.f32 %v284, 0.0
  %v349 = vmax.f32 %v285, 0.0
  %v350 = vmax.f32 %v286, 0.0
  %v351 = vmax.f32 %v287, 0.0
  %v352 = vmax.f32 %v288, 0.0
  %v353 = vmax.f32 %v289, 0.0
  %v354 = vmax.f32 %v290, 0.0
  %v355 = vmax.f32 %v291, 0.0
  %v356 = vmax.f32 %v292, 0.0
  %v357 = vmax.f32 %v293, 0.0
  %v358 = vmax.f32 %v294, 0.0
  %v359 = vmax.f32 %v295, 0.0
  %v360 = vmax.f32 %v296, 0.0
  %v361 = vmax.f32 %v297, 0.0
  %v362 = vmax.f32 %v298, 0.0
  %v363 = vmax.f32 %v299, 0.0
  %v364 = vmax.f32 %v300, 0.0
  %v365 = vmax.f32 %v301, 0.0
  %v366 = vmax.f32 %v302, 0.0
  %v367 = vmax.f32 %v303, 0.0
  %v368 = vmax.f32 %v304, 0.0
  %v369 = vmax.f32 %v305, 0.0
  %v370 = vpack.c.bf16 %v306, %v306
  %v371 = vpack.c.bf16 %v307, %v307
  %v372 = vpack.c.bf16 %v308, %v308
  %v373 = vpack.c.bf16 %v309, %v309
  %v374 = vpack.c.bf16 %v310, %v310
  %v375 = vpack.c.bf16 %v311, %v311
  %v376 = vpack.c.bf16 %v312, %v312
  %v377 = vpack.c.bf16 %v313, %v313
  %v378 = vpack.c.bf16 %v314, %v314
  %v379 = vpack.c.bf16 %v315, %v315
  %v380 = vpack.c.bf16 %v316, %v316
  %v381 = vpack.c.bf16 %v317, %v317
  %v382 = vpack.c.bf16 %v318, %v318
  %v383 = vpack.c.bf16 %v319, %v319
  %v384 = vpack.c.bf16 %v320, %v320
  %v385 = vpack.c.bf16 %v321, %v321
  %v386 = vpack.c.bf16 %v322, %v322
  %v387 = vpack.c.bf16 %v323, %v323
  %v388 = vpack.c.bf16 %v324, %v324
  %v389 = vpack.c.bf16 %v325, %v325
  %v390 = vpack.c.bf16 %v326, %v326
  %v391 = vpack.c.bf16 %v327, %v327
  %v392 = vpack.c.bf16 %v328, %v328
  %v393 = vpack.c.bf16 %v329, %v329
  %v394 = vpack.c.bf16 %v330, %v330
  %v395 = vpack.c.bf16 %v331, %v331
  %v396 = vpack.c.bf16 %v332, %v332
  %v397 = vpack.c.bf16 %v333, %v333
  %v398 = vpack.c.bf16 %v334, %v334
  %v399 = vpack.c.bf16 %v335, %v335
  %v400 = vpack.c.bf16 %v336, %v336
  %v401 = vpack.c.bf16 %v337, %v337
  %v402 = vpack.c.bf16 %v338, %v338
  %v403 = vpack.c.bf16 %v339, %v339
  %v404 = vpack.c.bf16 %v340, %v340
  %v405 = vpack.c.bf16 %v341, %v341
  %v406 = vpack.c.bf16 %v342, %v342
  %v407 = vpack.c.bf16 %v343, %v343
  %v408 = vpack.c.bf16 %v344, %v344
  %v409 = vpack.c.bf16 %v345, %v345
  %v410 = vpack.c.bf16 %v346, %v346
  %v411 = vpack.c.bf16 %v347, %v347
  %v412 = vpack.c.bf16 %v348, %v348
  %v413 = vpack.c.bf16 %v349, %v349
  %v414 = vpack.c.bf16 %v350, %v350
  %v415 = vpack.c.bf16 %v351, %v351
  %v416 = vpack.c.bf16 %v352, %v352
  %v417 = vpack.c.bf16 %v353, %v353
  %v418 = vpack.c.bf16 %v354, %v354
  %v419 = vpack.c.bf16 %v355, %v355
  %v420 = vpack.c.bf16 %v356, %v356
  %v421 = vpack.c.bf16 %v357, %v357
  %v422 = vpack.c.bf16 %v358, %v358
  %v423 = vpack.c.bf16 %v359, %v359
  %v424 = vpack.c.bf16 %v360, %v360
  %v425 = vpack.c.bf16 %v361, %v361
  %v426 = vpack.c.bf16 %v362, %v362
  %v427 = vpack.c.bf16 %v363, %v363
  %v428 = vpack.c.bf16 %v364, %v364
  %v429 = vpack.c.bf16 %v365, %v365
  %v430 = vpack.c.bf16 %v366, %v366
  %v431 = vpack.c.bf16 %v367, %v367
  %v432 = vpack.c.bf16 %v368, %v368
  %v433 = vpack.c.bf16 %v369, %v369
  %vm434 = vcmask 519168
  %435 = vst.msk [vmem:[%s5] sm:$0xf] %vm434, %v370
  %436 = vst.msk [vmem:[%s5 + $0x4] sm:$0xf] %vm434, %v371
  %437 = vst.msk [vmem:[%s5 + $0x8] sm:$0xf] %vm434, %v372
  %438 = vst.msk [vmem:[%s5 + $0xc] sm:$0xf] %vm434, %v373
  %439 = vst.msk [vmem:[%s5 + $0x10] sm:$0xf] %vm434, %v374
  %440 = vst.msk [vmem:[%s5 + $0x14] sm:$0xf] %vm434, %v375
  %441 = vst.msk [vmem:[%s5 + $0x18] sm:$0xf] %vm434, %v376
  %442 = vst.msk [vmem:[%s5 + $0x1c] sm:$0xf] %vm434, %v377
  %443 = vst.msk [vmem:[%s5 + $0x20] sm:$0xf] %vm434, %v378
  %444 = vst.msk [vmem:[%s5 + $0x24] sm:$0xf] %vm434, %v379
  %445 = vst.msk [vmem:[%s5 + $0x28] sm:$0xf] %vm434, %v380
  %446 = vst.msk [vmem:[%s5 + $0x2c] sm:$0xf] %vm434, %v381
  %447 = vst.msk [vmem:[%s5 + $0x30] sm:$0xf] %vm434, %v382
  %448 = vst.msk [vmem:[%s5 + $0x34] sm:$0xf] %vm434, %v383
  %449 = vst.msk [vmem:[%s5 + $0x38] sm:$0xf] %vm434, %v384
  %450 = vst.msk [vmem:[%s5 + $0x3c] sm:$0xf] %vm434, %v385
  %451 = vst.msk [vmem:[%s5 + $0x40] sm:$0xf] %vm434, %v386
  %452 = vst.msk [vmem:[%s5 + $0x44] sm:$0xf] %vm434, %v387
  %453 = vst.msk [vmem:[%s5 + $0x48] sm:$0xf] %vm434, %v388
  %454 = vst.msk [vmem:[%s5 + $0x4c] sm:$0xf] %vm434, %v389
  %455 = vst.msk [vmem:[%s5 + $0x50] sm:$0xf] %vm434, %v390
  %456 = vst.msk [vmem:[%s5 + $0x54] sm:$0xf] %vm434, %v391
  %457 = vst.msk [vmem:[%s5 + $0x58] sm:$0xf] %vm434, %v392
  %458 = vst.msk [vmem:[%s5 + $0x5c] sm:$0xf] %vm434, %v393
  %459 = vst.msk [vmem:[%s5 + $0x60] sm:$0xf] %vm434, %v394
  %460 = vst.msk [vmem:[%s5 + $0x64] sm:$0xf] %vm434, %v395
  %461 = vst.msk [vmem:[%s5 + $0x68] sm:$0xf] %vm434, %v396
  %462 = vst.msk [vmem:[%s5 + $0x6c] sm:$0xf] %vm434, %v397
  %463 = vst.msk [vmem:[%s5 + $0x70] sm:$0xf] %vm434, %v398
  %464 = vst.msk [vmem:[%s5 + $0x74] sm:$0xf] %vm434, %v399
  %465 = vst.msk [vmem:[%s5 + $0x78] sm:$0xf] %vm434, %v400
  %466 = vst.msk [vmem:[%s5 + $0x7c] sm:$0xf] %vm434, %v401
  %467 = vst.msk [vmem:[%s5 + $0x80] sm:$0xf] %vm434, %v402
  %468 = vst.msk [vmem:[%s5 + $0x84] sm:$0xf] %vm434, %v403
  %469 = vst.msk [vmem:[%s5 + $0x88] sm:$0xf] %vm434, %v404
  %470 = vst.msk [vmem:[%s5 + $0x8c] sm:$0xf] %vm434, %v405
  %471 = vst.msk [vmem:[%s5 + $0x90] sm:$0xf] %vm434, %v406
  %472 = vst.msk [vmem:[%s5 + $0x94] sm:$0xf] %vm434, %v407
  %473 = vst.msk [vmem:[%s5 + $0x98] sm:$0xf] %vm434, %v408
  %474 = vst.msk [vmem:[%s5 + $0x9c] sm:$0xf] %vm434, %v409
  %475 = vst.msk [vmem:[%s5 + $0xa0] sm:$0xf] %vm434, %v410
  %476 = vst.msk [vmem:[%s5 + $0xa4] sm:$0xf] %vm434, %v411
  %477 = vst.msk [vmem:[%s5 + $0xa8] sm:$0xf] %vm434, %v412
  %478 = vst.msk [vmem:[%s5 + $0xac] sm:$0xf] %vm434, %v413
  %479 = vst.msk [vmem:[%s5 + $0xb0] sm:$0xf] %vm434, %v414
  %480 = vst.msk [vmem:[%s5 + $0xb4] sm:$0xf] %vm434, %v415
  %481 = vst.msk [vmem:[%s5 + $0xb8] sm:$0xf] %vm434, %v416
  %482 = vst.msk [vmem:[%s5 + $0xbc] sm:$0xf] %vm434, %v417
  %483 = vst.msk [vmem:[%s5 + $0xc0] sm:$0xf] %vm434, %v418
  %484 = vst.msk [vmem:[%s5 + $0xc4] sm:$0xf] %vm434, %v419
  %485 = vst.msk [vmem:[%s5 + $0xc8] sm:$0xf] %vm434, %v420
  %486 = vst.msk [vmem:[%s5 + $0xcc] sm:$0xf] %vm434, %v421
  %487 = vst.msk [vmem:[%s5 + $0xd0] sm:$0xf] %vm434, %v422
  %488 = vst.msk [vmem:[%s5 + $0xd4] sm:$0xf] %vm434, %v423
  %489 = vst.msk [vmem:[%s5 + $0xd8] sm:$0xf] %vm434, %v424
  %490 = vst.msk [vmem:[%s5 + $0xdc] sm:$0xf] %vm434, %v425
  %491 = vst.msk [vmem:[%s5 + $0xe0] sm:$0xf] %vm434, %v426
  %492 = vst.msk [vmem:[%s5 + $0xe4] sm:$0xf] %vm434, %v427
  %493 = vst.msk [vmem:[%s5 + $0xe8] sm:$0xf] %vm434, %v428
  %494 = vst.msk [vmem:[%s5 + $0xec] sm:$0xf] %vm434, %v429
  %495 = vst.msk [vmem:[%s5 + $0xf0] sm:$0xf] %vm434, %v430
  %496 = vst.msk [vmem:[%s5 + $0xf4] sm:$0xf] %vm434, %v431
  %497 = vst.msk [vmem:[%s5 + $0xf8] sm:$0xf] %vm434, %v432
  %498 = vst.msk [vmem:[%s5 + $0xfc] sm:$0xf] %vm434, %v433
  // Predicated region
  $region22: #{generator_forward.20} parent=0 // pred_check
    _
  $region23: #{generator_forward.20} parent=0 // pred_check_branch
    %500 = sbr.rel (0) target = $region25
  $region24: #{generator_forward.20} parent=0 // pred_region
    _
  $region25: #{generator_forward.20} parent=0 // pred_fallthru
    _
  // Predicated region
  $region26: #{generator_forward.20} parent=0 // pred_check
    _
  $region27: #{generator_forward.20} parent=0 // pred_check_branch
    %502 = sbr.rel (0) target = $region29
  $region28: #{generator_forward.20} parent=0 // pred_region
    _
  $region29: #{generator_forward.20} parent=0 // pred_fallthru
    _

// kernel: generator_forward.21
$region0: #{generator_forward.21}
  #allocation0 [shape = 'u32[]', space=smem, size = 0x4, offset = 0x4, fixed_abs, tag = 'smem constant byte address 0x4 - core index']
  #allocation1 [shape = 'u32[72,128]{1,0:T(1,128)}', space=vmem, size = 0x9000, scoped, tag = 'internal scratch']
  %s0 = inlined_call_operand.vmem [shape: bf16[592,256], index: 0, kind: input, shape index: {}]
  %s1 = inlined_call_operand.vmem [shape: bf16[256,128], index: 1, kind: input, shape index: {}]
  %s2 = inlined_call_operand.vmem [shape: f32[592,128], index: 2, kind: output, shape index: {}]
  %s3 = sld [smem:[#allocation0]]
  $region18: #{generator_forward.21} parent=0
    _
  %s5 = ssub.s32 1, %s3
  %s6 = scalar_select 0, %s5, %s3
  // Predicated region
  $region2: #{generator_forward.21} parent=0 // pred_check
    _
  $region3: #{generator_forward.21} parent=0 // pred_check_branch
    %8 = sbr.rel (0) target = $region5
  $region4: #{generator_forward.21} parent=0 // pred_region
    _
  $region5: #{generator_forward.21} parent=0 // pred_fallthru
    _
  // Predicated region
  $region6: #{generator_forward.21} parent=0 // pred_check
    _
  $region7: #{generator_forward.21} parent=0 // pred_check_branch
    %10 = sbr.rel (0) target = $region9
  $region8: #{generator_forward.21} parent=0 // pred_region
    _
  $region9: #{generator_forward.21} parent=0 // pred_fallthru
    _
  %v11 = vld [vmem:[%s0] sm:$0xff]
  %v12 = vld [vmem:[%s0 + $0x8] sm:$0xff]
  %v13 = vld [vmem:[%s0 + $0x10] sm:$0xff]
  %v14 = vld [vmem:[%s0 + $0x18] sm:$0xff]
  %v15 = vld [vmem:[%s0 + $0x20] sm:$0xff]
  %v16 = vld [vmem:[%s0 + $0x28] sm:$0xff]
  %v17 = vld [vmem:[%s0 + $0x30] sm:$0xff]
  %v18 = vld [vmem:[%s0 + $0x38] sm:$0xff]
  %v19 = vld [vmem:[%s0 + $0x40] sm:$0xff]
  %v20 = vld [vmem:[%s0 + $0x48] sm:$0xff]
  %v21 = vld [vmem:[%s0 + $0x50] sm:$0xff]
  %v22 = vld [vmem:[%s0 + $0x58] sm:$0xff]
  %v23 = vld [vmem:[%s0 + $0x60] sm:$0xff]
  %v24 = vld [vmem:[%s0 + $0x68] sm:$0xff]
  %v25 = vld [vmem:[%s0 + $0x70] sm:$0xff]
  %v26 = vld [vmem:[%s0 + $0x78] sm:$0xff]
  %v27 = vld [vmem:[%s0 + $0x80] sm:$0xff]
  %v28 = vld [vmem:[%s0 + $0x88] sm:$0xff]
  %v29 = vld [vmem:[%s0 + $0x90] sm:$0xff]
  %v30 = vld [vmem:[%s0 + $0x98] sm:$0xff]
  %v31 = vld [vmem:[%s0 + $0xa0] sm:$0xff]
  %v32 = vld [vmem:[%s0 + $0xa8] sm:$0xff]
  %v33 = vld [vmem:[%s0 + $0xb0] sm:$0xff]
  %v34 = vld [vmem:[%s0 + $0xb8] sm:$0xff]
  %v35 = vld [vmem:[%s0 + $0xc0] sm:$0xff]
  %v36 = vld [vmem:[%s0 + $0xc8] sm:$0xff]
  %v37 = vld [vmem:[%s0 + $0xd0] sm:$0xff]
  %v38 = vld [vmem:[%s0 + $0xd8] sm:$0xff]
  %v39 = vld [vmem:[%s0 + $0xe0] sm:$0xff]
  %v40 = vld [vmem:[%s0 + $0xe8] sm:$0xff]
  %v41 = vld [vmem:[%s0 + $0xf0] sm:$0xff]
  %v42 = vld [vmem:[%s0 + $0xf8] sm:$0xff]
  %v43 = vld [vmem:[%s0 + $0x100] sm:$0xff]
  %v44 = vld [vmem:[%s0 + $0x108] sm:$0xff]
  %v45 = vld [vmem:[%s0 + $0x110] sm:$0xff]
  %v46 = vld [vmem:[%s0 + $0x118] sm:$0xff]
  %v47 = vld [vmem:[%s0 + $0x120] sm:$0xff]
  %v48 = vld [vmem:[%s0 + $0x128] sm:$0xff]
  %v49 = vld [vmem:[%s0 + $0x130] sm:$0xff]
  %v50 = vld [vmem:[%s0 + $0x138] sm:$0xff]
  %v51 = vld [vmem:[%s0 + $0x140] sm:$0xff]
  %v52 = vld [vmem:[%s0 + $0x148] sm:$0xff]
  %v53 = vld [vmem:[%s0 + $0x150] sm:$0xff]
  %v54 = vld [vmem:[%s0 + $0x158] sm:$0xff]
  %v55 = vld [vmem:[%s0 + $0x160] sm:$0xff]
  %v56 = vld [vmem:[%s0 + $0x168] sm:$0xff]
  %v57 = vld [vmem:[%s0 + $0x170] sm:$0xff]
  %v58 = vld [vmem:[%s0 + $0x178] sm:$0xff]
  %v59 = vld [vmem:[%s0 + $0x180] sm:$0xff]
  %v60 = vld [vmem:[%s0 + $0x188] sm:$0xff]
  %v61 = vld [vmem:[%s0 + $0x190] sm:$0xff]
  %v62 = vld [vmem:[%s0 + $0x198] sm:$0xff]
  %v63 = vld [vmem:[%s0 + $0x1a0] sm:$0xff]
  %v64 = vld [vmem:[%s0 + $0x1a8] sm:$0xff]
  %v65 = vld [vmem:[%s0 + $0x1b0] sm:$0xff]
  %v66 = vld [vmem:[%s0 + $0x1b8] sm:$0xff]
  %v67 = vld [vmem:[%s0 + $0x1c0] sm:$0xff]
  %v68 = vld [vmem:[%s0 + $0x1c8] sm:$0xff]
  %v69 = vld [vmem:[%s0 + $0x1d0] sm:$0xff]
  %v70 = vld [vmem:[%s0 + $0x1d8] sm:$0xff]
  %v71 = vld [vmem:[%s0 + $0x1e0] sm:$0xff]
  %v72 = vld [vmem:[%s0 + $0x1e8] sm:$0xff]
  %v73 = vld [vmem:[%s0 + $0x1f0] sm:$0xff]
  %v74 = vld [vmem:[%s0 + $0x1f8] sm:$0xff]
  %v75 = vld [vmem:[%s0 + $0x200] sm:$0xff]
  %v76 = vld [vmem:[%s0 + $0x208] sm:$0xff]
  %v77 = vld [vmem:[%s0 + $0x210] sm:$0xff]
  %v78 = vld [vmem:[%s0 + $0x218] sm:$0xff]
  %v79 = vld [vmem:[%s0 + $0x220] sm:$0xff]
  %v80 = vld [vmem:[%s0 + $0x228] sm:$0xff]
  %v81 = vld [vmem:[%s0 + $0x230] sm:$0xff]
  %v82 = vld [vmem:[%s0 + $0x238] sm:$0xff]
  %v83 = vld [vmem:[%s0 + $0x240] sm:$0xff]
  %v84 = vld [vmem:[%s0 + $0x248] sm:$0xff]
  %v85 = vld [vmem:[%s1] sm:$0xf]
  %v86 = vld [vmem:[%s1 + $0x4] sm:$0xf]
  %v87 = vld [vmem:[%s1 + $0x8] sm:$0xf]
  %v88 = vld [vmem:[%s1 + $0xc] sm:$0xf]
  %v89 = vld [vmem:[%s1 + $0x10] sm:$0xf]
  %v90 = vld [vmem:[%s1 + $0x14] sm:$0xf]
  %v91 = vld [vmem:[%s1 + $0x18] sm:$0xf]
  %v92 = vld [vmem:[%s1 + $0x1c] sm:$0xf]
  %v93 = vld [vmem:[%s1 + $0x20] sm:$0xf]
  %v94 = vld [vmem:[%s1 + $0x24] sm:$0xf]
  %v95 = vld [vmem:[%s1 + $0x28] sm:$0xf]
  %v96 = vld [vmem:[%s1 + $0x2c] sm:$0xf]
  %v97 = vld [vmem:[%s1 + $0x30] sm:$0xf]
  %v98 = vld [vmem:[%s1 + $0x34] sm:$0xf]
  %v99 = vld [vmem:[%s1 + $0x38] sm:$0xf]
  %v100 = vld [vmem:[%s1 + $0x3c] sm:$0xf]
  %v101 = vld [vmem:[%s1 + $0x40] sm:$0xf]
  %v102 = vld [vmem:[%s1 + $0x44] sm:$0xf]
  %v103 = vld [vmem:[%s1 + $0x48] sm:$0xf]
  %v104 = vld [vmem:[%s1 + $0x4c] sm:$0xf]
  %v105 = vld [vmem:[%s1 + $0x50] sm:$0xf]
  %v106 = vld [vmem:[%s1 + $0x54] sm:$0xf]
  %v107 = vld [vmem:[%s1 + $0x58] sm:$0xf]
  %v108 = vld [vmem:[%s1 + $0x5c] sm:$0xf]
  %v109 = vld [vmem:[%s1 + $0x60] sm:$0xf]
  %v110 = vld [vmem:[%s1 + $0x64] sm:$0xf]
  %v111 = vld [vmem:[%s1 + $0x68] sm:$0xf]
  %v112 = vld [vmem:[%s1 + $0x6c] sm:$0xf]
  %v113 = vld [vmem:[%s1 + $0x70] sm:$0xf]
  %v114 = vld [vmem:[%s1 + $0x74] sm:$0xf]
  %v115 = vld [vmem:[%s1 + $0x78] sm:$0xf]
  %v116 = vld [vmem:[%s1 + $0x7c] sm:$0xf]
  %v191 = vunpack.c.l.b16 %v11
  %v192 = vunpack.c.h.b16 %v11
  %v193 = vunpack.c.l.b16 %v12
  %v194 = vunpack.c.h.b16 %v12
  %v195 = vunpack.c.l.b16 %v13
  %v196 = vunpack.c.h.b16 %v13
  %v197 = vunpack.c.l.b16 %v14
  %v198 = vunpack.c.h.b16 %v14
  %v199 = vunpack.c.l.b16 %v15
  %v200 = vunpack.c.h.b16 %v15
  %v201 = vunpack.c.l.b16 %v16
  %v202 = vunpack.c.h.b16 %v16
  %v203 = vunpack.c.l.b16 %v17
  %v204 = vunpack.c.h.b16 %v17
  %v205 = vunpack.c.l.b16 %v18
  %v206 = vunpack.c.h.b16 %v18
  %v207 = vunpack.c.l.b16 %v19
  %v208 = vunpack.c.h.b16 %v19
  %v209 = vunpack.c.l.b16 %v20
  %v210 = vunpack.c.h.b16 %v20
  %v211 = vunpack.c.l.b16 %v21
  %v212 = vunpack.c.h.b16 %v21
  %v213 = vunpack.c.l.b16 %v22
  %v214 = vunpack.c.h.b16 %v22
  %v215 = vunpack.c.l.b16 %v23
  %v216 = vunpack.c.h.b16 %v23
  %v217 = vunpack.c.l.b16 %v24
  %v218 = vunpack.c.h.b16 %v24
  %v219 = vunpack.c.l.b16 %v25
  %v220 = vunpack.c.h.b16 %v25
  %v221 = vunpack.c.l.b16 %v26
  %v222 = vunpack.c.h.b16 %v26
  %v223 = vunpack.c.l.b16 %v27
  %v224 = vunpack.c.h.b16 %v27
  %v225 = vunpack.c.l.b16 %v28
  %v226 = vunpack.c.h.b16 %v28
  %v227 = vunpack.c.l.b16 %v29
  %v228 = vunpack.c.h.b16 %v29
  %v229 = vunpack.c.l.b16 %v30
  %v230 = vunpack.c.h.b16 %v30
  %v231 = vunpack.c.l.b16 %v31
  %v232 = vunpack.c.h.b16 %v31
  %v233 = vunpack.c.l.b16 %v32
  %v234 = vunpack.c.h.b16 %v32
  %v235 = vunpack.c.l.b16 %v33
  %v236 = vunpack.c.h.b16 %v33
  %v237 = vunpack.c.l.b16 %v34
  %v238 = vunpack.c.h.b16 %v34
  %v239 = vunpack.c.l.b16 %v35
  %v240 = vunpack.c.h.b16 %v35
  %v241 = vunpack.c.l.b16 %v36
  %v242 = vunpack.c.h.b16 %v36
  %v243 = vunpack.c.l.b16 %v37
  %v244 = vunpack.c.h.b16 %v37
  %v245 = vunpack.c.l.b16 %v38
  %v246 = vunpack.c.h.b16 %v38
  %v247 = vunpack.c.l.b16 %v39
  %v248 = vunpack.c.h.b16 %v39
  %v249 = vunpack.c.l.b16 %v40
  %v250 = vunpack.c.h.b16 %v40
  %v251 = vunpack.c.l.b16 %v41
  %v252 = vunpack.c.h.b16 %v41
  %v253 = vunpack.c.l.b16 %v42
  %v254 = vunpack.c.h.b16 %v42
  %v255 = vunpack.c.l.b16 %v43
  %v256 = vunpack.c.h.b16 %v43
  %v257 = vunpack.c.l.b16 %v44
  %v258 = vunpack.c.h.b16 %v44
  %v259 = vunpack.c.l.b16 %v45
  %v260 = vunpack.c.h.b16 %v45
  %v261 = vunpack.c.l.b16 %v46
  %v262 = vunpack.c.h.b16 %v46
  %v263 = vunpack.c.l.b16 %v47
  %v264 = vunpack.c.h.b16 %v47
  %v265 = vunpack.c.l.b16 %v48
  %v266 = vunpack.c.h.b16 %v48
  %v267 = vunpack.c.l.b16 %v49
  %v268 = vunpack.c.h.b16 %v49
  %v269 = vunpack.c.l.b16 %v50
  %v270 = vunpack.c.h.b16 %v50
  %v271 = vunpack.c.l.b16 %v51
  %v272 = vunpack.c.h.b16 %v51
  %v273 = vunpack.c.l.b16 %v52
  %v274 = vunpack.c.h.b16 %v52
  %v275 = vunpack.c.l.b16 %v53
  %v276 = vunpack.c.h.b16 %v53
  %v277 = vunpack.c.l.b16 %v54
  %v278 = vunpack.c.h.b16 %v54
  %v279 = vunpack.c.l.b16 %v55
  %v280 = vunpack.c.h.b16 %v55
  %v281 = vunpack.c.l.b16 %v56
  %v282 = vunpack.c.h.b16 %v56
  %v283 = vunpack.c.l.b16 %v57
  %v284 = vunpack.c.h.b16 %v57
  %v285 = vunpack.c.l.b16 %v58
  %v286 = vunpack.c.h.b16 %v58
  %v287 = vunpack.c.l.b16 %v59
  %v288 = vunpack.c.h.b16 %v59
  %v289 = vunpack.c.l.b16 %v60
  %v290 = vunpack.c.h.b16 %v60
  %v291 = vunpack.c.l.b16 %v61
  %v292 = vunpack.c.h.b16 %v61
  %v293 = vunpack.c.l.b16 %v62
  %v294 = vunpack.c.h.b16 %v62
  %v295 = vunpack.c.l.b16 %v63
  %v296 = vunpack.c.h.b16 %v63
  %v297 = vunpack.c.l.b16 %v64
  %v298 = vunpack.c.h.b16 %v64
  %v299 = vunpack.c.l.b16 %v65
  %v300 = vunpack.c.h.b16 %v65
  %v301 = vunpack.c.l.b16 %v66
  %v302 = vunpack.c.h.b16 %v66
  %v303 = vunpack.c.l.b16 %v67
  %v304 = vunpack.c.h.b16 %v67
  %v305 = vunpack.c.l.b16 %v68
  %v306 = vunpack.c.h.b16 %v68
  %v307 = vunpack.c.l.b16 %v69
  %v308 = vunpack.c.h.b16 %v69
  %v309 = vunpack.c.l.b16 %v70
  %v310 = vunpack.c.h.b16 %v70
  %v311 = vunpack.c.l.b16 %v71
  %v312 = vunpack.c.h.b16 %v71
  %v313 = vunpack.c.l.b16 %v72
  %v314 = vunpack.c.h.b16 %v72
  %v315 = vunpack.c.l.b16 %v73
  %v316 = vunpack.c.h.b16 %v73
  %v317 = vunpack.c.l.b16 %v74
  %v318 = vunpack.c.h.b16 %v74
  %v319 = vunpack.c.l.b16 %v75
  %v320 = vunpack.c.h.b16 %v75
  %v321 = vunpack.c.l.b16 %v76
  %v322 = vunpack.c.h.b16 %v76
  %v323 = vunpack.c.l.b16 %v77
  %v324 = vunpack.c.h.b16 %v77
  %v325 = vunpack.c.l.b16 %v78
  %v326 = vunpack.c.h.b16 %v78
  %v327 = vunpack.c.l.b16 %v79
  %v328 = vunpack.c.h.b16 %v79
  %v329 = vunpack.c.l.b16 %v80
  %v330 = vunpack.c.h.b16 %v80
  %v331 = vunpack.c.l.b16 %v81
  %v332 = vunpack.c.h.b16 %v81
  %v333 = vunpack.c.l.b16 %v82
  %v334 = vunpack.c.h.b16 %v82
  %v335 = vunpack.c.l.b16 %v83
  %v336 = vunpack.c.h.b16 %v83
  %v337 = vunpack.c.l.b16 %v84
  %v338 = vunpack.c.h.b16 %v84
  %v339 = vpack.c.b16 %v193, %v191
  %v340 = vpack.c.b16 %v194, %v192
  %v341 = vpack.c.b16 %v197, %v195
  %v342 = vpack.c.b16 %v198, %v196
  %v343 = vpack.c.b16 %v201, %v199
  %v344 = vpack.c.b16 %v202, %v200
  %v345 = vpack.c.b16 %v205, %v203
  %v346 = vpack.c.b16 %v206, %v204
  %v347 = vpack.c.b16 %v209, %v207
  %v348 = vpack.c.b16 %v210, %v208
  %v349 = vpack.c.b16 %v213, %v211
  %v350 = vpack.c.b16 %v214, %v212
  %v351 = vpack.c.b16 %v217, %v215
  %v352 = vpack.c.b16 %v218, %v216
  %v353 = vpack.c.b16 %v221, %v219
  %v354 = vpack.c.b16 %v222, %v220
  %v355 = vpack.c.b16 %v225, %v223
  %v356 = vpack.c.b16 %v226, %v224
  %v357 = vpack.c.b16 %v229, %v227
  %v358 = vpack.c.b16 %v230, %v228
  %v359 = vpack.c.b16 %v233, %v231
  %v360 = vpack.c.b16 %v234, %v232
  %v361 = vpack.c.b16 %v237, %v235
  %v362 = vpack.c.b16 %v238, %v236
  %v363 = vpack.c.b16 %v241, %v239
  %v364 = vpack.c.b16 %v242, %v240
  %v365 = vpack.c.b16 %v245, %v243
  %v366 = vpack.c.b16 %v246, %v244
  %v367 = vpack.c.b16 %v249, %v247
  %v368 = vpack.c.b16 %v250, %v248
  %v369 = vpack.c.b16 %v253, %v251
  %v370 = vpack.c.b16 %v254, %v252
  %v371 = vpack.c.b16 %v257, %v255
  %v372 = vpack.c.b16 %v258, %v256
  %v373 = vpack.c.b16 %v261, %v259
  %v374 = vpack.c.b16 %v262, %v260
  %v375 = vpack.c.b16 %v265, %v263
  %v376 = vpack.c.b16 %v266, %v264
  %v377 = vpack.c.b16 %v269, %v267
  %v378 = vpack.c.b16 %v270, %v268
  %v379 = vpack.c.b16 %v273, %v271
  %v380 = vpack.c.b16 %v274, %v272
  %v381 = vpack.c.b16 %v277, %v275
  %v382 = vpack.c.b16 %v278, %v276
  %v383 = vpack.c.b16 %v281, %v279
  %v384 = vpack.c.b16 %v282, %v280
  %v385 = vpack.c.b16 %v285, %v283
  %v386 = vpack.c.b16 %v286, %v284
  %v387 = vpack.c.b16 %v289, %v287
  %v388 = vpack.c.b16 %v290, %v288
  %v389 = vpack.c.b16 %v293, %v291
  %v390 = vpack.c.b16 %v294, %v292
  %v391 = vpack.c.b16 %v297, %v295
  %v392 = vpack.c.b16 %v298, %v296
  %v393 = vpack.c.b16 %v301, %v299
  %v394 = vpack.c.b16 %v302, %v300
  %v395 = vpack.c.b16 %v305, %v303
  %v396 = vpack.c.b16 %v306, %v304
  %v397 = vpack.c.b16 %v309, %v307
  %v398 = vpack.c.b16 %v310, %v308
  %v399 = vpack.c.b16 %v313, %v311
  %v400 = vpack.c.b16 %v314, %v312
  %v401 = vpack.c.b16 %v317, %v315
  %v402 = vpack.c.b16 %v318, %v316
  %v403 = vpack.c.b16 %v321, %v319
  %v404 = vpack.c.b16 %v322, %v320
  %v405 = vpack.c.b16 %v325, %v323
  %v406 = vpack.c.b16 %v326, %v324
  %v407 = vpack.c.b16 %v329, %v327
  %v408 = vpack.c.b16 %v330, %v328
  %v409 = vpack.c.b16 %v333, %v331
  %v410 = vpack.c.b16 %v334, %v332
  %v411 = vpack.c.b16 %v337, %v335
  %v412 = vpack.c.b16 %v338, %v336
  %v519 = vunpack.c.l.b16 %v85
  %v520 = vunpack.c.l.b16 %v86
  %v521 = vunpack.c.l.b16 %v87
  %v522 = vunpack.c.l.b16 %v88
  %v523 = vunpack.c.l.b16 %v89
  %v524 = vunpack.c.l.b16 %v90
  %v525 = vunpack.c.l.b16 %v91
  %v526 = vunpack.c.l.b16 %v92
  %v527 = vunpack.c.l.b16 %v93
  %v528 = vunpack.c.l.b16 %v94
  %v529 = vunpack.c.l.b16 %v95
  %v530 = vunpack.c.l.b16 %v96
  %v531 = vunpack.c.l.b16 %v97
  %v532 = vunpack.c.l.b16 %v98
  %v533 = vunpack.c.l.b16 %v99
  %v534 = vunpack.c.l.b16 %v100
  %v535 = vunpack.c.l.b16 %v101
  %v536 = vunpack.c.l.b16 %v102
  %v537 = vunpack.c.l.b16 %v103
  %v538 = vunpack.c.l.b16 %v104
  %v539 = vunpack.c.l.b16 %v105
  %v540 = vunpack.c.l.b16 %v106
  %v541 = vunpack.c.l.b16 %v107
  %v542 = vunpack.c.l.b16 %v108
  %v543 = vunpack.c.l.b16 %v109
  %v544 = vunpack.c.l.b16 %v110
  %v545 = vunpack.c.l.b16 %v111
  %v546 = vunpack.c.l.b16 %v112
  %v547 = vunpack.c.l.b16 %v113
  %v548 = vunpack.c.l.b16 %v114
  %v549 = vunpack.c.l.b16 %v115
  %v550 = vunpack.c.l.b16 %v116
  %v551 = vpack.c.b16 %v520, %v519
  %v552 = vpack.c.b16 %v522, %v521
  %v553 = vpack.c.b16 %v524, %v523
  %v554 = vpack.c.b16 %v526, %v525
  %v555 = vpack.c.b16 %v528, %v527
  %v556 = vpack.c.b16 %v530, %v529
  %v557 = vpack.c.b16 %v532, %v531
  %v558 = vpack.c.b16 %v534, %v533
  %v559 = vpack.c.b16 %v536, %v535
  %v560 = vpack.c.b16 %v538, %v537
  %v561 = vpack.c.b16 %v540, %v539
  %v562 = vpack.c.b16 %v542, %v541
  %v563 = vpack.c.b16 %v544, %v543
  %v564 = vpack.c.b16 %v546, %v545
  %v565 = vpack.c.b16 %v548, %v547
  %v566 = vpack.c.b16 %v550, %v549
  %583 = vmatpush.bf16.msra.mxu0 %v558
  %584 = vmatpush.bf16.msra.mxu0 %v557
  %585 = vmatpush.bf16.msra.mxu0 %v556
  %586 = vmatpush.bf16.msra.mxu0 %v555
  %587 = vmatpush.bf16.msra.mxu0 %v554
  %588 = vmatpush.bf16.msra.mxu0 %v553
  %589 = vmatpush.bf16.msra.mxu0 %v552
  %590 = vmatpush.bf16.msra.mxu0 %v551
  %591 = vmatmul.bf16.gmra.mxu0 %v339
  %v592 = vpop.f32.mrf.mxu0
  %v593 = vadd.f32 0.0, %v592
  %v594 = vpop.f32.mrf.mxu0
  %v595 = vadd.f32 0.0, %v594
  %596 = vmatmul.bf16.gmra.mxu0 %v341
  %v597 = vpop.f32.mrf.mxu0
  %v598 = vadd.f32 0.0, %v597
  %v599 = vpop.f32.mrf.mxu0
  %v600 = vadd.f32 0.0, %v599
  %601 = vmatmul.bf16.gmra.mxu0 %v343
  %v602 = vpop.f32.mrf.mxu0
  %v603 = vadd.f32 0.0, %v602
  %v604 = vpop.f32.mrf.mxu0
  %v605 = vadd.f32 0.0, %v604
  %606 = vmatmul.bf16.gmra.mxu0 %v345
  %v607 = vpop.f32.mrf.mxu0
  %v608 = vadd.f32 0.0, %v607
  %v609 = vpop.f32.mrf.mxu0
  %v610 = vadd.f32 0.0, %v609
  %611 = vmatmul.bf16.gmra.mxu0 %v347
  %v612 = vpop.f32.mrf.mxu0
  %v613 = vadd.f32 0.0, %v612
  %v614 = vpop.f32.mrf.mxu0
  %v615 = vadd.f32 0.0, %v614
  %616 = vmatmul.bf16.gmra.mxu0 %v349
  %v617 = vpop.f32.mrf.mxu0
  %v618 = vadd.f32 0.0, %v617
  %v619 = vpop.f32.mrf.mxu0
  %v620 = vadd.f32 0.0, %v619
  %621 = vmatmul.bf16.gmra.mxu0 %v351
  %v622 = vpop.f32.mrf.mxu0
  %v623 = vadd.f32 0.0, %v622
  %v624 = vpop.f32.mrf.mxu0
  %v625 = vadd.f32 0.0, %v624
  %626 = vmatmul.bf16.gmra.mxu0 %v353
  %v627 = vpop.f32.mrf.mxu0
  %v628 = vadd.f32 0.0, %v627
  %v629 = vpop.f32.mrf.mxu0
  %v630 = vadd.f32 0.0, %v629
  %631 = vmatmul.bf16.gmra.mxu0 %v355
  %v632 = vpop.f32.mrf.mxu0
  %v633 = vadd.f32 0.0, %v632
  %v634 = vpop.f32.mrf.mxu0
  %v635 = vadd.f32 0.0, %v634
  %636 = vmatmul.bf16.gmra.mxu0 %v357
  %v637 = vpop.f32.mrf.mxu0
  %v638 = vadd.f32 0.0, %v637
  %v639 = vpop.f32.mrf.mxu0
  %v640 = vadd.f32 0.0, %v639
  %641 = vmatmul.bf16.gmra.mxu0 %v359
  %v642 = vpop.f32.mrf.mxu0
  %v643 = vadd.f32 0.0, %v642
  %v644 = vpop.f32.mrf.mxu0
  %v645 = vadd.f32 0.0, %v644
  %646 = vmatmul.bf16.gmra.mxu0 %v361
  %v647 = vpop.f32.mrf.mxu0
  %v648 = vadd.f32 0.0, %v647
  %v649 = vpop.f32.mrf.mxu0
  %v650 = vadd.f32 0.0, %v649
  %651 = vmatmul.bf16.gmra.mxu0 %v363
  %v652 = vpop.f32.mrf.mxu0
  %v653 = vadd.f32 0.0, %v652
  %v654 = vpop.f32.mrf.mxu0
  %v655 = vadd.f32 0.0, %v654
  %656 = vmatmul.bf16.gmra.mxu0 %v365
  %v657 = vpop.f32.mrf.mxu0
  %v658 = vadd.f32 0.0, %v657
  %v659 = vpop.f32.mrf.mxu0
  %v660 = vadd.f32 0.0, %v659
  %661 = vmatmul.bf16.gmra.mxu0 %v367
  %v662 = vpop.f32.mrf.mxu0
  %v663 = vadd.f32 0.0, %v662
  %v664 = vpop.f32.mrf.mxu0
  %v665 = vadd.f32 0.0, %v664
  %666 = vmatmul.bf16.gmra.mxu0 %v369
  %v667 = vpop.f32.mrf.mxu0
  %v668 = vadd.f32 0.0, %v667
  %v669 = vpop.f32.mrf.mxu0
  %v670 = vadd.f32 0.0, %v669
  %671 = vmatmul.bf16.gmra.mxu0 %v371
  %v672 = vpop.f32.mrf.mxu0
  %v673 = vadd.f32 0.0, %v672
  %v674 = vpop.f32.mrf.mxu0
  %v675 = vadd.f32 0.0, %v674
  %676 = vmatmul.bf16.gmra.mxu0 %v373
  %v677 = vpop.f32.mrf.mxu0
  %v678 = vadd.f32 0.0, %v677
  %v679 = vpop.f32.mrf.mxu0
  %v680 = vadd.f32 0.0, %v679
  %681 = vmatmul.bf16.gmra.mxu0 %v375
  %v682 = vpop.f32.mrf.mxu0
  %v683 = vadd.f32 0.0, %v682
  %v684 = vpop.f32.mrf.mxu0
  %v685 = vadd.f32 0.0, %v684
  %686 = vmatmul.bf16.gmra.mxu0 %v377
  %v687 = vpop.f32.mrf.mxu0
  %v688 = vadd.f32 0.0, %v687
  %v689 = vpop.f32.mrf.mxu0
  %v690 = vadd.f32 0.0, %v689
  %691 = vmatmul.bf16.gmra.mxu0 %v379
  %v692 = vpop.f32.mrf.mxu0
  %v693 = vadd.f32 0.0, %v692
  %v694 = vpop.f32.mrf.mxu0
  %v695 = vadd.f32 0.0, %v694
  %696 = vmatmul.bf16.gmra.mxu0 %v381
  %v697 = vpop.f32.mrf.mxu0
  %v698 = vadd.f32 0.0, %v697
  %v699 = vpop.f32.mrf.mxu0
  %v700 = vadd.f32 0.0, %v699
  %701 = vmatmul.bf16.gmra.mxu0 %v383
  %v702 = vpop.f32.mrf.mxu0
  %v703 = vadd.f32 0.0, %v702
  %v704 = vpop.f32.mrf.mxu0
  %v705 = vadd.f32 0.0, %v704
  %706 = vmatmul.bf16.gmra.mxu0 %v385
  %v707 = vpop.f32.mrf.mxu0
  %v708 = vadd.f32 0.0, %v707
  %v709 = vpop.f32.mrf.mxu0
  %v710 = vadd.f32 0.0, %v709
  %711 = vmatmul.bf16.gmra.mxu0 %v387
  %v712 = vpop.f32.mrf.mxu0
  %v713 = vadd.f32 0.0, %v712
  %v714 = vpop.f32.mrf.mxu0
  %v715 = vadd.f32 0.0, %v714
  %716 = vmatmul.bf16.gmra.mxu0 %v389
  %v717 = vpop.f32.mrf.mxu0
  %v718 = vadd.f32 0.0, %v717
  %v719 = vpop.f32.mrf.mxu0
  %v720 = vadd.f32 0.0, %v719
  %721 = vmatmul.bf16.gmra.mxu0 %v391
  %v722 = vpop.f32.mrf.mxu0
  %v723 = vadd.f32 0.0, %v722
  %v724 = vpop.f32.mrf.mxu0
  %v725 = vadd.f32 0.0, %v724
  %726 = vmatmul.bf16.gmra.mxu0 %v393
  %v727 = vpop.f32.mrf.mxu0
  %v728 = vadd.f32 0.0, %v727
  %v729 = vpop.f32.mrf.mxu0
  %v730 = vadd.f32 0.0, %v729
  %731 = vmatmul.bf16.gmra.mxu0 %v395
  %v732 = vpop.f32.mrf.mxu0
  %v733 = vadd.f32 0.0, %v732
  %v734 = vpop.f32.mrf.mxu0
  %v735 = vadd.f32 0.0, %v734
  %736 = vmatmul.bf16.gmra.mxu0 %v397
  %v737 = vpop.f32.mrf.mxu0
  %v738 = vadd.f32 0.0, %v737
  %v739 = vpop.f32.mrf.mxu0
  %v740 = vadd.f32 0.0, %v739
  %741 = vmatmul.bf16.gmra.mxu0 %v399
  %v742 = vpop.f32.mrf.mxu0
  %v743 = vadd.f32 0.0, %v742
  %v744 = vpop.f32.mrf.mxu0
  %v745 = vadd.f32 0.0, %v744
  %746 = vmatmul.bf16.gmra.mxu0 %v401
  %v747 = vpop.f32.mrf.mxu0
  %v748 = vadd.f32 0.0, %v747
  %v749 = vpop.f32.mrf.mxu0
  %v750 = vadd.f32 0.0, %v749
  %751 = vmatmul.bf16.gmra.mxu0 %v403
  %v752 = vpop.f32.mrf.mxu0
  %v753 = vadd.f32 0.0, %v752
  %v754 = vpop.f32.mrf.mxu0
  %v755 = vadd.f32 0.0, %v754
  %756 = vmatmul.bf16.gmra.mxu0 %v405
  %v757 = vpop.f32.mrf.mxu0
  %v758 = vadd.f32 0.0, %v757
  %v759 = vpop.f32.mrf.mxu0
  %v760 = vadd.f32 0.0, %v759
  %761 = vmatmul.bf16.gmra.mxu0 %v407
  %v762 = vpop.f32.mrf.mxu0
  %v763 = vadd.f32 0.0, %v762
  %v764 = vpop.f32.mrf.mxu0
  %v765 = vadd.f32 0.0, %v764
  %766 = vmatmul.bf16.gmra.mxu0 %v409
  %v767 = vpop.f32.mrf.mxu0
  %v768 = vadd.f32 0.0, %v767
  %v769 = vpop.f32.mrf.mxu0
  %v770 = vadd.f32 0.0, %v769
  %771 = vmatmul.bf16.gmra.mxu0 %v411
  %v772 = vpop.f32.mrf.mxu0
  %v773 = vadd.f32 0.0, %v772
  %v774 = vpop.f32.mrf.mxu0
  %v775 = vadd.f32 0.0, %v774
  %776 = vdwg.mxu0
  %777 = vmatpush.bf16.msra.mxu0 %v566
  %778 = vmatpush.bf16.msra.mxu0 %v565
  %779 = vmatpush.bf16.msra.mxu0 %v564
  %780 = vmatpush.bf16.msra.mxu0 %v563
  %781 = vmatpush.bf16.msra.mxu0 %v562
  %782 = vmatpush.bf16.msra.mxu0 %v561
  %783 = vmatpush.bf16.msra.mxu0 %v560
  %784 = vmatpush.bf16.msra.mxu0 %v559
  %785 = vmatmul.bf16.gmra.mxu0 %v340
  %v786 = vpop.f32.mrf.mxu0
  %v787 = vadd.f32 %v593, %v786
  %v788 = vpop.f32.mrf.mxu0
  %v789 = vadd.f32 %v595, %v788
  %790 = vmatmul.bf16.gmra.mxu0 %v342
  %v791 = vpop.f32.mrf.mxu0
  %v792 = vadd.f32 %v598, %v791
  %v793 = vpop.f32.mrf.mxu0
  %v794 = vadd.f32 %v600, %v793
  %795 = vmatmul.bf16.gmra.mxu0 %v344
  %v796 = vpop.f32.mrf.mxu0
  %v797 = vadd.f32 %v603, %v796
  %v798 = vpop.f32.mrf.mxu0
  %v799 = vadd.f32 %v605, %v798
  %800 = vmatmul.bf16.gmra.mxu0 %v346
  %v801 = vpop.f32.mrf.mxu0
  %v802 = vadd.f32 %v608, %v801
  %v803 = vpop.f32.mrf.mxu0
  %v804 = vadd.f32 %v610, %v803
  %805 = vmatmul.bf16.gmra.mxu0 %v348
  %v806 = vpop.f32.mrf.mxu0
  %v807 = vadd.f32 %v613, %v806
  %v808 = vpop.f32.mrf.mxu0
  %v809 = vadd.f32 %v615, %v808
  %810 = vmatmul.bf16.gmra.mxu0 %v350
  %v811 = vpop.f32.mrf.mxu0
  %v812 = vadd.f32 %v618, %v811
  %v813 = vpop.f32.mrf.mxu0
  %v814 = vadd.f32 %v620, %v813
  %815 = vmatmul.bf16.gmra.mxu0 %v352
  %v816 = vpop.f32.mrf.mxu0
  %v817 = vadd.f32 %v623, %v816
  %v818 = vpop.f32.mrf.mxu0
  %v819 = vadd.f32 %v625, %v818
  %820 = vmatmul.bf16.gmra.mxu0 %v354
  %v821 = vpop.f32.mrf.mxu0
  %v822 = vadd.f32 %v628, %v821
  %v823 = vpop.f32.mrf.mxu0
  %v824 = vadd.f32 %v630, %v823
  %825 = vmatmul.bf16.gmra.mxu0 %v356
  %v826 = vpop.f32.mrf.mxu0
  %v827 = vadd.f32 %v633, %v826
  %v828 = vpop.f32.mrf.mxu0
  %v829 = vadd.f32 %v635, %v828
  %830 = vmatmul.bf16.gmra.mxu0 %v358
  %v831 = vpop.f32.mrf.mxu0
  %v832 = vadd.f32 %v638, %v831
  %v833 = vpop.f32.mrf.mxu0
  %v834 = vadd.f32 %v640, %v833
  %835 = vmatmul.bf16.gmra.mxu0 %v360
  %v836 = vpop.f32.mrf.mxu0
  %v837 = vadd.f32 %v643, %v836
  %v838 = vpop.f32.mrf.mxu0
  %v839 = vadd.f32 %v645, %v838
  %840 = vmatmul.bf16.gmra.mxu0 %v362
  %v841 = vpop.f32.mrf.mxu0
  %v842 = vadd.f32 %v648, %v841
  %v843 = vpop.f32.mrf.mxu0
  %v844 = vadd.f32 %v650, %v843
  %845 = vmatmul.bf16.gmra.mxu0 %v364
  %v846 = vpop.f32.mrf.mxu0
  %v847 = vadd.f32 %v653, %v846
  %v848 = vpop.f32.mrf.mxu0
  %v849 = vadd.f32 %v655, %v848
  %850 = vmatmul.bf16.gmra.mxu0 %v366
  %v851 = vpop.f32.mrf.mxu0
  %v852 = vadd.f32 %v658, %v851
  %v853 = vpop.f32.mrf.mxu0
  %v854 = vadd.f32 %v660, %v853
  %855 = vmatmul.bf16.gmra.mxu0 %v368
  %v856 = vpop.f32.mrf.mxu0
  %v857 = vadd.f32 %v663, %v856
  %v858 = vpop.f32.mrf.mxu0
  %v859 = vadd.f32 %v665, %v858
  %860 = vmatmul.bf16.gmra.mxu0 %v370
  %v861 = vpop.f32.mrf.mxu0
  %v862 = vadd.f32 %v668, %v861
  %v863 = vpop.f32.mrf.mxu0
  %v864 = vadd.f32 %v670, %v863
  %865 = vmatmul.bf16.gmra.mxu0 %v372
  %v866 = vpop.f32.mrf.mxu0
  %v867 = vadd.f32 %v673, %v866
  %v868 = vpop.f32.mrf.mxu0
  %v869 = vadd.f32 %v675, %v868
  %870 = vmatmul.bf16.gmra.mxu0 %v374
  %v871 = vpop.f32.mrf.mxu0
  %v872 = vadd.f32 %v678, %v871
  %v873 = vpop.f32.mrf.mxu0
  %v874 = vadd.f32 %v680, %v873
  %875 = vmatmul.bf16.gmra.mxu0 %v376
  %v876 = vpop.f32.mrf.mxu0
  %v877 = vadd.f32 %v683, %v876
  %v878 = vpop.f32.mrf.mxu0
  %v879 = vadd.f32 %v685, %v878
  %880 = vmatmul.bf16.gmra.mxu0 %v378
  %v881 = vpop.f32.mrf.mxu0
  %v882 = vadd.f32 %v688, %v881
  %v883 = vpop.f32.mrf.mxu0
  %v884 = vadd.f32 %v690, %v883
  %885 = vmatmul.bf16.gmra.mxu0 %v380
  %v886 = vpop.f32.mrf.mxu0
  %v887 = vadd.f32 %v693, %v886
  %v888 = vpop.f32.mrf.mxu0
  %v889 = vadd.f32 %v695, %v888
  %890 = vmatmul.bf16.gmra.mxu0 %v382
  %v891 = vpop.f32.mrf.mxu0
  %v892 = vadd.f32 %v698, %v891
  %v893 = vpop.f32.mrf.mxu0
  %v894 = vadd.f32 %v700, %v893
  %895 = vmatmul.bf16.gmra.mxu0 %v384
  %v896 = vpop.f32.mrf.mxu0
  %v897 = vadd.f32 %v703, %v896
  %v898 = vpop.f32.mrf.mxu0
  %v899 = vadd.f32 %v705, %v898
  %900 = vmatmul.bf16.gmra.mxu0 %v386
  %v901 = vpop.f32.mrf.mxu0
  %v902 = vadd.f32 %v708, %v901
  %v903 = vpop.f32.mrf.mxu0
  %v904 = vadd.f32 %v710, %v903
  %905 = vmatmul.bf16.gmra.mxu0 %v388
  %v906 = vpop.f32.mrf.mxu0
  %v907 = vadd.f32 %v713, %v906
  %v908 = vpop.f32.mrf.mxu0
  %v909 = vadd.f32 %v715, %v908
  %910 = vmatmul.bf16.gmra.mxu0 %v390
  %v911 = vpop.f32.mrf.mxu0
  %v912 = vadd.f32 %v718, %v911
  %v913 = vpop.f32.mrf.mxu0
  %v914 = vadd.f32 %v720, %v913
  %915 = vmatmul.bf16.gmra.mxu0 %v392
  %v916 = vpop.f32.mrf.mxu0
  %v917 = vadd.f32 %v723, %v916
  %v918 = vpop.f32.mrf.mxu0
  %v919 = vadd.f32 %v725, %v918
  %920 = vmatmul.bf16.gmra.mxu0 %v394
  %v921 = vpop.f32.mrf.mxu0
  %v922 = vadd.f32 %v728, %v921
  %v923 = vpop.f32.mrf.mxu0
  %v924 = vadd.f32 %v730, %v923
  %925 = vmatmul.bf16.gmra.mxu0 %v396
  %v926 = vpop.f32.mrf.mxu0
  %v927 = vadd.f32 %v733, %v926
  %v928 = vpop.f32.mrf.mxu0
  %v929 = vadd.f32 %v735, %v928
  %930 = vmatmul.bf16.gmra.mxu0 %v398
  %v931 = vpop.f32.mrf.mxu0
  %v932 = vadd.f32 %v738, %v931
  %v933 = vpop.f32.mrf.mxu0
  %v934 = vadd.f32 %v740, %v933
  %935 = vmatmul.bf16.gmra.mxu0 %v400
  %v936 = vpop.f32.mrf.mxu0
  %v937 = vadd.f32 %v743, %v936
  %v938 = vpop.f32.mrf.mxu0
  %v939 = vadd.f32 %v745, %v938
  %940 = vmatmul.bf16.gmra.mxu0 %v402
  %v941 = vpop.f32.mrf.mxu0
  %v942 = vadd.f32 %v748, %v941
  %v943 = vpop.f32.mrf.mxu0
  %v944 = vadd.f32 %v750, %v943
  %945 = vmatmul.bf16.gmra.mxu0 %v404
  %v946 = vpop.f32.mrf.mxu0
  %v947 = vadd.f32 %v753, %v946
  %v948 = vpop.f32.mrf.mxu0
  %v949 = vadd.f32 %v755, %v948
  %950 = vmatmul.bf16.gmra.mxu0 %v406
  %v951 = vpop.f32.mrf.mxu0
  %v952 = vadd.f32 %v758, %v951
  %v953 = vpop.f32.mrf.mxu0
  %v954 = vadd.f32 %v760, %v953
  %955 = vmatmul.bf16.gmra.mxu0 %v408
  %v956 = vpop.f32.mrf.mxu0
  %v957 = vadd.f32 %v763, %v956
  %v958 = vpop.f32.mrf.mxu0
  %v959 = vadd.f32 %v765, %v958
  %960 = vmatmul.bf16.gmra.mxu0 %v410
  %v961 = vpop.f32.mrf.mxu0
  %v962 = vadd.f32 %v768, %v961
  %v963 = vpop.f32.mrf.mxu0
  %v964 = vadd.f32 %v770, %v963
  %965 = vmatmul.bf16.gmra.mxu0 %v412
  %v966 = vpop.f32.mrf.mxu0
  %v967 = vadd.f32 %v773, %v966
  %v968 = vpop.f32.mrf.mxu0
  %v969 = vadd.f32 %v775, %v968
  %970 = vdwg.mxu0
  %971 = vst [vmem:[%s2] sm:$0xff] %v787
  %972 = vst [vmem:[%s2 + $0x8] sm:$0xff] %v789
  %973 = vst [vmem:[%s2 + $0x10] sm:$0xff] %v792
  %974 = vst [vmem:[%s2 + $0x18] sm:$0xff] %v794
  %975 = vst [vmem:[%s2 + $0x20] sm:$0xff] %v797
  %976 = vst [vmem:[%s2 + $0x28] sm:$0xff] %v799
  %977 = vst [vmem:[%s2 + $0x30] sm:$0xff] %v802
  %978 = vst [vmem:[%s2 + $0x38] sm:$0xff] %v804
  %979 = vst [vmem:[%s2 + $0x40] sm:$0xff] %v807
  %980 = vst [vmem:[%s2 + $0x48] sm:$0xff] %v809
  %981 = vst [vmem:[%s2 + $0x50] sm:$0xff] %v812
  %982 = vst [vmem:[%s2 + $0x58] sm:$0xff] %v814
  %983 = vst [vmem:[%s2 + $0x60] sm:$0xff] %v817
  %984 = vst [vmem:[%s2 + $0x68] sm:$0xff] %v819
  %985 = vst [vmem:[%s2 + $0x70] sm:$0xff] %v822
  %986 = vst [vmem:[%s2 + $0x78] sm:$0xff] %v824
  %987 = vst [vmem:[%s2 + $0x80] sm:$0xff] %v827
  %988 = vst [vmem:[%s2 + $0x88] sm:$0xff] %v829
  %989 = vst [vmem:[%s2 + $0x90] sm:$0xff] %v832
  %990 = vst [vmem:[%s2 + $0x98] sm:$0xff] %v834
  %991 = vst [vmem:[%s2 + $0xa0] sm:$0xff] %v837
  %992 = vst [vmem:[%s2 + $0xa8] sm:$0xff] %v839
  %993 = vst [vmem:[%s2 + $0xb0] sm:$0xff] %v842
  %994 = vst [vmem:[%s2 + $0xb8] sm:$0xff] %v844
  %995 = vst [vmem:[%s2 + $0xc0] sm:$0xff] %v847
  %996 = vst [vmem:[%s2 + $0xc8] sm:$0xff] %v849
  %997 = vst [vmem:[%s2 + $0xd0] sm:$0xff] %v852
  %998 = vst [vmem:[%s2 + $0xd8] sm:$0xff] %v854
  %999 = vst [vmem:[%s2 + $0xe0] sm:$0xff] %v857
  %1000 = vst [vmem:[%s2 + $0xe8] sm:$0xff] %v859
  %1001 = vst [vmem:[%s2 + $0xf0] sm:$0xff] %v862
  %1002 = vst [vmem:[%s2 + $0xf8] sm:$0xff] %v864
  %1003 = vst [vmem:[%s2 + $0x100] sm:$0xff] %v867
  %1004 = vst [vmem:[%s2 + $0x108] sm:$0xff] %v869
  %1005 = vst [vmem:[%s2 + $0x110] sm:$0xff] %v872
  %1006 = vst [vmem:[%s2 + $0x118] sm:$0xff] %v874
  %1007 = vst [vmem:[%s2 + $0x120] sm:$0xff] %v877
  %1008 = vst [vmem:[%s2 + $0x128] sm:$0xff] %v879
  %1009 = vst [vmem:[%s2 + $0x130] sm:$0xff] %v882
  %1010 = vst [vmem:[%s2 + $0x138] sm:$0xff] %v884
  %1011 = vst [vmem:[%s2 + $0x140] sm:$0xff] %v887
  %1012 = vst [vmem:[%s2 + $0x148] sm:$0xff] %v889
  %1013 = vst [vmem:[%s2 + $0x150] sm:$0xff] %v892
  %1014 = vst [vmem:[%s2 + $0x158] sm:$0xff] %v894
  %1015 = vst [vmem:[%s2 + $0x160] sm:$0xff] %v897
  %1016 = vst [vmem:[%s2 + $0x168] sm:$0xff] %v899
  %1017 = vst [vmem:[%s2 + $0x170] sm:$0xff] %v902
  %1018 = vst [vmem:[%s2 + $0x178] sm:$0xff] %v904
  %1019 = vst [vmem:[%s2 + $0x180] sm:$0xff] %v907
  %1020 = vst [vmem:[%s2 + $0x188] sm:$0xff] %v909
  %1021 = vst [vmem:[%s2 + $0x190] sm:$0xff] %v912
  %1022 = vst [vmem:[%s2 + $0x198] sm:$0xff] %v914
  %1023 = vst [vmem:[%s2 + $0x1a0] sm:$0xff] %v917
  %1024 = vst [vmem:[%s2 + $0x1a8] sm:$0xff] %v919
  %1025 = vst [vmem:[%s2 + $0x1b0] sm:$0xff] %v922
  %1026 = vst [vmem:[%s2 + $0x1b8] sm:$0xff] %v924
  %1027 = vst [vmem:[%s2 + $0x1c0] sm:$0xff] %v927
  %1028 = vst [vmem:[%s2 + $0x1c8] sm:$0xff] %v929
  %1029 = vst [vmem:[%s2 + $0x1d0] sm:$0xff] %v932
  %1030 = vst [vmem:[%s2 + $0x1d8] sm:$0xff] %v934
  %1031 = vst [vmem:[%s2 + $0x1e0] sm:$0xff] %v937
  %1032 = vst [vmem:[%s2 + $0x1e8] sm:$0xff] %v939
  %1033 = vst [vmem:[%s2 + $0x1f0] sm:$0xff] %v942
  %1034 = vst [vmem:[%s2 + $0x1f8] sm:$0xff] %v944
  %1035 = vst [vmem:[%s2 + $0x200] sm:$0xff] %v947
  %1036 = vst [vmem:[%s2 + $0x208] sm:$0xff] %v949
  %1037 = vst [vmem:[%s2 + $0x210] sm:$0xff] %v952
  %1038 = vst [vmem:[%s2 + $0x218] sm:$0xff] %v954
  %1039 = vst [vmem:[%s2 + $0x220] sm:$0xff] %v957
  %1040 = vst [vmem:[%s2 + $0x228] sm:$0xff] %v959
  %1041 = vst [vmem:[%s2 + $0x230] sm:$0xff] %v962
  %1042 = vst [vmem:[%s2 + $0x238] sm:$0xff] %v964
  %1043 = vst [vmem:[%s2 + $0x240] sm:$0xff] %v967
  %1044 = vst [vmem:[%s2 + $0x248] sm:$0xff] %v969
  // Predicated region
  $region10: #{generator_forward.21} parent=0 // pred_check
    _
  $region11: #{generator_forward.21} parent=0 // pred_check_branch
    %1046 = sbr.rel (0) target = $region13
  $region12: #{generator_forward.21} parent=0 // pred_region
    _
  $region13: #{generator_forward.21} parent=0 // pred_fallthru
    _
  // Predicated region
  $region14: #{generator_forward.21} parent=0 // pred_check
    _
  $region15: #{generator_forward.21} parent=0 // pred_check_branch
    %1048 = sbr.rel (0) target = $region17
  $region16: #{generator_forward.21} parent=0 // pred_region
    _
  $region17: #{generator_forward.21} parent=0 // pred_fallthru
    _

// kernel: generator_forward.22
$region0: #{generator_forward.22}
  #allocation0 [shape = 'u32[]', space=smem, size = 0x4, offset = 0x4, fixed_abs, tag = 'smem constant byte address 0x4 - core index']
  #allocation1 [shape = 'u32[72,128]{1,0:T(1,128)}', space=vmem, size = 0x9000, scoped, tag = 'internal scratch']
  %s0 = inlined_call_operand.vmem [shape: f32[2048,1], index: 0, kind: input, shape index: {}]
  %s1 = inlined_call_operand.hbm [shape: f32[1,1], index: 1, kind: output, shape index: {0}]
  %s2 = inlined_call_operand.hbm [shape: f32[1,1], index: 2, kind: output, shape index: {1}]
  %3 = xla_tuple %s1, %s2
  %s4 = sld [smem:[#allocation0]]
  $region49: #{generator_forward.22} parent=0
    _
  %s6 = ssub.s32 1, %s4
  %s7 = scalar_select 0, %s6, %s4
  $region1: #{generator_forward.22} parent=0
    #allocation2 [shape = 'u8[512]{0}', space=vmem, size = 0x400, scoped, tag = 'output window, operand 0, single buffered']
    #allocation3 [shape = 's32[2]{0}', space=sflag, size = 0x8, scoped, tag = 'scoped memory for generator_forward.22']
    #allocation4 [shape = 'u8[512]{0}', space=vmem, size = 0x400, scoped, tag = 'output window, operand 1, single buffered']
    #allocation5 [shape = 's32[1]{0}', space=sflag, size = 0x4, scoped, tag = 'scoped memory for generator_forward.22']
    %8 = vsyncpa [#allocation3], 0
    %9 = vsyncpa [#allocation5], 0
    loop: start=0, step=1, limit=4
    $region2: #{generator_forward.22} parent=1 // loop_pre_header
      _
    $region3: #{generator_forward.22} parent=1 // loop_header
      %s11 = sphi 0, %s15
      %p12 = scmp.ge.s32.totalorder %s11, 4
      %s21 = sphi 0, %s23
      %s24 = sphi 0, %s21
      %s25 = sphi 0, %s24
      %s41 = sphi 0, %s25
      %s45 = sphi 0, %s45
      %s47 = sphi 0, %s45
      %s48 = sphi 0, %s47
      %s62 = sphi 0, %s48
      %s66 = sphi 0, %s66
      %s68 = sphi 0, %s66
      %s69 = sphi 0, %s68
      %s83 = sphi 0, %s69
    $region4: #{generator_forward.22} parent=1 // loop_header_branch
      %14 = sbr.rel (%p12) target = $region8
    $region5: #{generator_forward.22} parent=1 // loop_body
      %s16 = ssub.s32 %s11, 1
      %s17 = ssub.s32 %s11, 2
      %s18 = sadd.s32 %s11, 1
      %s19 = ssub.s32 %s11, %s18
      %p20 = scmp.eq.s32.totalorder %s19, 0
      %s22 = sadd.s32 %s21, 1
      %s23 = scalar_select %p20, %s21, %s22
      %p26 = pneg %p20
      %p27 = scmp.eq.s32.totalorder %s11, 1
      %p28 = por %p26, %p27
      %p29 = scmp.ne.s32.totalorder %s21, %s24
      %p30 = scmp.eq.s32.totalorder %s11, 0
      %p31 = por %p29, %p30
      %p32 = scmp.ne.s32.totalorder %s21, %s24
      %p33 = scmp.eq.s32.totalorder %s16, 1
      %p34 = por %p32, %p33
      %p35 = scmp.ne.s32.totalorder %s24, %s25
      %p36 = scmp.eq.s32.totalorder %s16, 0
      %p37 = por %p35, %p36
      %p38 = scmp.ne.s32.totalorder %s24, %s25
      %p39 = scmp.eq.s32.totalorder %s17, 1
      %p40 = por %p38, %p39
      %p42 = scmp.ne.s32.totalorder %s25, %s41
      %p43 = scmp.eq.s32.totalorder %s17, 0
      %p44 = por %p42, %p43
      %s46 = sadd.s32 %s45, 1
      %p49 = scmp.eq.s32.totalorder %s11, 1
      %p50 = scmp.ne.s32.totalorder %s45, %s47
      %p51 = scmp.eq.s32.totalorder %s11, 0
      %p52 = por %p50, %p51
      %p53 = scmp.ne.s32.totalorder %s45, %s47
      %p54 = scmp.eq.s32.totalorder %s16, 1
      %p55 = por %p53, %p54
      %p56 = scmp.ne.s32.totalorder %s47, %s48
      %p57 = scmp.eq.s32.totalorder %s16, 0
      %p58 = por %p56, %p57
      %p59 = scmp.ne.s32.totalorder %s47, %s48
      %p60 = scmp.eq.s32.totalorder %s17, 1
      %p61 = por %p59, %p60
      %p63 = scmp.ne.s32.totalorder %s48, %s62
      %p64 = scmp.eq.s32.totalorder %s17, 0
      %p65 = por %p63, %p64
      %s67 = sadd.s32 %s66, 1
      %p70 = scmp.eq.s32.totalorder %s11, 1
      %p71 = scmp.ne.s32.totalorder %s66, %s68
      %p72 = scmp.eq.s32.totalorder %s11, 0
      %p73 = por %p71, %p72
      %p74 = scmp.ne.s32.totalorder %s66, %s68
      %p75 = scmp.eq.s32.totalorder %s16, 1
      %p76 = por %p74, %p75
      %p77 = scmp.ne.s32.totalorder %s68, %s69
      %p78 = scmp.eq.s32.totalorder %s16, 0
      %p79 = por %p77, %p78
      %p80 = scmp.ne.s32.totalorder %s68, %s69
      %p81 = scmp.eq.s32.totalorder %s17, 1
      %p82 = por %p80, %p81
      %p84 = scmp.ne.s32.totalorder %s69, %s83
      %p85 = scmp.eq.s32.totalorder %s17, 0
      %p86 = por %p84, %p85
      %p87 = scmp.le.s32.totalorder 1, %s11
      %p88 = scmp.lt.s32.totalorder %s11, 3
      %p89 = pnand %p87, %p88
      %p90 = pneg %p89
      // Predicated region
      $region9: #{generator_forward.22} parent=5 // pred_check
        _
      $region10: #{generator_forward.22} parent=5 // pred_check_branch
        %92 = sbr.rel (%p89) target = $region12
      $region11: #{generator_forward.22} parent=5 // pred_region
        %s93 = ssub.s32 %s11, 1
      $region12: #{generator_forward.22} parent=5 // pred_fallthru
        _
      %p94 = scmp.lt.s32.totalorder %s11, 2
      // Predicated region
      $region13: #{generator_forward.22} parent=5 // pred_check
        %p95 = pneg %p94
      $region14: #{generator_forward.22} parent=5 // pred_check_branch
        %97 = sbr.rel (%p95) target = $region16
      $region15: #{generator_forward.22} parent=5 // pred_region
        // Predicated region
        $region17: #{generator_forward.22} parent=15 // pred_check
          %p98 = pneg %p31
        $region18: #{generator_forward.22} parent=15 // pred_check_branch
          %100 = sbr.rel (%p98) target = $region20
        $region19: #{generator_forward.22} parent=15 // pred_region
          %s101 = smul.u32 128, %s11
          %p102 = scmp.lt.s32.totalorder %s101, 255
          %s103 = scalar_select %p102, %s101, 255
          %s104 = smul.addr %s103, 8
          %s105 = scalar_lea.vmem %s0, %s104
          %s106 = smul.u32 128, %s11
        $region20: #{generator_forward.22} parent=15 // pred_fallthru
          _
      $region16: #{generator_forward.22} parent=5 // pred_fallthru
        _
      %p107 = scmp.le.s32.totalorder 1, %s11
      %p108 = scmp.lt.s32.totalorder %s11, 3
      %p109 = pnand %p107, %p108
      %p110 = pneg %p109
      // Predicated region
      $region21: #{generator_forward.22} parent=5 // pred_check
        _
      $region22: #{generator_forward.22} parent=5 // pred_check_branch
        %112 = sbr.rel (%p109) target = $region24
      $region23: #{generator_forward.22} parent=5 // pred_region
        %s113 = ssub.s32 %s11, 1
        %s114 = smul.u32 128, %s16
        %p115 = scmp.lt.s32.totalorder %s114, 255
        %s116 = scalar_select %p115, %s114, 255
        %s117 = smul.addr %s116, 8
        %s118 = scalar_lea.vmem %s0, %s117
        %p119 = pneg %p37
        %p120 = pneg %p34
        %p121 = pneg %p58
        %p122 = pneg %p55
        %p123 = pneg %p79
        %p124 = pneg %p76
        %s125 = smul.u32 128, %s16
        %p126 = scmp.lt.s32.totalorder %s125, 255
        %s127 = scalar_select %p126, %s125, 255
        %s128 = smul.addr %s127, 8
        %s129 = scalar_lea.vmem %s0, %s128
        %s130 = smul.u32 128, %s16
        %p131 = scmp.eq.s32.totalorder %s16, 0
        // Predicated region
        $region25: #{generator_forward.22} parent=23 // pred_check
          %p132 = pneg %p131
        $region26: #{generator_forward.22} parent=23 // pred_check_branch
          %134 = sbr.rel (%p132) target = $region28
        $region27: #{generator_forward.22} parent=23 // pred_region
          %vm135 = vcmask 0
          %136 = vst.msk [vmem:[#allocation2] sm:$0x1] %vm135, 0.0
          %137 = vst.msk [vmem:[#allocation4] sm:$0x1] %vm135, 0.0
        $region28: #{generator_forward.22} parent=23 // pred_fallthru
          _
        %v138 = vld [vmem:[%s129] sm:$0xff]
        %v139 = vld [vmem:[%s129 + $0x8] sm:$0xff]
        %v140 = vld [vmem:[%s129 + $0x10] sm:$0xff]
        %v141 = vld [vmem:[%s129 + $0x18] sm:$0xff]
        %v142 = vld [vmem:[%s129 + $0x20] sm:$0xff]
        %v143 = vld [vmem:[%s129 + $0x28] sm:$0xff]
        %v144 = vld [vmem:[%s129 + $0x30] sm:$0xff]
        %v145 = vld [vmem:[%s129 + $0x38] sm:$0xff]
        %v146 = vld [vmem:[%s129 + $0x40] sm:$0xff]
        %v147 = vld [vmem:[%s129 + $0x48] sm:$0xff]
        %v148 = vld [vmem:[%s129 + $0x50] sm:$0xff]
        %v149 = vld [vmem:[%s129 + $0x58] sm:$0xff]
        %v150 = vld [vmem:[%s129 + $0x60] sm:$0xff]
        %v151 = vld [vmem:[%s129 + $0x68] sm:$0xff]
        %v152 = vld [vmem:[%s129 + $0x70] sm:$0xff]
        %v153 = vld [vmem:[%s129 + $0x78] sm:$0xff]
        %v154 = vld [vmem:[%s129 + $0x80] sm:$0xff]
        %v155 = vld [vmem:[%s129 + $0x88] sm:$0xff]
        %v156 = vld [vmem:[%s129 + $0x90] sm:$0xff]
        %v157 = vld [vmem:[%s129 + $0x98] sm:$0xff]
        %v158 = vld [vmem:[%s129 + $0xa0] sm:$0xff]
        %v159 = vld [vmem:[%s129 + $0xa8] sm:$0xff]
        %v160 = vld [vmem:[%s129 + $0xb0] sm:$0xff]
        %v161 = vld [vmem:[%s129 + $0xb8] sm:$0xff]
        %v162 = vld [vmem:[%s129 + $0xc0] sm:$0xff]
        %v163 = vld [vmem:[%s129 + $0xc8] sm:$0xff]
        %v164 = vld [vmem:[%s129 + $0xd0] sm:$0xff]
        %v165 = vld [vmem:[%s129 + $0xd8] sm:$0xff]
        %v166 = vld [vmem:[%s129 + $0xe0] sm:$0xff]
        %v167 = vld [vmem:[%s129 + $0xe8] sm:$0xff]
        %v168 = vld [vmem:[%s129 + $0xf0] sm:$0xff]
        %v169 = vld [vmem:[%s129 + $0xf8] sm:$0xff]
        %v170 = vld [vmem:[%s129 + $0x100] sm:$0xff]
        %v171 = vld [vmem:[%s129 + $0x108] sm:$0xff]
        %v172 = vld [vmem:[%s129 + $0x110] sm:$0xff]
        %v173 = vld [vmem:[%s129 + $0x118] sm:$0xff]
        %v174 = vld [vmem:[%s129 + $0x120] sm:$0xff]
        %v175 = vld [vmem:[%s129 + $0x128] sm:$0xff]
        %v176 = vld [vmem:[%s129 + $0x130] sm:$0xff]
        %v177 = vld [vmem:[%s129 + $0x138] sm:$0xff]
        %v178 = vld [vmem:[%s129 + $0x140] sm:$0xff]
        %v179 = vld [vmem:[%s129 + $0x148] sm:$0xff]
        %v180 = vld [vmem:[%s129 + $0x150] sm:$0xff]
        %v181 = vld [vmem:[%s129 + $0x158] sm:$0xff]
        %v182 = vld [vmem:[%s129 + $0x160] sm:$0xff]
        %v183 = vld [vmem:[%s129 + $0x168] sm:$0xff]
        %v184 = vld [vmem:[%s129 + $0x170] sm:$0xff]
        %v185 = vld [vmem:[%s129 + $0x178] sm:$0xff]
        %v186 = vld [vmem:[%s129 + $0x180] sm:$0xff]
        %v187 = vld [vmem:[%s129 + $0x188] sm:$0xff]
        %v188 = vld [vmem:[%s129 + $0x190] sm:$0xff]
        %v189 = vld [vmem:[%s129 + $0x198] sm:$0xff]
        %v190 = vld [vmem:[%s129 + $0x1a0] sm:$0xff]
        %v191 = vld [vmem:[%s129 + $0x1a8] sm:$0xff]
        %v192 = vld [vmem:[%s129 + $0x1b0] sm:$0xff]
        %v193 = vld [vmem:[%s129 + $0x1b8] sm:$0xff]
        %v194 = vld [vmem:[%s129 + $0x1c0] sm:$0xff]
        %v195 = vld [vmem:[%s129 + $0x1c8] sm:$0xff]
        %v196 = vld [vmem:[%s129 + $0x1d0] sm:$0xff]
        %v197 = vld [vmem:[%s129 + $0x1d8] sm:$0xff]
        %v198 = vld [vmem:[%s129 + $0x1e0] sm:$0xff]
        %v199 = vld [vmem:[%s129 + $0x1e8] sm:$0xff]
        %v200 = vld [vmem:[%s129 + $0x1f0] sm:$0xff]
        %v201 = vld [vmem:[%s129 + $0x1f8] sm:$0xff]
        %v202 = vld [vmem:[%s129 + $0x200] sm:$0xff]
        %v203 = vld [vmem:[%s129 + $0x208] sm:$0xff]
        %v204 = vld [vmem:[%s129 + $0x210] sm:$0xff]
        %v205 = vld [vmem:[%s129 + $0x218] sm:$0xff]
        %v206 = vld [vmem:[%s129 + $0x220] sm:$0xff]
        %v207 = vld [vmem:[%s129 + $0x228] sm:$0xff]
        %v208 = vld [vmem:[%s129 + $0x230] sm:$0xff]
        %v209 = vld [vmem:[%s129 + $0x238] sm:$0xff]
        %v210 = vld [vmem:[%s129 + $0x240] sm:$0xff]
        %v211 = vld [vmem:[%s129 + $0x248] sm:$0xff]
        %v212 = vld [vmem:[%s129 + $0x250] sm:$0xff]
        %v213 = vld [vmem:[%s129 + $0x258] sm:$0xff]
        %v214 = vld [vmem:[%s129 + $0x260] sm:$0xff]
        %v215 = vld [vmem:[%s129 + $0x268] sm:$0xff]
        %v216 = vld [vmem:[%s129 + $0x270] sm:$0xff]
        %v217 = vld [vmem:[%s129 + $0x278] sm:$0xff]
        %v218 = vld [vmem:[%s129 + $0x280] sm:$0xff]
        %v219 = vld [vmem:[%s129 + $0x288] sm:$0xff]
        %v220 = vld [vmem:[%s129 + $0x290] sm:$0xff]
        %v221 = vld [vmem:[%s129 + $0x298] sm:$0xff]
        %v222 = vld [vmem:[%s129 + $0x2a0] sm:$0xff]
        %v223 = vld [vmem:[%s129 + $0x2a8] sm:$0xff]
        %v224 = vld [vmem:[%s129 + $0x2b0] sm:$0xff]
        %v225 = vld [vmem:[%s129 + $0x2b8] sm:$0xff]
        %v226 = vld [vmem:[%s129 + $0x2c0] sm:$0xff]
        %v227 = vld [vmem:[%s129 + $0x2c8] sm:$0xff]
        %v228 = vld [vmem:[%s129 + $0x2d0] sm:$0xff]
        %v229 = vld [vmem:[%s129 + $0x2d8] sm:$0xff]
        %v230 = vld [vmem:[%s129 + $0x2e0] sm:$0xff]
        %v231 = vld [vmem:[%s129 + $0x2e8] sm:$0xff]
        %v232 = vld [vmem:[%s129 + $0x2f0] sm:$0xff]
        %v233 = vld [vmem:[%s129 + $0x2f8] sm:$0xff]
        %v234 = vld [vmem:[%s129 + $0x300] sm:$0xff]
        %v235 = vld [vmem:[%s129 + $0x308] sm:$0xff]
        %v236 = vld [vmem:[%s129 + $0x310] sm:$0xff]
        %v237 = vld [vmem:[%s129 + $0x318] sm:$0xff]
        %v238 = vld [vmem:[%s129 + $0x320] sm:$0xff]
        %v239 = vld [vmem:[%s129 + $0x328] sm:$0xff]
        %v240 = vld [vmem:[%s129 + $0x330] sm:$0xff]
        %v241 = vld [vmem:[%s129 + $0x338] sm:$0xff]
        %v242 = vld [vmem:[%s129 + $0x340] sm:$0xff]
        %v243 = vld [vmem:[%s129 + $0x348] sm:$0xff]
        %v244 = vld [vmem:[%s129 + $0x350] sm:$0xff]
        %v245 = vld [vmem:[%s129 + $0x358] sm:$0xff]
        %v246 = vld [vmem:[%s129 + $0x360] sm:$0xff]
        %v247 = vld [vmem:[%s129 + $0x368] sm:$0xff]
        %v248 = vld [vmem:[%s129 + $0x370] sm:$0xff]
        %v249 = vld [vmem:[%s129 + $0x378] sm:$0xff]
        %v250 = vld [vmem:[%s129 + $0x380] sm:$0xff]
        %v251 = vld [vmem:[%s129 + $0x388] sm:$0xff]
        %v252 = vld [vmem:[%s129 + $0x390] sm:$0xff]
        %v253 = vld [vmem:[%s129 + $0x398] sm:$0xff]
        %v254 = vld [vmem:[%s129 + $0x3a0] sm:$0xff]
        %v255 = vld [vmem:[%s129 + $0x3a8] sm:$0xff]
        %v256 = vld [vmem:[%s129 + $0x3b0] sm:$0xff]
        %v257 = vld [vmem:[%s129 + $0x3b8] sm:$0xff]
        %v258 = vld [vmem:[%s129 + $0x3c0] sm:$0xff]
        %v259 = vld [vmem:[%s129 + $0x3c8] sm:$0xff]
        %v260 = vld [vmem:[%s129 + $0x3d0] sm:$0xff]
        %v261 = vld [vmem:[%s129 + $0x3d8] sm:$0xff]
        %v262 = vld [vmem:[%s129 + $0x3e0] sm:$0xff]
        %v263 = vld [vmem:[%s129 + $0x3e8] sm:$0xff]
        %v264 = vld [vmem:[%s129 + $0x3f0] sm:$0xff]
        %v265 = vld [vmem:[%s129 + $0x3f8] sm:$0xff]
        %v266 = vld [vmem:[#allocation2] sm:$0x1]
        %vm267 = vcmask 7168
        %v268 = vsel %vm267, %v138, 0.0
        %v269 = vsel %vm267, %v139, 0.0
        %v270 = vadd.f32 %v268, %v269
        %v271 = vsel %vm267, %v140, 0.0
        %v272 = vadd.f32 %v270, %v271
        %v273 = vsel %vm267, %v141, 0.0
        %v274 = vadd.f32 %v272, %v273
        %v275 = vsel %vm267, %v142, 0.0
        %v276 = vadd.f32 %v274, %v275
        %v277 = vsel %vm267, %v143, 0.0
        %v278 = vadd.f32 %v276, %v277
        %v279 = vsel %vm267, %v144, 0.0
        %v280 = vadd.f32 %v278, %v279
        %v281 = vsel %vm267, %v145, 0.0
        %v282 = vadd.f32 %v280, %v281
        %v283 = vsel %vm267, %v146, 0.0
        %v284 = vadd.f32 %v282, %v283
        %v285 = vsel %vm267, %v147, 0.0
        %v286 = vadd.f32 %v284, %v285
        %v287 = vsel %vm267, %v148, 0.0
        %v288 = vadd.f32 %v286, %v287
        %v289 = vsel %vm267, %v149, 0.0
        %v290 = vadd.f32 %v288, %v289
        %v291 = vsel %vm267, %v150, 0.0
        %v292 = vadd.f32 %v290, %v291
        %v293 = vsel %vm267, %v151, 0.0
        %v294 = vadd.f32 %v292, %v293
        %v295 = vsel %vm267, %v152, 0.0
        %v296 = vadd.f32 %v294, %v295
        %v297 = vsel %vm267, %v153, 0.0
        %v298 = vadd.f32 %v296, %v297
        %v299 = vsel %vm267, %v154, 0.0
        %v300 = vadd.f32 %v298, %v299
        %v301 = vsel %vm267, %v155, 0.0
        %v302 = vadd.f32 %v300, %v301
        %v303 = vsel %vm267, %v156, 0.0
        %v304 = vadd.f32 %v302, %v303
        %v305 = vsel %vm267, %v157, 0.0
        %v306 = vadd.f32 %v304, %v305
        %v307 = vsel %vm267, %v158, 0.0
        %v308 = vadd.f32 %v306, %v307
        %v309 = vsel %vm267, %v159, 0.0
        %v310 = vadd.f32 %v308, %v309
        %v311 = vsel %vm267, %v160, 0.0
        %v312 = vadd.f32 %v310, %v311
        %v313 = vsel %vm267, %v161, 0.0
        %v314 = vadd.f32 %v312, %v313
        %v315 = vsel %vm267, %v162, 0.0
        %v316 = vadd.f32 %v314, %v315
        %v317 = vsel %vm267, %v163, 0.0
        %v318 = vadd.f32 %v316, %v317
        %v319 = vsel %vm267, %v164, 0.0
        %v320 = vadd.f32 %v318, %v319
        %v321 = vsel %vm267, %v165, 0.0
        %v322 = vadd.f32 %v320, %v321
        %v323 = vsel %vm267, %v166, 0.0
        %v324 = vadd.f32 %v322, %v323
        %v325 = vsel %vm267, %v167, 0.0
        %v326 = vadd.f32 %v324, %v325
        %v327 = vsel %vm267, %v168, 0.0
        %v328 = vadd.f32 %v326, %v327
        %v329 = vsel %vm267, %v169, 0.0
        %v330 = vadd.f32 %v328, %v329
        %v331 = vsel %vm267, %v170, 0.0
        %v332 = vadd.f32 %v330, %v331
        %v333 = vsel %vm267, %v171, 0.0
        %v334 = vadd.f32 %v332, %v333
        %v335 = vsel %vm267, %v172, 0.0
        %v336 = vadd.f32 %v334, %v335
        %v337 = vsel %vm267, %v173, 0.0
        %v338 = vadd.f32 %v336, %v337
        %v339 = vsel %vm267, %v174, 0.0
        %v340 = vadd.f32 %v338, %v339
        %v341 = vsel %vm267, %v175, 0.0
        %v342 = vadd.f32 %v340, %v341
        %v343 = vsel %vm267, %v176, 0.0
        %v344 = vadd.f32 %v342, %v343
        %v345 = vsel %vm267, %v177, 0.0
        %v346 = vadd.f32 %v344, %v345
        %v347 = vsel %vm267, %v178, 0.0
        %v348 = vadd.f32 %v346, %v347
        %v349 = vsel %vm267, %v179, 0.0
        %v350 = vadd.f32 %v348, %v349
        %v351 = vsel %vm267, %v180, 0.0
        %v352 = vadd.f32 %v350, %v351
        %v353 = vsel %vm267, %v181, 0.0
        %v354 = vadd.f32 %v352, %v353
        %v355 = vsel %vm267, %v182, 0.0
        %v356 = vadd.f32 %v354, %v355
        %v357 = vsel %vm267, %v183, 0.0
        %v358 = vadd.f32 %v356, %v357
        %v359 = vsel %vm267, %v184, 0.0
        %v360 = vadd.f32 %v358, %v359
        %v361 = vsel %vm267, %v185, 0.0
        %v362 = vadd.f32 %v360, %v361
        %v363 = vsel %vm267, %v186, 0.0
        %v364 = vadd.f32 %v362, %v363
        %v365 = vsel %vm267, %v187, 0.0
        %v366 = vadd.f32 %v364, %v365
        %v367 = vsel %vm267, %v188, 0.0
        %v368 = vadd.f32 %v366, %v367
        %v369 = vsel %vm267, %v189, 0.0
        %v370 = vadd.f32 %v368, %v369
        %v371 = vsel %vm267, %v190, 0.0
        %v372 = vadd.f32 %v370, %v371
        %v373 = vsel %vm267, %v191, 0.0
        %v374 = vadd.f32 %v372, %v373
        %v375 = vsel %vm267, %v192, 0.0
        %v376 = vadd.f32 %v374, %v375
        %v377 = vsel %vm267, %v193, 0.0
        %v378 = vadd.f32 %v376, %v377
        %v379 = vsel %vm267, %v194, 0.0
        %v380 = vadd.f32 %v378, %v379
        %v381 = vsel %vm267, %v195, 0.0
        %v382 = vadd.f32 %v380, %v381
        %v383 = vsel %vm267, %v196, 0.0
        %v384 = vadd.f32 %v382, %v383
        %v385 = vsel %vm267, %v197, 0.0
        %v386 = vadd.f32 %v384, %v385
        %v387 = vsel %vm267, %v198, 0.0
        %v388 = vadd.f32 %v386, %v387
        %v389 = vsel %vm267, %v199, 0.0
        %v390 = vadd.f32 %v388, %v389
        %v391 = vsel %vm267, %v200, 0.0
        %v392 = vadd.f32 %v390, %v391
        %v393 = vsel %vm267, %v201, 0.0
        %v394 = vadd.f32 %v392, %v393
        %v395 = vsel %vm267, %v202, 0.0
        %v396 = vadd.f32 %v394, %v395
        %v397 = vsel %vm267, %v203, 0.0
        %v398 = vadd.f32 %v396, %v397
        %v399 = vsel %vm267, %v204, 0.0
        %v400 = vadd.f32 %v398, %v399
        %v401 = vsel %vm267, %v205, 0.0
        %v402 = vadd.f32 %v400, %v401
        %v403 = vsel %vm267, %v206, 0.0
        %v404 = vadd.f32 %v402, %v403
        %v405 = vsel %vm267, %v207, 0.0
        %v406 = vadd.f32 %v404, %v405
        %v407 = vsel %vm267, %v208, 0.0
        %v408 = vadd.f32 %v406, %v407
        %v409 = vsel %vm267, %v209, 0.0
        %v410 = vadd.f32 %v408, %v409
        %v411 = vsel %vm267, %v210, 0.0
        %v412 = vadd.f32 %v410, %v411
        %v413 = vsel %vm267, %v211, 0.0
        %v414 = vadd.f32 %v412, %v413
        %v415 = vsel %vm267, %v212, 0.0
        %v416 = vadd.f32 %v414, %v415
        %v417 = vsel %vm267, %v213, 0.0
        %v418 = vadd.f32 %v416, %v417
        %v419 = vsel %vm267, %v214, 0.0
        %v420 = vadd.f32 %v418, %v419
        %v421 = vsel %vm267, %v215, 0.0
        %v422 = vadd.f32 %v420, %v421
        %v423 = vsel %vm267, %v216, 0.0
        %v424 = vadd.f32 %v422, %v423
        %v425 = vsel %vm267, %v217, 0.0
        %v426 = vadd.f32 %v424, %v425
        %v427 = vsel %vm267, %v218, 0.0
        %v428 = vadd.f32 %v426, %v427
        %v429 = vsel %vm267, %v219, 0.0
        %v430 = vadd.f32 %v428, %v429
        %v431 = vsel %vm267, %v220, 0.0
        %v432 = vadd.f32 %v430, %v431
        %v433 = vsel %vm267, %v221, 0.0
        %v434 = vadd.f32 %v432, %v433
        %v435 = vsel %vm267, %v222, 0.0
        %v436 = vadd.f32 %v434, %v435
        %v437 = vsel %vm267, %v223, 0.0
        %v438 = vadd.f32 %v436, %v437
        %v439 = vsel %vm267, %v224, 0.0
        %v440 = vadd.f32 %v438, %v439
        %v441 = vsel %vm267, %v225, 0.0
        %v442 = vadd.f32 %v440, %v441
        %v443 = vsel %vm267, %v226, 0.0
        %v444 = vadd.f32 %v442, %v443
        %v445 = vsel %vm267, %v227, 0.0
        %v446 = vadd.f32 %v444, %v445
        %v447 = vsel %vm267, %v228, 0.0
        %v448 = vadd.f32 %v446, %v447
        %v449 = vsel %vm267, %v229, 0.0
        %v450 = vadd.f32 %v448, %v449
        %v451 = vsel %vm267, %v230, 0.0
        %v452 = vadd.f32 %v450, %v451
        %v453 = vsel %vm267, %v231, 0.0
        %v454 = vadd.f32 %v452, %v453
        %v455 = vsel %vm267, %v232, 0.0
        %v456 = vadd.f32 %v454, %v455
        %v457 = vsel %vm267, %v233, 0.0
        %v458 = vadd.f32 %v456, %v457
        %v459 = vsel %vm267, %v234, 0.0
        %v460 = vadd.f32 %v458, %v459
        %v461 = vsel %vm267, %v235, 0.0
        %v462 = vadd.f32 %v460, %v461
        %v463 = vsel %vm267, %v236, 0.0
        %v464 = vadd.f32 %v462, %v463
        %v465 = vsel %vm267, %v237, 0.0
        %v466 = vadd.f32 %v464, %v465
        %v467 = vsel %vm267, %v238, 0.0
        %v468 = vadd.f32 %v466, %v467
        %v469 = vsel %vm267, %v239, 0.0
        %v470 = vadd.f32 %v468, %v469
        %v471 = vsel %vm267, %v240, 0.0
        %v472 = vadd.f32 %v470, %v471
        %v473 = vsel %vm267, %v241, 0.0
        %v474 = vadd.f32 %v472, %v473
        %v475 = vsel %vm267, %v242, 0.0
        %v476 = vadd.f32 %v474, %v475
        %v477 = vsel %vm267, %v243, 0.0
        %v478 = vadd.f32 %v476, %v477
        %v479 = vsel %vm267, %v244, 0.0
        %v480 = vadd.f32 %v478, %v479
        %v481 = vsel %vm267, %v245, 0.0
        %v482 = vadd.f32 %v480, %v481
        %v483 = vsel %vm267, %v246, 0.0
        %v484 = vadd.f32 %v482, %v483
        %v485 = vsel %vm267, %v247, 0.0
        %v486 = vadd.f32 %v484, %v485
        %v487 = vsel %vm267, %v248, 0.0
        %v488 = vadd.f32 %v486, %v487
        %v489 = vsel %vm267, %v249, 0.0
        %v490 = vadd.f32 %v488, %v489
        %v491 = vsel %vm267, %v250, 0.0
        %v492 = vadd.f32 %v490, %v491
        %v493 = vsel %vm267, %v251, 0.0
        %v494 = vadd.f32 %v492, %v493
        %v495 = vsel %vm267, %v252, 0.0
        %v496 = vadd.f32 %v494, %v495
        %v497 = vsel %vm267, %v253, 0.0
        %v498 = vadd.f32 %v496, %v497
        %v499 = vsel %vm267, %v254, 0.0
        %v500 = vadd.f32 %v498, %v499
        %v501 = vsel %vm267, %v255, 0.0
        %v502 = vadd.f32 %v500, %v501
        %v503 = vsel %vm267, %v256, 0.0
        %v504 = vadd.f32 %v502, %v503
        %v505 = vsel %vm267, %v257, 0.0
        %v506 = vadd.f32 %v504, %v505
        %v507 = vsel %vm267, %v258, 0.0
        %v508 = vadd.f32 %v506, %v507
        %v509 = vsel %vm267, %v259, 0.0
        %v510 = vadd.f32 %v508, %v509
        %v511 = vsel %vm267, %v260, 0.0
        %v512 = vadd.f32 %v510, %v511
        %v513 = vsel %vm267, %v261, 0.0
        %v514 = vadd.f32 %v512, %v513
        %v515 = vsel %vm267, %v262, 0.0
        %v516 = vadd.f32 %v514, %v515
        %v517 = vsel %vm267, %v263, 0.0
        %v518 = vadd.f32 %v516, %v517
        %v519 = vsel %vm267, %v264, 0.0
        %v520 = vadd.f32 %v518, %v519
        %v521 = vsel %vm267, %v265, 0.0
        %v522 = vadd.f32 %v520, %v521
        %v523 = vrot.slane %v522, 4
        %v524 = vadd.f32 %v522, %v523
        %v525 = vrot.slane %v524, 2
        %v526 = vadd.f32 %v524, %v525
        %v527 = vrot.slane %v526, 1
        %v528 = vadd.f32 %v526, %v527
        %v529 = vadd.f32 %v266, %v528
        %vm530 = vcmask 0
        %531 = vst.msk [vmem:[#allocation2] sm:$0x1] %vm530, %v529
        %v532 = vld [vmem:[#allocation4] sm:$0x1]
        %v533 = vmul.f32 %v138, %v138
        %v534 = vmul.f32 %v139, %v139
        %v535 = vmul.f32 %v140, %v140
        %v536 = vmul.f32 %v141, %v141
        %v537 = vmul.f32 %v142, %v142
        %v538 = vmul.f32 %v143, %v143
        %v539 = vmul.f32 %v144, %v144
        %v540 = vmul.f32 %v145, %v145
        %v541 = vmul.f32 %v146, %v146
        %v542 = vmul.f32 %v147, %v147
        %v543 = vmul.f32 %v148, %v148
        %v544 = vmul.f32 %v149, %v149
        %v545 = vmul.f32 %v150, %v150
        %v546 = vmul.f32 %v151, %v151
        %v547 = vmul.f32 %v152, %v152
        %v548 = vmul.f32 %v153, %v153
        %v549 = vmul.f32 %v154, %v154
        %v550 = vmul.f32 %v155, %v155
        %v551 = vmul.f32 %v156, %v156
        %v552 = vmul.f32 %v157, %v157
        %v553 = vmul.f32 %v158, %v158
        %v554 = vmul.f32 %v159, %v159
        %v555 = vmul.f32 %v160, %v160
        %v556 = vmul.f32 %v161, %v161
        %v557 = vmul.f32 %v162, %v162
        %v558 = vmul.f32 %v163, %v163
        %v559 = vmul.f32 %v164, %v164
        %v560 = vmul.f32 %v165, %v165
        %v561 = vmul.f32 %v166, %v166
        %v562 = vmul.f32 %v167, %v167
        %v563 = vmul.f32 %v168, %v168
        %v564 = vmul.f32 %v169, %v169
        %v565 = vmul.f32 %v170, %v170
        %v566 = vmul.f32 %v171, %v171
        %v567 = vmul.f32 %v172, %v172
        %v568 = vmul.f32 %v173, %v173
        %v569 = vmul.f32 %v174, %v174
        %v570 = vmul.f32 %v175, %v175
        %v571 = vmul.f32 %v176, %v176
        %v572 = vmul.f32 %v177, %v177
        %v573 = vmul.f32 %v178, %v178
        %v574 = vmul.f32 %v179, %v179
        %v575 = vmul.f32 %v180, %v180
        %v576 = vmul.f32 %v181, %v181
        %v577 = vmul.f32 %v182, %v182
        %v578 = vmul.f32 %v183, %v183
        %v579 = vmul.f32 %v184, %v184
        %v580 = vmul.f32 %v185, %v185
        %v581 = vmul.f32 %v186, %v186
        %v582 = vmul.f32 %v187, %v187
        %v583 = vmul.f32 %v188, %v188
        %v584 = vmul.f32 %v189, %v189
        %v585 = vmul.f32 %v190, %v190
        %v586 = vmul.f32 %v191, %v191
        %v587 = vmul.f32 %v192, %v192
        %v588 = vmul.f32 %v193, %v193
        %v589 = vmul.f32 %v194, %v194
        %v590 = vmul.f32 %v195, %v195
        %v591 = vmul.f32 %v196, %v196
        %v592 = vmul.f32 %v197, %v197
        %v593 = vmul.f32 %v198, %v198
        %v594 = vmul.f32 %v199, %v199
        %v595 = vmul.f32 %v200, %v200
        %v596 = vmul.f32 %v201, %v201
        %v597 = vmul.f32 %v202, %v202
        %v598 = vmul.f32 %v203, %v203
        %v599 = vmul.f32 %v204, %v204
        %v600 = vmul.f32 %v205, %v205
        %v601 = vmul.f32 %v206, %v206
        %v602 = vmul.f32 %v207, %v207
        %v603 = vmul.f32 %v208, %v208
        %v604 = vmul.f32 %v209, %v209
        %v605 = vmul.f32 %v210, %v210
        %v606 = vmul.f32 %v211, %v211
        %v607 = vmul.f32 %v212, %v212
        %v608 = vmul.f32 %v213, %v213
        %v609 = vmul.f32 %v214, %v214
        %v610 = vmul.f32 %v215, %v215
        %v611 = vmul.f32 %v216, %v216
        %v612 = vmul.f32 %v217, %v217
        %v613 = vmul.f32 %v218, %v218
        %v614 = vmul.f32 %v219, %v219
        %v615 = vmul.f32 %v220, %v220
        %v616 = vmul.f32 %v221, %v221
        %v617 = vmul.f32 %v222, %v222
        %v618 = vmul.f32 %v223, %v223
        %v619 = vmul.f32 %v224, %v224
        %v620 = vmul.f32 %v225, %v225
        %v621 = vmul.f32 %v226, %v226
        %v622 = vmul.f32 %v227, %v227
        %v623 = vmul.f32 %v228, %v228
        %v624 = vmul.f32 %v229, %v229
        %v625 = vmul.f32 %v230, %v230
        %v626 = vmul.f32 %v231, %v231
        %v627 = vmul.f32 %v232, %v232
        %v628 = vmul.f32 %v233, %v233
        %v629 = vmul.f32 %v234, %v234
        %v630 = vmul.f32 %v235, %v235
        %v631 = vmul.f32 %v236, %v236
        %v632 = vmul.f32 %v237, %v237
        %v633 = vmul.f32 %v238, %v238
        %v634 = vmul.f32 %v239, %v239
        %v635 = vmul.f32 %v240, %v240
        %v636 = vmul.f32 %v241, %v241
        %v637 = vmul.f32 %v242, %v242
        %v638 = vmul.f32 %v243, %v243
        %v639 = vmul.f32 %v244, %v244
        %v640 = vmul.f32 %v245, %v245
        %v641 = vmul.f32 %v246, %v246
        %v642 = vmul.f32 %v247, %v247
        %v643 = vmul.f32 %v248, %v248
        %v644 = vmul.f32 %v249, %v249
        %v645 = vmul.f32 %v250, %v250
        %v646 = vmul.f32 %v251, %v251
        %v647 = vmul.f32 %v252, %v252
        %v648 = vmul.f32 %v253, %v253
        %v649 = vmul.f32 %v254, %v254
        %v650 = vmul.f32 %v255, %v255
        %v651 = vmul.f32 %v256, %v256
        %v652 = vmul.f32 %v257, %v257
        %v653 = vmul.f32 %v258, %v258
        %v654 = vmul.f32 %v259, %v259
        %v655 = vmul.f32 %v260, %v260
        %v656 = vmul.f32 %v261, %v261
        %v657 = vmul.f32 %v262, %v262
        %v658 = vmul.f32 %v263, %v263
        %v659 = vmul.f32 %v264, %v264
        %v660 = vmul.f32 %v265, %v265
        %v661 = vsel %vm267, %v533, 0.0
        %v662 = vsel %vm267, %v534, 0.0
        %v663 = vadd.f32 %v661, %v662
        %v664 = vsel %vm267, %v535, 0.0
        %v665 = vadd.f32 %v663, %v664
        %v666 = vsel %vm267, %v536, 0.0
        %v667 = vadd.f32 %v665, %v666
        %v668 = vsel %vm267, %v537, 0.0
        %v669 = vadd.f32 %v667, %v668
        %v670 = vsel %vm267, %v538, 0.0
        %v671 = vadd.f32 %v669, %v670
        %v672 = vsel %vm267, %v539, 0.0
        %v673 = vadd.f32 %v671, %v672
        %v674 = vsel %vm267, %v540, 0.0
        %v675 = vadd.f32 %v673, %v674
        %v676 = vsel %vm267, %v541, 0.0
        %v677 = vadd.f32 %v675, %v676
        %v678 = vsel %vm267, %v542, 0.0
        %v679 = vadd.f32 %v677, %v678
        %v680 = vsel %vm267, %v543, 0.0
        %v681 = vadd.f32 %v679, %v680
        %v682 = vsel %vm267, %v544, 0.0
        %v683 = vadd.f32 %v681, %v682
        %v684 = vsel %vm267, %v545, 0.0
        %v685 = vadd.f32 %v683, %v684
        %v686 = vsel %vm267, %v546, 0.0
        %v687 = vadd.f32 %v685, %v686
        %v688 = vsel %vm267, %v547, 0.0
        %v689 = vadd.f32 %v687, %v688
        %v690 = vsel %vm267, %v548, 0.0
        %v691 = vadd.f32 %v689, %v690
        %v692 = vsel %vm267, %v549, 0.0
        %v693 = vadd.f32 %v691, %v692
        %v694 = vsel %vm267, %v550, 0.0
        %v695 = vadd.f32 %v693, %v694
        %v696 = vsel %vm267, %v551, 0.0
        %v697 = vadd.f32 %v695, %v696
        %v698 = vsel %vm267, %v552, 0.0
        %v699 = vadd.f32 %v697, %v698
        %v700 = vsel %vm267, %v553, 0.0
        %v701 = vadd.f32 %v699, %v700
        %v702 = vsel %vm267, %v554, 0.0
        %v703 = vadd.f32 %v701, %v702
        %v704 = vsel %vm267, %v555, 0.0
        %v705 = vadd.f32 %v703, %v704
        %v706 = vsel %vm267, %v556, 0.0
        %v707 = vadd.f32 %v705, %v706
        %v708 = vsel %vm267, %v557, 0.0
        %v709 = vadd.f32 %v707, %v708
        %v710 = vsel %vm267, %v558, 0.0
        %v711 = vadd.f32 %v709, %v710
        %v712 = vsel %vm267, %v559, 0.0
        %v713 = vadd.f32 %v711, %v712
        %v714 = vsel %vm267, %v560, 0.0
        %v715 = vadd.f32 %v713, %v714
        %v716 = vsel %vm267, %v561, 0.0
        %v717 = vadd.f32 %v715, %v716
        %v718 = vsel %vm267, %v562, 0.0
        %v719 = vadd.f32 %v717, %v718
        %v720 = vsel %vm267, %v563, 0.0
        %v721 = vadd.f32 %v719, %v720
        %v722 = vsel %vm267, %v564, 0.0
        %v723 = vadd.f32 %v721, %v722
        %v724 = vsel %vm267, %v565, 0.0
        %v725 = vadd.f32 %v723, %v724
        %v726 = vsel %vm267, %v566, 0.0
        %v727 = vadd.f32 %v725, %v726
        %v728 = vsel %vm267, %v567, 0.0
        %v729 = vadd.f32 %v727, %v728
        %v730 = vsel %vm267, %v568, 0.0
        %v731 = vadd.f32 %v729, %v730
        %v732 = vsel %vm267, %v569, 0.0
        %v733 = vadd.f32 %v731, %v732
        %v734 = vsel %vm267, %v570, 0.0
        %v735 = vadd.f32 %v733, %v734
        %v736 = vsel %vm267, %v571, 0.0
        %v737 = vadd.f32 %v735, %v736
        %v738 = vsel %vm267, %v572, 0.0
        %v739 = vadd.f32 %v737, %v738
        %v740 = vsel %vm267, %v573, 0.0
        %v741 = vadd.f32 %v739, %v740
        %v742 = vsel %vm267, %v574, 0.0
        %v743 = vadd.f32 %v741, %v742
        %v744 = vsel %vm267, %v575, 0.0
        %v745 = vadd.f32 %v743, %v744
        %v746 = vsel %vm267, %v576, 0.0
        %v747 = vadd.f32 %v745, %v746
        %v748 = vsel %vm267, %v577, 0.0
        %v749 = vadd.f32 %v747, %v748
        %v750 = vsel %vm267, %v578, 0.0
        %v751 = vadd.f32 %v749, %v750
        %v752 = vsel %vm267, %v579, 0.0
        %v753 = vadd.f32 %v751, %v752
        %v754 = vsel %vm267, %v580, 0.0
        %v755 = vadd.f32 %v753, %v754
        %v756 = vsel %vm267, %v581, 0.0
        %v757 = vadd.f32 %v755, %v756
        %v758 = vsel %vm267, %v582, 0.0
        %v759 = vadd.f32 %v757, %v758
        %v760 = vsel %vm267, %v583, 0.0
        %v761 = vadd.f32 %v759, %v760
        %v762 = vsel %vm267, %v584, 0.0
        %v763 = vadd.f32 %v761, %v762
        %v764 = vsel %vm267, %v585, 0.0
        %v765 = vadd.f32 %v763, %v764
        %v766 = vsel %vm267, %v586, 0.0
        %v767 = vadd.f32 %v765, %v766
        %v768 = vsel %vm267, %v587, 0.0
        %v769 = vadd.f32 %v767, %v768
        %v770 = vsel %vm267, %v588, 0.0
        %v771 = vadd.f32 %v769, %v770
        %v772 = vsel %vm267, %v589, 0.0
        %v773 = vadd.f32 %v771, %v772
        %v774 = vsel %vm267, %v590, 0.0
        %v775 = vadd.f32 %v773, %v774
        %v776 = vsel %vm267, %v591, 0.0
        %v777 = vadd.f32 %v775, %v776
        %v778 = vsel %vm267, %v592, 0.0
        %v779 = vadd.f32 %v777, %v778
        %v780 = vsel %vm267, %v593, 0.0
        %v781 = vadd.f32 %v779, %v780
        %v782 = vsel %vm267, %v594, 0.0
        %v783 = vadd.f32 %v781, %v782
        %v784 = vsel %vm267, %v595, 0.0
        %v785 = vadd.f32 %v783, %v784
        %v786 = vsel %vm267, %v596, 0.0
        %v787 = vadd.f32 %v785, %v786
        %v788 = vsel %vm267, %v597, 0.0
        %v789 = vadd.f32 %v787, %v788
        %v790 = vsel %vm267, %v598, 0.0
        %v791 = vadd.f32 %v789, %v790
        %v792 = vsel %vm267, %v599, 0.0
        %v793 = vadd.f32 %v791, %v792
        %v794 = vsel %vm267, %v600, 0.0
        %v795 = vadd.f32 %v793, %v794
        %v796 = vsel %vm267, %v601, 0.0
        %v797 = vadd.f32 %v795, %v796
        %v798 = vsel %vm267, %v602, 0.0
        %v799 = vadd.f32 %v797, %v798
        %v800 = vsel %vm267, %v603, 0.0
        %v801 = vadd.f32 %v799, %v800
        %v802 = vsel %vm267, %v604, 0.0
        %v803 = vadd.f32 %v801, %v802
        %v804 = vsel %vm267, %v605, 0.0
        %v805 = vadd.f32 %v803, %v804
        %v806 = vsel %vm267, %v606, 0.0
        %v807 = vadd.f32 %v805, %v806
        %v808 = vsel %vm267, %v607, 0.0
        %v809 = vadd.f32 %v807, %v808
        %v810 = vsel %vm267, %v608, 0.0
        %v811 = vadd.f32 %v809, %v810
        %v812 = vsel %vm267, %v609, 0.0
        %v813 = vadd.f32 %v811, %v812
        %v814 = vsel %vm267, %v610, 0.0
        %v815 = vadd.f32 %v813, %v814
        %v816 = vsel %vm267, %v611, 0.0
        %v817 = vadd.f32 %v815, %v816
        %v818 = vsel %vm267, %v612, 0.0
        %v819 = vadd.f32 %v817, %v818
        %v820 = vsel %vm267, %v613, 0.0
        %v821 = vadd.f32 %v819, %v820
        %v822 = vsel %vm267, %v614, 0.0
        %v823 = vadd.f32 %v821, %v822
        %v824 = vsel %vm267, %v615, 0.0
        %v825 = vadd.f32 %v823, %v824
        %v826 = vsel %vm267, %v616, 0.0
        %v827 = vadd.f32 %v825, %v826
        %v828 = vsel %vm267, %v617, 0.0
        %v829 = vadd.f32 %v827, %v828
        %v830 = vsel %vm267, %v618, 0.0
        %v831 = vadd.f32 %v829, %v830
        %v832 = vsel %vm267, %v619, 0.0
        %v833 = vadd.f32 %v831, %v832
        %v834 = vsel %vm267, %v620, 0.0
        %v835 = vadd.f32 %v833, %v834
        %v836 = vsel %vm267, %v621, 0.0
        %v837 = vadd.f32 %v835, %v836
        %v838 = vsel %vm267, %v622, 0.0
        %v839 = vadd.f32 %v837, %v838
        %v840 = vsel %vm267, %v623, 0.0
        %v841 = vadd.f32 %v839, %v840
        %v842 = vsel %vm267, %v624, 0.0
        %v843 = vadd.f32 %v841, %v842
        %v844 = vsel %vm267, %v625, 0.0
        %v845 = vadd.f32 %v843, %v844
        %v846 = vsel %vm267, %v626, 0.0
        %v847 = vadd.f32 %v845, %v846
        %v848 = vsel %vm267, %v627, 0.0
        %v849 = vadd.f32 %v847, %v848
        %v850 = vsel %vm267, %v628, 0.0
        %v851 = vadd.f32 %v849, %v850
        %v852 = vsel %vm267, %v629, 0.0
        %v853 = vadd.f32 %v851, %v852
        %v854 = vsel %vm267, %v630, 0.0
        %v855 = vadd.f32 %v853, %v854
        %v856 = vsel %vm267, %v631, 0.0
        %v857 = vadd.f32 %v855, %v856
        %v858 = vsel %vm267, %v632, 0.0
        %v859 = vadd.f32 %v857, %v858
        %v860 = vsel %vm267, %v633, 0.0
        %v861 = vadd.f32 %v859, %v860
        %v862 = vsel %vm267, %v634, 0.0
        %v863 = vadd.f32 %v861, %v862
        %v864 = vsel %vm267, %v635, 0.0
        %v865 = vadd.f32 %v863, %v864
        %v866 = vsel %vm267, %v636, 0.0
        %v867 = vadd.f32 %v865, %v866
        %v868 = vsel %vm267, %v637, 0.0
        %v869 = vadd.f32 %v867, %v868
        %v870 = vsel %vm267, %v638, 0.0
        %v871 = vadd.f32 %v869, %v870
        %v872 = vsel %vm267, %v639, 0.0
        %v873 = vadd.f32 %v871, %v872
        %v874 = vsel %vm267, %v640, 0.0
        %v875 = vadd.f32 %v873, %v874
        %v876 = vsel %vm267, %v641, 0.0
        %v877 = vadd.f32 %v875, %v876
        %v878 = vsel %vm267, %v642, 0.0
        %v879 = vadd.f32 %v877, %v878
        %v880 = vsel %vm267, %v643, 0.0
        %v881 = vadd.f32 %v879, %v880
        %v882 = vsel %vm267, %v644, 0.0
        %v883 = vadd.f32 %v881, %v882
        %v884 = vsel %vm267, %v645, 0.0
        %v885 = vadd.f32 %v883, %v884
        %v886 = vsel %vm267, %v646, 0.0
        %v887 = vadd.f32 %v885, %v886
        %v888 = vsel %vm267, %v647, 0.0
        %v889 = vadd.f32 %v887, %v888
        %v890 = vsel %vm267, %v648, 0.0
        %v891 = vadd.f32 %v889, %v890
        %v892 = vsel %vm267, %v649, 0.0
        %v893 = vadd.f32 %v891, %v892
        %v894 = vsel %vm267, %v650, 0.0
        %v895 = vadd.f32 %v893, %v894
        %v896 = vsel %vm267, %v651, 0.0
        %v897 = vadd.f32 %v895, %v896
        %v898 = vsel %vm267, %v652, 0.0
        %v899 = vadd.f32 %v897, %v898
        %v900 = vsel %vm267, %v653, 0.0
        %v901 = vadd.f32 %v899, %v900
        %v902 = vsel %vm267, %v654, 0.0
        %v903 = vadd.f32 %v901, %v902
        %v904 = vsel %vm267, %v655, 0.0
        %v905 = vadd.f32 %v903, %v904
        %v906 = vsel %vm267, %v656, 0.0
        %v907 = vadd.f32 %v905, %v906
        %v908 = vsel %vm267, %v657, 0.0
        %v909 = vadd.f32 %v907, %v908
        %v910 = vsel %vm267, %v658, 0.0
        %v911 = vadd.f32 %v909, %v910
        %v912 = vsel %vm267, %v659, 0.0
        %v913 = vadd.f32 %v911, %v912
        %v914 = vsel %vm267, %v660, 0.0
        %v915 = vadd.f32 %v913, %v914
        %v916 = vrot.slane %v915, 4
        %v917 = vadd.f32 %v915, %v916
        %v918 = vrot.slane %v917, 2
        %v919 = vadd.f32 %v917, %v918
        %v920 = vrot.slane %v919, 1
        %v921 = vadd.f32 %v919, %v920
        %v922 = vadd.f32 %v532, %v921
        %923 = vst.msk [vmem:[#allocation4] sm:$0x1] %vm530, %v922
        // Predicated region
        $region29: #{generator_forward.22} parent=23 // pred_check
          %p924 = pneg %p55
        $region30: #{generator_forward.22} parent=23 // pred_check_branch
          %926 = sbr.rel (%p924) target = $region32
        $region31: #{generator_forward.22} parent=23 // pred_region
          %928 = vsyncadd [#allocation3], 0
          %s930 = sshll.u32 [#allocation2], 4
          %s931 = int_to_ptr.vmem [resolvable:$true] %s930
          %s932 = sshll.u32 %s1, 4
          %s933 = int_to_ptr.hbm [resolvable:$true] %s932
          %935 = dma.vmem_to_hbm [thread:$0]  %s931, 16, %s933, [#allocation3]
        $region32: #{generator_forward.22} parent=23 // pred_fallthru
          _
        // Predicated region
        $region33: #{generator_forward.22} parent=23 // pred_check
          %p936 = pneg %p76
        $region34: #{generator_forward.22} parent=23 // pred_check_branch
          %938 = sbr.rel (%p936) target = $region36
        $region35: #{generator_forward.22} parent=23 // pred_region
          %940 = vsyncadd [#allocation5], 0
          %s942 = sshll.u32 [#allocation4], 4
          %s943 = int_to_ptr.vmem [resolvable:$true] %s942
          %s944 = sshll.u32 %s2, 4
          %s945 = int_to_ptr.hbm [resolvable:$true] %s944
          %947 = dma.vmem_to_hbm [thread:$0]  %s943, 16, %s945, [#allocation5]
        $region36: #{generator_forward.22} parent=23 // pred_fallthru
          _
        // Predicated region
        $region37: #{generator_forward.22} parent=23 // pred_check
          %p948 = pneg %p55
        $region38: #{generator_forward.22} parent=23 // pred_check_branch
          %950 = sbr.rel (%p948) target = $region40
        $region39: #{generator_forward.22} parent=23 // pred_region
          %952 = dma.done [#allocation3], 16
        $region40: #{generator_forward.22} parent=23 // pred_fallthru
          _
        // Predicated region
        $region41: #{generator_forward.22} parent=23 // pred_check
          %p953 = pneg %p76
        $region42: #{generator_forward.22} parent=23 // pred_check_branch
          %955 = sbr.rel (%p953) target = $region44
        $region43: #{generator_forward.22} parent=23 // pred_region
          %957 = dma.done [#allocation5], 16
        $region44: #{generator_forward.22} parent=23 // pred_fallthru
          _
      $region24: #{generator_forward.22} parent=5 // pred_fallthru
        _
      %p958 = scmp.le.s32.totalorder 2, %s11
      // Predicated region
      $region45: #{generator_forward.22} parent=5 // pred_check
        %p959 = pneg %p958
      $region46: #{generator_forward.22} parent=5 // pred_check_branch
        %961 = sbr.rel (%p959) target = $region48
      $region47: #{generator_forward.22} parent=5 // pred_region
        %s962 = ssub.s32 %s11, 2
      $region48: #{generator_forward.22} parent=5 // pred_fallthru
        _
    $region6: #{generator_forward.22} parent=1 // loop_footer
      %s15 = sadd.s32 1, %s11
    $region7: #{generator_forward.22} parent=1 // loop_footer_branch
      %10 = sbr.rel target = $region3
    $region8: #{generator_forward.22} parent=1 // loop_exit
      _
    %963 = vsyncpa [#allocation3], 1
    %s964 = scalar_lea.sflag [#allocation3], 1
    %965 = vsyncpa %s964, 1
    %966 = vsyncpa [#allocation5], 1

// kernel: generator_forward.23
$region0: #{generator_forward.23}
  #allocation0 [shape = 'u32[]', space=smem, size = 0x4, offset = 0x4, fixed_abs, tag = 'smem constant byte address 0x4 - core index']
  #allocation1 [shape = 'u32[72,128]{1,0:T(1,128)}', space=vmem, size = 0x9000, scoped, tag = 'internal scratch']
  #allocation2 [shape = 'f32[1,1]{1,0:T(1,128)S(1)}', space=vmem, size = 0x200, scoped, tag = 'scoped memory for generator_forward.23']
  #allocation3 [shape = 'f32[1,1]{1,0:T(1,128)S(1)}', space=vmem, size = 0x200, scoped, tag = 'scoped memory for generator_forward.23']
  #allocation4 [shape = 'f32[1,1]{1,0:T(1,128)S(1)}', space=vmem, size = 0x200, scoped, tag = 'scoped memory for generator_forward.23']
  #allocation5 [shape = 'f32[1,1]{1,0:T(1,128)S(1)}', space=vmem, size = 0x200, scoped, tag = 'scoped memory for generator_forward.23']
  %s0 = inlined_call_operand.vmem [shape: f32[2048,1], index: 0, kind: input, shape index: {}]
  %s1 = inlined_call_operand.<no memory space> [shape: f32[1,1], index: 1, kind: input, shape index: {}]
  %s2 = inlined_call_operand.<no memory space> [shape: f32[1,1], index: 2, kind: input, shape index: {}]
  %s3 = inlined_call_operand.<no memory space> [shape: f32[1,1], index: 3, kind: input, shape index: {}]
  %s4 = inlined_call_operand.<no memory space> [shape: f32[1,1], index: 4, kind: input, shape index: {}]
  %s5 = inlined_call_operand.vmem [shape: f32[2048,1], index: 5, kind: output, shape index: {}]
  %s6 = sld [smem:[#allocation0]]
  $region53: #{generator_forward.23} parent=0
    _
  %s8 = ssub.s32 1, %s6
  %s9 = scalar_select 0, %s8, %s6
  %v10 = vstv %s1
  %11 = vst [vmem:[#allocation2] sm:$0x1] %v10
  %v12 = vstv %s2
  %13 = vst [vmem:[#allocation3] sm:$0x1] %v12
  %v14 = vstv %s3
  %15 = vst [vmem:[#allocation4] sm:$0x1] %v14
  %v16 = vstv %s4
  %17 = vst [vmem:[#allocation5] sm:$0x1] %v16
  loop: start=0, step=1, limit=4
  $region2: #{generator_forward.23} parent=0 // loop_pre_header
    _
  $region3: #{generator_forward.23} parent=0 // loop_header
    %s19 = sphi 0, %s23
    %p20 = scmp.ge.s32.totalorder %s19, 4
    %s29 = sphi 0, %s31
    %s32 = sphi 0, %s29
    %s33 = sphi 0, %s32
    %s49 = sphi 0, %s33
    %s53 = sphi 0, %s53
    %s55 = sphi 0, %s53
    %s56 = sphi 0, %s55
    %s70 = sphi 0, %s56
    %s74 = sphi 0, %s74
    %s76 = sphi 0, %s74
    %s77 = sphi 0, %s76
    %s91 = sphi 0, %s77
    %s95 = sphi 0, %s95
    %s97 = sphi 0, %s95
    %s98 = sphi 0, %s97
    %s112 = sphi 0, %s98
    %s116 = sphi 0, %s116
    %s118 = sphi 0, %s116
    %s119 = sphi 0, %s118
    %s133 = sphi 0, %s119
    %s139 = sphi 0, %s141
    %s142 = sphi 0, %s139
    %s143 = sphi 0, %s142
    %s159 = sphi 0, %s143
  $region4: #{generator_forward.23} parent=0 // loop_header_branch
    %22 = sbr.rel (%p20) target = $region8
  $region5: #{generator_forward.23} parent=0 // loop_body
    %s24 = ssub.s32 %s19, 1
    %s25 = ssub.s32 %s19, 2
    %s26 = sadd.s32 %s19, 1
    %s27 = ssub.s32 %s19, %s26
    %p28 = scmp.eq.s32.totalorder %s27, 0
    %s30 = sadd.s32 %s29, 1
    %s31 = scalar_select %p28, %s29, %s30
    %p34 = pneg %p28
    %p35 = scmp.eq.s32.totalorder %s19, 1
    %p36 = por %p34, %p35
    %p37 = scmp.ne.s32.totalorder %s29, %s32
    %p38 = scmp.eq.s32.totalorder %s19, 0
    %p39 = por %p37, %p38
    %p40 = scmp.ne.s32.totalorder %s29, %s32
    %p41 = scmp.eq.s32.totalorder %s24, 1
    %p42 = por %p40, %p41
    %p43 = scmp.ne.s32.totalorder %s32, %s33
    %p44 = scmp.eq.s32.totalorder %s24, 0
    %p45 = por %p43, %p44
    %p46 = scmp.ne.s32.totalorder %s32, %s33
    %p47 = scmp.eq.s32.totalorder %s25, 1
    %p48 = por %p46, %p47
    %p50 = scmp.ne.s32.totalorder %s33, %s49
    %p51 = scmp.eq.s32.totalorder %s25, 0
    %p52 = por %p50, %p51
    %s54 = sadd.s32 %s53, 1
    %p57 = scmp.eq.s32.totalorder %s19, 1
    %p58 = scmp.ne.s32.totalorder %s53, %s55
    %p59 = scmp.eq.s32.totalorder %s19, 0
    %p60 = por %p58, %p59
    %p61 = scmp.ne.s32.totalorder %s53, %s55
    %p62 = scmp.eq.s32.totalorder %s24, 1
    %p63 = por %p61, %p62
    %p64 = scmp.ne.s32.totalorder %s55, %s56
    %p65 = scmp.eq.s32.totalorder %s24, 0
    %p66 = por %p64, %p65
    %p67 = scmp.ne.s32.totalorder %s55, %s56
    %p68 = scmp.eq.s32.totalorder %s25, 1
    %p69 = por %p67, %p68
    %p71 = scmp.ne.s32.totalorder %s56, %s70
    %p72 = scmp.eq.s32.totalorder %s25, 0
    %p73 = por %p71, %p72
    %s75 = sadd.s32 %s74, 1
    %p78 = scmp.eq.s32.totalorder %s19, 1
    %p79 = scmp.ne.s32.totalorder %s74, %s76
    %p80 = scmp.eq.s32.totalorder %s19, 0
    %p81 = por %p79, %p80
    %p82 = scmp.ne.s32.totalorder %s74, %s76
    %p83 = scmp.eq.s32.totalorder %s24, 1
    %p84 = por %p82, %p83
    %p85 = scmp.ne.s32.totalorder %s76, %s77
    %p86 = scmp.eq.s32.totalorder %s24, 0
    %p87 = por %p85, %p86
    %p88 = scmp.ne.s32.totalorder %s76, %s77
    %p89 = scmp.eq.s32.totalorder %s25, 1
    %p90 = por %p88, %p89
    %p92 = scmp.ne.s32.totalorder %s77, %s91
    %p93 = scmp.eq.s32.totalorder %s25, 0
    %p94 = por %p92, %p93
    %s96 = sadd.s32 %s95, 1
    %p99 = scmp.eq.s32.totalorder %s19, 1
    %p100 = scmp.ne.s32.totalorder %s95, %s97
    %p101 = scmp.eq.s32.totalorder %s19, 0
    %p102 = por %p100, %p101
    %p103 = scmp.ne.s32.totalorder %s95, %s97
    %p104 = scmp.eq.s32.totalorder %s24, 1
    %p105 = por %p103, %p104
    %p106 = scmp.ne.s32.totalorder %s97, %s98
    %p107 = scmp.eq.s32.totalorder %s24, 0
    %p108 = por %p106, %p107
    %p109 = scmp.ne.s32.totalorder %s97, %s98
    %p110 = scmp.eq.s32.totalorder %s25, 1
    %p111 = por %p109, %p110
    %p113 = scmp.ne.s32.totalorder %s98, %s112
    %p114 = scmp.eq.s32.totalorder %s25, 0
    %p115 = por %p113, %p114
    %s117 = sadd.s32 %s116, 1
    %p120 = scmp.eq.s32.totalorder %s19, 1
    %p121 = scmp.ne.s32.totalorder %s116, %s118
    %p122 = scmp.eq.s32.totalorder %s19, 0
    %p123 = por %p121, %p122
    %p124 = scmp.ne.s32.totalorder %s116, %s118
    %p125 = scmp.eq.s32.totalorder %s24, 1
    %p126 = por %p124, %p125
    %p127 = scmp.ne.s32.totalorder %s118, %s119
    %p128 = scmp.eq.s32.totalorder %s24, 0
    %p129 = por %p127, %p128
    %p130 = scmp.ne.s32.totalorder %s118, %s119
    %p131 = scmp.eq.s32.totalorder %s25, 1
    %p132 = por %p130, %p131
    %p134 = scmp.ne.s32.totalorder %s119, %s133
    %p135 = scmp.eq.s32.totalorder %s25, 0
    %p136 = por %p134, %p135
    %s137 = ssub.s32 %s19, %s26
    %p138 = scmp.eq.s32.totalorder %s137, 0
    %s140 = sadd.s32 %s139, 1
    %s141 = scalar_select %p138, %s139, %s140
    %p144 = pneg %p138
    %p145 = scmp.eq.s32.totalorder %s19, 1
    %p146 = por %p144, %p145
    %p147 = scmp.ne.s32.totalorder %s139, %s142
    %p148 = scmp.eq.s32.totalorder %s19, 0
    %p149 = por %p147, %p148
    %p150 = scmp.ne.s32.totalorder %s139, %s142
    %p151 = scmp.eq.s32.totalorder %s24, 1
    %p152 = por %p150, %p151
    %p153 = scmp.ne.s32.totalorder %s142, %s143
    %p154 = scmp.eq.s32.totalorder %s24, 0
    %p155 = por %p153, %p154
    %p156 = scmp.ne.s32.totalorder %s142, %s143
    %p157 = scmp.eq.s32.totalorder %s25, 1
    %p158 = por %p156, %p157
    %p160 = scmp.ne.s32.totalorder %s143, %s159
    %p161 = scmp.eq.s32.totalorder %s25, 0
    %p162 = por %p160, %p161
    %p163 = scmp.le.s32.totalorder 1, %s19
    %p164 = scmp.lt.s32.totalorder %s19, 3
    %p165 = pnand %p163, %p164
    %p166 = pneg %p165
    // Predicated region
    $region9: #{generator_forward.23} parent=5 // pred_check
      _
    $region10: #{generator_forward.23} parent=5 // pred_check_branch
      %168 = sbr.rel (%p165) target = $region12
    $region11: #{generator_forward.23} parent=5 // pred_region
      %s169 = ssub.s32 %s19, 1
      // Predicated region
      $region13: #{generator_forward.23} parent=11 // pred_check
        %p170 = pneg %p66
      $region14: #{generator_forward.23} parent=11 // pred_check_branch
        %172 = sbr.rel (%p170) target = $region16
      $region15: #{generator_forward.23} parent=11 // pred_region
        _
      $region16: #{generator_forward.23} parent=11 // pred_fallthru
        _
      // Predicated region
      $region17: #{generator_forward.23} parent=11 // pred_check
        %p173 = pneg %p87
      $region18: #{generator_forward.23} parent=11 // pred_check_branch
        %175 = sbr.rel (%p173) target = $region20
      $region19: #{generator_forward.23} parent=11 // pred_region
        _
      $region20: #{generator_forward.23} parent=11 // pred_fallthru
        _
      // Predicated region
      $region21: #{generator_forward.23} parent=11 // pred_check
        %p176 = pneg %p108
      $region22: #{generator_forward.23} parent=11 // pred_check_branch
        %178 = sbr.rel (%p176) target = $region24
      $region23: #{generator_forward.23} parent=11 // pred_region
        _
      $region24: #{generator_forward.23} parent=11 // pred_fallthru
        _
      // Predicated region
      $region25: #{generator_forward.23} parent=11 // pred_check
        %p179 = pneg %p129
      $region26: #{generator_forward.23} parent=11 // pred_check_branch
        %181 = sbr.rel (%p179) target = $region28
      $region27: #{generator_forward.23} parent=11 // pred_region
        _
      $region28: #{generator_forward.23} parent=11 // pred_fallthru
        _
    $region12: #{generator_forward.23} parent=5 // pred_fallthru
      _
    %p182 = scmp.lt.s32.totalorder %s19, 2
    // Predicated region
    $region29: #{generator_forward.23} parent=5 // pred_check
      %p183 = pneg %p182
    $region30: #{generator_forward.23} parent=5 // pred_check_branch
      %185 = sbr.rel (%p183) target = $region32
    $region31: #{generator_forward.23} parent=5 // pred_region
      // Predicated region
      $region33: #{generator_forward.23} parent=31 // pred_check
        %p186 = pneg %p39
      $region34: #{generator_forward.23} parent=31 // pred_check_branch
        %188 = sbr.rel (%p186) target = $region36
      $region35: #{generator_forward.23} parent=31 // pred_region
        %s189 = smul.u32 128, %s19
        %p190 = scmp.lt.s32.totalorder %s189, 255
        %s191 = scalar_select %p190, %s189, 255
        %s192 = smul.addr %s191, 8
        %s193 = scalar_lea.vmem %s0, %s192
        %s194 = smul.u32 128, %s19
      $region36: #{generator_forward.23} parent=31 // pred_fallthru
        _
    $region32: #{generator_forward.23} parent=5 // pred_fallthru
      _
    %p195 = scmp.le.s32.totalorder 1, %s19
    %p196 = scmp.lt.s32.totalorder %s19, 3
    %p197 = pnand %p195, %p196
    %p198 = pneg %p197
    // Predicated region
    $region37: #{generator_forward.23} parent=5 // pred_check
      _
    $region38: #{generator_forward.23} parent=5 // pred_check_branch
      %200 = sbr.rel (%p197) target = $region40
    $region39: #{generator_forward.23} parent=5 // pred_region
      %s201 = ssub.s32 %s19, 1
      %s202 = smul.u32 128, %s24
      %p203 = scmp.lt.s32.totalorder %s202, 255
      %s204 = scalar_select %p203, %s202, 255
      %s205 = smul.addr %s204, 8
      %s206 = scalar_lea.vmem %s0, %s205
      %p207 = pneg %p45
      %p208 = pneg %p42
      %p209 = pneg %p66
      %p210 = pneg %p63
      %p211 = pneg %p87
      %p212 = pneg %p84
      %p213 = pneg %p108
      %p214 = pneg %p105
      %p215 = pneg %p129
      %p216 = pneg %p126
      %p217 = pneg %p155
      %p218 = pneg %p152
      %s219 = smul.u32 128, %s24
      %p220 = scmp.lt.s32.totalorder %s219, 255
      %s221 = scalar_select %p220, %s219, 255
      %s222 = smul.addr %s221, 8
      %s223 = scalar_lea.vmem %s5, %s222
      %s224 = smul.u32 128, %s24
      %p225 = scmp.lt.s32.totalorder %s224, 255
      %s226 = scalar_select %p225, %s224, 255
      %s227 = smul.addr %s226, 8
      %s228 = scalar_lea.vmem %s0, %s227
      %s229 = smul.u32 128, %s24
      %s230 = smul.u32 128, %s24
      %p231 = scmp.lt.s32.totalorder %s230, 255
      %s232 = scalar_select %p231, %s230, 255
      %s233 = smul.addr %s232, 8
      %s234 = scalar_lea.vmem %s5, %s233
      %s235 = smul.u32 128, %s24
      %v236 = vld [vmem:[#allocation2] sm:$0x1]
      %v237 = vmul.f32 %v236, 0.00048828125
      %v238 = vld [vmem:[#allocation3] sm:$0x1]
      %v239 = vmul.f32 %v238, 0.00048828125
      %v240 = vmul.f32 %v237, %v237
      %v241 = vsub.f32 %v239, %v240
      %v242 = vmax.f32 %v241, 0.0
      %v243 = vld [vmem:[#allocation4] sm:$0x1]
      %v244 = vadd.f32 %v242, 1e-05
      %v245 = vrsqrt.pop %v244
      %v246 = vmul.f32 %v245, %v244
      %v247 = vmul.f32 %v246, %v245
      %v248 = vmul.f32 0.5, %v247
      %v249 = vsub.f32 1.5, %v248
      %v250 = vmul.f32 %v245, %v249
      %vm251 = vweird.f32 %v244
      %vm252 = vweird.f32 %v245
      %vm253 = vmor %vm251, %vm252
      %v254 = vsel %vm253, %v245, %v250
      %v255 = vmul.f32 %v243, %v254
      %v256 = vld [vmem:[%s228] sm:$0xff]
      %v257 = vld [vmem:[%s228 + $0x8] sm:$0xff]
      %v258 = vld [vmem:[%s228 + $0x10] sm:$0xff]
      %v259 = vld [vmem:[%s228 + $0x18] sm:$0xff]
      %v260 = vld [vmem:[%s228 + $0x20] sm:$0xff]
      %v261 = vld [vmem:[%s228 + $0x28] sm:$0xff]
      %v262 = vld [vmem:[%s228 + $0x30] sm:$0xff]
      %v263 = vld [vmem:[%s228 + $0x38] sm:$0xff]
      %v264 = vld [vmem:[%s228 + $0x40] sm:$0xff]
      %v265 = vld [vmem:[%s228 + $0x48] sm:$0xff]
      %v266 = vld [vmem:[%s228 + $0x50] sm:$0xff]
      %v267 = vld [vmem:[%s228 + $0x58] sm:$0xff]
      %v268 = vld [vmem:[%s228 + $0x60] sm:$0xff]
      %v269 = vld [vmem:[%s228 + $0x68] sm:$0xff]
      %v270 = vld [vmem:[%s228 + $0x70] sm:$0xff]
      %v271 = vld [vmem:[%s228 + $0x78] sm:$0xff]
      %v272 = vld [vmem:[%s228 + $0x80] sm:$0xff]
      %v273 = vld [vmem:[%s228 + $0x88] sm:$0xff]
      %v274 = vld [vmem:[%s228 + $0x90] sm:$0xff]
      %v275 = vld [vmem:[%s228 + $0x98] sm:$0xff]
      %v276 = vld [vmem:[%s228 + $0xa0] sm:$0xff]
      %v277 = vld [vmem:[%s228 + $0xa8] sm:$0xff]
      %v278 = vld [vmem:[%s228 + $0xb0] sm:$0xff]
      %v279 = vld [vmem:[%s228 + $0xb8] sm:$0xff]
      %v280 = vld [vmem:[%s228 + $0xc0] sm:$0xff]
      %v281 = vld [vmem:[%s228 + $0xc8] sm:$0xff]
      %v282 = vld [vmem:[%s228 + $0xd0] sm:$0xff]
      %v283 = vld [vmem:[%s228 + $0xd8] sm:$0xff]
      %v284 = vld [vmem:[%s228 + $0xe0] sm:$0xff]
      %v285 = vld [vmem:[%s228 + $0xe8] sm:$0xff]
      %v286 = vld [vmem:[%s228 + $0xf0] sm:$0xff]
      %v287 = vld [vmem:[%s228 + $0xf8] sm:$0xff]
      %v288 = vld [vmem:[%s228 + $0x100] sm:$0xff]
      %v289 = vld [vmem:[%s228 + $0x108] sm:$0xff]
      %v290 = vld [vmem:[%s228 + $0x110] sm:$0xff]
      %v291 = vld [vmem:[%s228 + $0x118] sm:$0xff]
      %v292 = vld [vmem:[%s228 + $0x120] sm:$0xff]
      %v293 = vld [vmem:[%s228 + $0x128] sm:$0xff]
      %v294 = vld [vmem:[%s228 + $0x130] sm:$0xff]
      %v295 = vld [vmem:[%s228 + $0x138] sm:$0xff]
      %v296 = vld [vmem:[%s228 + $0x140] sm:$0xff]
      %v297 = vld [vmem:[%s228 + $0x148] sm:$0xff]
      %v298 = vld [vmem:[%s228 + $0x150] sm:$0xff]
      %v299 = vld [vmem:[%s228 + $0x158] sm:$0xff]
      %v300 = vld [vmem:[%s228 + $0x160] sm:$0xff]
      %v301 = vld [vmem:[%s228 + $0x168] sm:$0xff]
      %v302 = vld [vmem:[%s228 + $0x170] sm:$0xff]
      %v303 = vld [vmem:[%s228 + $0x178] sm:$0xff]
      %v304 = vld [vmem:[%s228 + $0x180] sm:$0xff]
      %v305 = vld [vmem:[%s228 + $0x188] sm:$0xff]
      %v306 = vld [vmem:[%s228 + $0x190] sm:$0xff]
      %v307 = vld [vmem:[%s228 + $0x198] sm:$0xff]
      %v308 = vld [vmem:[%s228 + $0x1a0] sm:$0xff]
      %v309 = vld [vmem:[%s228 + $0x1a8] sm:$0xff]
      %v310 = vld [vmem:[%s228 + $0x1b0] sm:$0xff]
      %v311 = vld [vmem:[%s228 + $0x1b8] sm:$0xff]
      %v312 = vld [vmem:[%s228 + $0x1c0] sm:$0xff]
      %v313 = vld [vmem:[%s228 + $0x1c8] sm:$0xff]
      %v314 = vld [vmem:[%s228 + $0x1d0] sm:$0xff]
      %v315 = vld [vmem:[%s228 + $0x1d8] sm:$0xff]
      %v316 = vld [vmem:[%s228 + $0x1e0] sm:$0xff]
      %v317 = vld [vmem:[%s228 + $0x1e8] sm:$0xff]
      %v318 = vld [vmem:[%s228 + $0x1f0] sm:$0xff]
      %v319 = vld [vmem:[%s228 + $0x1f8] sm:$0xff]
      %v320 = vld [vmem:[%s228 + $0x200] sm:$0xff]
      %v321 = vld [vmem:[%s228 + $0x208] sm:$0xff]
      %v322 = vld [vmem:[%s228 + $0x210] sm:$0xff]
      %v323 = vld [vmem:[%s228 + $0x218] sm:$0xff]
      %v324 = vld [vmem:[%s228 + $0x220] sm:$0xff]
      %v325 = vld [vmem:[%s228 + $0x228] sm:$0xff]
      %v326 = vld [vmem:[%s228 + $0x230] sm:$0xff]
      %v327 = vld [vmem:[%s228 + $0x238] sm:$0xff]
      %v328 = vld [vmem:[%s228 + $0x240] sm:$0xff]
      %v329 = vld [vmem:[%s228 + $0x248] sm:$0xff]
      %v330 = vld [vmem:[%s228 + $0x250] sm:$0xff]
      %v331 = vld [vmem:[%s228 + $0x258] sm:$0xff]
      %v332 = vld [vmem:[%s228 + $0x260] sm:$0xff]
      %v333 = vld [vmem:[%s228 + $0x268] sm:$0xff]
      %v334 = vld [vmem:[%s228 + $0x270] sm:$0xff]
      %v335 = vld [vmem:[%s228 + $0x278] sm:$0xff]
      %v336 = vld [vmem:[%s228 + $0x280] sm:$0xff]
      %v337 = vld [vmem:[%s228 + $0x288] sm:$0xff]
      %v338 = vld [vmem:[%s228 + $0x290] sm:$0xff]
      %v339 = vld [vmem:[%s228 + $0x298] sm:$0xff]
      %v340 = vld [vmem:[%s228 + $0x2a0] sm:$0xff]
      %v341 = vld [vmem:[%s228 + $0x2a8] sm:$0xff]
      %v342 = vld [vmem:[%s228 + $0x2b0] sm:$0xff]
      %v343 = vld [vmem:[%s228 + $0x2b8] sm:$0xff]
      %v344 = vld [vmem:[%s228 + $0x2c0] sm:$0xff]
      %v345 = vld [vmem:[%s228 + $0x2c8] sm:$0xff]
      %v346 = vld [vmem:[%s228 + $0x2d0] sm:$0xff]
      %v347 = vld [vmem:[%s228 + $0x2d8] sm:$0xff]
      %v348 = vld [vmem:[%s228 + $0x2e0] sm:$0xff]
      %v349 = vld [vmem:[%s228 + $0x2e8] sm:$0xff]
      %v350 = vld [vmem:[%s228 + $0x2f0] sm:$0xff]
      %v351 = vld [vmem:[%s228 + $0x2f8] sm:$0xff]
      %v352 = vld [vmem:[%s228 + $0x300] sm:$0xff]
      %v353 = vld [vmem:[%s228 + $0x308] sm:$0xff]
      %v354 = vld [vmem:[%s228 + $0x310] sm:$0xff]
      %v355 = vld [vmem:[%s228 + $0x318] sm:$0xff]
      %v356 = vld [vmem:[%s228 + $0x320] sm:$0xff]
      %v357 = vld [vmem:[%s228 + $0x328] sm:$0xff]
      %v358 = vld [vmem:[%s228 + $0x330] sm:$0xff]
      %v359 = vld [vmem:[%s228 + $0x338] sm:$0xff]
      %v360 = vld [vmem:[%s228 + $0x340] sm:$0xff]
      %v361 = vld [vmem:[%s228 + $0x348] sm:$0xff]
      %v362 = vld [vmem:[%s228 + $0x350] sm:$0xff]
      %v363 = vld [vmem:[%s228 + $0x358] sm:$0xff]
      %v364 = vld [vmem:[%s228 + $0x360] sm:$0xff]
      %v365 = vld [vmem:[%s228 + $0x368] sm:$0xff]
      %v366 = vld [vmem:[%s228 + $0x370] sm:$0xff]
      %v367 = vld [vmem:[%s228 + $0x378] sm:$0xff]
      %v368 = vld [vmem:[%s228 + $0x380] sm:$0xff]
      %v369 = vld [vmem:[%s228 + $0x388] sm:$0xff]
      %v370 = vld [vmem:[%s228 + $0x390] sm:$0xff]
      %v371 = vld [vmem:[%s228 + $0x398] sm:$0xff]
      %v372 = vld [vmem:[%s228 + $0x3a0] sm:$0xff]
      %v373 = vld [vmem:[%s228 + $0x3a8] sm:$0xff]
      %v374 = vld [vmem:[%s228 + $0x3b0] sm:$0xff]
      %v375 = vld [vmem:[%s228 + $0x3b8] sm:$0xff]
      %v376 = vld [vmem:[%s228 + $0x3c0] sm:$0xff]
      %v377 = vld [vmem:[%s228 + $0x3c8] sm:$0xff]
      %v378 = vld [vmem:[%s228 + $0x3d0] sm:$0xff]
      %v379 = vld [vmem:[%s228 + $0x3d8] sm:$0xff]
      %v380 = vld [vmem:[%s228 + $0x3e0] sm:$0xff]
      %v381 = vld [vmem:[%s228 + $0x3e8] sm:$0xff]
      %v382 = vld [vmem:[%s228 + $0x3f0] sm:$0xff]
      %v383 = vld [vmem:[%s228 + $0x3f8] sm:$0xff]
      %v385 = vperm.slane %v237, 0
      %v387 = vsub.f32 %v256, %v385
      %v388 = vsub.f32 %v257, %v385
      %v389 = vsub.f32 %v258, %v385
      %v390 = vsub.f32 %v259, %v385
      %v391 = vsub.f32 %v260, %v385
      %v392 = vsub.f32 %v261, %v385
      %v393 = vsub.f32 %v262, %v385
      %v394 = vsub.f32 %v263, %v385
      %v395 = vsub.f32 %v264, %v385
      %v396 = vsub.f32 %v265, %v385
      %v397 = vsub.f32 %v266, %v385
      %v398 = vsub.f32 %v267, %v385
      %v399 = vsub.f32 %v268, %v385
      %v400 = vsub.f32 %v269, %v385
      %v401 = vsub.f32 %v270, %v385
      %v402 = vsub.f32 %v271, %v385
      %v403 = vsub.f32 %v272, %v385
      %v404 = vsub.f32 %v273, %v385
      %v405 = vsub.f32 %v274, %v385
      %v406 = vsub.f32 %v275, %v385
      %v407 = vsub.f32 %v276, %v385
      %v408 = vsub.f32 %v277, %v385
      %v409 = vsub.f32 %v278, %v385
      %v410 = vsub.f32 %v279, %v385
      %v411 = vsub.f32 %v280, %v385
      %v412 = vsub.f32 %v281, %v385
      %v413 = vsub.f32 %v282, %v385
      %v414 = vsub.f32 %v283, %v385
      %v415 = vsub.f32 %v284, %v385
      %v416 = vsub.f32 %v285, %v385
      %v417 = vsub.f32 %v286, %v385
      %v418 = vsub.f32 %v287, %v385
      %v419 = vsub.f32 %v288, %v385
      %v420 = vsub.f32 %v289, %v385
      %v421 = vsub.f32 %v290, %v385
      %v422 = vsub.f32 %v291, %v385
      %v423 = vsub.f32 %v292, %v385
      %v424 = vsub.f32 %v293, %v385
      %v425 = vsub.f32 %v294, %v385
      %v426 = vsub.f32 %v295, %v385
      %v427 = vsub.f32 %v296, %v385
      %v428 = vsub.f32 %v297, %v385
      %v429 = vsub.f32 %v298, %v385
      %v430 = vsub.f32 %v299, %v385
      %v431 = vsub.f32 %v300, %v385
      %v432 = vsub.f32 %v301, %v385
      %v433 = vsub.f32 %v302, %v385
      %v434 = vsub.f32 %v303, %v385
      %v435 = vsub.f32 %v304, %v385
      %v436 = vsub.f32 %v305, %v385
      %v437 = vsub.f32 %v306, %v385
      %v438 = vsub.f32 %v307, %v385
      %v439 = vsub.f32 %v308, %v385
      %v440 = vsub.f32 %v309, %v385
      %v441 = vsub.f32 %v310, %v385
      %v442 = vsub.f32 %v311, %v385
      %v443 = vsub.f32 %v312, %v385
      %v444 = vsub.f32 %v313, %v385
      %v445 = vsub.f32 %v314, %v385
      %v446 = vsub.f32 %v315, %v385
      %v447 = vsub.f32 %v316, %v385
      %v448 = vsub.f32 %v317, %v385
      %v449 = vsub.f32 %v318, %v385
      %v450 = vsub.f32 %v319, %v385
      %v451 = vsub.f32 %v320, %v385
      %v452 = vsub.f32 %v321, %v385
      %v453 = vsub.f32 %v322, %v385
      %v454 = vsub.f32 %v323, %v385
      %v455 = vsub.f32 %v324, %v385
      %v456 = vsub.f32 %v325, %v385
      %v457 = vsub.f32 %v326, %v385
      %v458 = vsub.f32 %v327, %v385
      %v459 = vsub.f32 %v328, %v385
      %v460 = vsub.f32 %v329, %v385
      %v461 = vsub.f32 %v330, %v385
      %v462 = vsub.f32 %v331, %v385
      %v463 = vsub.f32 %v332, %v385
      %v464 = vsub.f32 %v333, %v385
      %v465 = vsub.f32 %v334, %v385
      %v466 = vsub.f32 %v335, %v385
      %v467 = vsub.f32 %v336, %v385
      %v468 = vsub.f32 %v337, %v385
      %v469 = vsub.f32 %v338, %v385
      %v470 = vsub.f32 %v339, %v385
      %v471 = vsub.f32 %v340, %v385
      %v472 = vsub.f32 %v341, %v385
      %v473 = vsub.f32 %v342, %v385
      %v474 = vsub.f32 %v343, %v385
      %v475 = vsub.f32 %v344, %v385
      %v476 = vsub.f32 %v345, %v385
      %v477 = vsub.f32 %v346, %v385
      %v478 = vsub.f32 %v347, %v385
      %v479 = vsub.f32 %v348, %v385
      %v480 = vsub.f32 %v349, %v385
      %v481 = vsub.f32 %v350, %v385
      %v482 = vsub.f32 %v351, %v385
      %v483 = vsub.f32 %v352, %v385
      %v484 = vsub.f32 %v353, %v385
      %v485 = vsub.f32 %v354, %v385
      %v486 = vsub.f32 %v355, %v385
      %v487 = vsub.f32 %v356, %v385
      %v488 = vsub.f32 %v357, %v385
      %v489 = vsub.f32 %v358, %v385
      %v490 = vsub.f32 %v359, %v385
      %v491 = vsub.f32 %v360, %v385
      %v492 = vsub.f32 %v361, %v385
      %v493 = vsub.f32 %v362, %v385
      %v494 = vsub.f32 %v363, %v385
      %v495 = vsub.f32 %v364, %v385
      %v496 = vsub.f32 %v365, %v385
      %v497 = vsub.f32 %v366, %v385
      %v498 = vsub.f32 %v367, %v385
      %v499 = vsub.f32 %v368, %v385
      %v500 = vsub.f32 %v369, %v385
      %v501 = vsub.f32 %v370, %v385
      %v502 = vsub.f32 %v371, %v385
      %v503 = vsub.f32 %v372, %v385
      %v504 = vsub.f32 %v373, %v385
      %v505 = vsub.f32 %v374, %v385
      %v506 = vsub.f32 %v375, %v385
      %v507 = vsub.f32 %v376, %v385
      %v508 = vsub.f32 %v377, %v385
      %v509 = vsub.f32 %v378, %v385
      %v510 = vsub.f32 %v379, %v385
      %v511 = vsub.f32 %v380, %v385
      %v512 = vsub.f32 %v381, %v385
      %v513 = vsub.f32 %v382, %v385
      %v514 = vsub.f32 %v383, %v385
      %v516 = vperm.slane %v255, 0
      %v518 = vmul.f32 %v387, %v516
      %v519 = vmul.f32 %v388, %v516
      %v520 = vmul.f32 %v389, %v516
      %v521 = vmul.f32 %v390, %v516
      %v522 = vmul.f32 %v391, %v516
      %v523 = vmul.f32 %v392, %v516
      %v524 = vmul.f32 %v393, %v516
      %v525 = vmul.f32 %v394, %v516
      %v526 = vmul.f32 %v395, %v516
      %v527 = vmul.f32 %v396, %v516
      %v528 = vmul.f32 %v397, %v516
      %v529 = vmul.f32 %v398, %v516
      %v530 = vmul.f32 %v399, %v516
      %v531 = vmul.f32 %v400, %v516
      %v532 = vmul.f32 %v401, %v516
      %v533 = vmul.f32 %v402, %v516
      %v534 = vmul.f32 %v403, %v516
      %v535 = vmul.f32 %v404, %v516
      %v536 = vmul.f32 %v405, %v516
      %v537 = vmul.f32 %v406, %v516
      %v538 = vmul.f32 %v407, %v516
      %v539 = vmul.f32 %v408, %v516
      %v540 = vmul.f32 %v409, %v516
      %v541 = vmul.f32 %v410, %v516
      %v542 = vmul.f32 %v411, %v516
      %v543 = vmul.f32 %v412, %v516
      %v544 = vmul.f32 %v413, %v516
      %v545 = vmul.f32 %v414, %v516
      %v546 = vmul.f32 %v415, %v516
      %v547 = vmul.f32 %v416, %v516
      %v548 = vmul.f32 %v417, %v516
      %v549 = vmul.f32 %v418, %v516
      %v550 = vmul.f32 %v419, %v516
      %v551 = vmul.f32 %v420, %v516
      %v552 = vmul.f32 %v421, %v516
      %v553 = vmul.f32 %v422, %v516
      %v554 = vmul.f32 %v423, %v516
      %v555 = vmul.f32 %v424, %v516
      %v556 = vmul.f32 %v425, %v516
      %v557 = vmul.f32 %v426, %v516
      %v558 = vmul.f32 %v427, %v516
      %v559 = vmul.f32 %v428, %v516
      %v560 = vmul.f32 %v429, %v516
      %v561 = vmul.f32 %v430, %v516
      %v562 = vmul.f32 %v431, %v516
      %v563 = vmul.f32 %v432, %v516
      %v564 = vmul.f32 %v433, %v516
      %v565 = vmul.f32 %v434, %v516
      %v566 = vmul.f32 %v435, %v516
      %v567 = vmul.f32 %v436, %v516
      %v568 = vmul.f32 %v437, %v516
      %v569 = vmul.f32 %v438, %v516
      %v570 = vmul.f32 %v439, %v516
      %v571 = vmul.f32 %v440, %v516
      %v572 = vmul.f32 %v441, %v516
      %v573 = vmul.f32 %v442, %v516
      %v574 = vmul.f32 %v443, %v516
      %v575 = vmul.f32 %v444, %v516
      %v576 = vmul.f32 %v445, %v516
      %v577 = vmul.f32 %v446, %v516
      %v578 = vmul.f32 %v447, %v516
      %v579 = vmul.f32 %v448, %v516
      %v580 = vmul.f32 %v449, %v516
      %v581 = vmul.f32 %v450, %v516
      %v582 = vmul.f32 %v451, %v516
      %v583 = vmul.f32 %v452, %v516
      %v584 = vmul.f32 %v453, %v516
      %v585 = vmul.f32 %v454, %v516
      %v586 = vmul.f32 %v455, %v516
      %v587 = vmul.f32 %v456, %v516
      %v588 = vmul.f32 %v457, %v516
      %v589 = vmul.f32 %v458, %v516
      %v590 = vmul.f32 %v459, %v516
      %v591 = vmul.f32 %v460, %v516
      %v592 = vmul.f32 %v461, %v516
      %v593 = vmul.f32 %v462, %v516
      %v594 = vmul.f32 %v463, %v516
      %v595 = vmul.f32 %v464, %v516
      %v596 = vmul.f32 %v465, %v516
      %v597 = vmul.f32 %v466, %v516
      %v598 = vmul.f32 %v467, %v516
      %v599 = vmul.f32 %v468, %v516
      %v600 = vmul.f32 %v469, %v516
      %v601 = vmul.f32 %v470, %v516
      %v602 = vmul.f32 %v471, %v516
      %v603 = vmul.f32 %v472, %v516
      %v604 = vmul.f32 %v473, %v516
      %v605 = vmul.f32 %v474, %v516
      %v606 = vmul.f32 %v475, %v516
      %v607 = vmul.f32 %v476, %v516
      %v608 = vmul.f32 %v477, %v516
      %v609 = vmul.f32 %v478, %v516
      %v610 = vmul.f32 %v479, %v516
      %v611 = vmul.f32 %v480, %v516
      %v612 = vmul.f32 %v481, %v516
      %v613 = vmul.f32 %v482, %v516
      %v614 = vmul.f32 %v483, %v516
      %v615 = vmul.f32 %v484, %v516
      %v616 = vmul.f32 %v485, %v516
      %v617 = vmul.f32 %v486, %v516
      %v618 = vmul.f32 %v487, %v516
      %v619 = vmul.f32 %v488, %v516
      %v620 = vmul.f32 %v489, %v516
      %v621 = vmul.f32 %v490, %v516
      %v622 = vmul.f32 %v491, %v516
      %v623 = vmul.f32 %v492, %v516
      %v624 = vmul.f32 %v493, %v516
      %v625 = vmul.f32 %v494, %v516
      %v626 = vmul.f32 %v495, %v516
      %v627 = vmul.f32 %v496, %v516
      %v628 = vmul.f32 %v497, %v516
      %v629 = vmul.f32 %v498, %v516
      %v630 = vmul.f32 %v499, %v516
      %v631 = vmul.f32 %v500, %v516
      %v632 = vmul.f32 %v501, %v516
      %v633 = vmul.f32 %v502, %v516
      %v634 = vmul.f32 %v503, %v516
      %v635 = vmul.f32 %v504, %v516
      %v636 = vmul.f32 %v505, %v516
      %v637 = vmul.f32 %v506, %v516
      %v638 = vmul.f32 %v507, %v516
      %v639 = vmul.f32 %v508, %v516
      %v640 = vmul.f32 %v509, %v516
      %v641 = vmul.f32 %v510, %v516
      %v642 = vmul.f32 %v511, %v516
      %v643 = vmul.f32 %v512, %v516
      %v644 = vmul.f32 %v513, %v516
      %v645 = vmul.f32 %v514, %v516
      %v646 = vld [vmem:[#allocation5] sm:$0x1]
      %v648 = vperm.slane %v646, 0
      %v650 = vadd.f32 %v518, %v648
      %v651 = vadd.f32 %v519, %v648
      %v652 = vadd.f32 %v520, %v648
      %v653 = vadd.f32 %v521, %v648
      %v654 = vadd.f32 %v522, %v648
      %v655 = vadd.f32 %v523, %v648
      %v656 = vadd.f32 %v524, %v648
      %v657 = vadd.f32 %v525, %v648
      %v658 = vadd.f32 %v526, %v648
      %v659 = vadd.f32 %v527, %v648
      %v660 = vadd.f32 %v528, %v648
      %v661 = vadd.f32 %v529, %v648
      %v662 = vadd.f32 %v530, %v648
      %v663 = vadd.f32 %v531, %v648
      %v664 = vadd.f32 %v532, %v648
      %v665 = vadd.f32 %v533, %v648
      %v666 = vadd.f32 %v534, %v648
      %v667 = vadd.f32 %v535, %v648
      %v668 = vadd.f32 %v536, %v648
      %v669 = vadd.f32 %v537, %v648
      %v670 = vadd.f32 %v538, %v648
      %v671 = vadd.f32 %v539, %v648
      %v672 = vadd.f32 %v540, %v648
      %v673 = vadd.f32 %v541, %v648
      %v674 = vadd.f32 %v542, %v648
      %v675 = vadd.f32 %v543, %v648
      %v676 = vadd.f32 %v544, %v648
      %v677 = vadd.f32 %v545, %v648
      %v678 = vadd.f32 %v546, %v648
      %v679 = vadd.f32 %v547, %v648
      %v680 = vadd.f32 %v548, %v648
      %v681 = vadd.f32 %v549, %v648
      %v682 = vadd.f32 %v550, %v648
      %v683 = vadd.f32 %v551, %v648
      %v684 = vadd.f32 %v552, %v648
      %v685 = vadd.f32 %v553, %v648
      %v686 = vadd.f32 %v554, %v648
      %v687 = vadd.f32 %v555, %v648
      %v688 = vadd.f32 %v556, %v648
      %v689 = vadd.f32 %v557, %v648
      %v690 = vadd.f32 %v558, %v648
      %v691 = vadd.f32 %v559, %v648
      %v692 = vadd.f32 %v560, %v648
      %v693 = vadd.f32 %v561, %v648
      %v694 = vadd.f32 %v562, %v648
      %v695 = vadd.f32 %v563, %v648
      %v696 = vadd.f32 %v564, %v648
      %v697 = vadd.f32 %v565, %v648
      %v698 = vadd.f32 %v566, %v648
      %v699 = vadd.f32 %v567, %v648
      %v700 = vadd.f32 %v568, %v648
      %v701 = vadd.f32 %v569, %v648
      %v702 = vadd.f32 %v570, %v648
      %v703 = vadd.f32 %v571, %v648
      %v704 = vadd.f32 %v572, %v648
      %v705 = vadd.f32 %v573, %v648
      %v706 = vadd.f32 %v574, %v648
      %v707 = vadd.f32 %v575, %v648
      %v708 = vadd.f32 %v576, %v648
      %v709 = vadd.f32 %v577, %v648
      %v710 = vadd.f32 %v578, %v648
      %v711 = vadd.f32 %v579, %v648
      %v712 = vadd.f32 %v580, %v648
      %v713 = vadd.f32 %v581, %v648
      %v714 = vadd.f32 %v582, %v648
      %v715 = vadd.f32 %v583, %v648
      %v716 = vadd.f32 %v584, %v648
      %v717 = vadd.f32 %v585, %v648
      %v718 = vadd.f32 %v586, %v648
      %v719 = vadd.f32 %v587, %v648
      %v720 = vadd.f32 %v588, %v648
      %v721 = vadd.f32 %v589, %v648
      %v722 = vadd.f32 %v590, %v648
      %v723 = vadd.f32 %v591, %v648
      %v724 = vadd.f32 %v592, %v648
      %v725 = vadd.f32 %v593, %v648
      %v726 = vadd.f32 %v594, %v648
      %v727 = vadd.f32 %v595, %v648
      %v728 = vadd.f32 %v596, %v648
      %v729 = vadd.f32 %v597, %v648
      %v730 = vadd.f32 %v598, %v648
      %v731 = vadd.f32 %v599, %v648
      %v732 = vadd.f32 %v600, %v648
      %v733 = vadd.f32 %v601, %v648
      %v734 = vadd.f32 %v602, %v648
      %v735 = vadd.f32 %v603, %v648
      %v736 = vadd.f32 %v604, %v648
      %v737 = vadd.f32 %v605, %v648
      %v738 = vadd.f32 %v606, %v648
      %v739 = vadd.f32 %v607, %v648
      %v740 = vadd.f32 %v608, %v648
      %v741 = vadd.f32 %v609, %v648
      %v742 = vadd.f32 %v610, %v648
      %v743 = vadd.f32 %v611, %v648
      %v744 = vadd.f32 %v612, %v648
      %v745 = vadd.f32 %v613, %v648
      %v746 = vadd.f32 %v614, %v648
      %v747 = vadd.f32 %v615, %v648
      %v748 = vadd.f32 %v616, %v648
      %v749 = vadd.f32 %v617, %v648
      %v750 = vadd.f32 %v618, %v648
      %v751 = vadd.f32 %v619, %v648
      %v752 = vadd.f32 %v620, %v648
      %v753 = vadd.f32 %v621, %v648
      %v754 = vadd.f32 %v622, %v648
      %v755 = vadd.f32 %v623, %v648
      %v756 = vadd.f32 %v624, %v648
      %v757 = vadd.f32 %v625, %v648
      %v758 = vadd.f32 %v626, %v648
      %v759 = vadd.f32 %v627, %v648
      %v760 = vadd.f32 %v628, %v648
      %v761 = vadd.f32 %v629, %v648
      %v762 = vadd.f32 %v630, %v648
      %v763 = vadd.f32 %v631, %v648
      %v764 = vadd.f32 %v632, %v648
      %v765 = vadd.f32 %v633, %v648
      %v766 = vadd.f32 %v634, %v648
      %v767 = vadd.f32 %v635, %v648
      %v768 = vadd.f32 %v636, %v648
      %v769 = vadd.f32 %v637, %v648
      %v770 = vadd.f32 %v638, %v648
      %v771 = vadd.f32 %v639, %v648
      %v772 = vadd.f32 %v640, %v648
      %v773 = vadd.f32 %v641, %v648
      %v774 = vadd.f32 %v642, %v648
      %v775 = vadd.f32 %v643, %v648
      %v776 = vadd.f32 %v644, %v648
      %v777 = vadd.f32 %v645, %v648
      %v778 = vtanh.pop %v650
      %v779 = vtanh.pop %v651
      %v780 = vtanh.pop %v652
      %v781 = vtanh.pop %v653
      %v782 = vtanh.pop %v654
      %v783 = vtanh.pop %v655
      %v784 = vtanh.pop %v656
      %v785 = vtanh.pop %v657
      %v786 = vtanh.pop %v658
      %v787 = vtanh.pop %v659
      %v788 = vtanh.pop %v660
      %v789 = vtanh.pop %v661
      %v790 = vtanh.pop %v662
      %v791 = vtanh.pop %v663
      %v792 = vtanh.pop %v664
      %v793 = vtanh.pop %v665
      %v794 = vtanh.pop %v666
      %v795 = vtanh.pop %v667
      %v796 = vtanh.pop %v668
      %v797 = vtanh.pop %v669
      %v798 = vtanh.pop %v670
      %v799 = vtanh.pop %v671
      %v800 = vtanh.pop %v672
      %v801 = vtanh.pop %v673
      %v802 = vtanh.pop %v674
      %v803 = vtanh.pop %v675
      %v804 = vtanh.pop %v676
      %v805 = vtanh.pop %v677
      %v806 = vtanh.pop %v678
      %v807 = vtanh.pop %v679
      %v808 = vtanh.pop %v680
      %v809 = vtanh.pop %v681
      %v810 = vtanh.pop %v682
      %v811 = vtanh.pop %v683
      %v812 = vtanh.pop %v684
      %v813 = vtanh.pop %v685
      %v814 = vtanh.pop %v686
      %v815 = vtanh.pop %v687
      %v816 = vtanh.pop %v688
      %v817 = vtanh.pop %v689
      %v818 = vtanh.pop %v690
      %v819 = vtanh.pop %v691
      %v820 = vtanh.pop %v692
      %v821 = vtanh.pop %v693
      %v822 = vtanh.pop %v694
      %v823 = vtanh.pop %v695
      %v824 = vtanh.pop %v696
      %v825 = vtanh.pop %v697
      %v826 = vtanh.pop %v698
      %v827 = vtanh.pop %v699
      %v828 = vtanh.pop %v700
      %v829 = vtanh.pop %v701
      %v830 = vtanh.pop %v702
      %v831 = vtanh.pop %v703
      %v832 = vtanh.pop %v704
      %v833 = vtanh.pop %v705
      %v834 = vtanh.pop %v706
      %v835 = vtanh.pop %v707
      %v836 = vtanh.pop %v708
      %v837 = vtanh.pop %v709
      %v838 = vtanh.pop %v710
      %v839 = vtanh.pop %v711
      %v840 = vtanh.pop %v712
      %v841 = vtanh.pop %v713
      %v842 = vtanh.pop %v714
      %v843 = vtanh.pop %v715
      %v844 = vtanh.pop %v716
      %v845 = vtanh.pop %v717
      %v846 = vtanh.pop %v718
      %v847 = vtanh.pop %v719
      %v848 = vtanh.pop %v720
      %v849 = vtanh.pop %v721
      %v850 = vtanh.pop %v722
      %v851 = vtanh.pop %v723
      %v852 = vtanh.pop %v724
      %v853 = vtanh.pop %v725
      %v854 = vtanh.pop %v726
      %v855 = vtanh.pop %v727
      %v856 = vtanh.pop %v728
      %v857 = vtanh.pop %v729
      %v858 = vtanh.pop %v730
      %v859 = vtanh.pop %v731
      %v860 = vtanh.pop %v732
      %v861 = vtanh.pop %v733
      %v862 = vtanh.pop %v734
      %v863 = vtanh.pop %v735
      %v864 = vtanh.pop %v736
      %v865 = vtanh.pop %v737
      %v866 = vtanh.pop %v738
      %v867 = vtanh.pop %v739
      %v868 = vtanh.pop %v740
      %v869 = vtanh.pop %v741
      %v870 = vtanh.pop %v742
      %v871 = vtanh.pop %v743
      %v872 = vtanh.pop %v744
      %v873 = vtanh.pop %v745
      %v874 = vtanh.pop %v746
      %v875 = vtanh.pop %v747
      %v876 = vtanh.pop %v748
      %v877 = vtanh.pop %v749
      %v878 = vtanh.pop %v750
      %v879 = vtanh.pop %v751
      %v880 = vtanh.pop %v752
      %v881 = vtanh.pop %v753
      %v882 = vtanh.pop %v754
      %v883 = vtanh.pop %v755
      %v884 = vtanh.pop %v756
      %v885 = vtanh.pop %v757
      %v886 = vtanh.pop %v758
      %v887 = vtanh.pop %v759
      %v888 = vtanh.pop %v760
      %v889 = vtanh.pop %v761
      %v890 = vtanh.pop %v762
      %v891 = vtanh.pop %v763
      %v892 = vtanh.pop %v764
      %v893 = vtanh.pop %v765
      %v894 = vtanh.pop %v766
      %v895 = vtanh.pop %v767
      %v896 = vtanh.pop %v768
      %v897 = vtanh.pop %v769
      %v898 = vtanh.pop %v770
      %v899 = vtanh.pop %v771
      %v900 = vtanh.pop %v772
      %v901 = vtanh.pop %v773
      %v902 = vtanh.pop %v774
      %v903 = vtanh.pop %v775
      %v904 = vtanh.pop %v776
      %v905 = vtanh.pop %v777
      %vm906 = vcmask 7168
      %907 = vst.msk [vmem:[%s234] sm:$0xff] %vm906, %v778
      %908 = vst.msk [vmem:[%s234 + $0x8] sm:$0xff] %vm906, %v779
      %909 = vst.msk [vmem:[%s234 + $0x10] sm:$0xff] %vm906, %v780
      %910 = vst.msk [vmem:[%s234 + $0x18] sm:$0xff] %vm906, %v781
      %911 = vst.msk [vmem:[%s234 + $0x20] sm:$0xff] %vm906, %v782
      %912 = vst.msk [vmem:[%s234 + $0x28] sm:$0xff] %vm906, %v783
      %913 = vst.msk [vmem:[%s234 + $0x30] sm:$0xff] %vm906, %v784
      %914 = vst.msk [vmem:[%s234 + $0x38] sm:$0xff] %vm906, %v785
      %915 = vst.msk [vmem:[%s234 + $0x40] sm:$0xff] %vm906, %v786
      %916 = vst.msk [vmem:[%s234 + $0x48] sm:$0xff] %vm906, %v787
      %917 = vst.msk [vmem:[%s234 + $0x50] sm:$0xff] %vm906, %v788
      %918 = vst.msk [vmem:[%s234 + $0x58] sm:$0xff] %vm906, %v789
      %919 = vst.msk [vmem:[%s234 + $0x60] sm:$0xff] %vm906, %v790
      %920 = vst.msk [vmem:[%s234 + $0x68] sm:$0xff] %vm906, %v791
      %921 = vst.msk [vmem:[%s234 + $0x70] sm:$0xff] %vm906, %v792
      %922 = vst.msk [vmem:[%s234 + $0x78] sm:$0xff] %vm906, %v793
      %923 = vst.msk [vmem:[%s234 + $0x80] sm:$0xff] %vm906, %v794
      %924 = vst.msk [vmem:[%s234 + $0x88] sm:$0xff] %vm906, %v795
      %925 = vst.msk [vmem:[%s234 + $0x90] sm:$0xff] %vm906, %v796
      %926 = vst.msk [vmem:[%s234 + $0x98] sm:$0xff] %vm906, %v797
      %927 = vst.msk [vmem:[%s234 + $0xa0] sm:$0xff] %vm906, %v798
      %928 = vst.msk [vmem:[%s234 + $0xa8] sm:$0xff] %vm906, %v799
      %929 = vst.msk [vmem:[%s234 + $0xb0] sm:$0xff] %vm906, %v800
      %930 = vst.msk [vmem:[%s234 + $0xb8] sm:$0xff] %vm906, %v801
      %931 = vst.msk [vmem:[%s234 + $0xc0] sm:$0xff] %vm906, %v802
      %932 = vst.msk [vmem:[%s234 + $0xc8] sm:$0xff] %vm906, %v803
      %933 = vst.msk [vmem:[%s234 + $0xd0] sm:$0xff] %vm906, %v804
      %934 = vst.msk [vmem:[%s234 + $0xd8] sm:$0xff] %vm906, %v805
      %935 = vst.msk [vmem:[%s234 + $0xe0] sm:$0xff] %vm906, %v806
      %936 = vst.msk [vmem:[%s234 + $0xe8] sm:$0xff] %vm906, %v807
      %937 = vst.msk [vmem:[%s234 + $0xf0] sm:$0xff] %vm906, %v808
      %938 = vst.msk [vmem:[%s234 + $0xf8] sm:$0xff] %vm906, %v809
      %939 = vst.msk [vmem:[%s234 + $0x100] sm:$0xff] %vm906, %v810
      %940 = vst.msk [vmem:[%s234 + $0x108] sm:$0xff] %vm906, %v811
      %941 = vst.msk [vmem:[%s234 + $0x110] sm:$0xff] %vm906, %v812
      %942 = vst.msk [vmem:[%s234 + $0x118] sm:$0xff] %vm906, %v813
      %943 = vst.msk [vmem:[%s234 + $0x120] sm:$0xff] %vm906, %v814
      %944 = vst.msk [vmem:[%s234 + $0x128] sm:$0xff] %vm906, %v815
      %945 = vst.msk [vmem:[%s234 + $0x130] sm:$0xff] %vm906, %v816
      %946 = vst.msk [vmem:[%s234 + $0x138] sm:$0xff] %vm906, %v817
      %947 = vst.msk [vmem:[%s234 + $0x140] sm:$0xff] %vm906, %v818
      %948 = vst.msk [vmem:[%s234 + $0x148] sm:$0xff] %vm906, %v819
      %949 = vst.msk [vmem:[%s234 + $0x150] sm:$0xff] %vm906, %v820
      %950 = vst.msk [vmem:[%s234 + $0x158] sm:$0xff] %vm906, %v821
      %951 = vst.msk [vmem:[%s234 + $0x160] sm:$0xff] %vm906, %v822
      %952 = vst.msk [vmem:[%s234 + $0x168] sm:$0xff] %vm906, %v823
      %953 = vst.msk [vmem:[%s234 + $0x170] sm:$0xff] %vm906, %v824
      %954 = vst.msk [vmem:[%s234 + $0x178] sm:$0xff] %vm906, %v825
      %955 = vst.msk [vmem:[%s234 + $0x180] sm:$0xff] %vm906, %v826
      %956 = vst.msk [vmem:[%s234 + $0x188] sm:$0xff] %vm906, %v827
      %957 = vst.msk [vmem:[%s234 + $0x190] sm:$0xff] %vm906, %v828
      %958 = vst.msk [vmem:[%s234 + $0x198] sm:$0xff] %vm906, %v829
      %959 = vst.msk [vmem:[%s234 + $0x1a0] sm:$0xff] %vm906, %v830
      %960 = vst.msk [vmem:[%s234 + $0x1a8] sm:$0xff] %vm906, %v831
      %961 = vst.msk [vmem:[%s234 + $0x1b0] sm:$0xff] %vm906, %v832
      %962 = vst.msk [vmem:[%s234 + $0x1b8] sm:$0xff] %vm906, %v833
      %963 = vst.msk [vmem:[%s234 + $0x1c0] sm:$0xff] %vm906, %v834
      %964 = vst.msk [vmem:[%s234 + $0x1c8] sm:$0xff] %vm906, %v835
      %965 = vst.msk [vmem:[%s234 + $0x1d0] sm:$0xff] %vm906, %v836
      %966 = vst.msk [vmem:[%s234 + $0x1d8] sm:$0xff] %vm906, %v837
      %967 = vst.msk [vmem:[%s234 + $0x1e0] sm:$0xff] %vm906, %v838
      %968 = vst.msk [vmem:[%s234 + $0x1e8] sm:$0xff] %vm906, %v839
      %969 = vst.msk [vmem:[%s234 + $0x1f0] sm:$0xff] %vm906, %v840
      %970 = vst.msk [vmem:[%s234 + $0x1f8] sm:$0xff] %vm906, %v841
      %971 = vst.msk [vmem:[%s234 + $0x200] sm:$0xff] %vm906, %v842
      %972 = vst.msk [vmem:[%s234 + $0x208] sm:$0xff] %vm906, %v843
      %973 = vst.msk [vmem:[%s234 + $0x210] sm:$0xff] %vm906, %v844
      %974 = vst.msk [vmem:[%s234 + $0x218] sm:$0xff] %vm906, %v845
      %975 = vst.msk [vmem:[%s234 + $0x220] sm:$0xff] %vm906, %v846
      %976 = vst.msk [vmem:[%s234 + $0x228] sm:$0xff] %vm906, %v847
      %977 = vst.msk [vmem:[%s234 + $0x230] sm:$0xff] %vm906, %v848
      %978 = vst.msk [vmem:[%s234 + $0x238] sm:$0xff] %vm906, %v849
      %979 = vst.msk [vmem:[%s234 + $0x240] sm:$0xff] %vm906, %v850
      %980 = vst.msk [vmem:[%s234 + $0x248] sm:$0xff] %vm906, %v851
      %981 = vst.msk [vmem:[%s234 + $0x250] sm:$0xff] %vm906, %v852
      %982 = vst.msk [vmem:[%s234 + $0x258] sm:$0xff] %vm906, %v853
      %983 = vst.msk [vmem:[%s234 + $0x260] sm:$0xff] %vm906, %v854
      %984 = vst.msk [vmem:[%s234 + $0x268] sm:$0xff] %vm906, %v855
      %985 = vst.msk [vmem:[%s234 + $0x270] sm:$0xff] %vm906, %v856
      %986 = vst.msk [vmem:[%s234 + $0x278] sm:$0xff] %vm906, %v857
      %987 = vst.msk [vmem:[%s234 + $0x280] sm:$0xff] %vm906, %v858
      %988 = vst.msk [vmem:[%s234 + $0x288] sm:$0xff] %vm906, %v859
      %989 = vst.msk [vmem:[%s234 + $0x290] sm:$0xff] %vm906, %v860
      %990 = vst.msk [vmem:[%s234 + $0x298] sm:$0xff] %vm906, %v861
      %991 = vst.msk [vmem:[%s234 + $0x2a0] sm:$0xff] %vm906, %v862
      %992 = vst.msk [vmem:[%s234 + $0x2a8] sm:$0xff] %vm906, %v863
      %993 = vst.msk [vmem:[%s234 + $0x2b0] sm:$0xff] %vm906, %v864
      %994 = vst.msk [vmem:[%s234 + $0x2b8] sm:$0xff] %vm906, %v865
      %995 = vst.msk [vmem:[%s234 + $0x2c0] sm:$0xff] %vm906, %v866
      %996 = vst.msk [vmem:[%s234 + $0x2c8] sm:$0xff] %vm906, %v867
      %997 = vst.msk [vmem:[%s234 + $0x2d0] sm:$0xff] %vm906, %v868
      %998 = vst.msk [vmem:[%s234 + $0x2d8] sm:$0xff] %vm906, %v869
      %999 = vst.msk [vmem:[%s234 + $0x2e0] sm:$0xff] %vm906, %v870
      %1000 = vst.msk [vmem:[%s234 + $0x2e8] sm:$0xff] %vm906, %v871
      %1001 = vst.msk [vmem:[%s234 + $0x2f0] sm:$0xff] %vm906, %v872
      %1002 = vst.msk [vmem:[%s234 + $0x2f8] sm:$0xff] %vm906, %v873
      %1003 = vst.msk [vmem:[%s234 + $0x300] sm:$0xff] %vm906, %v874
      %1004 = vst.msk [vmem:[%s234 + $0x308] sm:$0xff] %vm906, %v875
      %1005 = vst.msk [vmem:[%s234 + $0x310] sm:$0xff] %vm906, %v876
      %1006 = vst.msk [vmem:[%s234 + $0x318] sm:$0xff] %vm906, %v877
      %1007 = vst.msk [vmem:[%s234 + $0x320] sm:$0xff] %vm906, %v878
      %1008 = vst.msk [vmem:[%s234 + $0x328] sm:$0xff] %vm906, %v879
      %1009 = vst.msk [vmem:[%s234 + $0x330] sm:$0xff] %vm906, %v880
      %1010 = vst.msk [vmem:[%s234 + $0x338] sm:$0xff] %vm906, %v881
      %1011 = vst.msk [vmem:[%s234 + $0x340] sm:$0xff] %vm906, %v882
      %1012 = vst.msk [vmem:[%s234 + $0x348] sm:$0xff] %vm906, %v883
      %1013 = vst.msk [vmem:[%s234 + $0x350] sm:$0xff] %vm906, %v884
      %1014 = vst.msk [vmem:[%s234 + $0x358] sm:$0xff] %vm906, %v885
      %1015 = vst.msk [vmem:[%s234 + $0x360] sm:$0xff] %vm906, %v886
      %1016 = vst.msk [vmem:[%s234 + $0x368] sm:$0xff] %vm906, %v887
      %1017 = vst.msk [vmem:[%s234 + $0x370] sm:$0xff] %vm906, %v888
      %1018 = vst.msk [vmem:[%s234 + $0x378] sm:$0xff] %vm906, %v889
      %1019 = vst.msk [vmem:[%s234 + $0x380] sm:$0xff] %vm906, %v890
      %1020 = vst.msk [vmem:[%s234 + $0x388] sm:$0xff] %vm906, %v891
      %1021 = vst.msk [vmem:[%s234 + $0x390] sm:$0xff] %vm906, %v892
      %1022 = vst.msk [vmem:[%s234 + $0x398] sm:$0xff] %vm906, %v893
      %1023 = vst.msk [vmem:[%s234 + $0x3a0] sm:$0xff] %vm906, %v894
      %1024 = vst.msk [vmem:[%s234 + $0x3a8] sm:$0xff] %vm906, %v895
      %1025 = vst.msk [vmem:[%s234 + $0x3b0] sm:$0xff] %vm906, %v896
      %1026 = vst.msk [vmem:[%s234 + $0x3b8] sm:$0xff] %vm906, %v897
      %1027 = vst.msk [vmem:[%s234 + $0x3c0] sm:$0xff] %vm906, %v898
      %1028 = vst.msk [vmem:[%s234 + $0x3c8] sm:$0xff] %vm906, %v899
      %1029 = vst.msk [vmem:[%s234 + $0x3d0] sm:$0xff] %vm906, %v900
      %1030 = vst.msk [vmem:[%s234 + $0x3d8] sm:$0xff] %vm906, %v901
      %1031 = vst.msk [vmem:[%s234 + $0x3e0] sm:$0xff] %vm906, %v902
      %1032 = vst.msk [vmem:[%s234 + $0x3e8] sm:$0xff] %vm906, %v903
      %1033 = vst.msk [vmem:[%s234 + $0x3f0] sm:$0xff] %vm906, %v904
      %1034 = vst.msk [vmem:[%s234 + $0x3f8] sm:$0xff] %vm906, %v905
      %s1035 = smul.u32 128, %s24
      %p1036 = scmp.lt.s32.totalorder %s1035, 255
      %s1037 = scalar_select %p1036, %s1035, 255
      %s1038 = smul.addr %s1037, 8
      %s1039 = scalar_lea.vmem %s5, %s1038
      // Predicated region
      $region41: #{generator_forward.23} parent=39 // pred_check
        %p1040 = pneg %p152
      $region42: #{generator_forward.23} parent=39 // pred_check_branch
        %1042 = sbr.rel (%p1040) target = $region44
      $region43: #{generator_forward.23} parent=39 // pred_region
        %s1043 = smul.u32 128, %s24
      $region44: #{generator_forward.23} parent=39 // pred_fallthru
        _
    $region40: #{generator_forward.23} parent=5 // pred_fallthru
      _
    %p1044 = scmp.le.s32.totalorder 2, %s19
    // Predicated region
    $region45: #{generator_forward.23} parent=5 // pred_check
      %p1045 = pneg %p1044
    $region46: #{generator_forward.23} parent=5 // pred_check_branch
      %1047 = sbr.rel (%p1045) target = $region48
    $region47: #{generator_forward.23} parent=5 // pred_region
      %s1048 = ssub.s32 %s19, 2
      // Predicated region
      $region49: #{generator_forward.23} parent=47 // pred_check
        %p1049 = pneg %p158
      $region50: #{generator_forward.23} parent=47 // pred_check_branch
        %1051 = sbr.rel (%p1049) target = $region52
      $region51: #{generator_forward.23} parent=47 // pred_region
        %s1052 = smul.u32 128, %s25
        %p1053 = scmp.lt.s32.totalorder %s1052, 255
        %s1054 = scalar_select %p1053, %s1052, 255
        %s1055 = smul.addr %s1054, 8
        %s1056 = scalar_lea.vmem %s5, %s1055
      $region52: #{generator_forward.23} parent=47 // pred_fallthru
        _
    $region48: #{generator_forward.23} parent=5 // pred_fallthru
      _
  $region6: #{generator_forward.23} parent=0 // loop_footer
    %s23 = sadd.s32 1, %s19
  $region7: #{generator_forward.23} parent=0 // loop_footer_branch
    %18 = sbr.rel target = $region3
  $region8: #{generator_forward.23} parent=0 // loop_exit
    _

</llo_original>
